<compile_context>
chip_gen: v6e
topology: v6e:2x2x1
jax: 0.10.0
libtpu: 0.0.40
codegen_flags: <defaults>
</compile_context>

<pallas_src>
import numpy as np
import jax
import jax.numpy as jnp
from jax.experimental import pallas as pl
from jax.experimental.pallas import tpu as pltpu

# ----------------------------- config (scaled-down synthetic) -----------------------------
SAMPLE_RATE = 16000
N_FFT = 400
HOP_LENGTH = 160
N_MELS = 80
N_FREQ = N_FFT // 2 + 1          # 201
N_FREQ_PAD = 256                 # freq padded to a lane-friendly 256
N_MEL_PAD = 128                  # mel columns padded to 128 per frame parity
MEL_COLS = 2 * N_MEL_PAD         # 256 lane-dense mel output columns (even | odd frame)
N_FRAMES = 64                    # scaled-down chunk: 64 mel frames
N_SAMPLES = N_FRAMES * HOP_LENGTH

D_MODEL = 64
N_HEADS = 4
HEAD_DIM = D_MODEL // N_HEADS
FFN_DIM = 128
N_LAYERS = 2
SEQ = (N_FRAMES + 2 * 1 - 3) // 2 + 1   # conv2 stride-2 output length = 32
N_STAGES = N_LAYERS + 2                  # conv stem + layers + final LN
LN_EPS = 1e-5

INV_LN10 = np.float32(1.0 / np.log(10.0))
SQRT_2_OVER_PI = 0.7978845608028654


# ----------------------- in-kernel math helpers -----------------------
def _gelu(x):
    # tanh-approx GELU (EUP tanh frees VALU slots). HF Whisper uses exact-erf GELU; ~1e-3 max-abs tolerance.
    return 0.5 * x * (1.0 + jnp.tanh(SQRT_2_OVER_PI * (x + 0.044715 * x * x * x)))


def _layernorm(x, gamma, beta):
    mu = jnp.mean(x, axis=-1, keepdims=True)
    xc = x - mu
    var = jnp.mean(xc * xc, axis=-1, keepdims=True)
    return xc * jax.lax.rsqrt(var + LN_EPS) * gamma + beta


def _shift_down(v):
    # result[r] = v[r-1], zeroed at the first row of every length-SEQ segment (batch boundary / conv pad)
    rolled = pltpu.roll(v, 1, 0)
    row = jax.lax.broadcasted_iota(jnp.int32, v.shape, 0)
    return jnp.where(row % SEQ == 0, 0.0, rolled)


def _shift_up(v):
    # result[r] = v[r+1], zeroed at the last row of every length-SEQ segment
    n = v.shape[0]
    rolled = pltpu.roll(v, n - 1, 0)
    row = jax.lax.broadcasted_iota(jnp.int32, v.shape, 0)
    return jnp.where(row % SEQ == SEQ - 1, 0.0, rolled)


# ----------------------------- Pallas kernel #1: log-mel -----------------------------
def mel_kernel(mag_ref, filt_ref, o_ref):
    # mag_ref : (SEQ, 512) f32, row s = [freqs of frame 2s | freqs of frame 2s+1]
    # filt_ref: (512, 256) f32 block-diagonal filterbank^T -> cols 0:80 even mels, 128:208 odd mels
    # Output is clamp(1e-10).log10 only; the global-max floor + (x+4)/4 is fused into the megakernel.
    m = jnp.dot(mag_ref[...], filt_ref[...], preferred_element_type=jnp.float32)
    m = jnp.maximum(m, 1e-10)
    o_ref[...] = jnp.log(m) * INV_LN10


# ----------------------------- Pallas kernel #2: encoder megakernel -----------------------------
def encoder_megakernel(logspec_ref, w1_ref, b1_ref, w2_ref, b2_ref, pos_ref,
                       lnp_ref, wqkv_ref, bqkv_ref, wo_ref, bo_ref,
                       wf1_ref, bf1_ref, wf2_ref, bf2_ref, lnf_ref, o_ref):
    f32 = jnp.float32
    bf16 = jnp.bfloat16
    s = pl.program_id(0)

    # ---------------- stage 0: dynamic-range floor + conv stem + pos emb ----------------
    @pl.when(s == 0)
    def _conv_stem():
        ls = logspec_ref[...]                                 # (B*SEQ, 256) f32
        # Padded columns hold log10(1e-10) = -10 <= any clamped real value, so the global max is exact.
        gmax = jnp.max(ls)
        x = (jnp.maximum(ls, gmax - 8.0) + 4.0) * 0.25
        xe = x[:, 0:N_MEL_PAD]                                # even frames (lanes 80:128 multiply zero weights)
        xo = x[:, N_MEL_PAD:MEL_COLS]                         # odd frames
        xo_prev = _shift_down(xo)                             # x[2s-1]
        xe_next = _shift_up(xe)                               # x[2s+2]
        # hoisted bf16 casts (each operand cast once)
        xe_b, xo_b = xe.astype(bf16), xo.astype(bf16)
        xop_b, xen_b = xo_prev.astype(bf16), xe_next.astype(bf16)
        w10, w11, w12 = w1_ref[0], w1_ref[1], w1_ref[2]
        b1 = b1_ref[...]
        he = _gelu(b1
                   + jnp.dot(xop_b, w10, preferred_element_type=f32)
                   + jnp.dot(xe_b, w11, preferred_element_type=f32)
                   + jnp.dot(xo_b, w12, preferred_element_type=f32))      # h[2s]
        ho = _gelu(b1
                   + jnp.dot(xe_b, w10, preferred_element_type=f32)
                   + jnp.dot(xo_b, w11, preferred_element_type=f32)
                   + jnp.dot(xen_b, w12, preferred_element_type=f32))     # h[2s+1]
        ho_prev = _shift_down(ho)                                         # h[2t-1]
        he_b, ho_b, hop_b = he.astype(bf16), ho.astype(bf16), ho_prev.astype(bf16)
        out = _gelu(b2_ref[...]
                    + jnp.dot(hop_b, w2_ref[0], preferred_element_type=f32)
                    + jnp.dot(he_b, w2_ref[1], preferred_element_type=f32)
                    + jnp.dot(ho_b, w2_ref[2], preferred_element_type=f32))
        o_ref[...] = out + pos_ref[...]                                   # hidden state stays in VMEM

    # ---------------- stages 1..N_LAYERS: pre-LN encoder layer ----------------
    @pl.when(jnp.logical_and(s >= 1, s <= N_LAYERS))
    def _layer():
        x = o_ref[...]                                         # (B*SEQ, D) f32, resident
        rows = x.shape[0]
        batch = rows // SEQ
        ln = lnp_ref[0]                                        # (4, D) = [ln1_g, ln1_b, ln2_g, ln2_b]

        # --- attention block ---
        xn = _layernorm(x, ln[0:1, :], ln[1:2, :])
        qkv = jnp.dot(xn.astype(bf16), wqkv_ref[0],
                      preferred_element_type=f32) + bqkv_ref[0]          # (B*SEQ, 3D), q pre-scaled
        qkv3 = qkv.reshape(batch, SEQ, 3 * D_MODEL)
        q3 = qkv3[:, :, 0:D_MODEL].astype(bf16)                          # hoisted casts
        k3 = qkv3[:, :, D_MODEL:2 * D_MODEL].astype(bf16)
        v3 = qkv3[:, :, 2 * D_MODEL:3 * D_MODEL].astype(bf16)
        heads = []
        for h in range(N_HEADS):                               # static 4-iter loop; each iter batched over B
            sl = slice(h * HEAD_DIM, (h + 1) * HEAD_DIM)
            sc = jnp.einsum('bqd,bkd->bqk', q3[:, :, sl], k3[:, :, sl],
                            preferred_element_type=f32)                  # (B, SEQ, SEQ)
            sc = sc - jnp.max(sc, axis=-1, keepdims=True)
            p = jnp.exp(sc)
            p = p * pl.reciprocal(jnp.sum(p, axis=-1, keepdims=True), approx=True)
            heads.append(jnp.einsum('bqk,bkd->bqd', p.astype(bf16), v3[:, :, sl],
                                    preferred_element_type=f32))          # (B, SEQ, HEAD_DIM)
        attn = jnp.concatenate(heads, axis=-1).reshape(rows, D_MODEL)     # single concat
        y = x + bo_ref[0] + jnp.dot(attn.astype(bf16), wo_ref[0],
                                    preferred_element_type=f32)           # ONE out-projection + residual

        # --- MLP block ---
        yn = _layernorm(y, ln[2:3, :], ln[3:4, :])
        ff = _gelu(jnp.dot(yn.astype(bf16), wf1_ref[0],
                           preferred_element_type=f32) + bf1_ref[0])
        ff = jnp.dot(ff.astype(bf16), wf2_ref[0],
                     preferred_element_type=f32) + bf2_ref[0]
        o_ref[...] = y + ff

    # ---------------- final stage: final LayerNorm ----------------
    @pl.when(s == N_STAGES - 1)
    def _final_ln():
        o_ref[...] = _layernorm(o_ref[...], lnf_ref[0:1, :], lnf_ref[1:2, :])


# ----------------------------- Pallas wrappers -----------------------------
def mel_logspec(mag_pair, filt2, batch):
    rows = mag_pair.shape[0]                 # B*SEQ
    return pl.pallas_call(
        mel_kernel,
        out_shape=jax.ShapeDtypeStruct((rows, MEL_COLS), jnp.float32),
        grid=(batch,),
        in_specs=[pl.BlockSpec((SEQ, 2 * N_FREQ_PAD), lambda i: (i, 0)),
                  pl.BlockSpec((2 * N_FREQ_PAD, MEL_COLS), lambda i: (0, 0))],
        out_specs=pl.BlockSpec((SEQ, MEL_COLS), lambda i: (i, 0)),
        compiler_params=pltpu.CompilerParams(dimension_semantics=("parallel",)),
    )(mag_pair, filt2)


def encoder_stack(logspec, pk):
    rows = logspec.shape[0]                  # B*SEQ

    def const2(r, c):
        return pl.BlockSpec((r, c), lambda s: (0, 0))

    def const3(a, r, c):
        return pl.BlockSpec((a, r, c), lambda s: (0, 0, 0))

    def per_layer(r, c):
        # layer weights stacked (N_LAYERS, r, c); stage s -> layer clip(s-1, 0, N_LAYERS-1)
        return pl.BlockSpec(
            (1, r, c),
            lambda s: (jnp.maximum(0, jnp.minimum(s - 1, N_LAYERS - 1)), 0, 0))

    return pl.pallas_call(
        encoder_megakernel,
        out_shape=jax.ShapeDtypeStruct((rows, D_MODEL), jnp.float32),
        grid=(N_STAGES,),
        in_specs=[
            const2(rows, MEL_COLS),              # log-mel spectrogram (pre-floor)
            const3(3, N_MEL_PAD, D_MODEL),       # conv1 taps (bf16, in-ch padded to 128)
            const2(1, D_MODEL),                  # conv1 bias
            const3(3, D_MODEL, D_MODEL),         # conv2 taps (bf16)
            const2(1, D_MODEL),                  # conv2 bias
            const2(rows, D_MODEL),               # positional embedding (tiled over batch)
            per_layer(4, D_MODEL),               # [ln1_g, ln1_b, ln2_g, ln2_b]
            per_layer(D_MODEL, 3 * D_MODEL),     # wqkv (bf16, q pre-scaled)
            per_layer(1, 3 * D_MODEL),           # bqkv
            per_layer(D_MODEL, D_MODEL),         # wo (bf16)
            per_layer(1, D_MODEL),               # bo
            per_layer(D_MODEL, FFN_DIM),         # wf1 (bf16)
            per_layer(1, FFN_DIM),               # bf1
            per_layer(FFN_DIM, D_MODEL),         # wf2 (bf16)
            per_layer(1, D_MODEL),               # bf2
            const2(2, D_MODEL),                  # final LN
        ],
        out_specs=pl.BlockSpec((rows, D_MODEL), lambda s: (0, 0)),   # constant index -> VMEM-resident
        compiler_params=pltpu.CompilerParams(dimension_semantics=("arbitrary",)),
    )(logspec, pk["w1"], pk["b1"], pk["w2"], pk["b2"], pk["pos"],
      pk["lnp"], pk["wqkv"], pk["bqkv"], pk["wo"], pk["bo"],
      pk["wf1"], pk["bf1"], pk["wf2"], pk["bf2"], pk["lnf"])


# ----------------------------- feature extraction glue (XLA) -----------------------------
def mel_filterbank(n_mels=N_MELS, n_fft=N_FFT, sr=SAMPLE_RATE):
    # librosa-style slaney mel filterbank, built deterministically in-script
    def hz_to_mel(f):
        f = np.asarray(f, dtype=np.float64)
        f_sp = 200.0 / 3
        mels = f / f_sp
        min_log_hz = 1000.0
        min_log_mel = min_log_hz / f_sp
        logstep = np.log(6.4) / 27.0
        return np.where(f >= min_log_hz,
                        min_log_mel + np.log(np.maximum(f, min_log_hz) / min_log_hz) / logstep,
                        mels)

    def mel_to_hz(m):
        m = np.asarray(m, dtype=np.float64)
        f_sp = 200.0 / 3
        freqs = f_sp * m
        min_log_hz = 1000.0
        min_log_mel = min_log_hz / f_sp
        logstep = np.log(6.4) / 27.0
        return np.where(m >= min_log_mel,
                        min_log_hz * np.exp(logstep * (m - min_log_mel)),
                        freqs)

    n_freqs = n_fft // 2 + 1
    fftfreqs = np.linspace(0, sr / 2, n_freqs)
    mels = np.linspace(hz_to_mel(0.0), hz_to_mel(sr / 2), n_mels + 2)
    mel_f = mel_to_hz(mels)
    fdiff = np.diff(mel_f)
    ramps = mel_f[:, None] - fftfreqs[None, :]
    weights = np.zeros((n_mels, n_freqs))
    for i in range(n_mels):
        lower = -ramps[i] / fdiff[i]
        upper = ramps[i + 2] / fdiff[i + 1]
        weights[i] = np.maximum(0.0, np.minimum(lower, upper))
    enorm = 2.0 / (mel_f[2:n_mels + 2] - mel_f[:n_mels])
    weights *= enorm[:, None]
    return weights.astype(np.float32)


def pad_or_trim(audio, length=N_SAMPLES):
    n = audio.shape[-1]
    if n > length:
        audio = audio[..., :length]
    if n < length:
        audio = jnp.pad(audio, ((0, 0), (0, length - n)))
    return audio


def stft_magnitudes_tm(audio):
    # TODO(synk): FFT has no Pallas primitive; rfft stays in plain JAX (XLA FFT).
    b, n = audio.shape
    pad = N_FFT // 2
    x = jnp.pad(audio, ((0, 0), (pad, pad)), mode="reflect")
    window = 0.5 * (1.0 - jnp.cos(2.0 * jnp.pi * jnp.arange(N_FFT) / N_FFT))   # periodic hann
    starts = jnp.arange(N_FRAMES) * HOP_LENGTH                # frames 0..T-1 (ref drops the last frame)
    frames = x[:, starts[:, None] + jnp.arange(N_FFT)[None, :]]                # (B, T, N_FFT), time-major
    spec = jnp.fft.rfft(frames * window, axis=-1)                              # (B, T, 201)
    return (jnp.abs(spec) ** 2).astype(jnp.float32)


def sinusoids(length, channels, max_timescale=10000.0):
    inc = np.log(max_timescale) / (channels // 2 - 1)
    inv_ts = np.exp(-inc * np.arange(channels // 2))
    scaled = np.arange(length)[:, None] * inv_ts[None, :]
    return np.concatenate([np.sin(scaled), np.cos(scaled)], axis=1).astype(np.float32)


# ----------------------------- parameters -----------------------------
def init_params(key):
    def nrm(k, shape, scale=0.02):
        return scale * jax.random.normal(k, shape, dtype=jnp.float32)

    keys = iter(jax.random.split(key, 64))
    p = {
        "mel_filters": jnp.asarray(mel_filterbank()),
        "conv1_w": nrm(next(keys), (D_MODEL, N_MELS, 3)),
        "conv1_b": jnp.zeros((D_MODEL,), jnp.float32),
        "conv2_w": nrm(next(keys), (D_MODEL, D_MODEL, 3)),
        "conv2_b": jnp.zeros((D_MODEL,), jnp.float32),
        "pos": jnp.asarray(sinusoids(SEQ, D_MODEL)),
        "lnf_g": jnp.ones((D_MODEL,), jnp.float32),
        "lnf_b": jnp.zeros((D_MODEL,), jnp.float32),
        "layers": [],
    }
    for _ in range(N_LAYERS):
        p["layers"].append({
            "ln1_g": jnp.ones((D_MODEL,), jnp.float32),
            "ln1_b": jnp.zeros((D_MODEL,), jnp.float32),
            "wq": nrm(next(keys), (D_MODEL, D_MODEL)), "bq": jnp.zeros((D_MODEL,), jnp.float32),
            "wk": nrm(next(keys), (D_MODEL, D_MODEL)),                       # k_proj has no bias
            "wv": nrm(next(keys), (D_MODEL, D_MODEL)), "bv": jnp.zeros((D_MODEL,), jnp.float32),
            "wo": nrm(next(keys), (D_MODEL, D_MODEL)), "bo": jnp.zeros((D_MODEL,), jnp.float32),
            "ln2_g": jnp.ones((D_MODEL,), jnp.float32),
            "ln2_b": jnp.zeros((D_MODEL,), jnp.float32),
            "wf1": nrm(next(keys), (D_MODEL, FFN_DIM)), "bf1": jnp.zeros((FFN_DIM,), jnp.float32),
            "wf2": nrm(next(keys), (FFN_DIM, D_MODEL)), "bf2": jnp.zeros((D_MODEL,), jnp.float32),
        })
    return p


def pack_params(p, batch):
    # All weight fusion / padding / bf16 casting done ONCE here (not per forward).
    f32, bf16 = jnp.float32, jnp.bfloat16

    filtT = jnp.transpose(p["mel_filters"])                                   # (201, 80)
    filt2 = jnp.zeros((2 * N_FREQ_PAD, MEL_COLS), f32)
    filt2 = filt2.at[0:N_FREQ, 0:N_MELS].set(filtT)                           # even-frame block
    filt2 = filt2.at[N_FREQ_PAD:N_FREQ_PAD + N_FREQ, N_MEL_PAD:N_MEL_PAD + N_MELS].set(filtT)  # odd-frame

    w1 = jnp.transpose(p["conv1_w"], (2, 1, 0))                               # (3, 80, D)
    w1 = jnp.pad(w1, ((0, 0), (0, N_MEL_PAD - N_MELS), (0, 0))).astype(bf16)  # (3, 128, D), pad rows zero
    w2 = jnp.transpose(p["conv2_w"], (2, 1, 0)).astype(bf16)                  # (3, D, D)

    scaling = float(HEAD_DIM) ** -0.5
    lnp, wqkv, bqkv, wo, bo, wf1, bf1, wf2, bf2 = ([] for _ in range(9))
    for lp in p["layers"]:
        lnp.append(jnp.stack([lp["ln1_g"], lp["ln1_b"], lp["ln2_g"], lp["ln2_b"]]))
        wqkv.append(jnp.concatenate([lp["wq"] * scaling, lp["wk"], lp["wv"]], axis=1))
        bqkv.append(jnp.concatenate([lp["bq"] * scaling,
                                     jnp.zeros((D_MODEL,), f32), lp["bv"]])[None, :])
        wo.append(lp["wo"]); bo.append(lp["bo"][None, :])
        wf1.append(lp["wf1"]); bf1.append(lp["bf1"][None, :])
        wf2.append(lp["wf2"]); bf2.append(lp["bf2"][None, :])

    return {
        "filt2": filt2,
        "w1": w1, "b1": p["conv1_b"][None, :],
        "w2": w2, "b2": p["conv2_b"][None, :],
        "pos": jnp.tile(p["pos"], (batch, 1)),                                # (B*SEQ, D)
        "lnp": jnp.stack(lnp),
        "wqkv": jnp.stack(wqkv).astype(bf16), "bqkv": jnp.stack(bqkv),
        "wo": jnp.stack(wo).astype(bf16), "bo": jnp.stack(bo),
        "wf1": jnp.stack(wf1).astype(bf16), "bf1": jnp.stack(bf1),
        "wf2": jnp.stack(wf2).astype(bf16), "bf2": jnp.stack(bf2),
        "lnf": jnp.stack([p["lnf_g"], p["lnf_b"]]),
    }


# ----------------------------- full forward -----------------------------
def whisper_encoder_forward(audio, pk):
    b = audio.shape[0]

    # --- log-mel front end ---
    padded = pad_or_trim(audio, N_SAMPLES)
    mag = stft_magnitudes_tm(padded)                                          # (B, T, 201) time-major
    mag = jnp.pad(mag, ((0, 0), (0, 0), (0, N_FREQ_PAD - N_FREQ)))            # (B, T, 256)
    mag_pair = mag.reshape(b * SEQ, 2 * N_FREQ_PAD)                           # free reshape: frame pairs
    logspec = mel_logspec(mag_pair, pk["filt2"], b)                           # (B*SEQ, 256) lane-dense

    # --- fused conv stem + N_LAYERS encoder layers + final LN (single pallas_call) ---
    out2d = encoder_stack(logspec, pk)                                        # (B*SEQ, D)
    return out2d.reshape(b, SEQ, D_MODEL)                                     # last_hidden_state


# ----------------------------- main -----------------------------
if __name__ == "__main__":
    key = jax.random.PRNGKey(0)
    k_audio, k_params = jax.random.split(key)

    batch = 2
    audio_len = 9000                                              # < N_SAMPLES -> exercises zero-pad
    audio = 0.1 * jax.random.normal(k_audio, (batch, audio_len), dtype=jnp.float32)

    params = init_params(k_params)
    packed = pack_params(params, batch)

    fwd = jax.jit(whisper_encoder_forward)
    out = jax.block_until_ready(fwd(audio, packed))

    assert out.shape == (batch, SEQ, D_MODEL), out.shape
    assert bool(jnp.all(jnp.isfinite(out)))
    print("KERNEL_OK")
</pallas_src>

<mosaic_0001>
module attributes {stable_mosaic.version = 11 : i64} {
  func.func @mel_kernel(%arg0: i32, %arg1: memref<32x512xf32, #tpu.memory_space<vmem>>, %arg2: memref<512x256xf32, #tpu.memory_space<vmem>>, %arg3: memref<32x256xf32, #tpu.memory_space<vmem>>) attributes {dimension_semantics = [#tpu.dimension_semantics<parallel>], iteration_bounds = array<i64: 2>, scalar_prefetch = 0 : i64, scratch_operands = 0 : i64, tpu.core_type = #tpu.core_type<tc>, window_params = [{transform_indices = @transform_0, window_bounds = array<i64: 32, 512>}, {pipeline_mode = #tpu.pipeline_mode<synchronous>, transform_indices = @transform_1, window_bounds = array<i64: 512, 256>}, {transform_indices = @transform_2, window_bounds = array<i64: 32, 256>}]} {
    %c0 = arith.constant 0 : index
    %c0_0 = arith.constant 0 : index
    %0 = vector.load %arg1[%c0, %c0_0] : memref<32x512xf32, #tpu.memory_space<vmem>>, vector<32x512xf32>
    %c0_1 = arith.constant 0 : index
    %c0_2 = arith.constant 0 : index
    %1 = vector.load %arg2[%c0_1, %c0_2] : memref<512x256xf32, #tpu.memory_space<vmem>>, vector<512x256xf32>
    %cst = arith.constant dense<0.000000e+00> : vector<32x256xf32>
    %2 = tpu.matmul %0, %1, %cst {dimension_numbers = #tpu.dot_dimension_numbers<[1], [0], [0], [1], [0, 0, 1, 1], [], []>} : vector<32x512xf32>, vector<512x256xf32>, vector<32x256xf32> -> vector<32x256xf32>
    %cst_3 = arith.constant 1.000000e-10 : f32
    %3 = vector.broadcast %cst_3 : f32 to vector<32x256xf32>
    %4 = arith.maximumf %2, %3 : vector<32x256xf32>
    %5 = math.log %4 : vector<32x256xf32>
    %cst_4 = arith.constant 0.434294492 : f32
    %6 = vector.broadcast %cst_4 : f32 to vector<32x256xf32>
    %7 = arith.mulf %5, %6 : vector<32x256xf32>
    %c0_5 = arith.constant 0 : index
    %c0_6 = arith.constant 0 : index
    %8 = vector.load %arg3[%c0_5, %c0_6] : memref<32x256xf32, #tpu.memory_space<vmem>>, vector<32x256xf32>
    tpu.vector_store %arg3[%c0_5, %c0_6], %7 {strides = array<i32>} : memref<32x256xf32, #tpu.memory_space<vmem>>, vector<32x256xf32>,
    return
  }
  func.func @transform_0(%arg0: i32) -> (i32, i32) {
    %c0_i32 = arith.constant 0 : i32
    %c0_i32_0 = arith.constant 0 : i32
    return %arg0, %c0_i32 : i32, i32
  }
  func.func @transform_1(%arg0: i32) -> (i32, i32) {
    %c0_i32 = arith.constant 0 : i32
    %c0_i32_0 = arith.constant 0 : i32
    %c0_i32_1 = arith.constant 0 : i32
    return %c0_i32, %c0_i32_0 : i32, i32
  }
  func.func @transform_2(%arg0: i32) -> (i32, i32) {
    %c0_i32 = arith.constant 0 : i32
    %c0_i32_0 = arith.constant 0 : i32
    return %arg0, %c0_i32 : i32, i32
  }
}

module attributes {stable_mosaic.version = 11 : i64} {
  func.func @encoder_megakernel(%arg0: i32, %arg1: memref<64x256xf32, #tpu.memory_space<vmem>>, %arg2: memref<3x128x64xbf16, #tpu.memory_space<vmem>>, %arg3: memref<1x64xf32, #tpu.memory_space<vmem>>, %arg4: memref<3x64x64xbf16, #tpu.memory_space<vmem>>, %arg5: memref<1x64xf32, #tpu.memory_space<vmem>>, %arg6: memref<64x64xf32, #tpu.memory_space<vmem>>, %arg7: memref<1x4x64xf32, #tpu.memory_space<vmem>>, %arg8: memref<1x64x192xbf16, #tpu.memory_space<vmem>>, %arg9: memref<1x1x192xf32, #tpu.memory_space<vmem>>, %arg10: memref<1x64x64xbf16, #tpu.memory_space<vmem>>, %arg11: memref<1x1x64xf32, #tpu.memory_space<vmem>>, %arg12: memref<1x64x128xbf16, #tpu.memory_space<vmem>>, %arg13: memref<1x1x128xf32, #tpu.memory_space<vmem>>, %arg14: memref<1x128x64xbf16, #tpu.memory_space<vmem>>, %arg15: memref<1x1x64xf32, #tpu.memory_space<vmem>>, %arg16: memref<2x64xf32, #tpu.memory_space<vmem>>, %arg17: memref<64x64xf32, #tpu.memory_space<vmem>>) attributes {dimension_semantics = [#tpu.dimension_semantics<arbitrary>], iteration_bounds = array<i64: 4>, scalar_prefetch = 0 : i64, scratch_operands = 0 : i64, tpu.core_type = #tpu.core_type<tc>, window_params = [{pipeline_mode = #tpu.pipeline_mode<synchronous>, transform_indices = @transform_0, window_bounds = array<i64: 64, 256>}, {pipeline_mode = #tpu.pipeline_mode<synchronous>, transform_indices = @transform_1, window_bounds = array<i64: 3, 128, 64>}, {pipeline_mode = #tpu.pipeline_mode<synchronous>, transform_indices = @transform_2, window_bounds = array<i64: 1, 64>}, {pipeline_mode = #tpu.pipeline_mode<synchronous>, transform_indices = @transform_3, window_bounds = array<i64: 3, 64, 64>}, {pipeline_mode = #tpu.pipeline_mode<synchronous>, transform_indices = @transform_4, window_bounds = array<i64: 1, 64>}, {pipeline_mode = #tpu.pipeline_mode<synchronous>, transform_indices = @transform_5, window_bounds = array<i64: 64, 64>}, {transform_indices = @transform_6, window_bounds = array<i64: 1, 4, 64>}, {transform_indices = @transform_7, window_bounds = array<i64: 1, 64, 192>}, {transform_indices = @transform_8, window_bounds = array<i64: 1, 1, 192>}, {transform_indices = @transform_9, window_bounds = array<i64: 1, 64, 64>}, {transform_indices = @transform_10, window_bounds = array<i64: 1, 1, 64>}, {transform_indices = @transform_11, window_bounds = array<i64: 1, 64, 128>}, {transform_indices = @transform_12, window_bounds = array<i64: 1, 1, 128>}, {transform_indices = @transform_13, window_bounds = array<i64: 1, 128, 64>}, {transform_indices = @transform_14, window_bounds = array<i64: 1, 1, 64>}, {pipeline_mode = #tpu.pipeline_mode<synchronous>, transform_indices = @transform_15, window_bounds = array<i64: 2, 64>}, {pipeline_mode = #tpu.pipeline_mode<synchronous>, transform_indices = @transform_16, window_bounds = array<i64: 64, 64>}]} {
    %c0_i32 = arith.constant 0 : i32
    %0 = arith.cmpi eq, %arg0, %c0_i32 : i32
    %1 = arith.extui %0 : i1 to i32
    %c0_i32_0 = arith.constant 0 : i32
    %2 = arith.cmpi ne, %1, %c0_i32_0 : i32
    scf.if %2 {
      %c0 = arith.constant 0 : index
      %c0_3 = arith.constant 0 : index
      %11 = vector.load %arg1[%c0, %c0_3] : memref<64x256xf32, #tpu.memory_space<vmem>>, vector<64x256xf32>
      %12 = vector.shape_cast %11 : vector<64x256xf32> to vector<1x64x256xf32>
      %cst = arith.constant dense<0xFF800000> : vector<1xf32>
      %13 = vector.multi_reduction <maximumf>, %12, %cst [1, 2] : vector<1x64x256xf32> to vector<1xf32>
      %14 = vector.shape_cast %13 : vector<1xf32> to vector<1x1x1xf32>
      %15 = vector.extract %14[0, 0, 0] : f32 from vector<1x1x1xf32>
      %cst_4 = arith.constant 8.000000e+00 : f32
      %16 = arith.subf %15, %cst_4 : f32
      %17 = vector.broadcast %16 : f32 to vector<64x256xf32>
      %18 = arith.maximumf %11, %17 : vector<64x256xf32>
      %cst_5 = arith.constant 4.000000e+00 : f32
      %19 = vector.broadcast %cst_5 : f32 to vector<64x256xf32>
      %20 = arith.addf %18, %19 : vector<64x256xf32>
      %cst_6 = arith.constant 2.500000e-01 : f32
      %21 = vector.broadcast %cst_6 : f32 to vector<64x256xf32>
      %22 = arith.mulf %20, %21 : vector<64x256xf32>
      %23 = vector.extract_strided_slice %22 {offsets = [0, 0], sizes = [64, 128], strides = [1, 1]} : vector<64x256xf32> to vector<64x128xf32>
      %24 = vector.extract_strided_slice %22 {offsets = [0, 128], sizes = [64, 128], strides = [1, 1]} : vector<64x256xf32> to vector<64x128xf32>
      %c1_i32_7 = arith.constant 1 : i32
      %25 = tpu.dynamic_rotate %24 by %c1_i32_7 dim 0 : vector<64x128xf32>, i32 -> vector<64x128xf32>
      %26 = tpu.iota {dimensions = array<i32: 0>} : vector<64x128xi32>
      %c32_i32 = arith.constant 32 : i32
      %c0_i32_8 = arith.constant 0 : i32
      %27 = arith.cmpi eq, %c32_i32, %c0_i32_8 : i32
      %c1_i32_9 = arith.constant 1 : i32
      %28 = arith.select %27, %c1_i32_9, %c32_i32 : i32
      %29 = vector.broadcast %28 : i32 to vector<64x128xi32>
      %30 = arith.remsi %26, %29 : vector<64x128xi32>
      %c0_i32_10 = arith.constant 0 : i32
      %31 = vector.broadcast %c0_i32_10 : i32 to vector<64x128xi32>
      %32 = arith.cmpi ne, %30, %31 : vector<64x128xi32>
      %c0_i32_11 = arith.constant 0 : i32
      %33 = vector.broadcast %c0_i32_11 : i32 to vector<64x128xi32>
      %34 = arith.cmpi slt, %30, %33 : vector<64x128xi32>
      %c0_i32_12 = arith.constant 0 : i32
      %35 = arith.cmpi slt, %28, %c0_i32_12 : i32
      %36 = vector.broadcast %35 : i1 to vector<64x128xi1>
      %37 = vector.broadcast %36 : vector<64x128xi1> to vector<64x128xi1>
      %38 = arith.xori %34, %37 : vector<64x128xi1>
      %39 = arith.andi %38, %32 : vector<64x128xi1>
      %40 = vector.broadcast %28 : i32 to vector<64x128xi32>
      %41 = arith.addi %30, %40 : vector<64x128xi32>
      %42 = arith.select %39, %41, %30 : vector<64x128xi1>, vector<64x128xi32>
      %c0_i32_13 = arith.constant 0 : i32
      %43 = vector.broadcast %c0_i32_13 : i32 to vector<64x128xi32>
      %44 = arith.cmpi eq, %42, %43 : vector<64x128xi32>
      %cst_14 = arith.constant 0.000000e+00 : f32
      %45 = vector.broadcast %cst_14 : f32 to vector<64x128xf32>
      %46 = arith.select %44, %45, %25 : vector<64x128xi1>, vector<64x128xf32>
      %c63_i32 = arith.constant 63 : i32
      %47 = tpu.dynamic_rotate %23 by %c63_i32 dim 0 : vector<64x128xf32>, i32 -> vector<64x128xf32>
      %48 = tpu.iota {dimensions = array<i32: 0>} : vector<64x128xi32>
      %c32_i32_15 = arith.constant 32 : i32
      %c0_i32_16 = arith.constant 0 : i32
      %49 = arith.cmpi eq, %c32_i32_15, %c0_i32_16 : i32
      %c1_i32_17 = arith.constant 1 : i32
      %50 = arith.select %49, %c1_i32_17, %c32_i32_15 : i32
      %51 = vector.broadcast %50 : i32 to vector<64x128xi32>
      %52 = arith.remsi %48, %51 : vector<64x128xi32>
      %c0_i32_18 = arith.constant 0 : i32
      %53 = vector.broadcast %c0_i32_18 : i32 to vector<64x128xi32>
      %54 = arith.cmpi ne, %52, %53 : vector<64x128xi32>
      %c0_i32_19 = arith.constant 0 : i32
      %55 = vector.broadcast %c0_i32_19 : i32 to vector<64x128xi32>
      %56 = arith.cmpi slt, %52, %55 : vector<64x128xi32>
      %c0_i32_20 = arith.constant 0 : i32
      %57 = arith.cmpi slt, %50, %c0_i32_20 : i32
      %58 = vector.broadcast %57 : i1 to vector<64x128xi1>
      %59 = vector.broadcast %58 : vector<64x128xi1> to vector<64x128xi1>
      %60 = arith.xori %56, %59 : vector<64x128xi1>
      %61 = arith.andi %60, %54 : vector<64x128xi1>
      %62 = vector.broadcast %50 : i32 to vector<64x128xi32>
      %63 = arith.addi %52, %62 : vector<64x128xi32>
      %64 = arith.select %61, %63, %52 : vector<64x128xi1>, vector<64x128xi32>
      %c31_i32 = arith.constant 31 : i32
      %65 = vector.broadcast %c31_i32 : i32 to vector<64x128xi32>
      %66 = arith.cmpi eq, %64, %65 : vector<64x128xi32>
      %cst_21 = arith.constant 0.000000e+00 : f32
      %67 = vector.broadcast %cst_21 : f32 to vector<64x128xf32>
      %68 = arith.select %66, %67, %47 : vector<64x128xi1>, vector<64x128xf32>
      %69 = arith.truncf %23 : vector<64x128xf32> to vector<64x128xbf16>
      %70 = arith.truncf %24 : vector<64x128xf32> to vector<64x128xbf16>
      %71 = arith.truncf %46 : vector<64x128xf32> to vector<64x128xbf16>
      %72 = arith.truncf %68 : vector<64x128xf32> to vector<64x128xbf16>
      %c0_22 = arith.constant 0 : index
      %c0_23 = arith.constant 0 : index
      %c0_24 = arith.constant 0 : index
      %73 = vector.load %arg2[%c0_22, %c0_23, %c0_24] : memref<3x128x64xbf16, #tpu.memory_space<vmem>>, vector<1x128x64xbf16>
      %74 = vector.shape_cast %73 : vector<1x128x64xbf16> to vector<128x64xbf16>
      %c1 = arith.constant 1 : index
      %c0_25 = arith.constant 0 : index
      %c0_26 = arith.constant 0 : index
      %75 = vector.load %arg2[%c1, %c0_25, %c0_26] : memref<3x128x64xbf16, #tpu.memory_space<vmem>>, vector<1x128x64xbf16>
      %76 = vector.shape_cast %75 : vector<1x128x64xbf16> to vector<128x64xbf16>
      %c2 = arith.constant 2 : index
      %c0_27 = arith.constant 0 : index
      %c0_28 = arith.constant 0 : index
      %77 = vector.load %arg2[%c2, %c0_27, %c0_28] : memref<3x128x64xbf16, #tpu.memory_space<vmem>>, vector<1x128x64xbf16>
      %78 = vector.shape_cast %77 : vector<1x128x64xbf16> to vector<128x64xbf16>
      %c0_29 = arith.constant 0 : index
      %c0_30 = arith.constant 0 : index
      %79 = vector.load %arg3[%c0_29, %c0_30] : memref<1x64xf32, #tpu.memory_space<vmem>>, vector<1x64xf32>
      %cst_31 = arith.constant dense<0.000000e+00> : vector<64x64xf32>
      %80 = tpu.matmul %71, %74, %cst_31 {dimension_numbers = #tpu.dot_dimension_numbers<[1], [0], [0], [1], [0, 0, 1, 1], [], []>} : vector<64x128xbf16>, vector<128x64xbf16>, vector<64x64xf32> -> vector<64x64xf32>
      %81 = vector.broadcast %79 : vector<1x64xf32> to vector<64x64xf32>
      %82 = arith.addf %81, %80 : vector<64x64xf32>
      %cst_32 = arith.constant dense<0.000000e+00> : vector<64x64xf32>
      %83 = tpu.matmul %69, %76, %cst_32 {dimension_numbers = #tpu.dot_dimension_numbers<[1], [0], [0], [1], [0, 0, 1, 1], [], []>} : vector<64x128xbf16>, vector<128x64xbf16>, vector<64x64xf32> -> vector<64x64xf32>
      %84 = arith.addf %82, %83 : vector<64x64xf32>
      %cst_33 = arith.constant dense<0.000000e+00> : vector<64x64xf32>
      %85 = tpu.matmul %70, %78, %cst_33 {dimension_numbers = #tpu.dot_dimension_numbers<[1], [0], [0], [1], [0, 0, 1, 1], [], []>} : vector<64x128xbf16>, vector<128x64xbf16>, vector<64x64xf32> -> vector<64x64xf32>
      %86 = arith.addf %84, %85 : vector<64x64xf32>
      %cst_34 = arith.constant 5.000000e-01 : f32
      %87 = vector.broadcast %cst_34 : f32 to vector<64x64xf32>
      %88 = arith.mulf %87, %86 : vector<64x64xf32>
      %cst_35 = arith.constant 4.471500e-02 : f32
      %89 = vector.broadcast %cst_35 : f32 to vector<64x64xf32>
      %90 = arith.mulf %89, %86 : vector<64x64xf32>
      %91 = arith.mulf %90, %86 : vector<64x64xf32>
      %92 = arith.mulf %91, %86 : vector<64x64xf32>
      %93 = arith.addf %86, %92 : vector<64x64xf32>
      %cst_36 = arith.constant 0.797884583 : f32
      %94 = vector.broadcast %cst_36 : f32 to vector<64x64xf32>
      %95 = arith.mulf %94, %93 : vector<64x64xf32>
      %96 = math.tanh %95 : vector<64x64xf32>
      %cst_37 = arith.constant 1.000000e+00 : f32
      %97 = vector.broadcast %cst_37 : f32 to vector<64x64xf32>
      %98 = arith.addf %97, %96 : vector<64x64xf32>
      %99 = arith.mulf %88, %98 : vector<64x64xf32>
      %cst_38 = arith.constant dense<0.000000e+00> : vector<64x64xf32>
      %100 = tpu.matmul %69, %74, %cst_38 {dimension_numbers = #tpu.dot_dimension_numbers<[1], [0], [0], [1], [0, 0, 1, 1], [], []>} : vector<64x128xbf16>, vector<128x64xbf16>, vector<64x64xf32> -> vector<64x64xf32>
      %101 = vector.broadcast %79 : vector<1x64xf32> to vector<64x64xf32>
      %102 = arith.addf %101, %100 : vector<64x64xf32>
      %cst_39 = arith.constant dense<0.000000e+00> : vector<64x64xf32>
      %103 = tpu.matmul %70, %76, %cst_39 {dimension_numbers = #tpu.dot_dimension_numbers<[1], [0], [0], [1], [0, 0, 1, 1], [], []>} : vector<64x128xbf16>, vector<128x64xbf16>, vector<64x64xf32> -> vector<64x64xf32>
      %104 = arith.addf %102, %103 : vector<64x64xf32>
      %cst_40 = arith.constant dense<0.000000e+00> : vector<64x64xf32>
      %105 = tpu.matmul %72, %78, %cst_40 {dimension_numbers = #tpu.dot_dimension_numbers<[1], [0], [0], [1], [0, 0, 1, 1], [], []>} : vector<64x128xbf16>, vector<128x64xbf16>, vector<64x64xf32> -> vector<64x64xf32>
      %106 = arith.addf %104, %105 : vector<64x64xf32>
      %cst_41 = arith.constant 5.000000e-01 : f32
      %107 = vector.broadcast %cst_41 : f32 to vector<64x64xf32>
      %108 = arith.mulf %107, %106 : vector<64x64xf32>
      %cst_42 = arith.constant 4.471500e-02 : f32
      %109 = vector.broadcast %cst_42 : f32 to vector<64x64xf32>
      %110 = arith.mulf %109, %106 : vector<64x64xf32>
      %111 = arith.mulf %110, %106 : vector<64x64xf32>
      %112 = arith.mulf %111, %106 : vector<64x64xf32>
      %113 = arith.addf %106, %112 : vector<64x64xf32>
      %cst_43 = arith.constant 0.797884583 : f32
      %114 = vector.broadcast %cst_43 : f32 to vector<64x64xf32>
      %115 = arith.mulf %114, %113 : vector<64x64xf32>
      %116 = math.tanh %115 : vector<64x64xf32>
      %cst_44 = arith.constant 1.000000e+00 : f32
      %117 = vector.broadcast %cst_44 : f32 to vector<64x64xf32>
      %118 = arith.addf %117, %116 : vector<64x64xf32>
      %119 = arith.mulf %108, %118 : vector<64x64xf32>
      %c1_i32_45 = arith.constant 1 : i32
      %120 = tpu.dynamic_rotate %119 by %c1_i32_45 dim 0 : vector<64x64xf32>, i32 -> vector<64x64xf32>
      %121 = tpu.iota {dimensions = array<i32: 0>} : vector<64x64xi32>
      %c32_i32_46 = arith.constant 32 : i32
      %c0_i32_47 = arith.constant 0 : i32
      %122 = arith.cmpi eq, %c32_i32_46, %c0_i32_47 : i32
      %c1_i32_48 = arith.constant 1 : i32
      %123 = arith.select %122, %c1_i32_48, %c32_i32_46 : i32
      %124 = vector.broadcast %123 : i32 to vector<64x64xi32>
      %125 = arith.remsi %121, %124 : vector<64x64xi32>
      %c0_i32_49 = arith.constant 0 : i32
      %126 = vector.broadcast %c0_i32_49 : i32 to vector<64x64xi32>
      %127 = arith.cmpi ne, %125, %126 : vector<64x64xi32>
      %c0_i32_50 = arith.constant 0 : i32
      %128 = vector.broadcast %c0_i32_50 : i32 to vector<64x64xi32>
      %129 = arith.cmpi slt, %125, %128 : vector<64x64xi32>
      %c0_i32_51 = arith.constant 0 : i32
      %130 = arith.cmpi slt, %123, %c0_i32_51 : i32
      %131 = vector.broadcast %130 : i1 to vector<64x64xi1>
      %132 = vector.broadcast %131 : vector<64x64xi1> to vector<64x64xi1>
      %133 = arith.xori %129, %132 : vector<64x64xi1>
      %134 = arith.andi %133, %127 : vector<64x64xi1>
      %135 = vector.broadcast %123 : i32 to vector<64x64xi32>
      %136 = arith.addi %125, %135 : vector<64x64xi32>
      %137 = arith.select %134, %136, %125 : vector<64x64xi1>, vector<64x64xi32>
      %c0_i32_52 = arith.constant 0 : i32
      %138 = vector.broadcast %c0_i32_52 : i32 to vector<64x64xi32>
      %139 = arith.cmpi eq, %137, %138 : vector<64x64xi32>
      %cst_53 = arith.constant 0.000000e+00 : f32
      %140 = vector.broadcast %cst_53 : f32 to vector<64x64xf32>
      %141 = arith.select %139, %140, %120 : vector<64x64xi1>, vector<64x64xf32>
      %142 = arith.truncf %99 : vector<64x64xf32> to vector<64x64xbf16>
      %143 = arith.truncf %119 : vector<64x64xf32> to vector<64x64xbf16>
      %144 = arith.truncf %141 : vector<64x64xf32> to vector<64x64xbf16>
      %c0_54 = arith.constant 0 : index
      %c0_55 = arith.constant 0 : index
      %145 = vector.load %arg5[%c0_54, %c0_55] : memref<1x64xf32, #tpu.memory_space<vmem>>, vector<1x64xf32>
      %c0_56 = arith.constant 0 : index
      %c0_57 = arith.constant 0 : index
      %c0_58 = arith.constant 0 : index
      %146 = vector.load %arg4[%c0_56, %c0_57, %c0_58] : memref<3x64x64xbf16, #tpu.memory_space<vmem>>, vector<1x64x64xbf16>
      %147 = vector.shape_cast %146 : vector<1x64x64xbf16> to vector<64x64xbf16>
      %cst_59 = arith.constant dense<0.000000e+00> : vector<64x64xf32>
      %148 = tpu.matmul %144, %147, %cst_59 {dimension_numbers = #tpu.dot_dimension_numbers<[1], [0], [0], [1], [0, 0, 1, 1], [], []>} : vector<64x64xbf16>, vector<64x64xbf16>, vector<64x64xf32> -> vector<64x64xf32>
      %149 = vector.broadcast %145 : vector<1x64xf32> to vector<64x64xf32>
      %150 = arith.addf %149, %148 : vector<64x64xf32>
      %c1_60 = arith.constant 1 : index
      %c0_61 = arith.constant 0 : index
      %c0_62 = arith.constant 0 : index
      %151 = vector.load %arg4[%c1_60, %c0_61, %c0_62] : memref<3x64x64xbf16, #tpu.memory_space<vmem>>, vector<1x64x64xbf16>
      %152 = vector.shape_cast %151 : vector<1x64x64xbf16> to vector<64x64xbf16>
      %cst_63 = arith.constant dense<0.000000e+00> : vector<64x64xf32>
      %153 = tpu.matmul %142, %152, %cst_63 {dimension_numbers = #tpu.dot_dimension_numbers<[1], [0], [0], [1], [0, 0, 1, 1], [], []>} : vector<64x64xbf16>, vector<64x64xbf16>, vector<64x64xf32> -> vector<64x64xf32>
      %154 = arith.addf %150, %153 : vector<64x64xf32>
      %c2_64 = arith.constant 2 : index
      %c0_65 = arith.constant 0 : index
      %c0_66 = arith.constant 0 : index
      %155 = vector.load %arg4[%c2_64, %c0_65, %c0_66] : memref<3x64x64xbf16, #tpu.memory_space<vmem>>, vector<1x64x64xbf16>
      %156 = vector.shape_cast %155 : vector<1x64x64xbf16> to vector<64x64xbf16>
      %cst_67 = arith.constant dense<0.000000e+00> : vector<64x64xf32>
      %157 = tpu.matmul %143, %156, %cst_67 {dimension_numbers = #tpu.dot_dimension_numbers<[1], [0], [0], [1], [0, 0, 1, 1], [], []>} : vector<64x64xbf16>, vector<64x64xbf16>, vector<64x64xf32> -> vector<64x64xf32>
      %158 = arith.addf %154, %157 : vector<64x64xf32>
      %cst_68 = arith.constant 5.000000e-01 : f32
      %159 = vector.broadcast %cst_68 : f32 to vector<64x64xf32>
      %160 = arith.mulf %159, %158 : vector<64x64xf32>
      %cst_69 = arith.constant 4.471500e-02 : f32
      %161 = vector.broadcast %cst_69 : f32 to vector<64x64xf32>
      %162 = arith.mulf %161, %158 : vector<64x64xf32>
      %163 = arith.mulf %162, %158 : vector<64x64xf32>
      %164 = arith.mulf %163, %158 : vector<64x64xf32>
      %165 = arith.addf %158, %164 : vector<64x64xf32>
      %cst_70 = arith.constant 0.797884583 : f32
      %166 = vector.broadcast %cst_70 : f32 to vector<64x64xf32>
      %167 = arith.mulf %166, %165 : vector<64x64xf32>
      %168 = math.tanh %167 : vector<64x64xf32>
      %cst_71 = arith.constant 1.000000e+00 : f32
      %169 = vector.broadcast %cst_71 : f32 to vector<64x64xf32>
      %170 = arith.addf %169, %168 : vector<64x64xf32>
      %171 = arith.mulf %160, %170 : vector<64x64xf32>
      %c0_72 = arith.constant 0 : index
      %c0_73 = arith.constant 0 : index
      %172 = vector.load %arg6[%c0_72, %c0_73] : memref<64x64xf32, #tpu.memory_space<vmem>>, vector<64x64xf32>
      %173 = arith.addf %171, %172 : vector<64x64xf32>
      %c0_74 = arith.constant 0 : index
      %c0_75 = arith.constant 0 : index
      %174 = vector.load %arg17[%c0_74, %c0_75] : memref<64x64xf32, #tpu.memory_space<vmem>>, vector<64x64xf32>
      tpu.vector_store %arg17[%c0_74, %c0_75], %173 {strides = array<i32>} : memref<64x64xf32, #tpu.memory_space<vmem>>, vector<64x64xf32>,
    } else {
    }
    %c1_i32 = arith.constant 1 : i32
    %3 = arith.cmpi sge, %arg0, %c1_i32 : i32
    %c2_i32 = arith.constant 2 : i32
    %4 = arith.cmpi sle, %arg0, %c2_i32 : i32
    %5 = arith.andi %3, %4 : i1
    %6 = arith.extui %5 : i1 to i32
    %c0_i32_1 = arith.constant 0 : i32
    %7 = arith.cmpi ne, %6, %c0_i32_1 : i32
    scf.if %7 {
      %c0 = arith.constant 0 : index
      %c0_3 = arith.constant 0 : index
      %11 = vector.load %arg17[%c0, %c0_3] : memref<64x64xf32, #tpu.memory_space<vmem>>, vector<64x64xf32>
      %c0_4 = arith.constant 0 : index
      %c0_5 = arith.constant 0 : index
      %c0_6 = arith.constant 0 : index
      %12 = vector.load %arg7[%c0_4, %c0_5, %c0_6] : memref<1x4x64xf32, #tpu.memory_space<vmem>>, vector<1x4x64xf32>
      %13 = vector.shape_cast %12 : vector<1x4x64xf32> to vector<4x64xf32>
      %14 = vector.extract_strided_slice %13 {offsets = [0, 0], sizes = [1, 64], strides = [1, 1]} : vector<4x64xf32> to vector<1x64xf32>
      %15 = vector.extract_strided_slice %13 {offsets = [1, 0], sizes = [1, 64], strides = [1, 1]} : vector<4x64xf32> to vector<1x64xf32>
      %cst = arith.constant dense<0.000000e+00> : vector<64xf32>
      %16 = vector.multi_reduction <add>, %11, %cst [1] : vector<64x64xf32> to vector<64xf32>
      %17 = vector.shape_cast %16 : vector<64xf32> to vector<64x1xf32>
      %cst_7 = arith.constant 6.400000e+01 : f32
      %18 = vector.broadcast %cst_7 : f32 to vector<64x1xf32>
      %19 = arith.divf %17, %18 : vector<64x1xf32>
      %20 = vector.broadcast %19 : vector<64x1xf32> to vector<64x64xf32>
      %21 = arith.subf %11, %20 : vector<64x64xf32>
      %22 = arith.mulf %21, %21 : vector<64x64xf32>
      %cst_8 = arith.constant dense<0.000000e+00> : vector<64xf32>
      %23 = vector.multi_reduction <add>, %22, %cst_8 [1] : vector<64x64xf32> to vector<64xf32>
      %24 = vector.shape_cast %23 : vector<64xf32> to vector<64x1xf32>
      %cst_9 = arith.constant 6.400000e+01 : f32
      %25 = vector.broadcast %cst_9 : f32 to vector<64x1xf32>
      %26 = arith.divf %24, %25 : vector<64x1xf32>
      %cst_10 = arith.constant 9.99999974E-6 : f32
      %27 = vector.broadcast %cst_10 : f32 to vector<64x1xf32>
      %28 = arith.addf %26, %27 : vector<64x1xf32>
      %29 = math.rsqrt %28 : vector<64x1xf32>
      %30 = vector.broadcast %29 : vector<64x1xf32> to vector<64x64xf32>
      %31 = arith.mulf %21, %30 : vector<64x64xf32>
      %32 = vector.broadcast %14 : vector<1x64xf32> to vector<64x64xf32>
      %33 = arith.mulf %31, %32 : vector<64x64xf32>
      %34 = vector.broadcast %15 : vector<1x64xf32> to vector<64x64xf32>
      %35 = arith.addf %33, %34 : vector<64x64xf32>
      %36 = arith.truncf %35 : vector<64x64xf32> to vector<64x64xbf16>
      %c0_11 = arith.constant 0 : index
      %c0_12 = arith.constant 0 : index
      %c0_13 = arith.constant 0 : index
      %37 = vector.load %arg8[%c0_11, %c0_12, %c0_13] : memref<1x64x192xbf16, #tpu.memory_space<vmem>>, vector<1x64x192xbf16>
      %38 = vector.shape_cast %37 : vector<1x64x192xbf16> to vector<64x192xbf16>
      %cst_14 = arith.constant dense<0.000000e+00> : vector<64x192xf32>
      %39 = tpu.matmul %36, %38, %cst_14 {dimension_numbers = #tpu.dot_dimension_numbers<[1], [0], [0], [1], [0, 0, 1, 1], [], []>} : vector<64x64xbf16>, vector<64x192xbf16>, vector<64x192xf32> -> vector<64x192xf32>
      %c0_15 = arith.constant 0 : index
      %c0_16 = arith.constant 0 : index
      %c0_17 = arith.constant 0 : index
      %40 = vector.load %arg9[%c0_15, %c0_16, %c0_17] : memref<1x1x192xf32, #tpu.memory_space<vmem>>, vector<1x1x192xf32>
      %41 = vector.shape_cast %40 : vector<1x1x192xf32> to vector<1x192xf32>
      %42 = vector.broadcast %41 : vector<1x192xf32> to vector<64x192xf32>
      %43 = arith.addf %39, %42 : vector<64x192xf32>
      %44 = vector.shape_cast %43 : vector<64x192xf32> to vector<2x32x192xf32>
      %45 = vector.extract_strided_slice %44 {offsets = [0, 0, 0], sizes = [2, 32, 64], strides = [1, 1, 1]} : vector<2x32x192xf32> to vector<2x32x64xf32>
      %46 = arith.truncf %45 : vector<2x32x64xf32> to vector<2x32x64xbf16>
      %47 = vector.extract_strided_slice %44 {offsets = [0, 0, 64], sizes = [2, 32, 64], strides = [1, 1, 1]} : vector<2x32x192xf32> to vector<2x32x64xf32>
      %48 = arith.truncf %47 : vector<2x32x64xf32> to vector<2x32x64xbf16>
      %49 = vector.extract_strided_slice %44 {offsets = [0, 0, 128], sizes = [2, 32, 64], strides = [1, 1, 1]} : vector<2x32x192xf32> to vector<2x32x64xf32>
      %50 = arith.truncf %49 : vector<2x32x64xf32> to vector<2x32x64xbf16>
      %51 = vector.extract_strided_slice %46 {offsets = [0, 0, 0], sizes = [2, 32, 16], strides = [1, 1, 1]} : vector<2x32x64xbf16> to vector<2x32x16xbf16>
      %52 = vector.extract_strided_slice %48 {offsets = [0, 0, 0], sizes = [2, 32, 16], strides = [1, 1, 1]} : vector<2x32x64xbf16> to vector<2x32x16xbf16>
      "tpu.trace_start"() <{level = 10 : i32, message = "bqd,bkd->bqk"}> : () -> ()
      %cst_18 = arith.constant dense<0.000000e+00> : vector<2x32x32xf32>
      %53 = tpu.matmul %51, %52, %cst_18 {dimension_numbers = #tpu.dot_dimension_numbers<[2], [2], [1], [1], [0, 0, 0, 1, 1, 1], [0], [0]>} : vector<2x32x16xbf16>, vector<2x32x16xbf16>, vector<2x32x32xf32> -> vector<2x32x32xf32>
      "tpu.trace_stop"() : () -> ()
      %cst_19 = arith.constant dense<0xFF800000> : vector<2x32xf32>
      %54 = vector.multi_reduction <maximumf>, %53, %cst_19 [2] : vector<2x32x32xf32> to vector<2x32xf32>
      %55 = vector.shape_cast %54 : vector<2x32xf32> to vector<2x32x1xf32>
      %56 = vector.broadcast %55 : vector<2x32x1xf32> to vector<2x32x32xf32>
      %57 = arith.subf %53, %56 : vector<2x32x32xf32>
      %58 = math.exp %57 : vector<2x32x32xf32>
      %cst_20 = arith.constant dense<0.000000e+00> : vector<2x32xf32>
      %59 = vector.multi_reduction <add>, %58, %cst_20 [2] : vector<2x32x32xf32> to vector<2x32xf32>
      %60 = vector.shape_cast %59 : vector<2x32xf32> to vector<2x32x1xf32>
      %61 = tpu.reciprocal %60 {approx = true} : vector<2x32x1xf32> -> vector<2x32x1xf32>
      %62 = vector.broadcast %61 : vector<2x32x1xf32> to vector<2x32x32xf32>
      %63 = arith.mulf %58, %62 : vector<2x32x32xf32>
      %64 = arith.truncf %63 : vector<2x32x32xf32> to vector<2x32x32xbf16>
      %65 = vector.extract_strided_slice %50 {offsets = [0, 0, 0], sizes = [2, 32, 16], strides = [1, 1, 1]} : vector<2x32x64xbf16> to vector<2x32x16xbf16>
      "tpu.trace_start"() <{level = 10 : i32, message = "bqk,bkd->bqd"}> : () -> ()
      %cst_21 = arith.constant dense<0.000000e+00> : vector<2x32x16xf32>
      %66 = tpu.matmul %64, %65, %cst_21 {dimension_numbers = #tpu.dot_dimension_numbers<[2], [1], [1], [2], [0, 0, 0, 1, 1, 2], [0], [0]>} : vector<2x32x32xbf16>, vector<2x32x16xbf16>, vector<2x32x16xf32> -> vector<2x32x16xf32>
      "tpu.trace_stop"() : () -> ()
      %67 = vector.extract_strided_slice %46 {offsets = [0, 0, 16], sizes = [2, 32, 16], strides = [1, 1, 1]} : vector<2x32x64xbf16> to vector<2x32x16xbf16>
      %68 = vector.extract_strided_slice %48 {offsets = [0, 0, 16], sizes = [2, 32, 16], strides = [1, 1, 1]} : vector<2x32x64xbf16> to vector<2x32x16xbf16>
      "tpu.trace_start"() <{level = 10 : i32, message = "bqd,bkd->bqk"}> : () -> ()
      %cst_22 = arith.constant dense<0.000000e+00> : vector<2x32x32xf32>
      %69 = tpu.matmul %67, %68, %cst_22 {dimension_numbers = #tpu.dot_dimension_numbers<[2], [2], [1], [1], [0, 0, 0, 1, 1, 1], [0], [0]>} : vector<2x32x16xbf16>, vector<2x32x16xbf16>, vector<2x32x32xf32> -> vector<2x32x32xf32>
      "tpu.trace_stop"() : () -> ()
      %cst_23 = arith.constant dense<0xFF800000> : vector<2x32xf32>
      %70 = vector.multi_reduction <maximumf>, %69, %cst_23 [2] : vector<2x32x32xf32> to vector<2x32xf32>
      %71 = vector.shape_cast %70 : vector<2x32xf32> to vector<2x32x1xf32>
      %72 = vector.broadcast %71 : vector<2x32x1xf32> to vector<2x32x32xf32>
      %73 = arith.subf %69, %72 : vector<2x32x32xf32>
      %74 = math.exp %73 : vector<2x32x32xf32>
      %cst_24 = arith.constant dense<0.000000e+00> : vector<2x32xf32>
      %75 = vector.multi_reduction <add>, %74, %cst_24 [2] : vector<2x32x32xf32> to vector<2x32xf32>
      %76 = vector.shape_cast %75 : vector<2x32xf32> to vector<2x32x1xf32>
      %77 = tpu.reciprocal %76 {approx = true} : vector<2x32x1xf32> -> vector<2x32x1xf32>
      %78 = vector.broadcast %77 : vector<2x32x1xf32> to vector<2x32x32xf32>
      %79 = arith.mulf %74, %78 : vector<2x32x32xf32>
      %80 = arith.truncf %79 : vector<2x32x32xf32> to vector<2x32x32xbf16>
      %81 = vector.extract_strided_slice %50 {offsets = [0, 0, 16], sizes = [2, 32, 16], strides = [1, 1, 1]} : vector<2x32x64xbf16> to vector<2x32x16xbf16>
      "tpu.trace_start"() <{level = 10 : i32, message = "bqk,bkd->bqd"}> : () -> ()
      %cst_25 = arith.constant dense<0.000000e+00> : vector<2x32x16xf32>
      %82 = tpu.matmul %80, %81, %cst_25 {dimension_numbers = #tpu.dot_dimension_numbers<[2], [1], [1], [2], [0, 0, 0, 1, 1, 2], [0], [0]>} : vector<2x32x32xbf16>, vector<2x32x16xbf16>, vector<2x32x16xf32> -> vector<2x32x16xf32>
      "tpu.trace_stop"() : () -> ()
      %83 = vector.extract_strided_slice %46 {offsets = [0, 0, 32], sizes = [2, 32, 16], strides = [1, 1, 1]} : vector<2x32x64xbf16> to vector<2x32x16xbf16>
      %84 = vector.extract_strided_slice %48 {offsets = [0, 0, 32], sizes = [2, 32, 16], strides = [1, 1, 1]} : vector<2x32x64xbf16> to vector<2x32x16xbf16>
      "tpu.trace_start"() <{level = 10 : i32, message = "bqd,bkd->bqk"}> : () -> ()
      %cst_26 = arith.constant dense<0.000000e+00> : vector<2x32x32xf32>
      %85 = tpu.matmul %83, %84, %cst_26 {dimension_numbers = #tpu.dot_dimension_numbers<[2], [2], [1], [1], [0, 0, 0, 1, 1, 1], [0], [0]>} : vector<2x32x16xbf16>, vector<2x32x16xbf16>, vector<2x32x32xf32> -> vector<2x32x32xf32>
      "tpu.trace_stop"() : () -> ()
      %cst_27 = arith.constant dense<0xFF800000> : vector<2x32xf32>
      %86 = vector.multi_reduction <maximumf>, %85, %cst_27 [2] : vector<2x32x32xf32> to vector<2x32xf32>
      %87 = vector.shape_cast %86 : vector<2x32xf32> to vector<2x32x1xf32>
      %88 = vector.broadcast %87 : vector<2x32x1xf32> to vector<2x32x32xf32>
      %89 = arith.subf %85, %88 : vector<2x32x32xf32>
      %90 = math.exp %89 : vector<2x32x32xf32>
      %cst_28 = arith.constant dense<0.000000e+00> : vector<2x32xf32>
      %91 = vector.multi_reduction <add>, %90, %cst_28 [2] : vector<2x32x32xf32> to vector<2x32xf32>
      %92 = vector.shape_cast %91 : vector<2x32xf32> to vector<2x32x1xf32>
      %93 = tpu.reciprocal %92 {approx = true} : vector<2x32x1xf32> -> vector<2x32x1xf32>
      %94 = vector.broadcast %93 : vector<2x32x1xf32> to vector<2x32x32xf32>
      %95 = arith.mulf %90, %94 : vector<2x32x32xf32>
      %96 = arith.truncf %95 : vector<2x32x32xf32> to vector<2x32x32xbf16>
      %97 = vector.extract_strided_slice %50 {offsets = [0, 0, 32], sizes = [2, 32, 16], strides = [1, 1, 1]} : vector<2x32x64xbf16> to vector<2x32x16xbf16>
      "tpu.trace_start"() <{level = 10 : i32, message = "bqk,bkd->bqd"}> : () -> ()
      %cst_29 = arith.constant dense<0.000000e+00> : vector<2x32x16xf32>
      %98 = tpu.matmul %96, %97, %cst_29 {dimension_numbers = #tpu.dot_dimension_numbers<[2], [1], [1], [2], [0, 0, 0, 1, 1, 2], [0], [0]>} : vector<2x32x32xbf16>, vector<2x32x16xbf16>, vector<2x32x16xf32> -> vector<2x32x16xf32>
      "tpu.trace_stop"() : () -> ()
      %99 = vector.extract_strided_slice %46 {offsets = [0, 0, 48], sizes = [2, 32, 16], strides = [1, 1, 1]} : vector<2x32x64xbf16> to vector<2x32x16xbf16>
      %100 = vector.extract_strided_slice %48 {offsets = [0, 0, 48], sizes = [2, 32, 16], strides = [1, 1, 1]} : vector<2x32x64xbf16> to vector<2x32x16xbf16>
      "tpu.trace_start"() <{level = 10 : i32, message = "bqd,bkd->bqk"}> : () -> ()
      %cst_30 = arith.constant dense<0.000000e+00> : vector<2x32x32xf32>
      %101 = tpu.matmul %99, %100, %cst_30 {dimension_numbers = #tpu.dot_dimension_numbers<[2], [2], [1], [1], [0, 0, 0, 1, 1, 1], [0], [0]>} : vector<2x32x16xbf16>, vector<2x32x16xbf16>, vector<2x32x32xf32> -> vector<2x32x32xf32>
      "tpu.trace_stop"() : () -> ()
      %cst_31 = arith.constant dense<0xFF800000> : vector<2x32xf32>
      %102 = vector.multi_reduction <maximumf>, %101, %cst_31 [2] : vector<2x32x32xf32> to vector<2x32xf32>
      %103 = vector.shape_cast %102 : vector<2x32xf32> to vector<2x32x1xf32>
      %104 = vector.broadcast %103 : vector<2x32x1xf32> to vector<2x32x32xf32>
      %105 = arith.subf %101, %104 : vector<2x32x32xf32>
      %106 = math.exp %105 : vector<2x32x32xf32>
      %cst_32 = arith.constant dense<0.000000e+00> : vector<2x32xf32>
      %107 = vector.multi_reduction <add>, %106, %cst_32 [2] : vector<2x32x32xf32> to vector<2x32xf32>
      %108 = vector.shape_cast %107 : vector<2x32xf32> to vector<2x32x1xf32>
      %109 = tpu.reciprocal %108 {approx = true} : vector<2x32x1xf32> -> vector<2x32x1xf32>
      %110 = vector.broadcast %109 : vector<2x32x1xf32> to vector<2x32x32xf32>
      %111 = arith.mulf %106, %110 : vector<2x32x32xf32>
      %112 = arith.truncf %111 : vector<2x32x32xf32> to vector<2x32x32xbf16>
      %113 = vector.extract_strided_slice %50 {offsets = [0, 0, 48], sizes = [2, 32, 16], strides = [1, 1, 1]} : vector<2x32x64xbf16> to vector<2x32x16xbf16>
      "tpu.trace_start"() <{level = 10 : i32, message = "bqk,bkd->bqd"}> : () -> ()
      %cst_33 = arith.constant dense<0.000000e+00> : vector<2x32x16xf32>
      %114 = tpu.matmul %112, %113, %cst_33 {dimension_numbers = #tpu.dot_dimension_numbers<[2], [1], [1], [2], [0, 0, 0, 1, 1, 2], [0], [0]>} : vector<2x32x32xbf16>, vector<2x32x16xbf16>, vector<2x32x16xf32> -> vector<2x32x16xf32>
      "tpu.trace_stop"() : () -> ()
      %115 = tpu.concatenate %66, %82, %98, %114 in 2 : vector<2x32x16xf32>, vector<2x32x16xf32>, vector<2x32x16xf32>, vector<2x32x16xf32> -> vector<2x32x64xf32>
      %116 = vector.shape_cast %115 : vector<2x32x64xf32> to vector<64x64xf32>
      %c0_34 = arith.constant 0 : index
      %c0_35 = arith.constant 0 : index
      %c0_36 = arith.constant 0 : index
      %117 = vector.load %arg11[%c0_34, %c0_35, %c0_36] : memref<1x1x64xf32, #tpu.memory_space<vmem>>, vector<1x1x64xf32>
      %118 = vector.shape_cast %117 : vector<1x1x64xf32> to vector<1x64xf32>
      %119 = vector.broadcast %118 : vector<1x64xf32> to vector<64x64xf32>
      %120 = arith.addf %11, %119 : vector<64x64xf32>
      %121 = arith.truncf %116 : vector<64x64xf32> to vector<64x64xbf16>
      %c0_37 = arith.constant 0 : index
      %c0_38 = arith.constant 0 : index
      %c0_39 = arith.constant 0 : index
      %122 = vector.load %arg10[%c0_37, %c0_38, %c0_39] : memref<1x64x64xbf16, #tpu.memory_space<vmem>>, vector<1x64x64xbf16>
      %123 = vector.shape_cast %122 : vector<1x64x64xbf16> to vector<64x64xbf16>
      %cst_40 = arith.constant dense<0.000000e+00> : vector<64x64xf32>
      %124 = tpu.matmul %121, %123, %cst_40 {dimension_numbers = #tpu.dot_dimension_numbers<[1], [0], [0], [1], [0, 0, 1, 1], [], []>} : vector<64x64xbf16>, vector<64x64xbf16>, vector<64x64xf32> -> vector<64x64xf32>
      %125 = arith.addf %120, %124 : vector<64x64xf32>
      %126 = vector.extract_strided_slice %13 {offsets = [2, 0], sizes = [1, 64], strides = [1, 1]} : vector<4x64xf32> to vector<1x64xf32>
      %127 = vector.extract_strided_slice %13 {offsets = [3, 0], sizes = [1, 64], strides = [1, 1]} : vector<4x64xf32> to vector<1x64xf32>
      %cst_41 = arith.constant dense<0.000000e+00> : vector<64xf32>
      %128 = vector.multi_reduction <add>, %125, %cst_41 [1] : vector<64x64xf32> to vector<64xf32>
      %129 = vector.shape_cast %128 : vector<64xf32> to vector<64x1xf32>
      %cst_42 = arith.constant 6.400000e+01 : f32
      %130 = vector.broadcast %cst_42 : f32 to vector<64x1xf32>
      %131 = arith.divf %129, %130 : vector<64x1xf32>
      %132 = vector.broadcast %131 : vector<64x1xf32> to vector<64x64xf32>
      %133 = arith.subf %125, %132 : vector<64x64xf32>
      %134 = arith.mulf %133, %133 : vector<64x64xf32>
      %cst_43 = arith.constant dense<0.000000e+00> : vector<64xf32>
      %135 = vector.multi_reduction <add>, %134, %cst_43 [1] : vector<64x64xf32> to vector<64xf32>
      %136 = vector.shape_cast %135 : vector<64xf32> to vector<64x1xf32>
      %cst_44 = arith.constant 6.400000e+01 : f32
      %137 = vector.broadcast %cst_44 : f32 to vector<64x1xf32>
      %138 = arith.divf %136, %137 : vector<64x1xf32>
      %cst_45 = arith.constant 9.99999974E-6 : f32
      %139 = vector.broadcast %cst_45 : f32 to vector<64x1xf32>
      %140 = arith.addf %138, %139 : vector<64x1xf32>
      %141 = math.rsqrt %140 : vector<64x1xf32>
      %142 = vector.broadcast %141 : vector<64x1xf32> to vector<64x64xf32>
      %143 = arith.mulf %133, %142 : vector<64x64xf32>
      %144 = vector.broadcast %126 : vector<1x64xf32> to vector<64x64xf32>
      %145 = arith.mulf %143, %144 : vector<64x64xf32>
      %146 = vector.broadcast %127 : vector<1x64xf32> to vector<64x64xf32>
      %147 = arith.addf %145, %146 : vector<64x64xf32>
      %148 = arith.truncf %147 : vector<64x64xf32> to vector<64x64xbf16>
      %c0_46 = arith.constant 0 : index
      %c0_47 = arith.constant 0 : index
      %c0_48 = arith.constant 0 : index
      %149 = vector.load %arg12[%c0_46, %c0_47, %c0_48] : memref<1x64x128xbf16, #tpu.memory_space<vmem>>, vector<1x64x128xbf16>
      %150 = vector.shape_cast %149 : vector<1x64x128xbf16> to vector<64x128xbf16>
      %cst_49 = arith.constant dense<0.000000e+00> : vector<64x128xf32>
      %151 = tpu.matmul %148, %150, %cst_49 {dimension_numbers = #tpu.dot_dimension_numbers<[1], [0], [0], [1], [0, 0, 1, 1], [], []>} : vector<64x64xbf16>, vector<64x128xbf16>, vector<64x128xf32> -> vector<64x128xf32>
      %c0_50 = arith.constant 0 : index
      %c0_51 = arith.constant 0 : index
      %c0_52 = arith.constant 0 : index
      %152 = vector.load %arg13[%c0_50, %c0_51, %c0_52] : memref<1x1x128xf32, #tpu.memory_space<vmem>>, vector<1x1x128xf32>
      %153 = vector.shape_cast %152 : vector<1x1x128xf32> to vector<1x128xf32>
      %154 = vector.broadcast %153 : vector<1x128xf32> to vector<64x128xf32>
      %155 = arith.addf %151, %154 : vector<64x128xf32>
      %cst_53 = arith.constant 5.000000e-01 : f32
      %156 = vector.broadcast %cst_53 : f32 to vector<64x128xf32>
      %157 = arith.mulf %156, %155 : vector<64x128xf32>
      %cst_54 = arith.constant 4.471500e-02 : f32
      %158 = vector.broadcast %cst_54 : f32 to vector<64x128xf32>
      %159 = arith.mulf %158, %155 : vector<64x128xf32>
      %160 = arith.mulf %159, %155 : vector<64x128xf32>
      %161 = arith.mulf %160, %155 : vector<64x128xf32>
      %162 = arith.addf %155, %161 : vector<64x128xf32>
      %cst_55 = arith.constant 0.797884583 : f32
      %163 = vector.broadcast %cst_55 : f32 to vector<64x128xf32>
      %164 = arith.mulf %163, %162 : vector<64x128xf32>
      %165 = math.tanh %164 : vector<64x128xf32>
      %cst_56 = arith.constant 1.000000e+00 : f32
      %166 = vector.broadcast %cst_56 : f32 to vector<64x128xf32>
      %167 = arith.addf %166, %165 : vector<64x128xf32>
      %168 = arith.mulf %157, %167 : vector<64x128xf32>
      %169 = arith.truncf %168 : vector<64x128xf32> to vector<64x128xbf16>
      %c0_57 = arith.constant 0 : index
      %c0_58 = arith.constant 0 : index
      %c0_59 = arith.constant 0 : index
      %170 = vector.load %arg14[%c0_57, %c0_58, %c0_59] : memref<1x128x64xbf16, #tpu.memory_space<vmem>>, vector<1x128x64xbf16>
      %171 = vector.shape_cast %170 : vector<1x128x64xbf16> to vector<128x64xbf16>
      %cst_60 = arith.constant dense<0.000000e+00> : vector<64x64xf32>
      %172 = tpu.matmul %169, %171, %cst_60 {dimension_numbers = #tpu.dot_dimension_numbers<[1], [0], [0], [1], [0, 0, 1, 1], [], []>} : vector<64x128xbf16>, vector<128x64xbf16>, vector<64x64xf32> -> vector<64x64xf32>
      %c0_61 = arith.constant 0 : index
      %c0_62 = arith.constant 0 : index
      %c0_63 = arith.constant 0 : index
      %173 = vector.load %arg15[%c0_61, %c0_62, %c0_63] : memref<1x1x64xf32, #tpu.memory_space<vmem>>, vector<1x1x64xf32>
      %174 = vector.shape_cast %173 : vector<1x1x64xf32> to vector<1x64xf32>
      %175 = vector.broadcast %174 : vector<1x64xf32> to vector<64x64xf32>
      %176 = arith.addf %172, %175 : vector<64x64xf32>
      %177 = arith.addf %125, %176 : vector<64x64xf32>
      %c0_64 = arith.constant 0 : index
      %c0_65 = arith.constant 0 : index
      %178 = vector.load %arg17[%c0_64, %c0_65] : memref<64x64xf32, #tpu.memory_space<vmem>>, vector<64x64xf32>
      tpu.vector_store %arg17[%c0_64, %c0_65], %177 {strides = array<i32>} : memref<64x64xf32, #tpu.memory_space<vmem>>, vector<64x64xf32>,
    } else {
    }
    %c3_i32 = arith.constant 3 : i32
    %8 = arith.cmpi eq, %arg0, %c3_i32 : i32
    %9 = arith.extui %8 : i1 to i32
    %c0_i32_2 = arith.constant 0 : i32
    %10 = arith.cmpi ne, %9, %c0_i32_2 : i32
    scf.if %10 {
      %c0 = arith.constant 0 : index
      %c0_3 = arith.constant 0 : index
      %11 = vector.load %arg17[%c0, %c0_3] : memref<64x64xf32, #tpu.memory_space<vmem>>, vector<64x64xf32>
      %c0_4 = arith.constant 0 : index
      %c0_5 = arith.constant 0 : index
      %12 = vector.load %arg16[%c0_4, %c0_5] : memref<2x64xf32, #tpu.memory_space<vmem>>, vector<1x64xf32>
      %c1 = arith.constant 1 : index
      %c0_6 = arith.constant 0 : index
      %13 = vector.load %arg16[%c1, %c0_6] : memref<2x64xf32, #tpu.memory_space<vmem>>, vector<1x64xf32>
      %cst = arith.constant dense<0.000000e+00> : vector<64xf32>
      %14 = vector.multi_reduction <add>, %11, %cst [1] : vector<64x64xf32> to vector<64xf32>
      %15 = vector.shape_cast %14 : vector<64xf32> to vector<64x1xf32>
      %cst_7 = arith.constant 6.400000e+01 : f32
      %16 = vector.broadcast %cst_7 : f32 to vector<64x1xf32>
      %17 = arith.divf %15, %16 : vector<64x1xf32>
      %18 = vector.broadcast %17 : vector<64x1xf32> to vector<64x64xf32>
      %19 = arith.subf %11, %18 : vector<64x64xf32>
      %20 = arith.mulf %19, %19 : vector<64x64xf32>
      %cst_8 = arith.constant dense<0.000000e+00> : vector<64xf32>
      %21 = vector.multi_reduction <add>, %20, %cst_8 [1] : vector<64x64xf32> to vector<64xf32>
      %22 = vector.shape_cast %21 : vector<64xf32> to vector<64x1xf32>
      %cst_9 = arith.constant 6.400000e+01 : f32
      %23 = vector.broadcast %cst_9 : f32 to vector<64x1xf32>
      %24 = arith.divf %22, %23 : vector<64x1xf32>
      %cst_10 = arith.constant 9.99999974E-6 : f32
      %25 = vector.broadcast %cst_10 : f32 to vector<64x1xf32>
      %26 = arith.addf %24, %25 : vector<64x1xf32>
      %27 = math.rsqrt %26 : vector<64x1xf32>
      %28 = vector.broadcast %27 : vector<64x1xf32> to vector<64x64xf32>
      %29 = arith.mulf %19, %28 : vector<64x64xf32>
      %30 = vector.broadcast %12 : vector<1x64xf32> to vector<64x64xf32>
      %31 = arith.mulf %29, %30 : vector<64x64xf32>
      %32 = vector.broadcast %13 : vector<1x64xf32> to vector<64x64xf32>
      %33 = arith.addf %31, %32 : vector<64x64xf32>
      %c0_11 = arith.constant 0 : index
      %c0_12 = arith.constant 0 : index
      %34 = vector.load %arg17[%c0_11, %c0_12] : memref<64x64xf32, #tpu.memory_space<vmem>>, vector<64x64xf32>
      tpu.vector_store %arg17[%c0_11, %c0_12], %33 {strides = array<i32>} : memref<64x64xf32, #tpu.memory_space<vmem>>, vector<64x64xf32>,
    } else {
    }
    return
  }
  func.func @transform_0(%arg0: i32) -> (i32, i32) {
    %c0_i32 = arith.constant 0 : i32
    %c0_i32_0 = arith.constant 0 : i32
    %c0_i32_1 = arith.constant 0 : i32
    return %c0_i32, %c0_i32_0 : i32, i32
  }
  func.func @transform_1(%arg0: i32) -> (i32, i32, i32) {
    %c0_i32 = arith.constant 0 : i32
    %c0_i32_0 = arith.constant 0 : i32
    %c0_i32_1 = arith.constant 0 : i32
    %c0_i32_2 = arith.constant 0 : i32
    return %c0_i32, %c0_i32_0, %c0_i32_1 : i32, i32, i32
  }
  func.func @transform_2(%arg0: i32) -> (i32, i32) {
    %c0_i32 = arith.constant 0 : i32
    %c0_i32_0 = arith.constant 0 : i32
    %c0_i32_1 = arith.constant 0 : i32
    return %c0_i32, %c0_i32_0 : i32, i32
  }
  func.func @transform_3(%arg0: i32) -> (i32, i32, i32) {
    %c0_i32 = arith.constant 0 : i32
    %c0_i32_0 = arith.constant 0 : i32
    %c0_i32_1 = arith.constant 0 : i32
    %c0_i32_2 = arith.constant 0 : i32
    return %c0_i32, %c0_i32_0, %c0_i32_1 : i32, i32, i32
  }
  func.func @transform_4(%arg0: i32) -> (i32, i32) {
    %c0_i32 = arith.constant 0 : i32
    %c0_i32_0 = arith.constant 0 : i32
    %c0_i32_1 = arith.constant 0 : i32
    return %c0_i32, %c0_i32_0 : i32, i32
  }
  func.func @transform_5(%arg0: i32) -> (i32, i32) {
    %c0_i32 = arith.constant 0 : i32
    %c0_i32_0 = arith.constant 0 : i32
    %c0_i32_1 = arith.constant 0 : i32
    return %c0_i32, %c0_i32_0 : i32, i32
  }
  func.func @transform_6(%arg0: i32) -> (i32, i32, i32) {
    %c1_i32 = arith.constant 1 : i32
    %0 = arith.subi %arg0, %c1_i32 : i32
    %c1_i32_0 = arith.constant 1 : i32
    %1 = arith.minsi %0, %c1_i32_0 : i32
    %c0_i32 = arith.constant 0 : i32
    %2 = arith.maxsi %c0_i32, %1 : i32
    %c0_i32_1 = arith.constant 0 : i32
    %c0_i32_2 = arith.constant 0 : i32
    %c0_i32_3 = arith.constant 0 : i32
    return %2, %c0_i32_1, %c0_i32_2 : i32, i32, i32
  }
  func.func @transform_7(%arg0: i32) -> (i32, i32, i32) {
    %c1_i32 = arith.constant 1 : i32
    %0 = arith.subi %arg0, %c1_i32 : i32
    %c1_i32_0 = arith.constant 1 : i32
    %1 = arith.minsi %0, %c1_i32_0 : i32
    %c0_i32 = arith.constant 0 : i32
    %2 = arith.maxsi %c0_i32, %1 : i32
    %c0_i32_1 = arith.constant 0 : i32
    %c0_i32_2 = arith.constant 0 : i32
    %c0_i32_3 = arith.constant 0 : i32
    return %2, %c0_i32_1, %c0_i32_2 : i32, i32, i32
  }
  func.func @transform_8(%arg0: i32) -> (i32, i32, i32) {
    %c1_i32 = arith.constant 1 : i32
    %0 = arith.subi %arg0, %c1_i32 : i32
    %c1_i32_0 = arith.constant 1 : i32
    %1 = arith.minsi %0, %c1_i32_0 : i32
    %c0_i32 = arith.constant 0 : i32
    %2 = arith.maxsi %c0_i32, %1 : i32
    %c0_i32_1 = arith.constant 0 : i32
    %c0_i32_2 = arith.constant 0 : i32
    %c0_i32_3 = arith.constant 0 : i32
    return %2, %c0_i32_1, %c0_i32_2 : i32, i32, i32
  }
  func.func @transform_9(%arg0: i32) -> (i32, i32, i32) {
    %c1_i32 = arith.constant 1 : i32
    %0 = arith.subi %arg0, %c1_i32 : i32
    %c1_i32_0 = arith.constant 1 : i32
    %1 = arith.minsi %0, %c1_i32_0 : i32
    %c0_i32 = arith.constant 0 : i32
    %2 = arith.maxsi %c0_i32, %1 : i32
    %c0_i32_1 = arith.constant 0 : i32
    %c0_i32_2 = arith.constant 0 : i32
    %c0_i32_3 = arith.constant 0 : i32
    return %2, %c0_i32_1, %c0_i32_2 : i32, i32, i32
  }
  func.func @transform_10(%arg0: i32) -> (i32, i32, i32) {
    %c1_i32 = arith.constant 1 : i32
    %0 = arith.subi %arg0, %c1_i32 : i32
    %c1_i32_0 = arith.constant 1 : i32
    %1 = arith.minsi %0, %c1_i32_0 : i32
    %c0_i32 = arith.constant 0 : i32
    %2 = arith.maxsi %c0_i32, %1 : i32
    %c0_i32_1 = arith.constant 0 : i32
    %c0_i32_2 = arith.constant 0 : i32
    %c0_i32_3 = arith.constant 0 : i32
    return %2, %c0_i32_1, %c0_i32_2 : i32, i32, i32
  }
  func.func @transform_11(%arg0: i32) -> (i32, i32, i32) {
    %c1_i32 = arith.constant 1 : i32
    %0 = arith.subi %arg0, %c1_i32 : i32
    %c1_i32_0 = arith.constant 1 : i32
    %1 = arith.minsi %0, %c1_i32_0 : i32
    %c0_i32 = arith.constant 0 : i32
    %2 = arith.maxsi %c0_i32, %1 : i32
    %c0_i32_1 = arith.constant 0 : i32
    %c0_i32_2 = arith.constant 0 : i32
    %c0_i32_3 = arith.constant 0 : i32
    return %2, %c0_i32_1, %c0_i32_2 : i32, i32, i32
  }
  func.func @transform_12(%arg0: i32) -> (i32, i32, i32) {
    %c1_i32 = arith.constant 1 : i32
    %0 = arith.subi %arg0, %c1_i32 : i32
    %c1_i32_0 = arith.constant 1 : i32
    %1 = arith.minsi %0, %c1_i32_0 : i32
    %c0_i32 = arith.constant 0 : i32
    %2 = arith.maxsi %c0_i32, %1 : i32
    %c0_i32_1 = arith.constant 0 : i32
    %c0_i32_2 = arith.constant 0 : i32
    %c0_i32_3 = arith.constant 0 : i32
    return %2, %c0_i32_1, %c0_i32_2 : i32, i32, i32
  }
  func.func @transform_13(%arg0: i32) -> (i32, i32, i32) {
    %c1_i32 = arith.constant 1 : i32
    %0 = arith.subi %arg0, %c1_i32 : i32
    %c1_i32_0 = arith.constant 1 : i32
    %1 = arith.minsi %0, %c1_i32_0 : i32
    %c0_i32 = arith.constant 0 : i32
    %2 = arith.maxsi %c0_i32, %1 : i32
    %c0_i32_1 = arith.constant 0 : i32
    %c0_i32_2 = arith.constant 0 : i32
    %c0_i32_3 = arith.constant 0 : i32
    return %2, %c0_i32_1, %c0_i32_2 : i32, i32, i32
  }
  func.func @transform_14(%arg0: i32) -> (i32, i32, i32) {
    %c1_i32 = arith.constant 1 : i32
    %0 = arith.subi %arg0, %c1_i32 : i32
    %c1_i32_0 = arith.constant 1 : i32
    %1 = arith.minsi %0, %c1_i32_0 : i32
    %c0_i32 = arith.constant 0 : i32
    %2 = arith.maxsi %c0_i32, %1 : i32
    %c0_i32_1 = arith.constant 0 : i32
    %c0_i32_2 = arith.constant 0 : i32
    %c0_i32_3 = arith.constant 0 : i32
    return %2, %c0_i32_1, %c0_i32_2 : i32, i32, i32
  }
  func.func @transform_15(%arg0: i32) -> (i32, i32) {
    %c0_i32 = arith.constant 0 : i32
    %c0_i32_0 = arith.constant 0 : i32
    %c0_i32_1 = arith.constant 0 : i32
    return %c0_i32, %c0_i32_0 : i32, i32
  }
  func.func @transform_16(%arg0: i32) -> (i32, i32) {
    %c0_i32 = arith.constant 0 : i32
    %c0_i32_0 = arith.constant 0 : i32
    %c0_i32_1 = arith.constant 0 : i32
    return %c0_i32, %c0_i32_0 : i32, i32
  }
}

</mosaic_0001>

<llo_original>
// kernel: reverse
$region0: #{reverse}
  %s0 = inlined_call_operand.vmem [shape: f32[2,256], index: 0, kind: input, shape index: {}]
  %s1 = inlined_call_operand.vmem [shape: f32[2,256], index: 1, kind: output, shape index: {}]
  %v2 = vlaneseq
  %v3 = vsub.s32 127, %v2
  %4 = vset.pattern.permute.xlu0 %v3
  $region1: #{reverse} parent=0
    #allocation0 [shape = 'u8[4096]{0}', space=vmem, size = 0x1000, scoped, tag = 'operand span for operand 0']
    #allocation1 [shape = 'u8[2048]{0}', space=vmem, size = 0x800, scoped, tag = 'packed  for operand 0']
    #allocation2 [shape = 'u8[4096]{0}', space=vmem, size = 0x1000, scoped, tag = 'operand span for operand 1']
    #allocation3 [shape = 'u8[2048]{0}', space=vmem, size = 0x800, scoped, tag = 'packed  for operand 1']
    loop: start=0, step=1, limit=4
    $region2: #{reverse} parent=1 // loop_pre_header
      _
    $region3: #{reverse} parent=1 // loop_header
      %s6 = sphi 0, %s10
      %p7 = scmp.ge.s32.totalorder %s6, 4
      %s13 = sphi 0, %s25
      %s14 = sphi 0, %s21
      %s15 = sphi 0, %s13
      %s16 = sphi 0, %s14
      %s17 = sphi 0, %s15
      %s18 = sphi 0, %s16
    $region4: #{reverse} parent=1 // loop_header_branch
      %9 = sbr.rel (%p7) target = $region8
    $region5: #{reverse} parent=1 // loop_body
      %s11 = ssub.s32 %s6, 1
      %s12 = ssub.s32 %s6, 2
      %s19 = sadd.s32 1, %s14
      %p20 = scmp.ge.s32.totalorder %s19, 2
      %s21 = scalar_select %p20, 0, %s19
      %s22 = sadd.s32 1, %s13
      %s23 = scalar_select %p20, %s22, %s13
      %p24 = scmp.ge.s32.totalorder %s23, 1
      %s25 = scalar_select %p24, 0, %s23
      %p26 = scmp.le.s32.totalorder 1, %s6
      %p27 = scmp.lt.s32.totalorder %s6, 3
      %p28 = pnand %p26, %p27
      %p29 = pneg %p28
      // Predicated region
      $region9: #{reverse} parent=5 // pred_check
        _
      $region10: #{reverse} parent=5 // pred_check_branch
        %31 = sbr.rel (%p28) target = $region12
      $region11: #{reverse} parent=5 // pred_region
        %s32 = ssub.s32 %s6, 1
      $region12: #{reverse} parent=5 // pred_fallthru
        _
      %p33 = scmp.lt.s32.totalorder %s6, 2
      // Predicated region
      $region13: #{reverse} parent=5 // pred_check
        %p34 = pneg %p33
      $region14: #{reverse} parent=5 // pred_check_branch
        %36 = sbr.rel (%p34) target = $region16
      $region15: #{reverse} parent=5 // pred_region
        %s37 = sand.u32 %s6, 1
        %s38 = sand.u32 %s6, 1
        %s39 = smul.addr %s38, 2
        %s40 = scalar_lea.vmem [#allocation1], %s39
        %s41 = ssub.s32 1, %s14
        %s42 = smul.addr %s13, 2
        %s43 = sadd.s32 %s41, %s42
        %s44 = smul.addr %s43, 2
        %s45 = scalar_lea.vmem %s0, %s44
        // Predicated region
        $region17: #{reverse} parent=15 // pred_check
          _
        $region18: #{reverse} parent=15 // pred_check_branch
          %47 = sbr.rel (0) target = $region20
        $region19: #{reverse} parent=15 // pred_region
          // Predicated region
          $region21: #{reverse} parent=19 // pred_check
            _
          $region22: #{reverse} parent=19 // pred_check_branch
            %49 = sbr.rel target = $region24
          $region23: #{reverse} parent=19 // pred_region
            // Predicated region
            $region36: #{reverse} parent=23 // pred_check
              _
            $region37: #{reverse} parent=23 // pred_check_branch
              %65 = sbr.rel (0) target = $region39
            $region38: #{reverse} parent=23 // pred_region
              %s67 = ssub.s32 4, 1
              loop: start=0, step=1, limit=1
              $region40: #{reverse} parent=38 // loop_pre_header
                _
              $region41: #{reverse} parent=38 // loop_header
                %s69 = sphi 0, %s73
                %p70 = scmp.ge.s32.totalorder %s69, 1
                %s74 = sphi %s45, %s45
                %s75 = sphi %s40, %s40
              $region42: #{reverse} parent=38 // loop_header_branch
                %72 = sbr.rel (%p70) target = $region46
              $region43: #{reverse} parent=38 // loop_body
                %v76 = vld [vmem:[%s74] sm:%s67]
                %77 = vst [vmem:[%s75] sm:%s67] %v76
              $region44: #{reverse} parent=38 // loop_footer
                %s73 = sadd.s32 1, %s69
              $region45: #{reverse} parent=38 // loop_footer_branch
                %68 = sbr.rel target = $region41
              $region46: #{reverse} parent=38 // loop_exit
                _
            $region39: #{reverse} parent=23 // pred_fallthru
              _
          $region24: #{reverse} parent=19 // pred_fallthru
            _
          // Predicated region
          $region25: #{reverse} parent=19 // pred_check
            _
          $region26: #{reverse} parent=19 // pred_check_branch
            %51 = sbr.rel (0) target = $region28
          $region27: #{reverse} parent=19 // pred_region
            %s53 = ssub.s32 4, 1
            loop: start=0, step=1, limit=1
            $region29: #{reverse} parent=27 // loop_pre_header
              _
            $region30: #{reverse} parent=27 // loop_header
              %s55 = sphi 0, %s59
              %p56 = scmp.ge.s32.totalorder %s55, 1
              %s60 = sphi %s45, %s45
              %s61 = sphi %s40, %s40
            $region31: #{reverse} parent=27 // loop_header_branch
              %58 = sbr.rel (%p56) target = $region35
            $region32: #{reverse} parent=27 // loop_body
              %v62 = vld [vmem:[%s60] sm:%s53]
              %63 = vst [vmem:[%s61] sm:%s53] %v62
            $region33: #{reverse} parent=27 // loop_footer
              %s59 = sadd.s32 1, %s55
            $region34: #{reverse} parent=27 // loop_footer_branch
              %54 = sbr.rel target = $region30
            $region35: #{reverse} parent=27 // loop_exit
              _
          $region28: #{reverse} parent=19 // pred_fallthru
            _
        $region20: #{reverse} parent=15 // pred_fallthru
          _
        %78 = vnop
      $region16: #{reverse} parent=5 // pred_fallthru
        _
      %p79 = scmp.le.s32.totalorder 1, %s6
      %p80 = scmp.lt.s32.totalorder %s6, 3
      %p81 = pnand %p79, %p80
      %p82 = pneg %p81
      // Predicated region
      $region47: #{reverse} parent=5 // pred_check
        _
      $region48: #{reverse} parent=5 // pred_check_branch
        %84 = sbr.rel (%p81) target = $region50
      $region49: #{reverse} parent=5 // pred_region
        %s85 = ssub.s32 %s6, 1
        %s86 = sand.u32 %s11, 1
        %s87 = sand.u32 %s11, 1
        %s88 = smul.addr %s87, 2
        %s89 = scalar_lea.vmem [#allocation1], %s88
        %s90 = sand.u32 %s11, 1
        %s91 = sand.u32 %s11, 1
        %s92 = smul.addr %s91, 2
        %s93 = scalar_lea.vmem [#allocation1], %s92
        %s94 = sand.u32 %s11, 1
        %s95 = sand.u32 %s11, 1
        %s96 = smul.addr %s95, 2
        %s97 = scalar_lea.vmem [#allocation3], %s96
        %s99 = sshll.u32 1, 2
        %s100 = ssub.s32 %s99, 1
        %v101 = vld [vmem:[%s93] sm:%s100]
        %102 = vst [vmem:[#allocation0] sm:%s100] %v101
        %s103 = ssub.s32 1, %s16
        %v104 = vld [vmem:[#allocation0] sm:$0xff]
        %105 = vperm.xlu0 %4, %v104
        %v106 = vpop.permute.xlu0 %105
        %107 = vst [vmem:[#allocation2] sm:$0xff] %v106
        %s109 = sshll.u32 1, 2
        %s110 = ssub.s32 %s109, 1
        %v112 = vld [vmem:[#allocation2] sm:%s110]
        %s113 = sshll.u32 1, 2
        %s114 = ssub.s32 %s113, 1
        %115 = vst [vmem:[%s97] sm:%s114] %v112
        %s116 = sand.u32 %s11, 1
        %s117 = sand.u32 %s11, 1
        %s118 = smul.addr %s117, 2
        %s119 = scalar_lea.vmem [#allocation3], %s118
        %s120 = smul.addr %s15, 2
        %s121 = sadd.s32 %s16, %s120
        %s122 = smul.addr %s121, 2
        %s123 = scalar_lea.vmem %s1, %s122
        // Predicated region
        $region51: #{reverse} parent=49 // pred_check
          _
        $region52: #{reverse} parent=49 // pred_check_branch
          %125 = sbr.rel (0) target = $region54
        $region53: #{reverse} parent=49 // pred_region
          // Predicated region
          $region55: #{reverse} parent=53 // pred_check
            _
          $region56: #{reverse} parent=53 // pred_check_branch
            %127 = sbr.rel target = $region58
          $region57: #{reverse} parent=53 // pred_region
            // Predicated region
            $region70: #{reverse} parent=57 // pred_check
              _
            $region71: #{reverse} parent=57 // pred_check_branch
              %143 = sbr.rel (0) target = $region73
            $region72: #{reverse} parent=57 // pred_region
              %s145 = ssub.s32 4, 1
              loop: start=0, step=1, limit=1
              $region74: #{reverse} parent=72 // loop_pre_header
                _
              $region75: #{reverse} parent=72 // loop_header
                %s147 = sphi 0, %s151
                %p148 = scmp.ge.s32.totalorder %s147, 1
                %s152 = sphi %s119, %s119
                %s153 = sphi %s123, %s123
              $region76: #{reverse} parent=72 // loop_header_branch
                %150 = sbr.rel (%p148) target = $region80
              $region77: #{reverse} parent=72 // loop_body
                %v154 = vld [vmem:[%s152] sm:%s145]
                %155 = vst [vmem:[%s153] sm:%s145] %v154
              $region78: #{reverse} parent=72 // loop_footer
                %s151 = sadd.s32 1, %s147
              $region79: #{reverse} parent=72 // loop_footer_branch
                %146 = sbr.rel target = $region75
              $region80: #{reverse} parent=72 // loop_exit
                _
            $region73: #{reverse} parent=57 // pred_fallthru
              _
          $region58: #{reverse} parent=53 // pred_fallthru
            _
          // Predicated region
          $region59: #{reverse} parent=53 // pred_check
            _
          $region60: #{reverse} parent=53 // pred_check_branch
            %129 = sbr.rel (0) target = $region62
          $region61: #{reverse} parent=53 // pred_region
            %s131 = ssub.s32 4, 1
            loop: start=0, step=1, limit=1
            $region63: #{reverse} parent=61 // loop_pre_header
              _
            $region64: #{reverse} parent=61 // loop_header
              %s133 = sphi 0, %s137
              %p134 = scmp.ge.s32.totalorder %s133, 1
              %s138 = sphi %s119, %s119
              %s139 = sphi %s123, %s123
            $region65: #{reverse} parent=61 // loop_header_branch
              %136 = sbr.rel (%p134) target = $region69
            $region66: #{reverse} parent=61 // loop_body
              %v140 = vld [vmem:[%s138] sm:%s131]
              %141 = vst [vmem:[%s139] sm:%s131] %v140
            $region67: #{reverse} parent=61 // loop_footer
              %s137 = sadd.s32 1, %s133
            $region68: #{reverse} parent=61 // loop_footer_branch
              %132 = sbr.rel target = $region64
            $region69: #{reverse} parent=61 // loop_exit
              _
          $region62: #{reverse} parent=53 // pred_fallthru
            _
        $region54: #{reverse} parent=49 // pred_fallthru
          _
        %156 = vnop
      $region50: #{reverse} parent=5 // pred_fallthru
        _
      %p157 = scmp.le.s32.totalorder 2, %s6
      // Predicated region
      $region81: #{reverse} parent=5 // pred_check
        %p158 = pneg %p157
      $region82: #{reverse} parent=5 // pred_check_branch
        %160 = sbr.rel (%p158) target = $region84
      $region83: #{reverse} parent=5 // pred_region
        %s161 = ssub.s32 %s6, 2
        %s162 = sand.u32 %s12, 1
        %s163 = sand.u32 %s12, 1
        %s164 = smul.addr %s163, 2
        %s165 = scalar_lea.vmem [#allocation3], %s164
      $region84: #{reverse} parent=5 // pred_fallthru
        _
    $region6: #{reverse} parent=1 // loop_footer
      %s10 = sadd.s32 1, %s6
    $region7: #{reverse} parent=1 // loop_footer_branch
      %5 = sbr.rel target = $region3
    $region8: #{reverse} parent=1 // loop_exit
      _

// kernel: whisper_encoder_forward.2
$region0: #{whisper_encoder_forward.2}
  #allocation0 [shape = 'u32[]', space=smem, size = 0x4, offset = 0x4, fixed_abs, tag = 'smem constant byte address 0x4 - core index']
  #allocation1 [shape = 'u32[144,128]{1,0:T(1,128)}', space=vmem, size = 0x12000, scoped, tag = 'internal scratch']
  %s0 = inlined_call_operand.vmem [shape: f32[64,512], index: 0, kind: input, shape index: {}]
  %s1 = inlined_call_operand.vmem [shape: f32[512,256], index: 1, kind: input, shape index: {}]
  %s2 = inlined_call_operand.vmem [shape: f32[64,256], index: 2, kind: output, shape index: {}]
  %s3 = sld [smem:[#allocation0]]
  $region41: #{whisper_encoder_forward.2} parent=0
    _
  %s5 = ssub.s32 1, %s3
  %s6 = scalar_select 0, %s5, %s3
  loop: start=0, step=1, limit=4
  $region2: #{whisper_encoder_forward.2} parent=0 // loop_pre_header
    _
  $region3: #{whisper_encoder_forward.2} parent=0 // loop_header
    %s8 = sphi 0, %s12
    %p9 = scmp.ge.s32.totalorder %s8, 4
    %s18 = sphi 0, %s20
    %s21 = sphi 0, %s18
    %s22 = sphi 0, %s21
    %s38 = sphi 0, %s22
    %s42 = sphi 0, %s42
    %s44 = sphi 0, %s42
    %s45 = sphi 0, %s44
    %s59 = sphi 0, %s45
    %s65 = sphi 0, %s67
    %s68 = sphi 0, %s65
    %s69 = sphi 0, %s68
    %s85 = sphi 0, %s69
  $region4: #{whisper_encoder_forward.2} parent=0 // loop_header_branch
    %11 = sbr.rel (%p9) target = $region8
  $region5: #{whisper_encoder_forward.2} parent=0 // loop_body
    %s13 = ssub.s32 %s8, 1
    %s14 = ssub.s32 %s8, 2
    %s15 = sadd.s32 %s8, 1
    %s16 = ssub.s32 %s8, %s15
    %p17 = scmp.eq.s32.totalorder %s16, 0
    %s19 = sadd.s32 %s18, 1
    %s20 = scalar_select %p17, %s18, %s19
    %p23 = pneg %p17
    %p24 = scmp.eq.s32.totalorder %s8, 1
    %p25 = por %p23, %p24
    %p26 = scmp.ne.s32.totalorder %s18, %s21
    %p27 = scmp.eq.s32.totalorder %s8, 0
    %p28 = por %p26, %p27
    %p29 = scmp.ne.s32.totalorder %s18, %s21
    %p30 = scmp.eq.s32.totalorder %s13, 1
    %p31 = por %p29, %p30
    %p32 = scmp.ne.s32.totalorder %s21, %s22
    %p33 = scmp.eq.s32.totalorder %s13, 0
    %p34 = por %p32, %p33
    %p35 = scmp.ne.s32.totalorder %s21, %s22
    %p36 = scmp.eq.s32.totalorder %s14, 1
    %p37 = por %p35, %p36
    %p39 = scmp.ne.s32.totalorder %s22, %s38
    %p40 = scmp.eq.s32.totalorder %s14, 0
    %p41 = por %p39, %p40
    %s43 = sadd.s32 %s42, 1
    %p46 = scmp.eq.s32.totalorder %s8, 1
    %p47 = scmp.ne.s32.totalorder %s42, %s44
    %p48 = scmp.eq.s32.totalorder %s8, 0
    %p49 = por %p47, %p48
    %p50 = scmp.ne.s32.totalorder %s42, %s44
    %p51 = scmp.eq.s32.totalorder %s13, 1
    %p52 = por %p50, %p51
    %p53 = scmp.ne.s32.totalorder %s44, %s45
    %p54 = scmp.eq.s32.totalorder %s13, 0
    %p55 = por %p53, %p54
    %p56 = scmp.ne.s32.totalorder %s44, %s45
    %p57 = scmp.eq.s32.totalorder %s14, 1
    %p58 = por %p56, %p57
    %p60 = scmp.ne.s32.totalorder %s45, %s59
    %p61 = scmp.eq.s32.totalorder %s14, 0
    %p62 = por %p60, %p61
    %s63 = ssub.s32 %s8, %s15
    %p64 = scmp.eq.s32.totalorder %s63, 0
    %s66 = sadd.s32 %s65, 1
    %s67 = scalar_select %p64, %s65, %s66
    %p70 = pneg %p64
    %p71 = scmp.eq.s32.totalorder %s8, 1
    %p72 = por %p70, %p71
    %p73 = scmp.ne.s32.totalorder %s65, %s68
    %p74 = scmp.eq.s32.totalorder %s8, 0
    %p75 = por %p73, %p74
    %p76 = scmp.ne.s32.totalorder %s65, %s68
    %p77 = scmp.eq.s32.totalorder %s13, 1
    %p78 = por %p76, %p77
    %p79 = scmp.ne.s32.totalorder %s68, %s69
    %p80 = scmp.eq.s32.totalorder %s13, 0
    %p81 = por %p79, %p80
    %p82 = scmp.ne.s32.totalorder %s68, %s69
    %p83 = scmp.eq.s32.totalorder %s14, 1
    %p84 = por %p82, %p83
    %p86 = scmp.ne.s32.totalorder %s69, %s85
    %p87 = scmp.eq.s32.totalorder %s14, 0
    %p88 = por %p86, %p87
    %p89 = scmp.le.s32.totalorder 1, %s8
    %p90 = scmp.lt.s32.totalorder %s8, 3
    %p91 = pnand %p89, %p90
    %p92 = pneg %p91
    // Predicated region
    $region9: #{whisper_encoder_forward.2} parent=5 // pred_check
      _
    $region10: #{whisper_encoder_forward.2} parent=5 // pred_check_branch
      %94 = sbr.rel (%p91) target = $region12
    $region11: #{whisper_encoder_forward.2} parent=5 // pred_region
      %s95 = ssub.s32 %s8, 1
      // Predicated region
      $region13: #{whisper_encoder_forward.2} parent=11 // pred_check
        %p96 = pneg %p55
      $region14: #{whisper_encoder_forward.2} parent=11 // pred_check_branch
        %98 = sbr.rel (%p96) target = $region16
      $region15: #{whisper_encoder_forward.2} parent=11 // pred_region
        _
      $region16: #{whisper_encoder_forward.2} parent=11 // pred_fallthru
        _
    $region12: #{whisper_encoder_forward.2} parent=5 // pred_fallthru
      _
    %p99 = scmp.lt.s32.totalorder %s8, 2
    // Predicated region
    $region17: #{whisper_encoder_forward.2} parent=5 // pred_check
      %p100 = pneg %p99
    $region18: #{whisper_encoder_forward.2} parent=5 // pred_check_branch
      %102 = sbr.rel (%p100) target = $region20
    $region19: #{whisper_encoder_forward.2} parent=5 // pred_region
      // Predicated region
      $region21: #{whisper_encoder_forward.2} parent=19 // pred_check
        %p103 = pneg %p28
      $region22: #{whisper_encoder_forward.2} parent=19 // pred_check_branch
        %105 = sbr.rel (%p103) target = $region24
      $region23: #{whisper_encoder_forward.2} parent=19 // pred_region
        %s106 = smul.u32 4, %s8
        %p107 = scmp.lt.s32.totalorder %s106, 7
        %s108 = scalar_select %p107, %s106, 7
        %s109 = smul.addr %s108, 4
        %s110 = smul.addr %s109, 8
        %s111 = scalar_lea.vmem %s0, %s110
        %s112 = smul.u32 4, %s8
      $region24: #{whisper_encoder_forward.2} parent=19 // pred_fallthru
        _
    $region20: #{whisper_encoder_forward.2} parent=5 // pred_fallthru
      _
    %p113 = scmp.le.s32.totalorder 1, %s8
    %p114 = scmp.lt.s32.totalorder %s8, 3
    %p115 = pnand %p113, %p114
    %p116 = pneg %p115
    // Predicated region
    $region25: #{whisper_encoder_forward.2} parent=5 // pred_check
      _
    $region26: #{whisper_encoder_forward.2} parent=5 // pred_check_branch
      %118 = sbr.rel (%p115) target = $region28
    $region27: #{whisper_encoder_forward.2} parent=5 // pred_region
      %s119 = ssub.s32 %s8, 1
      %s120 = smul.u32 4, %s13
      %p121 = scmp.lt.s32.totalorder %s120, 7
      %s122 = scalar_select %p121, %s120, 7
      %s123 = smul.addr %s122, 4
      %s124 = smul.addr %s123, 8
      %s125 = scalar_lea.vmem %s0, %s124
      %p126 = pneg %p34
      %p127 = pneg %p31
      %p128 = pneg %p55
      %p129 = pneg %p52
      %p130 = pneg %p81
      %p131 = pneg %p78
      %s132 = smul.u32 4, %s13
      %p133 = scmp.lt.s32.totalorder %s132, 7
      %s134 = scalar_select %p133, %s132, 7
      %s135 = smul.addr %s134, 2
      %s136 = smul.addr %s135, 8
      %s137 = scalar_lea.vmem %s2, %s136
      %s138 = smul.u32 4, %s13
      %p139 = scmp.lt.s32.totalorder %s138, 7
      %s140 = scalar_select %p139, %s138, 7
      %s141 = smul.addr %s140, 4
      %s142 = smul.addr %s141, 8
      %s143 = scalar_lea.vmem %s0, %s142
      %s144 = smul.u32 4, %s13
      %s145 = smul.u32 4, %s13
      %p146 = scmp.lt.s32.totalorder %s145, 7
      %s147 = scalar_select %p146, %s145, 7
      %s148 = smul.addr %s147, 2
      %s149 = smul.addr %s148, 8
      %s150 = scalar_lea.vmem %s2, %s149
      %s151 = smul.u32 4, %s13
      %v152 = vld [vmem:[%s143] sm:$0xff]
      %v153 = vld [vmem:[%s143 + $0x8] sm:$0xff]
      %v154 = vld [vmem:[%s143 + $0x10] sm:$0xff]
      %v155 = vld [vmem:[%s143 + $0x18] sm:$0xff]
      %v156 = vld [vmem:[%s143 + $0x20] sm:$0xff]
      %v157 = vld [vmem:[%s143 + $0x28] sm:$0xff]
      %v158 = vld [vmem:[%s143 + $0x30] sm:$0xff]
      %v159 = vld [vmem:[%s143 + $0x38] sm:$0xff]
      %v160 = vld [vmem:[%s143 + $0x40] sm:$0xff]
      %v161 = vld [vmem:[%s143 + $0x48] sm:$0xff]
      %v162 = vld [vmem:[%s143 + $0x50] sm:$0xff]
      %v163 = vld [vmem:[%s143 + $0x58] sm:$0xff]
      %v164 = vld [vmem:[%s143 + $0x60] sm:$0xff]
      %v165 = vld [vmem:[%s143 + $0x68] sm:$0xff]
      %v166 = vld [vmem:[%s143 + $0x70] sm:$0xff]
      %v167 = vld [vmem:[%s143 + $0x78] sm:$0xff]
      %v168 = vld [vmem:[%s1] sm:$0xff]
      %v169 = vld [vmem:[%s1 + $0x8] sm:$0xff]
      %v170 = vld [vmem:[%s1 + $0x10] sm:$0xff]
      %v171 = vld [vmem:[%s1 + $0x18] sm:$0xff]
      %v172 = vld [vmem:[%s1 + $0x20] sm:$0xff]
      %v173 = vld [vmem:[%s1 + $0x28] sm:$0xff]
      %v174 = vld [vmem:[%s1 + $0x30] sm:$0xff]
      %v175 = vld [vmem:[%s1 + $0x38] sm:$0xff]
      %v176 = vld [vmem:[%s1 + $0x40] sm:$0xff]
      %v177 = vld [vmem:[%s1 + $0x48] sm:$0xff]
      %v178 = vld [vmem:[%s1 + $0x50] sm:$0xff]
      %v179 = vld [vmem:[%s1 + $0x58] sm:$0xff]
      %v180 = vld [vmem:[%s1 + $0x60] sm:$0xff]
      %v181 = vld [vmem:[%s1 + $0x68] sm:$0xff]
      %v182 = vld [vmem:[%s1 + $0x70] sm:$0xff]
      %v183 = vld [vmem:[%s1 + $0x78] sm:$0xff]
      %v184 = vld [vmem:[%s1 + $0x80] sm:$0xff]
      %v185 = vld [vmem:[%s1 + $0x88] sm:$0xff]
      %v186 = vld [vmem:[%s1 + $0x90] sm:$0xff]
      %v187 = vld [vmem:[%s1 + $0x98] sm:$0xff]
      %v188 = vld [vmem:[%s1 + $0xa0] sm:$0xff]
      %v189 = vld [vmem:[%s1 + $0xa8] sm:$0xff]
      %v190 = vld [vmem:[%s1 + $0xb0] sm:$0xff]
      %v191 = vld [vmem:[%s1 + $0xb8] sm:$0xff]
      %v192 = vld [vmem:[%s1 + $0xc0] sm:$0xff]
      %v193 = vld [vmem:[%s1 + $0xc8] sm:$0xff]
      %v194 = vld [vmem:[%s1 + $0xd0] sm:$0xff]
      %v195 = vld [vmem:[%s1 + $0xd8] sm:$0xff]
      %v196 = vld [vmem:[%s1 + $0xe0] sm:$0xff]
      %v197 = vld [vmem:[%s1 + $0xe8] sm:$0xff]
      %v198 = vld [vmem:[%s1 + $0xf0] sm:$0xff]
      %v199 = vld [vmem:[%s1 + $0xf8] sm:$0xff]
      %v200 = vld [vmem:[%s1 + $0x100] sm:$0xff]
      %v201 = vld [vmem:[%s1 + $0x108] sm:$0xff]
      %v202 = vld [vmem:[%s1 + $0x110] sm:$0xff]
      %v203 = vld [vmem:[%s1 + $0x118] sm:$0xff]
      %v204 = vld [vmem:[%s1 + $0x120] sm:$0xff]
      %v205 = vld [vmem:[%s1 + $0x128] sm:$0xff]
      %v206 = vld [vmem:[%s1 + $0x130] sm:$0xff]
      %v207 = vld [vmem:[%s1 + $0x138] sm:$0xff]
      %v208 = vld [vmem:[%s1 + $0x140] sm:$0xff]
      %v209 = vld [vmem:[%s1 + $0x148] sm:$0xff]
      %v210 = vld [vmem:[%s1 + $0x150] sm:$0xff]
      %v211 = vld [vmem:[%s1 + $0x158] sm:$0xff]
      %v212 = vld [vmem:[%s1 + $0x160] sm:$0xff]
      %v213 = vld [vmem:[%s1 + $0x168] sm:$0xff]
      %v214 = vld [vmem:[%s1 + $0x170] sm:$0xff]
      %v215 = vld [vmem:[%s1 + $0x178] sm:$0xff]
      %v216 = vld [vmem:[%s1 + $0x180] sm:$0xff]
      %v217 = vld [vmem:[%s1 + $0x188] sm:$0xff]
      %v218 = vld [vmem:[%s1 + $0x190] sm:$0xff]
      %v219 = vld [vmem:[%s1 + $0x198] sm:$0xff]
      %v220 = vld [vmem:[%s1 + $0x1a0] sm:$0xff]
      %v221 = vld [vmem:[%s1 + $0x1a8] sm:$0xff]
      %v222 = vld [vmem:[%s1 + $0x1b0] sm:$0xff]
      %v223 = vld [vmem:[%s1 + $0x1b8] sm:$0xff]
      %v224 = vld [vmem:[%s1 + $0x1c0] sm:$0xff]
      %v225 = vld [vmem:[%s1 + $0x1c8] sm:$0xff]
      %v226 = vld [vmem:[%s1 + $0x1d0] sm:$0xff]
      %v227 = vld [vmem:[%s1 + $0x1d8] sm:$0xff]
      %v228 = vld [vmem:[%s1 + $0x1e0] sm:$0xff]
      %v229 = vld [vmem:[%s1 + $0x1e8] sm:$0xff]
      %v230 = vld [vmem:[%s1 + $0x1f0] sm:$0xff]
      %v231 = vld [vmem:[%s1 + $0x1f8] sm:$0xff]
      %v232 = vld [vmem:[%s1 + $0x200] sm:$0xff]
      %v233 = vld [vmem:[%s1 + $0x208] sm:$0xff]
      %v234 = vld [vmem:[%s1 + $0x210] sm:$0xff]
      %v235 = vld [vmem:[%s1 + $0x218] sm:$0xff]
      %v236 = vld [vmem:[%s1 + $0x220] sm:$0xff]
      %v237 = vld [vmem:[%s1 + $0x228] sm:$0xff]
      %v238 = vld [vmem:[%s1 + $0x230] sm:$0xff]
      %v239 = vld [vmem:[%s1 + $0x238] sm:$0xff]
      %v240 = vld [vmem:[%s1 + $0x240] sm:$0xff]
      %v241 = vld [vmem:[%s1 + $0x248] sm:$0xff]
      %v242 = vld [vmem:[%s1 + $0x250] sm:$0xff]
      %v243 = vld [vmem:[%s1 + $0x258] sm:$0xff]
      %v244 = vld [vmem:[%s1 + $0x260] sm:$0xff]
      %v245 = vld [vmem:[%s1 + $0x268] sm:$0xff]
      %v246 = vld [vmem:[%s1 + $0x270] sm:$0xff]
      %v247 = vld [vmem:[%s1 + $0x278] sm:$0xff]
      %v248 = vld [vmem:[%s1 + $0x280] sm:$0xff]
      %v249 = vld [vmem:[%s1 + $0x288] sm:$0xff]
      %v250 = vld [vmem:[%s1 + $0x290] sm:$0xff]
      %v251 = vld [vmem:[%s1 + $0x298] sm:$0xff]
      %v252 = vld [vmem:[%s1 + $0x2a0] sm:$0xff]
      %v253 = vld [vmem:[%s1 + $0x2a8] sm:$0xff]
      %v254 = vld [vmem:[%s1 + $0x2b0] sm:$0xff]
      %v255 = vld [vmem:[%s1 + $0x2b8] sm:$0xff]
      %v256 = vld [vmem:[%s1 + $0x2c0] sm:$0xff]
      %v257 = vld [vmem:[%s1 + $0x2c8] sm:$0xff]
      %v258 = vld [vmem:[%s1 + $0x2d0] sm:$0xff]
      %v259 = vld [vmem:[%s1 + $0x2d8] sm:$0xff]
      %v260 = vld [vmem:[%s1 + $0x2e0] sm:$0xff]
      %v261 = vld [vmem:[%s1 + $0x2e8] sm:$0xff]
      %v262 = vld [vmem:[%s1 + $0x2f0] sm:$0xff]
      %v263 = vld [vmem:[%s1 + $0x2f8] sm:$0xff]
      %v264 = vld [vmem:[%s1 + $0x300] sm:$0xff]
      %v265 = vld [vmem:[%s1 + $0x308] sm:$0xff]
      %v266 = vld [vmem:[%s1 + $0x310] sm:$0xff]
      %v267 = vld [vmem:[%s1 + $0x318] sm:$0xff]
      %v268 = vld [vmem:[%s1 + $0x320] sm:$0xff]
      %v269 = vld [vmem:[%s1 + $0x328] sm:$0xff]
      %v270 = vld [vmem:[%s1 + $0x330] sm:$0xff]
      %v271 = vld [vmem:[%s1 + $0x338] sm:$0xff]
      %v272 = vld [vmem:[%s1 + $0x340] sm:$0xff]
      %v273 = vld [vmem:[%s1 + $0x348] sm:$0xff]
      %v274 = vld [vmem:[%s1 + $0x350] sm:$0xff]
      %v275 = vld [vmem:[%s1 + $0x358] sm:$0xff]
      %v276 = vld [vmem:[%s1 + $0x360] sm:$0xff]
      %v277 = vld [vmem:[%s1 + $0x368] sm:$0xff]
      %v278 = vld [vmem:[%s1 + $0x370] sm:$0xff]
      %v279 = vld [vmem:[%s1 + $0x378] sm:$0xff]
      %v280 = vld [vmem:[%s1 + $0x380] sm:$0xff]
      %v281 = vld [vmem:[%s1 + $0x388] sm:$0xff]
      %v282 = vld [vmem:[%s1 + $0x390] sm:$0xff]
      %v283 = vld [vmem:[%s1 + $0x398] sm:$0xff]
      %v284 = vld [vmem:[%s1 + $0x3a0] sm:$0xff]
      %v285 = vld [vmem:[%s1 + $0x3a8] sm:$0xff]
      %v286 = vld [vmem:[%s1 + $0x3b0] sm:$0xff]
      %v287 = vld [vmem:[%s1 + $0x3b8] sm:$0xff]
      %v288 = vld [vmem:[%s1 + $0x3c0] sm:$0xff]
      %v289 = vld [vmem:[%s1 + $0x3c8] sm:$0xff]
      %v290 = vld [vmem:[%s1 + $0x3d0] sm:$0xff]
      %v291 = vld [vmem:[%s1 + $0x3d8] sm:$0xff]
      %v292 = vld [vmem:[%s1 + $0x3e0] sm:$0xff]
      %v293 = vld [vmem:[%s1 + $0x3e8] sm:$0xff]
      %v294 = vld [vmem:[%s1 + $0x3f0] sm:$0xff]
      %v295 = vld [vmem:[%s1 + $0x3f8] sm:$0xff]
      %296 = vmatprep.subr.mxu0 %v199
      %297 = vmatpush1.msra.mxu0 %v198
      %298 = vmatprep.subr.mxu0 %v197
      %299 = vmatpush1.msra.mxu0 %v196
      %300 = vmatprep.subr.mxu0 %v195
      %301 = vmatpush1.msra.mxu0 %v194
      %302 = vmatprep.subr.mxu0 %v193
      %303 = vmatpush1.msra.mxu0 %v192
      %304 = vmatprep.subr.mxu0 %v191
      %305 = vmatpush1.msra.mxu0 %v190
      %306 = vmatprep.subr.mxu0 %v189
      %307 = vmatpush1.msra.mxu0 %v188
      %308 = vmatprep.subr.mxu0 %v187
      %309 = vmatpush1.msra.mxu0 %v186
      %310 = vmatprep.subr.mxu0 %v185
      %311 = vmatpush1.msra.mxu0 %v184
      %312 = vmatprep.subr.mxu0 %v183
      %313 = vmatpush1.msra.mxu0 %v182
      %314 = vmatprep.subr.mxu0 %v181
      %315 = vmatpush1.msra.mxu0 %v180
      %316 = vmatprep.subr.mxu0 %v179
      %317 = vmatpush1.msra.mxu0 %v178
      %318 = vmatprep.subr.mxu0 %v177
      %319 = vmatpush1.msra.mxu0 %v176
      %320 = vmatprep.subr.mxu0 %v175
      %321 = vmatpush1.msra.mxu0 %v174
      %322 = vmatprep.subr.mxu0 %v173
      %323 = vmatpush1.msra.mxu0 %v172
      %324 = vmatprep.subr.mxu0 %v171
      %325 = vmatpush1.msra.mxu0 %v170
      %326 = vmatprep.subr.mxu0 %v169
      %327 = vmatpush1.msra.mxu0 %v168
      %328 = vmatprep.subr.mxu0 %v231
      %329 = vmatpush2.msra.mxu0 %v230
      %330 = vmatprep.subr.mxu0 %v229
      %331 = vmatpush2.msra.mxu0 %v228
      %332 = vmatprep.subr.mxu0 %v227
      %333 = vmatpush2.msra.mxu0 %v226
      %334 = vmatprep.subr.mxu0 %v225
      %335 = vmatpush2.msra.mxu0 %v224
      %336 = vmatprep.subr.mxu0 %v223
      %337 = vmatpush2.msra.mxu0 %v222
      %338 = vmatprep.subr.mxu0 %v221
      %339 = vmatpush2.msra.mxu0 %v220
      %340 = vmatprep.subr.mxu0 %v219
      %341 = vmatpush2.msra.mxu0 %v218
      %342 = vmatprep.subr.mxu0 %v217
      %343 = vmatpush2.msra.mxu0 %v216
      %344 = vmatprep.subr.mxu0 %v215
      %345 = vmatpush2.msra.mxu0 %v214
      %346 = vmatprep.subr.mxu0 %v213
      %347 = vmatpush2.msra.mxu0 %v212
      %348 = vmatprep.subr.mxu0 %v211
      %349 = vmatpush2.msra.mxu0 %v210
      %350 = vmatprep.subr.mxu0 %v209
      %351 = vmatpush2.msra.mxu0 %v208
      %352 = vmatprep.subr.mxu0 %v207
      %353 = vmatpush2.msra.mxu0 %v206
      %354 = vmatprep.subr.mxu0 %v205
      %355 = vmatpush2.msra.mxu0 %v204
      %356 = vmatprep.subr.mxu0 %v203
      %357 = vmatpush2.msra.mxu0 %v202
      %358 = vmatprep.subr.mxu0 %v201
      %359 = vmatpush2.msra.mxu0 %v200
      %360 = vmatprep.mubr.f32.mxu0 %v153
      %361 = vmatmul.mubr.f32.gmra.mxu0 %v152
      %v362 = vpop.f32.mrf.mxu0
      %v363 = vadd.f32 0.0, %v362
      %v364 = vpop.f32.mrf.mxu0
      %v365 = vadd.f32 0.0, %v364
      %366 = vmatprep.mubr.f32.mxu0 %v157
      %367 = vmatmul.mubr.f32.gmra.mxu0 %v156
      %v368 = vpop.f32.mrf.mxu0
      %v369 = vadd.f32 0.0, %v368
      %v370 = vpop.f32.mrf.mxu0
      %v371 = vadd.f32 0.0, %v370
      %372 = vmatprep.mubr.f32.mxu0 %v161
      %373 = vmatmul.mubr.f32.gmra.mxu0 %v160
      %v374 = vpop.f32.mrf.mxu0
      %v375 = vadd.f32 0.0, %v374
      %v376 = vpop.f32.mrf.mxu0
      %v377 = vadd.f32 0.0, %v376
      %378 = vmatprep.mubr.f32.mxu0 %v165
      %379 = vmatmul.mubr.f32.gmra.mxu0 %v164
      %v380 = vpop.f32.mrf.mxu0
      %v381 = vadd.f32 0.0, %v380
      %v382 = vpop.f32.mrf.mxu0
      %v383 = vadd.f32 0.0, %v382
      %384 = vdwg.mxu0
      %385 = vmatprep.subr.mxu0 %v263
      %386 = vmatpush1.msra.mxu0 %v262
      %387 = vmatprep.subr.mxu0 %v261
      %388 = vmatpush1.msra.mxu0 %v260
      %389 = vmatprep.subr.mxu0 %v259
      %390 = vmatpush1.msra.mxu0 %v258
      %391 = vmatprep.subr.mxu0 %v257
      %392 = vmatpush1.msra.mxu0 %v256
      %393 = vmatprep.subr.mxu0 %v255
      %394 = vmatpush1.msra.mxu0 %v254
      %395 = vmatprep.subr.mxu0 %v253
      %396 = vmatpush1.msra.mxu0 %v252
      %397 = vmatprep.subr.mxu0 %v251
      %398 = vmatpush1.msra.mxu0 %v250
      %399 = vmatprep.subr.mxu0 %v249
      %400 = vmatpush1.msra.mxu0 %v248
      %401 = vmatprep.subr.mxu0 %v247
      %402 = vmatpush1.msra.mxu0 %v246
      %403 = vmatprep.subr.mxu0 %v245
      %404 = vmatpush1.msra.mxu0 %v244
      %405 = vmatprep.subr.mxu0 %v243
      %406 = vmatpush1.msra.mxu0 %v242
      %407 = vmatprep.subr.mxu0 %v241
      %408 = vmatpush1.msra.mxu0 %v240
      %409 = vmatprep.subr.mxu0 %v239
      %410 = vmatpush1.msra.mxu0 %v238
      %411 = vmatprep.subr.mxu0 %v237
      %412 = vmatpush1.msra.mxu0 %v236
      %413 = vmatprep.subr.mxu0 %v235
      %414 = vmatpush1.msra.mxu0 %v234
      %415 = vmatprep.subr.mxu0 %v233
      %416 = vmatpush1.msra.mxu0 %v232
      %417 = vmatprep.subr.mxu0 %v295
      %418 = vmatpush2.msra.mxu0 %v294
      %419 = vmatprep.subr.mxu0 %v293
      %420 = vmatpush2.msra.mxu0 %v292
      %421 = vmatprep.subr.mxu0 %v291
      %422 = vmatpush2.msra.mxu0 %v290
      %423 = vmatprep.subr.mxu0 %v289
      %424 = vmatpush2.msra.mxu0 %v288
      %425 = vmatprep.subr.mxu0 %v287
      %426 = vmatpush2.msra.mxu0 %v286
      %427 = vmatprep.subr.mxu0 %v285
      %428 = vmatpush2.msra.mxu0 %v284
      %429 = vmatprep.subr.mxu0 %v283
      %430 = vmatpush2.msra.mxu0 %v282
      %431 = vmatprep.subr.mxu0 %v281
      %432 = vmatpush2.msra.mxu0 %v280
      %433 = vmatprep.subr.mxu0 %v279
      %434 = vmatpush2.msra.mxu0 %v278
      %435 = vmatprep.subr.mxu0 %v277
      %436 = vmatpush2.msra.mxu0 %v276
      %437 = vmatprep.subr.mxu0 %v275
      %438 = vmatpush2.msra.mxu0 %v274
      %439 = vmatprep.subr.mxu0 %v273
      %440 = vmatpush2.msra.mxu0 %v272
      %441 = vmatprep.subr.mxu0 %v271
      %442 = vmatpush2.msra.mxu0 %v270
      %443 = vmatprep.subr.mxu0 %v269
      %444 = vmatpush2.msra.mxu0 %v268
      %445 = vmatprep.subr.mxu0 %v267
      %446 = vmatpush2.msra.mxu0 %v266
      %447 = vmatprep.subr.mxu0 %v265
      %448 = vmatpush2.msra.mxu0 %v264
      %449 = vmatprep.mubr.f32.mxu0 %v155
      %450 = vmatmul.mubr.f32.gmra.mxu0 %v154
      %v451 = vpop.f32.mrf.mxu0
      %v452 = vadd.f32 %v363, %v451
      %v453 = vpop.f32.mrf.mxu0
      %v454 = vadd.f32 %v365, %v453
      %455 = vmatprep.mubr.f32.mxu0 %v159
      %456 = vmatmul.mubr.f32.gmra.mxu0 %v158
      %v457 = vpop.f32.mrf.mxu0
      %v458 = vadd.f32 %v369, %v457
      %v459 = vpop.f32.mrf.mxu0
      %v460 = vadd.f32 %v371, %v459
      %461 = vmatprep.mubr.f32.mxu0 %v163
      %462 = vmatmul.mubr.f32.gmra.mxu0 %v162
      %v463 = vpop.f32.mrf.mxu0
      %v464 = vadd.f32 %v375, %v463
      %v465 = vpop.f32.mrf.mxu0
      %v466 = vadd.f32 %v377, %v465
      %467 = vmatprep.mubr.f32.mxu0 %v167
      %468 = vmatmul.mubr.f32.gmra.mxu0 %v166
      %v469 = vpop.f32.mrf.mxu0
      %v470 = vadd.f32 %v381, %v469
      %v471 = vpop.f32.mrf.mxu0
      %v472 = vadd.f32 %v383, %v471
      %473 = vdwg.mxu0
      %v474 = vmax.f32 %v452, 1e-10
      %v475 = vmax.f32 %v454, 1e-10
      %v476 = vmax.f32 %v458, 1e-10
      %v477 = vmax.f32 %v460, 1e-10
      %v478 = vmax.f32 %v464, 1e-10
      %v479 = vmax.f32 %v466, 1e-10
      %v480 = vmax.f32 %v470, 1e-10
      %v481 = vmax.f32 %v472, 1e-10
      %v482 = vlog2.pop %v474
      %v483 = vmul.f32 %v482, 0.6931472
      %v484 = vlog2.pop %v475
      %v485 = vmul.f32 %v484, 0.6931472
      %v486 = vlog2.pop %v476
      %v487 = vmul.f32 %v486, 0.6931472
      %v488 = vlog2.pop %v477
      %v489 = vmul.f32 %v488, 0.6931472
      %v490 = vlog2.pop %v478
      %v491 = vmul.f32 %v490, 0.6931472
      %v492 = vlog2.pop %v479
      %v493 = vmul.f32 %v492, 0.6931472
      %v494 = vlog2.pop %v480
      %v495 = vmul.f32 %v494, 0.6931472
      %v496 = vlog2.pop %v481
      %v497 = vmul.f32 %v496, 0.6931472
      %v498 = vmul.f32 %v483, 0.4342945
      %v499 = vmul.f32 %v485, 0.4342945
      %v500 = vmul.f32 %v487, 0.4342945
      %v501 = vmul.f32 %v489, 0.4342945
      %v502 = vmul.f32 %v491, 0.4342945
      %v503 = vmul.f32 %v493, 0.4342945
      %v504 = vmul.f32 %v495, 0.4342945
      %v505 = vmul.f32 %v497, 0.4342945
      %506 = vst [vmem:[%s150] sm:$0xff] %v498
      %507 = vst [vmem:[%s150 + $0x8] sm:$0xff] %v499
      %508 = vst [vmem:[%s150 + $0x10] sm:$0xff] %v500
      %509 = vst [vmem:[%s150 + $0x18] sm:$0xff] %v501
      %510 = vst [vmem:[%s150 + $0x20] sm:$0xff] %v502
      %511 = vst [vmem:[%s150 + $0x28] sm:$0xff] %v503
      %512 = vst [vmem:[%s150 + $0x30] sm:$0xff] %v504
      %513 = vst [vmem:[%s150 + $0x38] sm:$0xff] %v505
      %s514 = smul.u32 4, %s13
      %p515 = scmp.lt.s32.totalorder %s514, 7
      %s516 = scalar_select %p515, %s514, 7
      %s517 = smul.addr %s516, 2
      %s518 = smul.addr %s517, 8
      %s519 = scalar_lea.vmem %s2, %s518
      // Predicated region
      $region29: #{whisper_encoder_forward.2} parent=27 // pred_check
        %p520 = pneg %p78
      $region30: #{whisper_encoder_forward.2} parent=27 // pred_check_branch
        %522 = sbr.rel (%p520) target = $region32
      $region31: #{whisper_encoder_forward.2} parent=27 // pred_region
        %s523 = smul.u32 4, %s13
      $region32: #{whisper_encoder_forward.2} parent=27 // pred_fallthru
        _
    $region28: #{whisper_encoder_forward.2} parent=5 // pred_fallthru
      _
    %p524 = scmp.le.s32.totalorder 2, %s8
    // Predicated region
    $region33: #{whisper_encoder_forward.2} parent=5 // pred_check
      %p525 = pneg %p524
    $region34: #{whisper_encoder_forward.2} parent=5 // pred_check_branch
      %527 = sbr.rel (%p525) target = $region36
    $region35: #{whisper_encoder_forward.2} parent=5 // pred_region
      %s528 = ssub.s32 %s8, 2
      // Predicated region
      $region37: #{whisper_encoder_forward.2} parent=35 // pred_check
        %p529 = pneg %p84
      $region38: #{whisper_encoder_forward.2} parent=35 // pred_check_branch
        %531 = sbr.rel (%p529) target = $region40
      $region39: #{whisper_encoder_forward.2} parent=35 // pred_region
        %s532 = smul.u32 4, %s14
        %p533 = scmp.lt.s32.totalorder %s532, 7
        %s534 = scalar_select %p533, %s532, 7
        %s535 = smul.addr %s534, 2
        %s536 = smul.addr %s535, 8
        %s537 = scalar_lea.vmem %s2, %s536
      $region40: #{whisper_encoder_forward.2} parent=35 // pred_fallthru
        _
    $region36: #{whisper_encoder_forward.2} parent=5 // pred_fallthru
      _
  $region6: #{whisper_encoder_forward.2} parent=0 // loop_footer
    %s12 = sadd.s32 1, %s8
  $region7: #{whisper_encoder_forward.2} parent=0 // loop_footer_branch
    %7 = sbr.rel target = $region3
  $region8: #{whisper_encoder_forward.2} parent=0 // loop_exit
    _

// kernel: whisper_encoder_forward.3
$region0: #{whisper_encoder_forward.3}
  #allocation0 [shape = 'u32[]', space=smem, size = 0x4, offset = 0x4, fixed_abs, tag = 'smem constant byte address 0x4 - core index']
  #allocation1 [shape = 'u32[144,128]{1,0:T(1,128)}', space=vmem, size = 0x12000, scoped, tag = 'internal scratch']
  %s0 = inlined_call_operand.vmem [shape: f32[64,256], index: 0, kind: input, shape index: {}]
  %s1 = inlined_call_operand.vmem [shape: bf16[3,128,64], index: 1, kind: input, shape index: {}]
  %s2 = inlined_call_operand.vmem [shape: f32[1,64], index: 2, kind: input, shape index: {}]
  %s3 = inlined_call_operand.vmem [shape: bf16[3,64,64], index: 3, kind: input, shape index: {}]
  %s4 = inlined_call_operand.vmem [shape: f32[1,64], index: 4, kind: input, shape index: {}]
  %s5 = inlined_call_operand.vmem [shape: f32[64,64], index: 5, kind: input, shape index: {}]
  %s6 = inlined_call_operand.vmem [shape: f32[2,4,64], index: 6, kind: input, shape index: {}]
  %s7 = inlined_call_operand.vmem [shape: bf16[2,64,192], index: 7, kind: input, shape index: {}]
  %s8 = inlined_call_operand.vmem [shape: f32[2,1,192], index: 8, kind: input, shape index: {}]
  %s9 = inlined_call_operand.vmem [shape: bf16[2,64,64], index: 9, kind: input, shape index: {}]
  %s10 = inlined_call_operand.vmem [shape: f32[2,1,64], index: 10, kind: input, shape index: {}]
  %s11 = inlined_call_operand.vmem [shape: bf16[2,64,128], index: 11, kind: input, shape index: {}]
  %s12 = inlined_call_operand.vmem [shape: f32[2,1,128], index: 12, kind: input, shape index: {}]
  %s13 = inlined_call_operand.vmem [shape: bf16[2,128,64], index: 13, kind: input, shape index: {}]
  %s14 = inlined_call_operand.vmem [shape: f32[2,1,64], index: 14, kind: input, shape index: {}]
  %s15 = inlined_call_operand.vmem [shape: f32[2,64], index: 15, kind: input, shape index: {}]
  %s16 = inlined_call_operand.hbm [shape: f32[64,64], index: 16, kind: output, shape index: {}]
  %s17 = sld [smem:[#allocation0]]
  $region109: #{whisper_encoder_forward.3} parent=0
    _
  %s19 = ssub.s32 1, %s17
  %s20 = scalar_select 0, %s19, %s17
  $region1: #{whisper_encoder_forward.3} parent=0
    #allocation2 [shape = 'u8[32768]{0}', space=vmem, size = 0x8000, scoped, tag = 'output window, operand 0, single buffered']
    #allocation3 [shape = 's32[2]{0}', space=sflag, size = 0x8, scoped, tag = 'scoped memory for whisper_encoder_forward.3']
    %21 = vsyncpa [#allocation3], 0
    loop: start=0, step=1, limit=6
    $region2: #{whisper_encoder_forward.3} parent=1 // loop_pre_header
      _
    $region3: #{whisper_encoder_forward.3} parent=1 // loop_header
      %s23 = sphi 0, %s27
      %p24 = scmp.ge.s32.totalorder %s23, 6
      %s31 = sphi 0, %s31
      %s33 = sphi 0, %s31
      %s34 = sphi 0, %s33
      %s48 = sphi 0, %s34
      %s52 = sphi 0, %s52
      %s54 = sphi 0, %s52
      %s55 = sphi 0, %s54
      %s69 = sphi 0, %s55
      %s73 = sphi 0, %s73
      %s75 = sphi 0, %s73
      %s76 = sphi 0, %s75
      %s90 = sphi 0, %s76
      %s94 = sphi 0, %s94
      %s96 = sphi 0, %s94
      %s97 = sphi 0, %s96
      %s111 = sphi 0, %s97
      %s115 = sphi 0, %s115
      %s117 = sphi 0, %s115
      %s118 = sphi 0, %s117
      %s132 = sphi 0, %s118
      %s136 = sphi 0, %s136
      %s138 = sphi 0, %s136
      %s139 = sphi 0, %s138
      %s153 = sphi 0, %s139
      %s169 = sphi 0, %s171
      %s172 = sphi 0, %s169
      %s173 = sphi 0, %s172
      %s189 = sphi 0, %s173
      %s205 = sphi 0, %s207
      %s208 = sphi 0, %s205
      %s209 = sphi 0, %s208
      %s225 = sphi 0, %s209
      %s241 = sphi 0, %s243
      %s244 = sphi 0, %s241
      %s245 = sphi 0, %s244
      %s261 = sphi 0, %s245
      %s277 = sphi 0, %s279
      %s280 = sphi 0, %s277
      %s281 = sphi 0, %s280
      %s297 = sphi 0, %s281
      %s313 = sphi 0, %s315
      %s316 = sphi 0, %s313
      %s317 = sphi 0, %s316
      %s333 = sphi 0, %s317
      %s349 = sphi 0, %s351
      %s352 = sphi 0, %s349
      %s353 = sphi 0, %s352
      %s369 = sphi 0, %s353
      %s385 = sphi 0, %s387
      %s388 = sphi 0, %s385
      %s389 = sphi 0, %s388
      %s405 = sphi 0, %s389
      %s421 = sphi 0, %s423
      %s424 = sphi 0, %s421
      %s425 = sphi 0, %s424
      %s441 = sphi 0, %s425
      %s457 = sphi 0, %s459
      %s460 = sphi 0, %s457
      %s461 = sphi 0, %s460
      %s477 = sphi 0, %s461
      %s481 = sphi 0, %s481
      %s483 = sphi 0, %s481
      %s484 = sphi 0, %s483
      %s498 = sphi 0, %s484
      %s502 = sphi 0, %s502
      %s504 = sphi 0, %s502
      %s505 = sphi 0, %s504
      %s519 = sphi 0, %s505
    $region4: #{whisper_encoder_forward.3} parent=1 // loop_header_branch
      %26 = sbr.rel (%p24) target = $region8
    $region5: #{whisper_encoder_forward.3} parent=1 // loop_body
      %s28 = ssub.s32 %s23, 1
      %s29 = ssub.s32 %s23, 2
      %s30 = sadd.s32 %s23, 1
      %s32 = sadd.s32 %s31, 1
      %p35 = scmp.eq.s32.totalorder %s23, 3
      %p36 = scmp.ne.s32.totalorder %s31, %s33
      %p37 = scmp.eq.s32.totalorder %s23, 0
      %p38 = por %p36, %p37
      %p39 = scmp.ne.s32.totalorder %s31, %s33
      %p40 = scmp.eq.s32.totalorder %s28, 3
      %p41 = por %p39, %p40
      %p42 = scmp.ne.s32.totalorder %s33, %s34
      %p43 = scmp.eq.s32.totalorder %s28, 0
      %p44 = por %p42, %p43
      %p45 = scmp.ne.s32.totalorder %s33, %s34
      %p46 = scmp.eq.s32.totalorder %s29, 3
      %p47 = por %p45, %p46
      %p49 = scmp.ne.s32.totalorder %s34, %s48
      %p50 = scmp.eq.s32.totalorder %s29, 0
      %p51 = por %p49, %p50
      %s53 = sadd.s32 %s52, 1
      %p56 = scmp.eq.s32.totalorder %s23, 3
      %p57 = scmp.ne.s32.totalorder %s52, %s54
      %p58 = scmp.eq.s32.totalorder %s23, 0
      %p59 = por %p57, %p58
      %p60 = scmp.ne.s32.totalorder %s52, %s54
      %p61 = scmp.eq.s32.totalorder %s28, 3
      %p62 = por %p60, %p61
      %p63 = scmp.ne.s32.totalorder %s54, %s55
      %p64 = scmp.eq.s32.totalorder %s28, 0
      %p65 = por %p63, %p64
      %p66 = scmp.ne.s32.totalorder %s54, %s55
      %p67 = scmp.eq.s32.totalorder %s29, 3
      %p68 = por %p66, %p67
      %p70 = scmp.ne.s32.totalorder %s55, %s69
      %p71 = scmp.eq.s32.totalorder %s29, 0
      %p72 = por %p70, %p71
      %s74 = sadd.s32 %s73, 1
      %p77 = scmp.eq.s32.totalorder %s23, 3
      %p78 = scmp.ne.s32.totalorder %s73, %s75
      %p79 = scmp.eq.s32.totalorder %s23, 0
      %p80 = por %p78, %p79
      %p81 = scmp.ne.s32.totalorder %s73, %s75
      %p82 = scmp.eq.s32.totalorder %s28, 3
      %p83 = por %p81, %p82
      %p84 = scmp.ne.s32.totalorder %s75, %s76
      %p85 = scmp.eq.s32.totalorder %s28, 0
      %p86 = por %p84, %p85
      %p87 = scmp.ne.s32.totalorder %s75, %s76
      %p88 = scmp.eq.s32.totalorder %s29, 3
      %p89 = por %p87, %p88
      %p91 = scmp.ne.s32.totalorder %s76, %s90
      %p92 = scmp.eq.s32.totalorder %s29, 0
      %p93 = por %p91, %p92
      %s95 = sadd.s32 %s94, 1
      %p98 = scmp.eq.s32.totalorder %s23, 3
      %p99 = scmp.ne.s32.totalorder %s94, %s96
      %p100 = scmp.eq.s32.totalorder %s23, 0
      %p101 = por %p99, %p100
      %p102 = scmp.ne.s32.totalorder %s94, %s96
      %p103 = scmp.eq.s32.totalorder %s28, 3
      %p104 = por %p102, %p103
      %p105 = scmp.ne.s32.totalorder %s96, %s97
      %p106 = scmp.eq.s32.totalorder %s28, 0
      %p107 = por %p105, %p106
      %p108 = scmp.ne.s32.totalorder %s96, %s97
      %p109 = scmp.eq.s32.totalorder %s29, 3
      %p110 = por %p108, %p109
      %p112 = scmp.ne.s32.totalorder %s97, %s111
      %p113 = scmp.eq.s32.totalorder %s29, 0
      %p114 = por %p112, %p113
      %s116 = sadd.s32 %s115, 1
      %p119 = scmp.eq.s32.totalorder %s23, 3
      %p120 = scmp.ne.s32.totalorder %s115, %s117
      %p121 = scmp.eq.s32.totalorder %s23, 0
      %p122 = por %p120, %p121
      %p123 = scmp.ne.s32.totalorder %s115, %s117
      %p124 = scmp.eq.s32.totalorder %s28, 3
      %p125 = por %p123, %p124
      %p126 = scmp.ne.s32.totalorder %s117, %s118
      %p127 = scmp.eq.s32.totalorder %s28, 0
      %p128 = por %p126, %p127
      %p129 = scmp.ne.s32.totalorder %s117, %s118
      %p130 = scmp.eq.s32.totalorder %s29, 3
      %p131 = por %p129, %p130
      %p133 = scmp.ne.s32.totalorder %s118, %s132
      %p134 = scmp.eq.s32.totalorder %s29, 0
      %p135 = por %p133, %p134
      %s137 = sadd.s32 %s136, 1
      %p140 = scmp.eq.s32.totalorder %s23, 3
      %p141 = scmp.ne.s32.totalorder %s136, %s138
      %p142 = scmp.eq.s32.totalorder %s23, 0
      %p143 = por %p141, %p142
      %p144 = scmp.ne.s32.totalorder %s136, %s138
      %p145 = scmp.eq.s32.totalorder %s28, 3
      %p146 = por %p144, %p145
      %p147 = scmp.ne.s32.totalorder %s138, %s139
      %p148 = scmp.eq.s32.totalorder %s28, 0
      %p149 = por %p147, %p148
      %p150 = scmp.ne.s32.totalorder %s138, %s139
      %p151 = scmp.eq.s32.totalorder %s29, 3
      %p152 = por %p150, %p151
      %p154 = scmp.ne.s32.totalorder %s139, %s153
      %p155 = scmp.eq.s32.totalorder %s29, 0
      %p156 = por %p154, %p155
      %s157 = ssub.s32 %s23, 1
      %p158 = scmp.lt.s32.totalorder %s157, 1
      %s159 = scalar_select %p158, %s157, 1
      %p160 = scmp.gt.s32.totalorder %s159, 0
      %s161 = scalar_select %p160, %s159, 0
      %s162 = ssub.s32 %s30, 1
      %p163 = scmp.lt.s32.totalorder %s162, 1
      %s164 = scalar_select %p163, %s162, 1
      %p165 = scmp.gt.s32.totalorder %s164, 0
      %s166 = scalar_select %p165, %s164, 0
      %s167 = ssub.s32 %s161, %s166
      %p168 = scmp.eq.s32.totalorder %s167, 0
      %s170 = sadd.s32 %s169, 1
      %s171 = scalar_select %p168, %s169, %s170
      %p174 = pneg %p168
      %p175 = scmp.eq.s32.totalorder %s23, 3
      %p176 = por %p174, %p175
      %p177 = scmp.ne.s32.totalorder %s169, %s172
      %p178 = scmp.eq.s32.totalorder %s23, 0
      %p179 = por %p177, %p178
      %p180 = scmp.ne.s32.totalorder %s169, %s172
      %p181 = scmp.eq.s32.totalorder %s28, 3
      %p182 = por %p180, %p181
      %p183 = scmp.ne.s32.totalorder %s172, %s173
      %p184 = scmp.eq.s32.totalorder %s28, 0
      %p185 = por %p183, %p184
      %p186 = scmp.ne.s32.totalorder %s172, %s173
      %p187 = scmp.eq.s32.totalorder %s29, 3
      %p188 = por %p186, %p187
      %p190 = scmp.ne.s32.totalorder %s173, %s189
      %p191 = scmp.eq.s32.totalorder %s29, 0
      %p192 = por %p190, %p191
      %s193 = ssub.s32 %s23, 1
      %p194 = scmp.lt.s32.totalorder %s193, 1
      %s195 = scalar_select %p194, %s193, 1
      %p196 = scmp.gt.s32.totalorder %s195, 0
      %s197 = scalar_select %p196, %s195, 0
      %s198 = ssub.s32 %s30, 1
      %p199 = scmp.lt.s32.totalorder %s198, 1
      %s200 = scalar_select %p199, %s198, 1
      %p201 = scmp.gt.s32.totalorder %s200, 0
      %s202 = scalar_select %p201, %s200, 0
      %s203 = ssub.s32 %s197, %s202
      %p204 = scmp.eq.s32.totalorder %s203, 0
      %s206 = sadd.s32 %s205, 1
      %s207 = scalar_select %p204, %s205, %s206
      %p210 = pneg %p204
      %p211 = scmp.eq.s32.totalorder %s23, 3
      %p212 = por %p210, %p211
      %p213 = scmp.ne.s32.totalorder %s205, %s208
      %p214 = scmp.eq.s32.totalorder %s23, 0
      %p215 = por %p213, %p214
      %p216 = scmp.ne.s32.totalorder %s205, %s208
      %p217 = scmp.eq.s32.totalorder %s28, 3
      %p218 = por %p216, %p217
      %p219 = scmp.ne.s32.totalorder %s208, %s209
      %p220 = scmp.eq.s32.totalorder %s28, 0
      %p221 = por %p219, %p220
      %p222 = scmp.ne.s32.totalorder %s208, %s209
      %p223 = scmp.eq.s32.totalorder %s29, 3
      %p224 = por %p222, %p223
      %p226 = scmp.ne.s32.totalorder %s209, %s225
      %p227 = scmp.eq.s32.totalorder %s29, 0
      %p228 = por %p226, %p227
      %s229 = ssub.s32 %s23, 1
      %p230 = scmp.lt.s32.totalorder %s229, 1
      %s231 = scalar_select %p230, %s229, 1
      %p232 = scmp.gt.s32.totalorder %s231, 0
      %s233 = scalar_select %p232, %s231, 0
      %s234 = ssub.s32 %s30, 1
      %p235 = scmp.lt.s32.totalorder %s234, 1
      %s236 = scalar_select %p235, %s234, 1
      %p237 = scmp.gt.s32.totalorder %s236, 0
      %s238 = scalar_select %p237, %s236, 0
      %s239 = ssub.s32 %s233, %s238
      %p240 = scmp.eq.s32.totalorder %s239, 0
      %s242 = sadd.s32 %s241, 1
      %s243 = scalar_select %p240, %s241, %s242
      %p246 = pneg %p240
      %p247 = scmp.eq.s32.totalorder %s23, 3
      %p248 = por %p246, %p247
      %p249 = scmp.ne.s32.totalorder %s241, %s244
      %p250 = scmp.eq.s32.totalorder %s23, 0
      %p251 = por %p249, %p250
      %p252 = scmp.ne.s32.totalorder %s241, %s244
      %p253 = scmp.eq.s32.totalorder %s28, 3
      %p254 = por %p252, %p253
      %p255 = scmp.ne.s32.totalorder %s244, %s245
      %p256 = scmp.eq.s32.totalorder %s28, 0
      %p257 = por %p255, %p256
      %p258 = scmp.ne.s32.totalorder %s244, %s245
      %p259 = scmp.eq.s32.totalorder %s29, 3
      %p260 = por %p258, %p259
      %p262 = scmp.ne.s32.totalorder %s245, %s261
      %p263 = scmp.eq.s32.totalorder %s29, 0
      %p264 = por %p262, %p263
      %s265 = ssub.s32 %s23, 1
      %p266 = scmp.lt.s32.totalorder %s265, 1
      %s267 = scalar_select %p266, %s265, 1
      %p268 = scmp.gt.s32.totalorder %s267, 0
      %s269 = scalar_select %p268, %s267, 0
      %s270 = ssub.s32 %s30, 1
      %p271 = scmp.lt.s32.totalorder %s270, 1
      %s272 = scalar_select %p271, %s270, 1
      %p273 = scmp.gt.s32.totalorder %s272, 0
      %s274 = scalar_select %p273, %s272, 0
      %s275 = ssub.s32 %s269, %s274
      %p276 = scmp.eq.s32.totalorder %s275, 0
      %s278 = sadd.s32 %s277, 1
      %s279 = scalar_select %p276, %s277, %s278
      %p282 = pneg %p276
      %p283 = scmp.eq.s32.totalorder %s23, 3
      %p284 = por %p282, %p283
      %p285 = scmp.ne.s32.totalorder %s277, %s280
      %p286 = scmp.eq.s32.totalorder %s23, 0
      %p287 = por %p285, %p286
      %p288 = scmp.ne.s32.totalorder %s277, %s280
      %p289 = scmp.eq.s32.totalorder %s28, 3
      %p290 = por %p288, %p289
      %p291 = scmp.ne.s32.totalorder %s280, %s281
      %p292 = scmp.eq.s32.totalorder %s28, 0
      %p293 = por %p291, %p292
      %p294 = scmp.ne.s32.totalorder %s280, %s281
      %p295 = scmp.eq.s32.totalorder %s29, 3
      %p296 = por %p294, %p295
      %p298 = scmp.ne.s32.totalorder %s281, %s297
      %p299 = scmp.eq.s32.totalorder %s29, 0
      %p300 = por %p298, %p299
      %s301 = ssub.s32 %s23, 1
      %p302 = scmp.lt.s32.totalorder %s301, 1
      %s303 = scalar_select %p302, %s301, 1
      %p304 = scmp.gt.s32.totalorder %s303, 0
      %s305 = scalar_select %p304, %s303, 0
      %s306 = ssub.s32 %s30, 1
      %p307 = scmp.lt.s32.totalorder %s306, 1
      %s308 = scalar_select %p307, %s306, 1
      %p309 = scmp.gt.s32.totalorder %s308, 0
      %s310 = scalar_select %p309, %s308, 0
      %s311 = ssub.s32 %s305, %s310
      %p312 = scmp.eq.s32.totalorder %s311, 0
      %s314 = sadd.s32 %s313, 1
      %s315 = scalar_select %p312, %s313, %s314
      %p318 = pneg %p312
      %p319 = scmp.eq.s32.totalorder %s23, 3
      %p320 = por %p318, %p319
      %p321 = scmp.ne.s32.totalorder %s313, %s316
      %p322 = scmp.eq.s32.totalorder %s23, 0
      %p323 = por %p321, %p322
      %p324 = scmp.ne.s32.totalorder %s313, %s316
      %p325 = scmp.eq.s32.totalorder %s28, 3
      %p326 = por %p324, %p325
      %p327 = scmp.ne.s32.totalorder %s316, %s317
      %p328 = scmp.eq.s32.totalorder %s28, 0
      %p329 = por %p327, %p328
      %p330 = scmp.ne.s32.totalorder %s316, %s317
      %p331 = scmp.eq.s32.totalorder %s29, 3
      %p332 = por %p330, %p331
      %p334 = scmp.ne.s32.totalorder %s317, %s333
      %p335 = scmp.eq.s32.totalorder %s29, 0
      %p336 = por %p334, %p335
      %s337 = ssub.s32 %s23, 1
      %p338 = scmp.lt.s32.totalorder %s337, 1
      %s339 = scalar_select %p338, %s337, 1
      %p340 = scmp.gt.s32.totalorder %s339, 0
      %s341 = scalar_select %p340, %s339, 0
      %s342 = ssub.s32 %s30, 1
      %p343 = scmp.lt.s32.totalorder %s342, 1
      %s344 = scalar_select %p343, %s342, 1
      %p345 = scmp.gt.s32.totalorder %s344, 0
      %s346 = scalar_select %p345, %s344, 0
      %s347 = ssub.s32 %s341, %s346
      %p348 = scmp.eq.s32.totalorder %s347, 0
      %s350 = sadd.s32 %s349, 1
      %s351 = scalar_select %p348, %s349, %s350
      %p354 = pneg %p348
      %p355 = scmp.eq.s32.totalorder %s23, 3
      %p356 = por %p354, %p355
      %p357 = scmp.ne.s32.totalorder %s349, %s352
      %p358 = scmp.eq.s32.totalorder %s23, 0
      %p359 = por %p357, %p358
      %p360 = scmp.ne.s32.totalorder %s349, %s352
      %p361 = scmp.eq.s32.totalorder %s28, 3
      %p362 = por %p360, %p361
      %p363 = scmp.ne.s32.totalorder %s352, %s353
      %p364 = scmp.eq.s32.totalorder %s28, 0
      %p365 = por %p363, %p364
      %p366 = scmp.ne.s32.totalorder %s352, %s353
      %p367 = scmp.eq.s32.totalorder %s29, 3
      %p368 = por %p366, %p367
      %p370 = scmp.ne.s32.totalorder %s353, %s369
      %p371 = scmp.eq.s32.totalorder %s29, 0
      %p372 = por %p370, %p371
      %s373 = ssub.s32 %s23, 1
      %p374 = scmp.lt.s32.totalorder %s373, 1
      %s375 = scalar_select %p374, %s373, 1
      %p376 = scmp.gt.s32.totalorder %s375, 0
      %s377 = scalar_select %p376, %s375, 0
      %s378 = ssub.s32 %s30, 1
      %p379 = scmp.lt.s32.totalorder %s378, 1
      %s380 = scalar_select %p379, %s378, 1
      %p381 = scmp.gt.s32.totalorder %s380, 0
      %s382 = scalar_select %p381, %s380, 0
      %s383 = ssub.s32 %s377, %s382
      %p384 = scmp.eq.s32.totalorder %s383, 0
      %s386 = sadd.s32 %s385, 1
      %s387 = scalar_select %p384, %s385, %s386
      %p390 = pneg %p384
      %p391 = scmp.eq.s32.totalorder %s23, 3
      %p392 = por %p390, %p391
      %p393 = scmp.ne.s32.totalorder %s385, %s388
      %p394 = scmp.eq.s32.totalorder %s23, 0
      %p395 = por %p393, %p394
      %p396 = scmp.ne.s32.totalorder %s385, %s388
      %p397 = scmp.eq.s32.totalorder %s28, 3
      %p398 = por %p396, %p397
      %p399 = scmp.ne.s32.totalorder %s388, %s389
      %p400 = scmp.eq.s32.totalorder %s28, 0
      %p401 = por %p399, %p400
      %p402 = scmp.ne.s32.totalorder %s388, %s389
      %p403 = scmp.eq.s32.totalorder %s29, 3
      %p404 = por %p402, %p403
      %p406 = scmp.ne.s32.totalorder %s389, %s405
      %p407 = scmp.eq.s32.totalorder %s29, 0
      %p408 = por %p406, %p407
      %s409 = ssub.s32 %s23, 1
      %p410 = scmp.lt.s32.totalorder %s409, 1
      %s411 = scalar_select %p410, %s409, 1
      %p412 = scmp.gt.s32.totalorder %s411, 0
      %s413 = scalar_select %p412, %s411, 0
      %s414 = ssub.s32 %s30, 1
      %p415 = scmp.lt.s32.totalorder %s414, 1
      %s416 = scalar_select %p415, %s414, 1
      %p417 = scmp.gt.s32.totalorder %s416, 0
      %s418 = scalar_select %p417, %s416, 0
      %s419 = ssub.s32 %s413, %s418
      %p420 = scmp.eq.s32.totalorder %s419, 0
      %s422 = sadd.s32 %s421, 1
      %s423 = scalar_select %p420, %s421, %s422
      %p426 = pneg %p420
      %p427 = scmp.eq.s32.totalorder %s23, 3
      %p428 = por %p426, %p427
      %p429 = scmp.ne.s32.totalorder %s421, %s424
      %p430 = scmp.eq.s32.totalorder %s23, 0
      %p431 = por %p429, %p430
      %p432 = scmp.ne.s32.totalorder %s421, %s424
      %p433 = scmp.eq.s32.totalorder %s28, 3
      %p434 = por %p432, %p433
      %p435 = scmp.ne.s32.totalorder %s424, %s425
      %p436 = scmp.eq.s32.totalorder %s28, 0
      %p437 = por %p435, %p436
      %p438 = scmp.ne.s32.totalorder %s424, %s425
      %p439 = scmp.eq.s32.totalorder %s29, 3
      %p440 = por %p438, %p439
      %p442 = scmp.ne.s32.totalorder %s425, %s441
      %p443 = scmp.eq.s32.totalorder %s29, 0
      %p444 = por %p442, %p443
      %s445 = ssub.s32 %s23, 1
      %p446 = scmp.lt.s32.totalorder %s445, 1
      %s447 = scalar_select %p446, %s445, 1
      %p448 = scmp.gt.s32.totalorder %s447, 0
      %s449 = scalar_select %p448, %s447, 0
      %s450 = ssub.s32 %s30, 1
      %p451 = scmp.lt.s32.totalorder %s450, 1
      %s452 = scalar_select %p451, %s450, 1
      %p453 = scmp.gt.s32.totalorder %s452, 0
      %s454 = scalar_select %p453, %s452, 0
      %s455 = ssub.s32 %s449, %s454
      %p456 = scmp.eq.s32.totalorder %s455, 0
      %s458 = sadd.s32 %s457, 1
      %s459 = scalar_select %p456, %s457, %s458
      %p462 = pneg %p456
      %p463 = scmp.eq.s32.totalorder %s23, 3
      %p464 = por %p462, %p463
      %p465 = scmp.ne.s32.totalorder %s457, %s460
      %p466 = scmp.eq.s32.totalorder %s23, 0
      %p467 = por %p465, %p466
      %p468 = scmp.ne.s32.totalorder %s457, %s460
      %p469 = scmp.eq.s32.totalorder %s28, 3
      %p470 = por %p468, %p469
      %p471 = scmp.ne.s32.totalorder %s460, %s461
      %p472 = scmp.eq.s32.totalorder %s28, 0
      %p473 = por %p471, %p472
      %p474 = scmp.ne.s32.totalorder %s460, %s461
      %p475 = scmp.eq.s32.totalorder %s29, 3
      %p476 = por %p474, %p475
      %p478 = scmp.ne.s32.totalorder %s461, %s477
      %p479 = scmp.eq.s32.totalorder %s29, 0
      %p480 = por %p478, %p479
      %s482 = sadd.s32 %s481, 1
      %p485 = scmp.eq.s32.totalorder %s23, 3
      %p486 = scmp.ne.s32.totalorder %s481, %s483
      %p487 = scmp.eq.s32.totalorder %s23, 0
      %p488 = por %p486, %p487
      %p489 = scmp.ne.s32.totalorder %s481, %s483
      %p490 = scmp.eq.s32.totalorder %s28, 3
      %p491 = por %p489, %p490
      %p492 = scmp.ne.s32.totalorder %s483, %s484
      %p493 = scmp.eq.s32.totalorder %s28, 0
      %p494 = por %p492, %p493
      %p495 = scmp.ne.s32.totalorder %s483, %s484
      %p496 = scmp.eq.s32.totalorder %s29, 3
      %p497 = por %p495, %p496
      %p499 = scmp.ne.s32.totalorder %s484, %s498
      %p500 = scmp.eq.s32.totalorder %s29, 0
      %p501 = por %p499, %p500
      %s503 = sadd.s32 %s502, 1
      %p506 = scmp.eq.s32.totalorder %s23, 3
      %p507 = scmp.ne.s32.totalorder %s502, %s504
      %p508 = scmp.eq.s32.totalorder %s23, 0
      %p509 = por %p507, %p508
      %p510 = scmp.ne.s32.totalorder %s502, %s504
      %p511 = scmp.eq.s32.totalorder %s28, 3
      %p512 = por %p510, %p511
      %p513 = scmp.ne.s32.totalorder %s504, %s505
      %p514 = scmp.eq.s32.totalorder %s28, 0
      %p515 = por %p513, %p514
      %p516 = scmp.ne.s32.totalorder %s504, %s505
      %p517 = scmp.eq.s32.totalorder %s29, 3
      %p518 = por %p516, %p517
      %p520 = scmp.ne.s32.totalorder %s505, %s519
      %p521 = scmp.eq.s32.totalorder %s29, 0
      %p522 = por %p520, %p521
      %p523 = scmp.le.s32.totalorder 1, %s23
      %p524 = scmp.lt.s32.totalorder %s23, 5
      %p525 = pnand %p523, %p524
      %p526 = pneg %p525
      // Predicated region
      $region9: #{whisper_encoder_forward.3} parent=5 // pred_check
        _
      $region10: #{whisper_encoder_forward.3} parent=5 // pred_check_branch
        %528 = sbr.rel (%p525) target = $region12
      $region11: #{whisper_encoder_forward.3} parent=5 // pred_region
        %s529 = ssub.s32 %s23, 1
        // Predicated region
        $region13: #{whisper_encoder_forward.3} parent=11 // pred_check
          %p530 = pneg %p44
        $region14: #{whisper_encoder_forward.3} parent=11 // pred_check_branch
          %532 = sbr.rel (%p530) target = $region16
        $region15: #{whisper_encoder_forward.3} parent=11 // pred_region
          _
        $region16: #{whisper_encoder_forward.3} parent=11 // pred_fallthru
          _
        // Predicated region
        $region17: #{whisper_encoder_forward.3} parent=11 // pred_check
          %p533 = pneg %p65
        $region18: #{whisper_encoder_forward.3} parent=11 // pred_check_branch
          %535 = sbr.rel (%p533) target = $region20
        $region19: #{whisper_encoder_forward.3} parent=11 // pred_region
          _
        $region20: #{whisper_encoder_forward.3} parent=11 // pred_fallthru
          _
        // Predicated region
        $region21: #{whisper_encoder_forward.3} parent=11 // pred_check
          %p536 = pneg %p86
        $region22: #{whisper_encoder_forward.3} parent=11 // pred_check_branch
          %538 = sbr.rel (%p536) target = $region24
        $region23: #{whisper_encoder_forward.3} parent=11 // pred_region
          _
        $region24: #{whisper_encoder_forward.3} parent=11 // pred_fallthru
          _
        // Predicated region
        $region25: #{whisper_encoder_forward.3} parent=11 // pred_check
          %p539 = pneg %p107
        $region26: #{whisper_encoder_forward.3} parent=11 // pred_check_branch
          %541 = sbr.rel (%p539) target = $region28
        $region27: #{whisper_encoder_forward.3} parent=11 // pred_region
          _
        $region28: #{whisper_encoder_forward.3} parent=11 // pred_fallthru
          _
        // Predicated region
        $region29: #{whisper_encoder_forward.3} parent=11 // pred_check
          %p542 = pneg %p128
        $region30: #{whisper_encoder_forward.3} parent=11 // pred_check_branch
          %544 = sbr.rel (%p542) target = $region32
        $region31: #{whisper_encoder_forward.3} parent=11 // pred_region
          _
        $region32: #{whisper_encoder_forward.3} parent=11 // pred_fallthru
          _
        // Predicated region
        $region33: #{whisper_encoder_forward.3} parent=11 // pred_check
          %p545 = pneg %p149
        $region34: #{whisper_encoder_forward.3} parent=11 // pred_check_branch
          %547 = sbr.rel (%p545) target = $region36
        $region35: #{whisper_encoder_forward.3} parent=11 // pred_region
          _
        $region36: #{whisper_encoder_forward.3} parent=11 // pred_fallthru
          _
        // Predicated region
        $region37: #{whisper_encoder_forward.3} parent=11 // pred_check
          %p548 = pneg %p494
        $region38: #{whisper_encoder_forward.3} parent=11 // pred_check_branch
          %550 = sbr.rel (%p548) target = $region40
        $region39: #{whisper_encoder_forward.3} parent=11 // pred_region
          _
        $region40: #{whisper_encoder_forward.3} parent=11 // pred_fallthru
          _
      $region12: #{whisper_encoder_forward.3} parent=5 // pred_fallthru
        _
      %p551 = scmp.lt.s32.totalorder %s23, 4
      // Predicated region
      $region41: #{whisper_encoder_forward.3} parent=5 // pred_check
        %p552 = pneg %p551
      $region42: #{whisper_encoder_forward.3} parent=5 // pred_check_branch
        %554 = sbr.rel (%p552) target = $region44
      $region43: #{whisper_encoder_forward.3} parent=5 // pred_region
        // Predicated region
        $region45: #{whisper_encoder_forward.3} parent=43 // pred_check
          %p555 = pneg %p179
        $region46: #{whisper_encoder_forward.3} parent=43 // pred_check_branch
          %557 = sbr.rel (%p555) target = $region48
        $region47: #{whisper_encoder_forward.3} parent=43 // pred_region
          %s558 = ssub.s32 %s23, 1
          %p559 = scmp.lt.s32.totalorder %s558, 1
          %s560 = scalar_select %p559, %s558, 1
          %p561 = scmp.gt.s32.totalorder %s560, 0
          %s562 = scalar_select %p561, %s560, 0
          %p563 = scmp.lt.s32.totalorder %s562, 1
          %s564 = scalar_select %p563, %s562, 1
          %s565 = smul.addr %s564, 4
          %s566 = scalar_lea.vmem %s6, %s565
          %s567 = ssub.s32 %s23, 1
          %p568 = scmp.lt.s32.totalorder %s567, 1
          %s569 = scalar_select %p568, %s567, 1
          %p570 = scmp.gt.s32.totalorder %s569, 0
          %s571 = scalar_select %p570, %s569, 0
        $region48: #{whisper_encoder_forward.3} parent=43 // pred_fallthru
          _
        // Predicated region
        $region49: #{whisper_encoder_forward.3} parent=43 // pred_check
          %p572 = pneg %p215
        $region50: #{whisper_encoder_forward.3} parent=43 // pred_check_branch
          %574 = sbr.rel (%p572) target = $region52
        $region51: #{whisper_encoder_forward.3} parent=43 // pred_region
          %s575 = ssub.s32 %s23, 1
          %p576 = scmp.lt.s32.totalorder %s575, 1
          %s577 = scalar_select %p576, %s575, 1
          %p578 = scmp.gt.s32.totalorder %s577, 0
          %s579 = scalar_select %p578, %s577, 0
          %p580 = scmp.lt.s32.totalorder %s579, 1
          %s581 = scalar_select %p580, %s579, 1
          %s582 = smul.addr %s581, 16
          %s583 = smul.addr %s582, 4
          %s584 = scalar_lea.vmem %s7, %s583
          %s585 = ssub.s32 %s23, 1
          %p586 = scmp.lt.s32.totalorder %s585, 1
          %s587 = scalar_select %p586, %s585, 1
          %p588 = scmp.gt.s32.totalorder %s587, 0
          %s589 = scalar_select %p588, %s587, 0
        $region52: #{whisper_encoder_forward.3} parent=43 // pred_fallthru
          _
        // Predicated region
        $region53: #{whisper_encoder_forward.3} parent=43 // pred_check
          %p590 = pneg %p251
        $region54: #{whisper_encoder_forward.3} parent=43 // pred_check_branch
          %592 = sbr.rel (%p590) target = $region56
        $region55: #{whisper_encoder_forward.3} parent=43 // pred_region
          %s593 = ssub.s32 %s23, 1
          %p594 = scmp.lt.s32.totalorder %s593, 1
          %s595 = scalar_select %p594, %s593, 1
          %p596 = scmp.gt.s32.totalorder %s595, 0
          %s597 = scalar_select %p596, %s595, 0
          %p598 = scmp.lt.s32.totalorder %s597, 1
          %s599 = scalar_select %p598, %s597, 1
          %s600 = smul.addr %s599, 2
          %s601 = scalar_lea.vmem %s8, %s600
          %s602 = ssub.s32 %s23, 1
          %p603 = scmp.lt.s32.totalorder %s602, 1
          %s604 = scalar_select %p603, %s602, 1
          %p605 = scmp.gt.s32.totalorder %s604, 0
          %s606 = scalar_select %p605, %s604, 0
        $region56: #{whisper_encoder_forward.3} parent=43 // pred_fallthru
          _
        // Predicated region
        $region57: #{whisper_encoder_forward.3} parent=43 // pred_check
          %p607 = pneg %p287
        $region58: #{whisper_encoder_forward.3} parent=43 // pred_check_branch
          %609 = sbr.rel (%p607) target = $region60
        $region59: #{whisper_encoder_forward.3} parent=43 // pred_region
          %s610 = ssub.s32 %s23, 1
          %p611 = scmp.lt.s32.totalorder %s610, 1
          %s612 = scalar_select %p611, %s610, 1
          %p613 = scmp.gt.s32.totalorder %s612, 0
          %s614 = scalar_select %p613, %s612, 0
          %p615 = scmp.lt.s32.totalorder %s614, 1
          %s616 = scalar_select %p615, %s614, 1
          %s617 = smul.addr %s616, 8
          %s618 = smul.addr %s617, 4
          %s619 = scalar_lea.vmem %s9, %s618
          %s620 = ssub.s32 %s23, 1
          %p621 = scmp.lt.s32.totalorder %s620, 1
          %s622 = scalar_select %p621, %s620, 1
          %p623 = scmp.gt.s32.totalorder %s622, 0
          %s624 = scalar_select %p623, %s622, 0
        $region60: #{whisper_encoder_forward.3} parent=43 // pred_fallthru
          _
        // Predicated region
        $region61: #{whisper_encoder_forward.3} parent=43 // pred_check
          %p625 = pneg %p323
        $region62: #{whisper_encoder_forward.3} parent=43 // pred_check_branch
          %627 = sbr.rel (%p625) target = $region64
        $region63: #{whisper_encoder_forward.3} parent=43 // pred_region
          %s628 = ssub.s32 %s23, 1
          %p629 = scmp.lt.s32.totalorder %s628, 1
          %s630 = scalar_select %p629, %s628, 1
          %p631 = scmp.gt.s32.totalorder %s630, 0
          %s632 = scalar_select %p631, %s630, 0
          %p633 = scmp.lt.s32.totalorder %s632, 1
          %s634 = scalar_select %p633, %s632, 1
          %s635 = scalar_lea.vmem %s10, %s634
          %s636 = ssub.s32 %s23, 1
          %p637 = scmp.lt.s32.totalorder %s636, 1
          %s638 = scalar_select %p637, %s636, 1
          %p639 = scmp.gt.s32.totalorder %s638, 0
          %s640 = scalar_select %p639, %s638, 0
        $region64: #{whisper_encoder_forward.3} parent=43 // pred_fallthru
          _
        // Predicated region
        $region65: #{whisper_encoder_forward.3} parent=43 // pred_check
          %p641 = pneg %p359
        $region66: #{whisper_encoder_forward.3} parent=43 // pred_check_branch
          %643 = sbr.rel (%p641) target = $region68
        $region67: #{whisper_encoder_forward.3} parent=43 // pred_region
          %s644 = ssub.s32 %s23, 1
          %p645 = scmp.lt.s32.totalorder %s644, 1
          %s646 = scalar_select %p645, %s644, 1
          %p647 = scmp.gt.s32.totalorder %s646, 0
          %s648 = scalar_select %p647, %s646, 0
          %p649 = scmp.lt.s32.totalorder %s648, 1
          %s650 = scalar_select %p649, %s648, 1
          %s651 = smul.addr %s650, 8
          %s652 = smul.addr %s651, 4
          %s653 = scalar_lea.vmem %s11, %s652
          %s654 = ssub.s32 %s23, 1
          %p655 = scmp.lt.s32.totalorder %s654, 1
          %s656 = scalar_select %p655, %s654, 1
          %p657 = scmp.gt.s32.totalorder %s656, 0
          %s658 = scalar_select %p657, %s656, 0
        $region68: #{whisper_encoder_forward.3} parent=43 // pred_fallthru
          _
        // Predicated region
        $region69: #{whisper_encoder_forward.3} parent=43 // pred_check
          %p659 = pneg %p395
        $region70: #{whisper_encoder_forward.3} parent=43 // pred_check_branch
          %661 = sbr.rel (%p659) target = $region72
        $region71: #{whisper_encoder_forward.3} parent=43 // pred_region
          %s662 = ssub.s32 %s23, 1
          %p663 = scmp.lt.s32.totalorder %s662, 1
          %s664 = scalar_select %p663, %s662, 1
          %p665 = scmp.gt.s32.totalorder %s664, 0
          %s666 = scalar_select %p665, %s664, 0
          %p667 = scmp.lt.s32.totalorder %s666, 1
          %s668 = scalar_select %p667, %s666, 1
          %s669 = scalar_lea.vmem %s12, %s668
          %s670 = ssub.s32 %s23, 1
          %p671 = scmp.lt.s32.totalorder %s670, 1
          %s672 = scalar_select %p671, %s670, 1
          %p673 = scmp.gt.s32.totalorder %s672, 0
          %s674 = scalar_select %p673, %s672, 0
        $region72: #{whisper_encoder_forward.3} parent=43 // pred_fallthru
          _
        // Predicated region
        $region73: #{whisper_encoder_forward.3} parent=43 // pred_check
          %p675 = pneg %p431
        $region74: #{whisper_encoder_forward.3} parent=43 // pred_check_branch
          %677 = sbr.rel (%p675) target = $region76
        $region75: #{whisper_encoder_forward.3} parent=43 // pred_region
          %s678 = ssub.s32 %s23, 1
          %p679 = scmp.lt.s32.totalorder %s678, 1
          %s680 = scalar_select %p679, %s678, 1
          %p681 = scmp.gt.s32.totalorder %s680, 0
          %s682 = scalar_select %p681, %s680, 0
          %p683 = scmp.lt.s32.totalorder %s682, 1
          %s684 = scalar_select %p683, %s682, 1
          %s685 = smul.addr %s684, 16
          %s686 = smul.addr %s685, 4
          %s687 = scalar_lea.vmem %s13, %s686
          %s688 = ssub.s32 %s23, 1
          %p689 = scmp.lt.s32.totalorder %s688, 1
          %s690 = scalar_select %p689, %s688, 1
          %p691 = scmp.gt.s32.totalorder %s690, 0
          %s692 = scalar_select %p691, %s690, 0
        $region76: #{whisper_encoder_forward.3} parent=43 // pred_fallthru
          _
        // Predicated region
        $region77: #{whisper_encoder_forward.3} parent=43 // pred_check
          %p693 = pneg %p467
        $region78: #{whisper_encoder_forward.3} parent=43 // pred_check_branch
          %695 = sbr.rel (%p693) target = $region80
        $region79: #{whisper_encoder_forward.3} parent=43 // pred_region
          %s696 = ssub.s32 %s23, 1
          %p697 = scmp.lt.s32.totalorder %s696, 1
          %s698 = scalar_select %p697, %s696, 1
          %p699 = scmp.gt.s32.totalorder %s698, 0
          %s700 = scalar_select %p699, %s698, 0
          %p701 = scmp.lt.s32.totalorder %s700, 1
          %s702 = scalar_select %p701, %s700, 1
          %s703 = scalar_lea.vmem %s14, %s702
          %s704 = ssub.s32 %s23, 1
          %p705 = scmp.lt.s32.totalorder %s704, 1
          %s706 = scalar_select %p705, %s704, 1
          %p707 = scmp.gt.s32.totalorder %s706, 0
          %s708 = scalar_select %p707, %s706, 0
        $region80: #{whisper_encoder_forward.3} parent=43 // pred_fallthru
          _
      $region44: #{whisper_encoder_forward.3} parent=5 // pred_fallthru
        _
      %p709 = scmp.le.s32.totalorder 1, %s23
      %p710 = scmp.lt.s32.totalorder %s23, 5
      %p711 = pnand %p709, %p710
      %p712 = pneg %p711
      // Predicated region
      $region81: #{whisper_encoder_forward.3} parent=5 // pred_check
        _
      $region82: #{whisper_encoder_forward.3} parent=5 // pred_check_branch
        %714 = sbr.rel (%p711) target = $region84
      $region83: #{whisper_encoder_forward.3} parent=5 // pred_region
        %s715 = ssub.s32 %s23, 1
        %p716 = pneg %p44
        %p717 = pneg %p41
        %p718 = pneg %p65
        %p719 = pneg %p62
        %p720 = pneg %p86
        %p721 = pneg %p83
        %p722 = pneg %p107
        %p723 = pneg %p104
        %p724 = pneg %p128
        %p725 = pneg %p125
        %p726 = pneg %p149
        %p727 = pneg %p146
        %s728 = ssub.s32 %s28, 1
        %p729 = scmp.lt.s32.totalorder %s728, 1
        %s730 = scalar_select %p729, %s728, 1
        %p731 = scmp.gt.s32.totalorder %s730, 0
        %s732 = scalar_select %p731, %s730, 0
        %p733 = scmp.lt.s32.totalorder %s732, 1
        %s734 = scalar_select %p733, %s732, 1
        %s735 = smul.addr %s734, 4
        %s736 = scalar_lea.vmem %s6, %s735
        %p737 = pneg %p185
        %p738 = pneg %p182
        %s739 = ssub.s32 %s28, 1
        %p740 = scmp.lt.s32.totalorder %s739, 1
        %s741 = scalar_select %p740, %s739, 1
        %p742 = scmp.gt.s32.totalorder %s741, 0
        %s743 = scalar_select %p742, %s741, 0
        %p744 = scmp.lt.s32.totalorder %s743, 1
        %s745 = scalar_select %p744, %s743, 1
        %s746 = smul.addr %s745, 16
        %s747 = smul.addr %s746, 4
        %s748 = scalar_lea.vmem %s7, %s747
        %p749 = pneg %p221
        %p750 = pneg %p218
        %s751 = ssub.s32 %s28, 1
        %p752 = scmp.lt.s32.totalorder %s751, 1
        %s753 = scalar_select %p752, %s751, 1
        %p754 = scmp.gt.s32.totalorder %s753, 0
        %s755 = scalar_select %p754, %s753, 0
        %p756 = scmp.lt.s32.totalorder %s755, 1
        %s757 = scalar_select %p756, %s755, 1
        %s758 = smul.addr %s757, 2
        %s759 = scalar_lea.vmem %s8, %s758
        %p760 = pneg %p257
        %p761 = pneg %p254
        %s762 = ssub.s32 %s28, 1
        %p763 = scmp.lt.s32.totalorder %s762, 1
        %s764 = scalar_select %p763, %s762, 1
        %p765 = scmp.gt.s32.totalorder %s764, 0
        %s766 = scalar_select %p765, %s764, 0
        %p767 = scmp.lt.s32.totalorder %s766, 1
        %s768 = scalar_select %p767, %s766, 1
        %s769 = smul.addr %s768, 8
        %s770 = smul.addr %s769, 4
        %s771 = scalar_lea.vmem %s9, %s770
        %p772 = pneg %p293
        %p773 = pneg %p290
        %s774 = ssub.s32 %s28, 1
        %p775 = scmp.lt.s32.totalorder %s774, 1
        %s776 = scalar_select %p775, %s774, 1
        %p777 = scmp.gt.s32.totalorder %s776, 0
        %s778 = scalar_select %p777, %s776, 0
        %p779 = scmp.lt.s32.totalorder %s778, 1
        %s780 = scalar_select %p779, %s778, 1
        %s781 = scalar_lea.vmem %s10, %s780
        %p782 = pneg %p329
        %p783 = pneg %p326
        %s784 = ssub.s32 %s28, 1
        %p785 = scmp.lt.s32.totalorder %s784, 1
        %s786 = scalar_select %p785, %s784, 1
        %p787 = scmp.gt.s32.totalorder %s786, 0
        %s788 = scalar_select %p787, %s786, 0
        %p789 = scmp.lt.s32.totalorder %s788, 1
        %s790 = scalar_select %p789, %s788, 1
        %s791 = smul.addr %s790, 8
        %s792 = smul.addr %s791, 4
        %s793 = scalar_lea.vmem %s11, %s792
        %p794 = pneg %p365
        %p795 = pneg %p362
        %s796 = ssub.s32 %s28, 1
        %p797 = scmp.lt.s32.totalorder %s796, 1
        %s798 = scalar_select %p797, %s796, 1
        %p799 = scmp.gt.s32.totalorder %s798, 0
        %s800 = scalar_select %p799, %s798, 0
        %p801 = scmp.lt.s32.totalorder %s800, 1
        %s802 = scalar_select %p801, %s800, 1
        %s803 = scalar_lea.vmem %s12, %s802
        %p804 = pneg %p401
        %p805 = pneg %p398
        %s806 = ssub.s32 %s28, 1
        %p807 = scmp.lt.s32.totalorder %s806, 1
        %s808 = scalar_select %p807, %s806, 1
        %p809 = scmp.gt.s32.totalorder %s808, 0
        %s810 = scalar_select %p809, %s808, 0
        %p811 = scmp.lt.s32.totalorder %s810, 1
        %s812 = scalar_select %p811, %s810, 1
        %s813 = smul.addr %s812, 16
        %s814 = smul.addr %s813, 4
        %s815 = scalar_lea.vmem %s13, %s814
        %p816 = pneg %p437
        %p817 = pneg %p434
        %s818 = ssub.s32 %s28, 1
        %p819 = scmp.lt.s32.totalorder %s818, 1
        %s820 = scalar_select %p819, %s818, 1
        %p821 = scmp.gt.s32.totalorder %s820, 0
        %s822 = scalar_select %p821, %s820, 0
        %p823 = scmp.lt.s32.totalorder %s822, 1
        %s824 = scalar_select %p823, %s822, 1
        %s825 = scalar_lea.vmem %s14, %s824
        %p826 = pneg %p473
        %p827 = pneg %p470
        %p828 = pneg %p494
        %p829 = pneg %p491
        %p830 = pneg %p515
        %p831 = pneg %p512
        %s832 = ssub.s32 %s28, 1
        %p833 = scmp.lt.s32.totalorder %s832, 1
        %s834 = scalar_select %p833, %s832, 1
        %p835 = scmp.gt.s32.totalorder %s834, 0
        %s836 = scalar_select %p835, %s834, 0
        %p837 = scmp.lt.s32.totalorder %s836, 1
        %s838 = scalar_select %p837, %s836, 1
        %s839 = smul.addr %s838, 4
        %s840 = scalar_lea.vmem %s6, %s839
        %s841 = ssub.s32 %s28, 1
        %p842 = scmp.lt.s32.totalorder %s841, 1
        %s843 = scalar_select %p842, %s841, 1
        %p844 = scmp.gt.s32.totalorder %s843, 0
        %s845 = scalar_select %p844, %s843, 0
        %s846 = ssub.s32 %s28, 1
        %p847 = scmp.lt.s32.totalorder %s846, 1
        %s848 = scalar_select %p847, %s846, 1
        %p849 = scmp.gt.s32.totalorder %s848, 0
        %s850 = scalar_select %p849, %s848, 0
        %p851 = scmp.lt.s32.totalorder %s850, 1
        %s852 = scalar_select %p851, %s850, 1
        %s853 = smul.addr %s852, 16
        %s854 = smul.addr %s853, 4
        %s855 = scalar_lea.vmem %s7, %s854
        %s856 = ssub.s32 %s28, 1
        %p857 = scmp.lt.s32.totalorder %s856, 1
        %s858 = scalar_select %p857, %s856, 1
        %p859 = scmp.gt.s32.totalorder %s858, 0
        %s860 = scalar_select %p859, %s858, 0
        %s861 = ssub.s32 %s28, 1
        %p862 = scmp.lt.s32.totalorder %s861, 1
        %s863 = scalar_select %p862, %s861, 1
        %p864 = scmp.gt.s32.totalorder %s863, 0
        %s865 = scalar_select %p864, %s863, 0
        %p866 = scmp.lt.s32.totalorder %s865, 1
        %s867 = scalar_select %p866, %s865, 1
        %s868 = smul.addr %s867, 2
        %s869 = scalar_lea.vmem %s8, %s868
        %s870 = ssub.s32 %s28, 1
        %p871 = scmp.lt.s32.totalorder %s870, 1
        %s872 = scalar_select %p871, %s870, 1
        %p873 = scmp.gt.s32.totalorder %s872, 0
        %s874 = scalar_select %p873, %s872, 0
        %s875 = ssub.s32 %s28, 1
        %p876 = scmp.lt.s32.totalorder %s875, 1
        %s877 = scalar_select %p876, %s875, 1
        %p878 = scmp.gt.s32.totalorder %s877, 0
        %s879 = scalar_select %p878, %s877, 0
        %p880 = scmp.lt.s32.totalorder %s879, 1
        %s881 = scalar_select %p880, %s879, 1
        %s882 = smul.addr %s881, 8
        %s883 = smul.addr %s882, 4
        %s884 = scalar_lea.vmem %s9, %s883
        %s885 = ssub.s32 %s28, 1
        %p886 = scmp.lt.s32.totalorder %s885, 1
        %s887 = scalar_select %p886, %s885, 1
        %p888 = scmp.gt.s32.totalorder %s887, 0
        %s889 = scalar_select %p888, %s887, 0
        %s890 = ssub.s32 %s28, 1
        %p891 = scmp.lt.s32.totalorder %s890, 1
        %s892 = scalar_select %p891, %s890, 1
        %p893 = scmp.gt.s32.totalorder %s892, 0
        %s894 = scalar_select %p893, %s892, 0
        %p895 = scmp.lt.s32.totalorder %s894, 1
        %s896 = scalar_select %p895, %s894, 1
        %s897 = scalar_lea.vmem %s10, %s896
        %s898 = ssub.s32 %s28, 1
        %p899 = scmp.lt.s32.totalorder %s898, 1
        %s900 = scalar_select %p899, %s898, 1
        %p901 = scmp.gt.s32.totalorder %s900, 0
        %s902 = scalar_select %p901, %s900, 0
        %s903 = ssub.s32 %s28, 1
        %p904 = scmp.lt.s32.totalorder %s903, 1
        %s905 = scalar_select %p904, %s903, 1
        %p906 = scmp.gt.s32.totalorder %s905, 0
        %s907 = scalar_select %p906, %s905, 0
        %p908 = scmp.lt.s32.totalorder %s907, 1
        %s909 = scalar_select %p908, %s907, 1
        %s910 = smul.addr %s909, 8
        %s911 = smul.addr %s910, 4
        %s912 = scalar_lea.vmem %s11, %s911
        %s913 = ssub.s32 %s28, 1
        %p914 = scmp.lt.s32.totalorder %s913, 1
        %s915 = scalar_select %p914, %s913, 1
        %p916 = scmp.gt.s32.totalorder %s915, 0
        %s917 = scalar_select %p916, %s915, 0
        %s918 = ssub.s32 %s28, 1
        %p919 = scmp.lt.s32.totalorder %s918, 1
        %s920 = scalar_select %p919, %s918, 1
        %p921 = scmp.gt.s32.totalorder %s920, 0
        %s922 = scalar_select %p921, %s920, 0
        %p923 = scmp.lt.s32.totalorder %s922, 1
        %s924 = scalar_select %p923, %s922, 1
        %s925 = scalar_lea.vmem %s12, %s924
        %s926 = ssub.s32 %s28, 1
        %p927 = scmp.lt.s32.totalorder %s926, 1
        %s928 = scalar_select %p927, %s926, 1
        %p929 = scmp.gt.s32.totalorder %s928, 0
        %s930 = scalar_select %p929, %s928, 0
        %s931 = ssub.s32 %s28, 1
        %p932 = scmp.lt.s32.totalorder %s931, 1
        %s933 = scalar_select %p932, %s931, 1
        %p934 = scmp.gt.s32.totalorder %s933, 0
        %s935 = scalar_select %p934, %s933, 0
        %p936 = scmp.lt.s32.totalorder %s935, 1
        %s937 = scalar_select %p936, %s935, 1
        %s938 = smul.addr %s937, 16
        %s939 = smul.addr %s938, 4
        %s940 = scalar_lea.vmem %s13, %s939
        %s941 = ssub.s32 %s28, 1
        %p942 = scmp.lt.s32.totalorder %s941, 1
        %s943 = scalar_select %p942, %s941, 1
        %p944 = scmp.gt.s32.totalorder %s943, 0
        %s945 = scalar_select %p944, %s943, 0
        %s946 = ssub.s32 %s28, 1
        %p947 = scmp.lt.s32.totalorder %s946, 1
        %s948 = scalar_select %p947, %s946, 1
        %p949 = scmp.gt.s32.totalorder %s948, 0
        %s950 = scalar_select %p949, %s948, 0
        %p951 = scmp.lt.s32.totalorder %s950, 1
        %s952 = scalar_select %p951, %s950, 1
        %s953 = scalar_lea.vmem %s14, %s952
        %s954 = ssub.s32 %s28, 1
        %p955 = scmp.lt.s32.totalorder %s954, 1
        %s956 = scalar_select %p955, %s954, 1
        %p957 = scmp.gt.s32.totalorder %s956, 0
        %s958 = scalar_select %p957, %s956, 0
        %p960 = scmp.eq.s32.totalorder %s28, 0
        // Predicated region
        $region85: #{whisper_encoder_forward.3} parent=83 // pred_check
          %p961 = pneg %p960
        $region86: #{whisper_encoder_forward.3} parent=83 // pred_check_branch
          %963 = sbr.rel (%p961) target = $region88
        $region87: #{whisper_encoder_forward.3} parent=83 // pred_region
          %v964 = vld [vmem:[%s0] sm:$0xff]
          %v965 = vld [vmem:[%s0 + $0x8] sm:$0xff]
          %v966 = vld [vmem:[%s0 + $0x10] sm:$0xff]
          %v967 = vld [vmem:[%s0 + $0x18] sm:$0xff]
          %v968 = vld [vmem:[%s0 + $0x20] sm:$0xff]
          %v969 = vld [vmem:[%s0 + $0x28] sm:$0xff]
          %v970 = vld [vmem:[%s0 + $0x30] sm:$0xff]
          %v971 = vld [vmem:[%s0 + $0x38] sm:$0xff]
          %v972 = vld [vmem:[%s0 + $0x40] sm:$0xff]
          %v973 = vld [vmem:[%s0 + $0x48] sm:$0xff]
          %v974 = vld [vmem:[%s0 + $0x50] sm:$0xff]
          %v975 = vld [vmem:[%s0 + $0x58] sm:$0xff]
          %v976 = vld [vmem:[%s0 + $0x60] sm:$0xff]
          %v977 = vld [vmem:[%s0 + $0x68] sm:$0xff]
          %v978 = vld [vmem:[%s0 + $0x70] sm:$0xff]
          %v979 = vld [vmem:[%s0 + $0x78] sm:$0xff]
          %v980 = vmax.f32 %v964, %v968
          %v981 = vmax.f32 %v965, %v969
          %v982 = vmax.f32 %v966, %v970
          %v983 = vmax.f32 %v967, %v971
          %v984 = vmax.f32 %v980, %v972
          %v985 = vmax.f32 %v981, %v973
          %v986 = vmax.f32 %v982, %v974
          %v987 = vmax.f32 %v983, %v975
          %v988 = vmax.f32 %v984, %v976
          %v989 = vmax.f32 %v985, %v977
          %v990 = vmax.f32 %v986, %v978
          %v991 = vmax.f32 %v987, %v979
          %v992 = vmax.f32 %v988, %v989
          %v993 = vmax.f32 %v990, %v991
          %v994 = vmax.f32 %v992, %v993
          %995 = vmax.xlane.f32.xlu0 %v994
          %v996 = vpop.xlane.xlu0 %995
          %v997 = vrot.slane %v996, 4
          %v998 = vmax.f32 %v996, %v997
          %v999 = vrot.slane %v998, 2
          %v1000 = vmax.f32 %v998, %v999
          %v1001 = vrot.slane %v1000, 1
          %v1002 = vmax.f32 %v1000, %v1001
          %s1003 = vtos %v1002
          %s1004 = ssub.f32 %s1003, 8.0
          %v1005 = vstv %s1004
          %v1006 = vmax.f32 %v964, %v1005
          %v1007 = vmax.f32 %v965, %v1005
          %v1008 = vmax.f32 %v966, %v1005
          %v1009 = vmax.f32 %v967, %v1005
          %v1010 = vmax.f32 %v968, %v1005
          %v1011 = vmax.f32 %v969, %v1005
          %v1012 = vmax.f32 %v970, %v1005
          %v1013 = vmax.f32 %v971, %v1005
          %v1014 = vmax.f32 %v972, %v1005
          %v1015 = vmax.f32 %v973, %v1005
          %v1016 = vmax.f32 %v974, %v1005
          %v1017 = vmax.f32 %v975, %v1005
          %v1018 = vmax.f32 %v976, %v1005
          %v1019 = vmax.f32 %v977, %v1005
          %v1020 = vmax.f32 %v978, %v1005
          %v1021 = vmax.f32 %v979, %v1005
          %v1022 = vadd.f32 %v1006, 4.0
          %v1023 = vadd.f32 %v1007, 4.0
          %v1024 = vadd.f32 %v1008, 4.0
          %v1025 = vadd.f32 %v1009, 4.0
          %v1026 = vadd.f32 %v1010, 4.0
          %v1027 = vadd.f32 %v1011, 4.0
          %v1028 = vadd.f32 %v1012, 4.0
          %v1029 = vadd.f32 %v1013, 4.0
          %v1030 = vadd.f32 %v1014, 4.0
          %v1031 = vadd.f32 %v1015, 4.0
          %v1032 = vadd.f32 %v1016, 4.0
          %v1033 = vadd.f32 %v1017, 4.0
          %v1034 = vadd.f32 %v1018, 4.0
          %v1035 = vadd.f32 %v1019, 4.0
          %v1036 = vadd.f32 %v1020, 4.0
          %v1037 = vadd.f32 %v1021, 4.0
          %v1038 = vmul.f32 %v1022, 0.25
          %v1039 = vmul.f32 %v1023, 0.25
          %v1040 = vmul.f32 %v1024, 0.25
          %v1041 = vmul.f32 %v1025, 0.25
          %v1042 = vmul.f32 %v1026, 0.25
          %v1043 = vmul.f32 %v1027, 0.25
          %v1044 = vmul.f32 %v1028, 0.25
          %v1045 = vmul.f32 %v1029, 0.25
          %v1046 = vmul.f32 %v1030, 0.25
          %v1047 = vmul.f32 %v1031, 0.25
          %v1048 = vmul.f32 %v1032, 0.25
          %v1049 = vmul.f32 %v1033, 0.25
          %v1050 = vmul.f32 %v1034, 0.25
          %v1051 = vmul.f32 %v1035, 0.25
          %v1052 = vmul.f32 %v1036, 0.25
          %v1053 = vmul.f32 %v1037, 0.25
          %v1054 = vrot.slane %v1039, 7
          %v1055 = vrot.slane %v1041, 7
          %v1056 = vrot.slane %v1043, 7
          %v1057 = vrot.slane %v1045, 7
          %v1058 = vrot.slane %v1047, 7
          %v1059 = vrot.slane %v1049, 7
          %v1060 = vrot.slane %v1051, 7
          %v1061 = vrot.slane %v1053, 7
          %v1062 = vlaneseq
          %v1063 = vshrl.u32 %v1062, 7
          %vm1064 = vcmp.lt.s32.totalorder %v1063, 1
          %v1065 = vsel %vm1064, %v1060, %v1061
          %v1066 = vsel %vm1064, %v1059, %v1060
          %v1067 = vsel %vm1064, %v1058, %v1059
          %v1068 = vsel %vm1064, %v1057, %v1058
          %v1069 = vsel %vm1064, %v1056, %v1057
          %v1070 = vsel %vm1064, %v1055, %v1056
          %v1071 = vsel %vm1064, %v1054, %v1055
          %v1072 = vsel %vm1064, %v1061, %v1054
          %v1073 = vadd.s32 %v1063, 8
          %v1074 = vadd.s32 %v1063, 16
          %v1075 = vadd.s32 %v1063, 24
          %v1076 = vadd.s32 %v1063, 32
          %v1077 = vadd.s32 %v1063, 40
          %v1078 = vadd.s32 %v1063, 48
          %v1079 = vadd.s32 %v1063, 56
          %vm1080 = vcmp.lt.s32.totalorder %v1063, 0
          %v1081 = vsub.s32 0, %v1063
          %v1082 = vsel %vm1080, %v1081, %v1063
          %v1083 = vshrl.u32 %v1082, 5
          %v1084 = vand.u32 %v1082, 31
          %v1085 = vsub.s32 0, %v1084
          %v1086 = vsel %vm1080, %v1085, %v1084
          %vm1087 = vcmp.lt.s32.totalorder %v1073, 0
          %v1088 = vsub.s32 0, %v1073
          %v1089 = vsel %vm1087, %v1088, %v1073
          %v1090 = vshrl.u32 %v1089, 5
          %v1091 = vand.u32 %v1089, 31
          %v1092 = vsub.s32 0, %v1091
          %v1093 = vsel %vm1087, %v1092, %v1091
          %vm1094 = vcmp.lt.s32.totalorder %v1074, 0
          %v1095 = vsub.s32 0, %v1074
          %v1096 = vsel %vm1094, %v1095, %v1074
          %v1097 = vshrl.u32 %v1096, 5
          %v1098 = vand.u32 %v1096, 31
          %v1099 = vsub.s32 0, %v1098
          %v1100 = vsel %vm1094, %v1099, %v1098
          %vm1101 = vcmp.lt.s32.totalorder %v1075, 0
          %v1102 = vsub.s32 0, %v1075
          %v1103 = vsel %vm1101, %v1102, %v1075
          %v1104 = vshrl.u32 %v1103, 5
          %v1105 = vand.u32 %v1103, 31
          %v1106 = vsub.s32 0, %v1105
          %v1107 = vsel %vm1101, %v1106, %v1105
          %vm1108 = vcmp.lt.s32.totalorder %v1076, 0
          %v1109 = vsub.s32 0, %v1076
          %v1110 = vsel %vm1108, %v1109, %v1076
          %v1111 = vshrl.u32 %v1110, 5
          %v1112 = vand.u32 %v1110, 31
          %v1113 = vsub.s32 0, %v1112
          %v1114 = vsel %vm1108, %v1113, %v1112
          %vm1115 = vcmp.lt.s32.totalorder %v1077, 0
          %v1116 = vsub.s32 0, %v1077
          %v1117 = vsel %vm1115, %v1116, %v1077
          %v1118 = vshrl.u32 %v1117, 5
          %v1119 = vand.u32 %v1117, 31
          %v1120 = vsub.s32 0, %v1119
          %v1121 = vsel %vm1115, %v1120, %v1119
          %vm1122 = vcmp.lt.s32.totalorder %v1078, 0
          %v1123 = vsub.s32 0, %v1078
          %v1124 = vsel %vm1122, %v1123, %v1078
          %v1125 = vshrl.u32 %v1124, 5
          %v1126 = vand.u32 %v1124, 31
          %v1127 = vsub.s32 0, %v1126
          %v1128 = vsel %vm1122, %v1127, %v1126
          %vm1129 = vcmp.lt.s32.totalorder %v1079, 0
          %v1130 = vsub.s32 0, %v1079
          %v1131 = vsel %vm1129, %v1130, %v1079
          %v1132 = vshrl.u32 %v1131, 5
          %v1133 = vand.u32 %v1131, 31
          %v1134 = vsub.s32 0, %v1133
          %v1135 = vsel %vm1129, %v1134, %v1133
          %vm1136 = vcmp.ne.s32.totalorder %v1086, 0
          %vm1137 = vcmp.ne.s32.totalorder %v1093, 0
          %vm1138 = vcmp.ne.s32.totalorder %v1100, 0
          %vm1139 = vcmp.ne.s32.totalorder %v1107, 0
          %vm1140 = vcmp.ne.s32.totalorder %v1114, 0
          %vm1141 = vcmp.ne.s32.totalorder %v1121, 0
          %vm1142 = vcmp.ne.s32.totalorder %v1128, 0
          %vm1143 = vcmp.ne.s32.totalorder %v1135, 0
          %vm1144 = vcmp.lt.s32.totalorder %v1086, 0
          %vm1145 = vcmp.lt.s32.totalorder %v1093, 0
          %vm1146 = vcmp.lt.s32.totalorder %v1100, 0
          %vm1147 = vcmp.lt.s32.totalorder %v1107, 0
          %vm1148 = vcmp.lt.s32.totalorder %v1114, 0
          %vm1149 = vcmp.lt.s32.totalorder %v1121, 0
          %vm1150 = vcmp.lt.s32.totalorder %v1128, 0
          %vm1151 = vcmp.lt.s32.totalorder %v1135, 0
          %vm1152 = vmand %vm1144, %vm1136
          %vm1153 = vmand %vm1145, %vm1137
          %vm1154 = vmand %vm1146, %vm1138
          %vm1155 = vmand %vm1147, %vm1139
          %vm1156 = vmand %vm1148, %vm1140
          %vm1157 = vmand %vm1149, %vm1141
          %vm1158 = vmand %vm1150, %vm1142
          %vm1159 = vmand %vm1151, %vm1143
          %v1160 = vadd.s32 %v1086, 32
          %v1161 = vadd.s32 %v1093, 32
          %v1162 = vadd.s32 %v1100, 32
          %v1163 = vadd.s32 %v1107, 32
          %v1164 = vadd.s32 %v1114, 32
          %v1165 = vadd.s32 %v1121, 32
          %v1166 = vadd.s32 %v1128, 32
          %v1167 = vadd.s32 %v1135, 32
          %v1168 = vsel %vm1152, %v1160, %v1086
          %v1169 = vsel %vm1153, %v1161, %v1093
          %v1170 = vsel %vm1154, %v1162, %v1100
          %v1171 = vsel %vm1155, %v1163, %v1107
          %v1172 = vsel %vm1156, %v1164, %v1114
          %v1173 = vsel %vm1157, %v1165, %v1121
          %v1174 = vsel %vm1158, %v1166, %v1128
          %v1175 = vsel %vm1159, %v1167, %v1135
          %vm1176 = vcmp.eq.s32.totalorder %v1168, 0
          %vm1177 = vcmp.eq.s32.totalorder %v1169, 0
          %vm1178 = vcmp.eq.s32.totalorder %v1170, 0
          %vm1179 = vcmp.eq.s32.totalorder %v1171, 0
          %vm1180 = vcmp.eq.s32.totalorder %v1172, 0
          %vm1181 = vcmp.eq.s32.totalorder %v1173, 0
          %vm1182 = vcmp.eq.s32.totalorder %v1174, 0
          %vm1183 = vcmp.eq.s32.totalorder %v1175, 0
          %v1184 = vsel %vm1176, 0.0, %v1072
          %v1185 = vsel %vm1177, 0.0, %v1071
          %v1186 = vsel %vm1178, 0.0, %v1070
          %v1187 = vsel %vm1179, 0.0, %v1069
          %v1188 = vsel %vm1180, 0.0, %v1068
          %v1189 = vsel %vm1181, 0.0, %v1067
          %v1190 = vsel %vm1182, 0.0, %v1066
          %v1191 = vsel %vm1183, 0.0, %v1065
          %v1192 = vrot.slane %v1038, 1
          %v1193 = vrot.slane %v1040, 1
          %v1194 = vrot.slane %v1042, 1
          %v1195 = vrot.slane %v1044, 1
          %v1196 = vrot.slane %v1046, 1
          %v1197 = vrot.slane %v1048, 1
          %v1198 = vrot.slane %v1050, 1
          %v1199 = vrot.slane %v1052, 1
          %vm1200 = vcmp.lt.s32.totalorder %v1063, 7
          %v1201 = vsel %vm1200, %v1198, %v1199
          %v1202 = vsel %vm1200, %v1197, %v1198
          %v1203 = vsel %vm1200, %v1196, %v1197
          %v1204 = vsel %vm1200, %v1195, %v1196
          %v1205 = vsel %vm1200, %v1194, %v1195
          %v1206 = vsel %vm1200, %v1193, %v1194
          %v1207 = vsel %vm1200, %v1192, %v1193
          %v1208 = vsel %vm1200, %v1199, %v1192
          %vm1209 = vcmp.eq.s32.totalorder %v1168, 31
          %vm1210 = vcmp.eq.s32.totalorder %v1169, 31
          %vm1211 = vcmp.eq.s32.totalorder %v1170, 31
          %vm1212 = vcmp.eq.s32.totalorder %v1171, 31
          %vm1213 = vcmp.eq.s32.totalorder %v1172, 31
          %vm1214 = vcmp.eq.s32.totalorder %v1173, 31
          %vm1215 = vcmp.eq.s32.totalorder %v1174, 31
          %vm1216 = vcmp.eq.s32.totalorder %v1175, 31
          %v1217 = vsel %vm1209, 0.0, %v1207
          %v1218 = vsel %vm1210, 0.0, %v1206
          %v1219 = vsel %vm1211, 0.0, %v1205
          %v1220 = vsel %vm1212, 0.0, %v1204
          %v1221 = vsel %vm1213, 0.0, %v1203
          %v1222 = vsel %vm1214, 0.0, %v1202
          %v1223 = vsel %vm1215, 0.0, %v1201
          %v1224 = vsel %vm1216, 0.0, %v1208
          %v1225 = vpack.c.bf16 %v1040, %v1038
          %v1226 = vpack.c.bf16 %v1044, %v1042
          %v1227 = vpack.c.bf16 %v1048, %v1046
          %v1228 = vpack.c.bf16 %v1052, %v1050
          %v1229 = vpack.c.bf16 %v1041, %v1039
          %v1230 = vpack.c.bf16 %v1045, %v1043
          %v1231 = vpack.c.bf16 %v1049, %v1047
          %v1232 = vpack.c.bf16 %v1053, %v1051
          %v1233 = vpack.c.bf16 %v1185, %v1184
          %v1234 = vpack.c.bf16 %v1187, %v1186
          %v1235 = vpack.c.bf16 %v1189, %v1188
          %v1236 = vpack.c.bf16 %v1191, %v1190
          %v1237 = vpack.c.bf16 %v1218, %v1217
          %v1238 = vpack.c.bf16 %v1220, %v1219
          %v1239 = vpack.c.bf16 %v1222, %v1221
          %v1240 = vpack.c.bf16 %v1224, %v1223
          %v1241 = vld [vmem:[%s1] sm:$0xf]
          %v1242 = vld [vmem:[%s1 + $0x4] sm:$0xf]
          %v1243 = vld [vmem:[%s1 + $0x8] sm:$0xf]
          %v1244 = vld [vmem:[%s1 + $0xc] sm:$0xf]
          %v1245 = vld [vmem:[%s1 + $0x10] sm:$0xf]
          %v1246 = vld [vmem:[%s1 + $0x14] sm:$0xf]
          %v1247 = vld [vmem:[%s1 + $0x18] sm:$0xf]
          %v1248 = vld [vmem:[%s1 + $0x1c] sm:$0xf]
          %v1249 = vld [vmem:[%s1 + $0x20] sm:$0xf]
          %v1250 = vld [vmem:[%s1 + $0x24] sm:$0xf]
          %v1251 = vld [vmem:[%s1 + $0x28] sm:$0xf]
          %v1252 = vld [vmem:[%s1 + $0x2c] sm:$0xf]
          %v1253 = vld [vmem:[%s1 + $0x30] sm:$0xf]
          %v1254 = vld [vmem:[%s1 + $0x34] sm:$0xf]
          %v1255 = vld [vmem:[%s1 + $0x38] sm:$0xf]
          %v1256 = vld [vmem:[%s1 + $0x3c] sm:$0xf]
          %s1257 = scalar_lea.vmem %s1, 64
          %v1258 = vld [vmem:[%s1257] sm:$0xf]
          %v1259 = vld [vmem:[%s1257 + $0x4] sm:$0xf]
          %v1260 = vld [vmem:[%s1257 + $0x8] sm:$0xf]
          %v1261 = vld [vmem:[%s1257 + $0xc] sm:$0xf]
          %v1262 = vld [vmem:[%s1257 + $0x10] sm:$0xf]
          %v1263 = vld [vmem:[%s1257 + $0x14] sm:$0xf]
          %v1264 = vld [vmem:[%s1257 + $0x18] sm:$0xf]
          %v1265 = vld [vmem:[%s1257 + $0x1c] sm:$0xf]
          %v1266 = vld [vmem:[%s1257 + $0x20] sm:$0xf]
          %v1267 = vld [vmem:[%s1257 + $0x24] sm:$0xf]
          %v1268 = vld [vmem:[%s1257 + $0x28] sm:$0xf]
          %v1269 = vld [vmem:[%s1257 + $0x2c] sm:$0xf]
          %v1270 = vld [vmem:[%s1257 + $0x30] sm:$0xf]
          %v1271 = vld [vmem:[%s1257 + $0x34] sm:$0xf]
          %v1272 = vld [vmem:[%s1257 + $0x38] sm:$0xf]
          %v1273 = vld [vmem:[%s1257 + $0x3c] sm:$0xf]
          %s1274 = scalar_lea.vmem %s1, 128
          %v1275 = vld [vmem:[%s1274] sm:$0xf]
          %v1276 = vld [vmem:[%s1274 + $0x4] sm:$0xf]
          %v1277 = vld [vmem:[%s1274 + $0x8] sm:$0xf]
          %v1278 = vld [vmem:[%s1274 + $0xc] sm:$0xf]
          %v1279 = vld [vmem:[%s1274 + $0x10] sm:$0xf]
          %v1280 = vld [vmem:[%s1274 + $0x14] sm:$0xf]
          %v1281 = vld [vmem:[%s1274 + $0x18] sm:$0xf]
          %v1282 = vld [vmem:[%s1274 + $0x1c] sm:$0xf]
          %v1283 = vld [vmem:[%s1274 + $0x20] sm:$0xf]
          %v1284 = vld [vmem:[%s1274 + $0x24] sm:$0xf]
          %v1285 = vld [vmem:[%s1274 + $0x28] sm:$0xf]
          %v1286 = vld [vmem:[%s1274 + $0x2c] sm:$0xf]
          %v1287 = vld [vmem:[%s1274 + $0x30] sm:$0xf]
          %v1288 = vld [vmem:[%s1274 + $0x34] sm:$0xf]
          %v1289 = vld [vmem:[%s1274 + $0x38] sm:$0xf]
          %v1290 = vld [vmem:[%s1274 + $0x3c] sm:$0xf]
          %v1291 = vld [vmem:[%s2] sm:$0x1]
          %v1308 = vunpack.c.l.b16 %v1241
          %v1309 = vunpack.c.l.b16 %v1242
          %v1310 = vunpack.c.l.b16 %v1243
          %v1311 = vunpack.c.l.b16 %v1244
          %v1312 = vunpack.c.l.b16 %v1245
          %v1313 = vunpack.c.l.b16 %v1246
          %v1314 = vunpack.c.l.b16 %v1247
          %v1315 = vunpack.c.l.b16 %v1248
          %v1316 = vunpack.c.l.b16 %v1249
          %v1317 = vunpack.c.l.b16 %v1250
          %v1318 = vunpack.c.l.b16 %v1251
          %v1319 = vunpack.c.l.b16 %v1252
          %v1320 = vunpack.c.l.b16 %v1253
          %v1321 = vunpack.c.l.b16 %v1254
          %v1322 = vunpack.c.l.b16 %v1255
          %v1323 = vunpack.c.l.b16 %v1256
          %v1324 = vpack.c.b16 %v1309, %v1308
          %v1325 = vpack.c.b16 %v1311, %v1310
          %v1326 = vpack.c.b16 %v1313, %v1312
          %v1327 = vpack.c.b16 %v1315, %v1314
          %v1328 = vpack.c.b16 %v1317, %v1316
          %v1329 = vpack.c.b16 %v1319, %v1318
          %v1330 = vpack.c.b16 %v1321, %v1320
          %v1331 = vpack.c.b16 %v1323, %v1322
          %1340 = vmatprep.subr.bf16.mxu0 0
          %1341 = vmatpush1.bf16.msra.mxu0 %v1331
          %1342 = vmatprep.subr.bf16.mxu0 0
          %1343 = vmatpush1.bf16.msra.mxu0 %v1330
          %1344 = vmatprep.subr.bf16.mxu0 0
          %1345 = vmatpush1.bf16.msra.mxu0 %v1329
          %1346 = vmatprep.subr.bf16.mxu0 0
          %1347 = vmatpush1.bf16.msra.mxu0 %v1328
          %1348 = vmatprep.subr.bf16.mxu0 0
          %1349 = vmatpush1.bf16.msra.mxu0 %v1327
          %1350 = vmatprep.subr.bf16.mxu0 0
          %1351 = vmatpush1.bf16.msra.mxu0 %v1326
          %1352 = vmatprep.subr.bf16.mxu0 0
          %1353 = vmatpush1.bf16.msra.mxu0 %v1325
          %1354 = vmatprep.subr.bf16.mxu0 0
          %1355 = vmatpush1.bf16.msra.mxu0 %v1324
          %1356 = vmatprep.subr.bf16.mxu0 0
          %1357 = vmatpush2.bf16.msra.mxu0 0
          %1358 = vmatprep.subr.bf16.mxu0 0
          %1359 = vmatpush2.bf16.msra.mxu0 0
          %1360 = vmatprep.subr.bf16.mxu0 0
          %1361 = vmatpush2.bf16.msra.mxu0 0
          %1362 = vmatprep.subr.bf16.mxu0 0
          %1363 = vmatpush2.bf16.msra.mxu0 0
          %1364 = vmatprep.subr.bf16.mxu0 0
          %1365 = vmatpush2.bf16.msra.mxu0 0
          %1366 = vmatprep.subr.bf16.mxu0 0
          %1367 = vmatpush2.bf16.msra.mxu0 0
          %1368 = vmatprep.subr.bf16.mxu0 0
          %1369 = vmatpush2.bf16.msra.mxu0 0
          %1370 = vmatprep.subr.bf16.mxu0 0
          %1371 = vmatpush2.bf16.msra.mxu0 0
          %1372 = vmatprep.mubr.bf16.mxu0 0
          %1373 = vmatmul.mubr.bf16.gmra.mxu0 %v1233
          %v1374 = vpop.f32.mrf.mxu0
          %v1375 = vadd.f32 0.0, %v1374
          %v1376 = vpop.f32.mrf.mxu0
          %v1377 = vpop.f32.mrf.mxu0
          %v1378 = vadd.f32 0.0, %v1377
          %v1379 = vpop.f32.mrf.mxu0
          %1380 = vmatprep.mubr.bf16.mxu0 0
          %1381 = vmatmul.mubr.bf16.gmra.mxu0 %v1234
          %v1382 = vpop.f32.mrf.mxu0
          %v1383 = vadd.f32 0.0, %v1382
          %v1384 = vpop.f32.mrf.mxu0
          %v1385 = vpop.f32.mrf.mxu0
          %v1386 = vadd.f32 0.0, %v1385
          %v1387 = vpop.f32.mrf.mxu0
          %1388 = vmatprep.mubr.bf16.mxu0 0
          %1389 = vmatmul.mubr.bf16.gmra.mxu0 %v1235
          %v1390 = vpop.f32.mrf.mxu0
          %v1391 = vadd.f32 0.0, %v1390
          %v1392 = vpop.f32.mrf.mxu0
          %v1393 = vpop.f32.mrf.mxu0
          %v1394 = vadd.f32 0.0, %v1393
          %v1395 = vpop.f32.mrf.mxu0
          %1396 = vmatprep.mubr.bf16.mxu0 0
          %1397 = vmatmul.mubr.bf16.gmra.mxu0 %v1236
          %v1398 = vpop.f32.mrf.mxu0
          %v1399 = vadd.f32 0.0, %v1398
          %v1400 = vpop.f32.mrf.mxu0
          %v1401 = vpop.f32.mrf.mxu0
          %v1402 = vadd.f32 0.0, %v1401
          %v1403 = vpop.f32.mrf.mxu0
          %1404 = vdwg.mxu0
          %v1406 = vlaneseq
          %v1407 = vshrl.u32 %v1406, 7
          %v1408 = vsub.s32 0, %v1407
          %v1409 = vrot.slane %v1291, %v1408
          %v1411 = vadd.f32 %v1409, %v1375
          %v1412 = vadd.f32 %v1409, %v1378
          %v1413 = vadd.f32 %v1409, %v1383
          %v1414 = vadd.f32 %v1409, %v1386
          %v1415 = vadd.f32 %v1409, %v1391
          %v1416 = vadd.f32 %v1409, %v1394
          %v1417 = vadd.f32 %v1409, %v1399
          %v1418 = vadd.f32 %v1409, %v1402
          %v1435 = vunpack.c.l.b16 %v1258
          %v1436 = vunpack.c.l.b16 %v1259
          %v1437 = vunpack.c.l.b16 %v1260
          %v1438 = vunpack.c.l.b16 %v1261
          %v1439 = vunpack.c.l.b16 %v1262
          %v1440 = vunpack.c.l.b16 %v1263
          %v1441 = vunpack.c.l.b16 %v1264
          %v1442 = vunpack.c.l.b16 %v1265
          %v1443 = vunpack.c.l.b16 %v1266
          %v1444 = vunpack.c.l.b16 %v1267
          %v1445 = vunpack.c.l.b16 %v1268
          %v1446 = vunpack.c.l.b16 %v1269
          %v1447 = vunpack.c.l.b16 %v1270
          %v1448 = vunpack.c.l.b16 %v1271
          %v1449 = vunpack.c.l.b16 %v1272
          %v1450 = vunpack.c.l.b16 %v1273
          %v1451 = vpack.c.b16 %v1436, %v1435
          %v1452 = vpack.c.b16 %v1438, %v1437
          %v1453 = vpack.c.b16 %v1440, %v1439
          %v1454 = vpack.c.b16 %v1442, %v1441
          %v1455 = vpack.c.b16 %v1444, %v1443
          %v1456 = vpack.c.b16 %v1446, %v1445
          %v1457 = vpack.c.b16 %v1448, %v1447
          %v1458 = vpack.c.b16 %v1450, %v1449
          %1467 = vmatprep.subr.bf16.mxu0 0
          %1468 = vmatpush1.bf16.msra.mxu0 %v1458
          %1469 = vmatprep.subr.bf16.mxu0 0
          %1470 = vmatpush1.bf16.msra.mxu0 %v1457
          %1471 = vmatprep.subr.bf16.mxu0 0
          %1472 = vmatpush1.bf16.msra.mxu0 %v1456
          %1473 = vmatprep.subr.bf16.mxu0 0
          %1474 = vmatpush1.bf16.msra.mxu0 %v1455
          %1475 = vmatprep.subr.bf16.mxu0 0
          %1476 = vmatpush1.bf16.msra.mxu0 %v1454
          %1477 = vmatprep.subr.bf16.mxu0 0
          %1478 = vmatpush1.bf16.msra.mxu0 %v1453
          %1479 = vmatprep.subr.bf16.mxu0 0
          %1480 = vmatpush1.bf16.msra.mxu0 %v1452
          %1481 = vmatprep.subr.bf16.mxu0 0
          %1482 = vmatpush1.bf16.msra.mxu0 %v1451
          %1483 = vmatprep.subr.bf16.mxu0 0
          %1484 = vmatpush2.bf16.msra.mxu0 0
          %1485 = vmatprep.subr.bf16.mxu0 0
          %1486 = vmatpush2.bf16.msra.mxu0 0
          %1487 = vmatprep.subr.bf16.mxu0 0
          %1488 = vmatpush2.bf16.msra.mxu0 0
          %1489 = vmatprep.subr.bf16.mxu0 0
          %1490 = vmatpush2.bf16.msra.mxu0 0
          %1491 = vmatprep.subr.bf16.mxu0 0
          %1492 = vmatpush2.bf16.msra.mxu0 0
          %1493 = vmatprep.subr.bf16.mxu0 0
          %1494 = vmatpush2.bf16.msra.mxu0 0
          %1495 = vmatprep.subr.bf16.mxu0 0
          %1496 = vmatpush2.bf16.msra.mxu0 0
          %1497 = vmatprep.subr.bf16.mxu0 0
          %1498 = vmatpush2.bf16.msra.mxu0 0
          %1499 = vmatprep.mubr.bf16.mxu0 0
          %1500 = vmatmul.mubr.bf16.gmra.mxu0 %v1225
          %v1501 = vpop.f32.mrf.mxu0
          %v1502 = vadd.f32 0.0, %v1501
          %v1503 = vpop.f32.mrf.mxu0
          %v1504 = vpop.f32.mrf.mxu0
          %v1505 = vadd.f32 0.0, %v1504
          %v1506 = vpop.f32.mrf.mxu0
          %1507 = vmatprep.mubr.bf16.mxu0 0
          %1508 = vmatmul.mubr.bf16.gmra.mxu0 %v1226
          %v1509 = vpop.f32.mrf.mxu0
          %v1510 = vadd.f32 0.0, %v1509
          %v1511 = vpop.f32.mrf.mxu0
          %v1512 = vpop.f32.mrf.mxu0
          %v1513 = vadd.f32 0.0, %v1512
          %v1514 = vpop.f32.mrf.mxu0
          %1515 = vmatprep.mubr.bf16.mxu0 0
          %1516 = vmatmul.mubr.bf16.gmra.mxu0 %v1227
          %v1517 = vpop.f32.mrf.mxu0
          %v1518 = vadd.f32 0.0, %v1517
          %v1519 = vpop.f32.mrf.mxu0
          %v1520 = vpop.f32.mrf.mxu0
          %v1521 = vadd.f32 0.0, %v1520
          %v1522 = vpop.f32.mrf.mxu0
          %1523 = vmatprep.mubr.bf16.mxu0 0
          %1524 = vmatmul.mubr.bf16.gmra.mxu0 %v1228
          %v1525 = vpop.f32.mrf.mxu0
          %v1526 = vadd.f32 0.0, %v1525
          %v1527 = vpop.f32.mrf.mxu0
          %v1528 = vpop.f32.mrf.mxu0
          %v1529 = vadd.f32 0.0, %v1528
          %v1530 = vpop.f32.mrf.mxu0
          %1531 = vdwg.mxu0
          %v1532 = vadd.f32 %v1411, %v1502
          %v1533 = vadd.f32 %v1412, %v1505
          %v1534 = vadd.f32 %v1413, %v1510
          %v1535 = vadd.f32 %v1414, %v1513
          %v1536 = vadd.f32 %v1415, %v1518
          %v1537 = vadd.f32 %v1416, %v1521
          %v1538 = vadd.f32 %v1417, %v1526
          %v1539 = vadd.f32 %v1418, %v1529
          %v1556 = vunpack.c.l.b16 %v1275
          %v1557 = vunpack.c.l.b16 %v1276
          %v1558 = vunpack.c.l.b16 %v1277
          %v1559 = vunpack.c.l.b16 %v1278
          %v1560 = vunpack.c.l.b16 %v1279
          %v1561 = vunpack.c.l.b16 %v1280
          %v1562 = vunpack.c.l.b16 %v1281
          %v1563 = vunpack.c.l.b16 %v1282
          %v1564 = vunpack.c.l.b16 %v1283
          %v1565 = vunpack.c.l.b16 %v1284
          %v1566 = vunpack.c.l.b16 %v1285
          %v1567 = vunpack.c.l.b16 %v1286
          %v1568 = vunpack.c.l.b16 %v1287
          %v1569 = vunpack.c.l.b16 %v1288
          %v1570 = vunpack.c.l.b16 %v1289
          %v1571 = vunpack.c.l.b16 %v1290
          %v1572 = vpack.c.b16 %v1557, %v1556
          %v1573 = vpack.c.b16 %v1559, %v1558
          %v1574 = vpack.c.b16 %v1561, %v1560
          %v1575 = vpack.c.b16 %v1563, %v1562
          %v1576 = vpack.c.b16 %v1565, %v1564
          %v1577 = vpack.c.b16 %v1567, %v1566
          %v1578 = vpack.c.b16 %v1569, %v1568
          %v1579 = vpack.c.b16 %v1571, %v1570
          %1588 = vmatprep.subr.bf16.mxu0 0
          %1589 = vmatpush1.bf16.msra.mxu0 %v1579
          %1590 = vmatprep.subr.bf16.mxu0 0
          %1591 = vmatpush1.bf16.msra.mxu0 %v1578
          %1592 = vmatprep.subr.bf16.mxu0 0
          %1593 = vmatpush1.bf16.msra.mxu0 %v1577
          %1594 = vmatprep.subr.bf16.mxu0 0
          %1595 = vmatpush1.bf16.msra.mxu0 %v1576
          %1596 = vmatprep.subr.bf16.mxu0 0
          %1597 = vmatpush1.bf16.msra.mxu0 %v1575
          %1598 = vmatprep.subr.bf16.mxu0 0
          %1599 = vmatpush1.bf16.msra.mxu0 %v1574
          %1600 = vmatprep.subr.bf16.mxu0 0
          %1601 = vmatpush1.bf16.msra.mxu0 %v1573
          %1602 = vmatprep.subr.bf16.mxu0 0
          %1603 = vmatpush1.bf16.msra.mxu0 %v1572
          %1604 = vmatprep.subr.bf16.mxu0 0
          %1605 = vmatpush2.bf16.msra.mxu0 0
          %1606 = vmatprep.subr.bf16.mxu0 0
          %1607 = vmatpush2.bf16.msra.mxu0 0
          %1608 = vmatprep.subr.bf16.mxu0 0
          %1609 = vmatpush2.bf16.msra.mxu0 0
          %1610 = vmatprep.subr.bf16.mxu0 0
          %1611 = vmatpush2.bf16.msra.mxu0 0
          %1612 = vmatprep.subr.bf16.mxu0 0
          %1613 = vmatpush2.bf16.msra.mxu0 0
          %1614 = vmatprep.subr.bf16.mxu0 0
          %1615 = vmatpush2.bf16.msra.mxu0 0
          %1616 = vmatprep.subr.bf16.mxu0 0
          %1617 = vmatpush2.bf16.msra.mxu0 0
          %1618 = vmatprep.subr.bf16.mxu0 0
          %1619 = vmatpush2.bf16.msra.mxu0 0
          %1620 = vmatprep.mubr.bf16.mxu0 0
          %1621 = vmatmul.mubr.bf16.gmra.mxu0 %v1229
          %v1622 = vpop.f32.mrf.mxu0
          %v1623 = vadd.f32 0.0, %v1622
          %v1624 = vpop.f32.mrf.mxu0
          %v1625 = vpop.f32.mrf.mxu0
          %v1626 = vadd.f32 0.0, %v1625
          %v1627 = vpop.f32.mrf.mxu0
          %1628 = vmatprep.mubr.bf16.mxu0 0
          %1629 = vmatmul.mubr.bf16.gmra.mxu0 %v1230
          %v1630 = vpop.f32.mrf.mxu0
          %v1631 = vadd.f32 0.0, %v1630
          %v1632 = vpop.f32.mrf.mxu0
          %v1633 = vpop.f32.mrf.mxu0
          %v1634 = vadd.f32 0.0, %v1633
          %v1635 = vpop.f32.mrf.mxu0
          %1636 = vmatprep.mubr.bf16.mxu0 0
          %1637 = vmatmul.mubr.bf16.gmra.mxu0 %v1231
          %v1638 = vpop.f32.mrf.mxu0
          %v1639 = vadd.f32 0.0, %v1638
          %v1640 = vpop.f32.mrf.mxu0
          %v1641 = vpop.f32.mrf.mxu0
          %v1642 = vadd.f32 0.0, %v1641
          %v1643 = vpop.f32.mrf.mxu0
          %1644 = vmatprep.mubr.bf16.mxu0 0
          %1645 = vmatmul.mubr.bf16.gmra.mxu0 %v1232
          %v1646 = vpop.f32.mrf.mxu0
          %v1647 = vadd.f32 0.0, %v1646
          %v1648 = vpop.f32.mrf.mxu0
          %v1649 = vpop.f32.mrf.mxu0
          %v1650 = vadd.f32 0.0, %v1649
          %v1651 = vpop.f32.mrf.mxu0
          %1652 = vdwg.mxu0
          %v1653 = vadd.f32 %v1532, %v1623
          %v1654 = vadd.f32 %v1533, %v1626
          %v1655 = vadd.f32 %v1534, %v1631
          %v1656 = vadd.f32 %v1535, %v1634
          %v1657 = vadd.f32 %v1536, %v1639
          %v1658 = vadd.f32 %v1537, %v1642
          %v1659 = vadd.f32 %v1538, %v1647
          %v1660 = vadd.f32 %v1539, %v1650
          %v1661 = vmul.f32 %v1653, 0.5
          %v1662 = vmul.f32 %v1654, 0.5
          %v1663 = vmul.f32 %v1655, 0.5
          %v1664 = vmul.f32 %v1656, 0.5
          %v1665 = vmul.f32 %v1657, 0.5
          %v1666 = vmul.f32 %v1658, 0.5
          %v1667 = vmul.f32 %v1659, 0.5
          %v1668 = vmul.f32 %v1660, 0.5
          %v1669 = vmul.f32 %v1653, 0.044715
          %v1670 = vmul.f32 %v1654, 0.044715
          %v1671 = vmul.f32 %v1655, 0.044715
          %v1672 = vmul.f32 %v1656, 0.044715
          %v1673 = vmul.f32 %v1657, 0.044715
          %v1674 = vmul.f32 %v1658, 0.044715
          %v1675 = vmul.f32 %v1659, 0.044715
          %v1676 = vmul.f32 %v1660, 0.044715
          %v1677 = vmul.f32 %v1669, %v1653
          %v1678 = vmul.f32 %v1670, %v1654
          %v1679 = vmul.f32 %v1671, %v1655
          %v1680 = vmul.f32 %v1672, %v1656
          %v1681 = vmul.f32 %v1673, %v1657
          %v1682 = vmul.f32 %v1674, %v1658
          %v1683 = vmul.f32 %v1675, %v1659
          %v1684 = vmul.f32 %v1676, %v1660
          %v1685 = vmul.f32 %v1677, %v1653
          %v1686 = vmul.f32 %v1678, %v1654
          %v1687 = vmul.f32 %v1679, %v1655
          %v1688 = vmul.f32 %v1680, %v1656
          %v1689 = vmul.f32 %v1681, %v1657
          %v1690 = vmul.f32 %v1682, %v1658
          %v1691 = vmul.f32 %v1683, %v1659
          %v1692 = vmul.f32 %v1684, %v1660
          %v1693 = vadd.f32 %v1653, %v1685
          %v1694 = vadd.f32 %v1654, %v1686
          %v1695 = vadd.f32 %v1655, %v1687
          %v1696 = vadd.f32 %v1656, %v1688
          %v1697 = vadd.f32 %v1657, %v1689
          %v1698 = vadd.f32 %v1658, %v1690
          %v1699 = vadd.f32 %v1659, %v1691
          %v1700 = vadd.f32 %v1660, %v1692
          %v1701 = vmul.f32 %v1693, 0.7978846
          %v1702 = vmul.f32 %v1694, 0.7978846
          %v1703 = vmul.f32 %v1695, 0.7978846
          %v1704 = vmul.f32 %v1696, 0.7978846
          %v1705 = vmul.f32 %v1697, 0.7978846
          %v1706 = vmul.f32 %v1698, 0.7978846
          %v1707 = vmul.f32 %v1699, 0.7978846
          %v1708 = vmul.f32 %v1700, 0.7978846
          %v1709 = vtanh.pop %v1701
          %v1710 = vtanh.pop %v1702
          %v1711 = vtanh.pop %v1703
          %v1712 = vtanh.pop %v1704
          %v1713 = vtanh.pop %v1705
          %v1714 = vtanh.pop %v1706
          %v1715 = vtanh.pop %v1707
          %v1716 = vtanh.pop %v1708
          %v1717 = vadd.f32 %v1709, 1.0
          %v1718 = vadd.f32 %v1710, 1.0
          %v1719 = vadd.f32 %v1711, 1.0
          %v1720 = vadd.f32 %v1712, 1.0
          %v1721 = vadd.f32 %v1713, 1.0
          %v1722 = vadd.f32 %v1714, 1.0
          %v1723 = vadd.f32 %v1715, 1.0
          %v1724 = vadd.f32 %v1716, 1.0
          %v1725 = vmul.f32 %v1661, %v1717
          %v1726 = vmul.f32 %v1662, %v1718
          %v1727 = vmul.f32 %v1663, %v1719
          %v1728 = vmul.f32 %v1664, %v1720
          %v1729 = vmul.f32 %v1665, %v1721
          %v1730 = vmul.f32 %v1666, %v1722
          %v1731 = vmul.f32 %v1667, %v1723
          %v1732 = vmul.f32 %v1668, %v1724
          %1733 = vmatprep.subr.bf16.mxu0 0
          %1734 = vmatpush1.bf16.msra.mxu0 %v1331
          %1735 = vmatprep.subr.bf16.mxu0 0
          %1736 = vmatpush1.bf16.msra.mxu0 %v1330
          %1737 = vmatprep.subr.bf16.mxu0 0
          %1738 = vmatpush1.bf16.msra.mxu0 %v1329
          %1739 = vmatprep.subr.bf16.mxu0 0
          %1740 = vmatpush1.bf16.msra.mxu0 %v1328
          %1741 = vmatprep.subr.bf16.mxu0 0
          %1742 = vmatpush1.bf16.msra.mxu0 %v1327
          %1743 = vmatprep.subr.bf16.mxu0 0
          %1744 = vmatpush1.bf16.msra.mxu0 %v1326
          %1745 = vmatprep.subr.bf16.mxu0 0
          %1746 = vmatpush1.bf16.msra.mxu0 %v1325
          %1747 = vmatprep.subr.bf16.mxu0 0
          %1748 = vmatpush1.bf16.msra.mxu0 %v1324
          %1749 = vmatprep.subr.bf16.mxu0 0
          %1750 = vmatpush2.bf16.msra.mxu0 0
          %1751 = vmatprep.subr.bf16.mxu0 0
          %1752 = vmatpush2.bf16.msra.mxu0 0
          %1753 = vmatprep.subr.bf16.mxu0 0
          %1754 = vmatpush2.bf16.msra.mxu0 0
          %1755 = vmatprep.subr.bf16.mxu0 0
          %1756 = vmatpush2.bf16.msra.mxu0 0
          %1757 = vmatprep.subr.bf16.mxu0 0
          %1758 = vmatpush2.bf16.msra.mxu0 0
          %1759 = vmatprep.subr.bf16.mxu0 0
          %1760 = vmatpush2.bf16.msra.mxu0 0
          %1761 = vmatprep.subr.bf16.mxu0 0
          %1762 = vmatpush2.bf16.msra.mxu0 0
          %1763 = vmatprep.subr.bf16.mxu0 0
          %1764 = vmatpush2.bf16.msra.mxu0 0
          %1765 = vmatprep.mubr.bf16.mxu0 0
          %1766 = vmatmul.mubr.bf16.gmra.mxu0 %v1225
          %v1767 = vpop.f32.mrf.mxu0
          %v1768 = vadd.f32 0.0, %v1767
          %v1769 = vpop.f32.mrf.mxu0
          %v1770 = vpop.f32.mrf.mxu0
          %v1771 = vadd.f32 0.0, %v1770
          %v1772 = vpop.f32.mrf.mxu0
          %1773 = vmatprep.mubr.bf16.mxu0 0
          %1774 = vmatmul.mubr.bf16.gmra.mxu0 %v1226
          %v1775 = vpop.f32.mrf.mxu0
          %v1776 = vadd.f32 0.0, %v1775
          %v1777 = vpop.f32.mrf.mxu0
          %v1778 = vpop.f32.mrf.mxu0
          %v1779 = vadd.f32 0.0, %v1778
          %v1780 = vpop.f32.mrf.mxu0
          %1781 = vmatprep.mubr.bf16.mxu0 0
          %1782 = vmatmul.mubr.bf16.gmra.mxu0 %v1227
          %v1783 = vpop.f32.mrf.mxu0
          %v1784 = vadd.f32 0.0, %v1783
          %v1785 = vpop.f32.mrf.mxu0
          %v1786 = vpop.f32.mrf.mxu0
          %v1787 = vadd.f32 0.0, %v1786
          %v1788 = vpop.f32.mrf.mxu0
          %1789 = vmatprep.mubr.bf16.mxu0 0
          %1790 = vmatmul.mubr.bf16.gmra.mxu0 %v1228
          %v1791 = vpop.f32.mrf.mxu0
          %v1792 = vadd.f32 0.0, %v1791
          %v1793 = vpop.f32.mrf.mxu0
          %v1794 = vpop.f32.mrf.mxu0
          %v1795 = vadd.f32 0.0, %v1794
          %v1796 = vpop.f32.mrf.mxu0
          %1797 = vdwg.mxu0
          %v1798 = vadd.f32 %v1409, %v1768
          %v1799 = vadd.f32 %v1409, %v1771
          %v1800 = vadd.f32 %v1409, %v1776
          %v1801 = vadd.f32 %v1409, %v1779
          %v1802 = vadd.f32 %v1409, %v1784
          %v1803 = vadd.f32 %v1409, %v1787
          %v1804 = vadd.f32 %v1409, %v1792
          %v1805 = vadd.f32 %v1409, %v1795
          %1806 = vmatprep.subr.bf16.mxu0 0
          %1807 = vmatpush1.bf16.msra.mxu0 %v1458
          %1808 = vmatprep.subr.bf16.mxu0 0
          %1809 = vmatpush1.bf16.msra.mxu0 %v1457
          %1810 = vmatprep.subr.bf16.mxu0 0
          %1811 = vmatpush1.bf16.msra.mxu0 %v1456
          %1812 = vmatprep.subr.bf16.mxu0 0
          %1813 = vmatpush1.bf16.msra.mxu0 %v1455
          %1814 = vmatprep.subr.bf16.mxu0 0
          %1815 = vmatpush1.bf16.msra.mxu0 %v1454
          %1816 = vmatprep.subr.bf16.mxu0 0
          %1817 = vmatpush1.bf16.msra.mxu0 %v1453
          %1818 = vmatprep.subr.bf16.mxu0 0
          %1819 = vmatpush1.bf16.msra.mxu0 %v1452
          %1820 = vmatprep.subr.bf16.mxu0 0
          %1821 = vmatpush1.bf16.msra.mxu0 %v1451
          %1822 = vmatprep.subr.bf16.mxu0 0
          %1823 = vmatpush2.bf16.msra.mxu0 0
          %1824 = vmatprep.subr.bf16.mxu0 0
          %1825 = vmatpush2.bf16.msra.mxu0 0
          %1826 = vmatprep.subr.bf16.mxu0 0
          %1827 = vmatpush2.bf16.msra.mxu0 0
          %1828 = vmatprep.subr.bf16.mxu0 0
          %1829 = vmatpush2.bf16.msra.mxu0 0
          %1830 = vmatprep.subr.bf16.mxu0 0
          %1831 = vmatpush2.bf16.msra.mxu0 0
          %1832 = vmatprep.subr.bf16.mxu0 0
          %1833 = vmatpush2.bf16.msra.mxu0 0
          %1834 = vmatprep.subr.bf16.mxu0 0
          %1835 = vmatpush2.bf16.msra.mxu0 0
          %1836 = vmatprep.subr.bf16.mxu0 0
          %1837 = vmatpush2.bf16.msra.mxu0 0
          %1838 = vmatprep.mubr.bf16.mxu0 0
          %1839 = vmatmul.mubr.bf16.gmra.mxu0 %v1229
          %v1840 = vpop.f32.mrf.mxu0
          %v1841 = vadd.f32 0.0, %v1840
          %v1842 = vpop.f32.mrf.mxu0
          %v1843 = vpop.f32.mrf.mxu0
          %v1844 = vadd.f32 0.0, %v1843
          %v1845 = vpop.f32.mrf.mxu0
          %1846 = vmatprep.mubr.bf16.mxu0 0
          %1847 = vmatmul.mubr.bf16.gmra.mxu0 %v1230
          %v1848 = vpop.f32.mrf.mxu0
          %v1849 = vadd.f32 0.0, %v1848
          %v1850 = vpop.f32.mrf.mxu0
          %v1851 = vpop.f32.mrf.mxu0
          %v1852 = vadd.f32 0.0, %v1851
          %v1853 = vpop.f32.mrf.mxu0
          %1854 = vmatprep.mubr.bf16.mxu0 0
          %1855 = vmatmul.mubr.bf16.gmra.mxu0 %v1231
          %v1856 = vpop.f32.mrf.mxu0
          %v1857 = vadd.f32 0.0, %v1856
          %v1858 = vpop.f32.mrf.mxu0
          %v1859 = vpop.f32.mrf.mxu0
          %v1860 = vadd.f32 0.0, %v1859
          %v1861 = vpop.f32.mrf.mxu0
          %1862 = vmatprep.mubr.bf16.mxu0 0
          %1863 = vmatmul.mubr.bf16.gmra.mxu0 %v1232
          %v1864 = vpop.f32.mrf.mxu0
          %v1865 = vadd.f32 0.0, %v1864
          %v1866 = vpop.f32.mrf.mxu0
          %v1867 = vpop.f32.mrf.mxu0
          %v1868 = vadd.f32 0.0, %v1867
          %v1869 = vpop.f32.mrf.mxu0
          %1870 = vdwg.mxu0
          %v1871 = vadd.f32 %v1798, %v1841
          %v1872 = vadd.f32 %v1799, %v1844
          %v1873 = vadd.f32 %v1800, %v1849
          %v1874 = vadd.f32 %v1801, %v1852
          %v1875 = vadd.f32 %v1802, %v1857
          %v1876 = vadd.f32 %v1803, %v1860
          %v1877 = vadd.f32 %v1804, %v1865
          %v1878 = vadd.f32 %v1805, %v1868
          %1879 = vmatprep.subr.bf16.mxu0 0
          %1880 = vmatpush1.bf16.msra.mxu0 %v1579
          %1881 = vmatprep.subr.bf16.mxu0 0
          %1882 = vmatpush1.bf16.msra.mxu0 %v1578
          %1883 = vmatprep.subr.bf16.mxu0 0
          %1884 = vmatpush1.bf16.msra.mxu0 %v1577
          %1885 = vmatprep.subr.bf16.mxu0 0
          %1886 = vmatpush1.bf16.msra.mxu0 %v1576
          %1887 = vmatprep.subr.bf16.mxu0 0
          %1888 = vmatpush1.bf16.msra.mxu0 %v1575
          %1889 = vmatprep.subr.bf16.mxu0 0
          %1890 = vmatpush1.bf16.msra.mxu0 %v1574
          %1891 = vmatprep.subr.bf16.mxu0 0
          %1892 = vmatpush1.bf16.msra.mxu0 %v1573
          %1893 = vmatprep.subr.bf16.mxu0 0
          %1894 = vmatpush1.bf16.msra.mxu0 %v1572
          %1895 = vmatprep.subr.bf16.mxu0 0
          %1896 = vmatpush2.bf16.msra.mxu0 0
          %1897 = vmatprep.subr.bf16.mxu0 0
          %1898 = vmatpush2.bf16.msra.mxu0 0
          %1899 = vmatprep.subr.bf16.mxu0 0
          %1900 = vmatpush2.bf16.msra.mxu0 0
          %1901 = vmatprep.subr.bf16.mxu0 0
          %1902 = vmatpush2.bf16.msra.mxu0 0
          %1903 = vmatprep.subr.bf16.mxu0 0
          %1904 = vmatpush2.bf16.msra.mxu0 0
          %1905 = vmatprep.subr.bf16.mxu0 0
          %1906 = vmatpush2.bf16.msra.mxu0 0
          %1907 = vmatprep.subr.bf16.mxu0 0
          %1908 = vmatpush2.bf16.msra.mxu0 0
          %1909 = vmatprep.subr.bf16.mxu0 0
          %1910 = vmatpush2.bf16.msra.mxu0 0
          %1911 = vmatprep.mubr.bf16.mxu0 0
          %1912 = vmatmul.mubr.bf16.gmra.mxu0 %v1237
          %v1913 = vpop.f32.mrf.mxu0
          %v1914 = vadd.f32 0.0, %v1913
          %v1915 = vpop.f32.mrf.mxu0
          %v1916 = vpop.f32.mrf.mxu0
          %v1917 = vadd.f32 0.0, %v1916
          %v1918 = vpop.f32.mrf.mxu0
          %1919 = vmatprep.mubr.bf16.mxu0 0
          %1920 = vmatmul.mubr.bf16.gmra.mxu0 %v1238
          %v1921 = vpop.f32.mrf.mxu0
          %v1922 = vadd.f32 0.0, %v1921
          %v1923 = vpop.f32.mrf.mxu0
          %v1924 = vpop.f32.mrf.mxu0
          %v1925 = vadd.f32 0.0, %v1924
          %v1926 = vpop.f32.mrf.mxu0
          %1927 = vmatprep.mubr.bf16.mxu0 0
          %1928 = vmatmul.mubr.bf16.gmra.mxu0 %v1239
          %v1929 = vpop.f32.mrf.mxu0
          %v1930 = vadd.f32 0.0, %v1929
          %v1931 = vpop.f32.mrf.mxu0
          %v1932 = vpop.f32.mrf.mxu0
          %v1933 = vadd.f32 0.0, %v1932
          %v1934 = vpop.f32.mrf.mxu0
          %1935 = vmatprep.mubr.bf16.mxu0 0
          %1936 = vmatmul.mubr.bf16.gmra.mxu0 %v1240
          %v1937 = vpop.f32.mrf.mxu0
          %v1938 = vadd.f32 0.0, %v1937
          %v1939 = vpop.f32.mrf.mxu0
          %v1940 = vpop.f32.mrf.mxu0
          %v1941 = vadd.f32 0.0, %v1940
          %v1942 = vpop.f32.mrf.mxu0
          %1943 = vdwg.mxu0
          %v1944 = vadd.f32 %v1871, %v1914
          %v1945 = vadd.f32 %v1872, %v1917
          %v1946 = vadd.f32 %v1873, %v1922
          %v1947 = vadd.f32 %v1874, %v1925
          %v1948 = vadd.f32 %v1875, %v1930
          %v1949 = vadd.f32 %v1876, %v1933
          %v1950 = vadd.f32 %v1877, %v1938
          %v1951 = vadd.f32 %v1878, %v1941
          %v1952 = vmul.f32 %v1944, 0.5
          %v1953 = vmul.f32 %v1945, 0.5
          %v1954 = vmul.f32 %v1946, 0.5
          %v1955 = vmul.f32 %v1947, 0.5
          %v1956 = vmul.f32 %v1948, 0.5
          %v1957 = vmul.f32 %v1949, 0.5
          %v1958 = vmul.f32 %v1950, 0.5
          %v1959 = vmul.f32 %v1951, 0.5
          %v1960 = vmul.f32 %v1944, 0.044715
          %v1961 = vmul.f32 %v1945, 0.044715
          %v1962 = vmul.f32 %v1946, 0.044715
          %v1963 = vmul.f32 %v1947, 0.044715
          %v1964 = vmul.f32 %v1948, 0.044715
          %v1965 = vmul.f32 %v1949, 0.044715
          %v1966 = vmul.f32 %v1950, 0.044715
          %v1967 = vmul.f32 %v1951, 0.044715
          %v1968 = vmul.f32 %v1960, %v1944
          %v1969 = vmul.f32 %v1961, %v1945
          %v1970 = vmul.f32 %v1962, %v1946
          %v1971 = vmul.f32 %v1963, %v1947
          %v1972 = vmul.f32 %v1964, %v1948
          %v1973 = vmul.f32 %v1965, %v1949
          %v1974 = vmul.f32 %v1966, %v1950
          %v1975 = vmul.f32 %v1967, %v1951
          %v1976 = vmul.f32 %v1968, %v1944
          %v1977 = vmul.f32 %v1969, %v1945
          %v1978 = vmul.f32 %v1970, %v1946
          %v1979 = vmul.f32 %v1971, %v1947
          %v1980 = vmul.f32 %v1972, %v1948
          %v1981 = vmul.f32 %v1973, %v1949
          %v1982 = vmul.f32 %v1974, %v1950
          %v1983 = vmul.f32 %v1975, %v1951
          %v1984 = vadd.f32 %v1944, %v1976
          %v1985 = vadd.f32 %v1945, %v1977
          %v1986 = vadd.f32 %v1946, %v1978
          %v1987 = vadd.f32 %v1947, %v1979
          %v1988 = vadd.f32 %v1948, %v1980
          %v1989 = vadd.f32 %v1949, %v1981
          %v1990 = vadd.f32 %v1950, %v1982
          %v1991 = vadd.f32 %v1951, %v1983
          %v1992 = vmul.f32 %v1984, 0.7978846
          %v1993 = vmul.f32 %v1985, 0.7978846
          %v1994 = vmul.f32 %v1986, 0.7978846
          %v1995 = vmul.f32 %v1987, 0.7978846
          %v1996 = vmul.f32 %v1988, 0.7978846
          %v1997 = vmul.f32 %v1989, 0.7978846
          %v1998 = vmul.f32 %v1990, 0.7978846
          %v1999 = vmul.f32 %v1991, 0.7978846
          %v2000 = vtanh.pop %v1992
          %v2001 = vtanh.pop %v1993
          %v2002 = vtanh.pop %v1994
          %v2003 = vtanh.pop %v1995
          %v2004 = vtanh.pop %v1996
          %v2005 = vtanh.pop %v1997
          %v2006 = vtanh.pop %v1998
          %v2007 = vtanh.pop %v1999
          %v2008 = vadd.f32 %v2000, 1.0
          %v2009 = vadd.f32 %v2001, 1.0
          %v2010 = vadd.f32 %v2002, 1.0
          %v2011 = vadd.f32 %v2003, 1.0
          %v2012 = vadd.f32 %v2004, 1.0
          %v2013 = vadd.f32 %v2005, 1.0
          %v2014 = vadd.f32 %v2006, 1.0
          %v2015 = vadd.f32 %v2007, 1.0
          %v2016 = vmul.f32 %v1952, %v2008
          %v2017 = vmul.f32 %v1953, %v2009
          %v2018 = vmul.f32 %v1954, %v2010
          %v2019 = vmul.f32 %v1955, %v2011
          %v2020 = vmul.f32 %v1956, %v2012
          %v2021 = vmul.f32 %v1957, %v2013
          %v2022 = vmul.f32 %v1958, %v2014
          %v2023 = vmul.f32 %v1959, %v2015
          %v2024 = vrot.slane %v2016, 7
          %v2025 = vrot.slane %v2017, 7
          %v2026 = vrot.slane %v2018, 7
          %v2027 = vrot.slane %v2019, 7
          %v2028 = vrot.slane %v2020, 7
          %v2029 = vrot.slane %v2021, 7
          %v2030 = vrot.slane %v2022, 7
          %v2031 = vrot.slane %v2023, 7
          %v2032 = vsel %vm1064, %v2030, %v2031
          %v2033 = vsel %vm1064, %v2029, %v2030
          %v2034 = vsel %vm1064, %v2028, %v2029
          %v2035 = vsel %vm1064, %v2027, %v2028
          %v2036 = vsel %vm1064, %v2026, %v2027
          %v2037 = vsel %vm1064, %v2025, %v2026
          %v2038 = vsel %vm1064, %v2024, %v2025
          %v2039 = vsel %vm1064, %v2031, %v2024
          %v2040 = vsel %vm1176, 0.0, %v2039
          %v2041 = vsel %vm1177, 0.0, %v2038
          %v2042 = vsel %vm1178, 0.0, %v2037
          %v2043 = vsel %vm1179, 0.0, %v2036
          %v2044 = vsel %vm1180, 0.0, %v2035
          %v2045 = vsel %vm1181, 0.0, %v2034
          %v2046 = vsel %vm1182, 0.0, %v2033
          %v2047 = vsel %vm1183, 0.0, %v2032
          %v2048 = vpack.c.bf16 %v1726, %v1725
          %v2049 = vpack.c.bf16 %v1728, %v1727
          %v2050 = vpack.c.bf16 %v1730, %v1729
          %v2051 = vpack.c.bf16 %v1732, %v1731
          %v2052 = vpack.c.bf16 %v2017, %v2016
          %v2053 = vpack.c.bf16 %v2019, %v2018
          %v2054 = vpack.c.bf16 %v2021, %v2020
          %v2055 = vpack.c.bf16 %v2023, %v2022
          %v2056 = vpack.c.bf16 %v2041, %v2040
          %v2057 = vpack.c.bf16 %v2043, %v2042
          %v2058 = vpack.c.bf16 %v2045, %v2044
          %v2059 = vpack.c.bf16 %v2047, %v2046
          %v2060 = vld [vmem:[%s4] sm:$0x1]
          %v2061 = vld [vmem:[%s3] sm:$0xf]
          %v2062 = vld [vmem:[%s3 + $0x4] sm:$0xf]
          %v2063 = vld [vmem:[%s3 + $0x8] sm:$0xf]
          %v2064 = vld [vmem:[%s3 + $0xc] sm:$0xf]
          %v2065 = vld [vmem:[%s3 + $0x10] sm:$0xf]
          %v2066 = vld [vmem:[%s3 + $0x14] sm:$0xf]
          %v2067 = vld [vmem:[%s3 + $0x18] sm:$0xf]
          %v2068 = vld [vmem:[%s3 + $0x1c] sm:$0xf]
          %v2077 = vunpack.c.l.b16 %v2061
          %v2078 = vunpack.c.l.b16 %v2062
          %v2079 = vunpack.c.l.b16 %v2063
          %v2080 = vunpack.c.l.b16 %v2064
          %v2081 = vunpack.c.l.b16 %v2065
          %v2082 = vunpack.c.l.b16 %v2066
          %v2083 = vunpack.c.l.b16 %v2067
          %v2084 = vunpack.c.l.b16 %v2068
          %v2085 = vpack.c.b16 %v2078, %v2077
          %v2086 = vpack.c.b16 %v2080, %v2079
          %v2087 = vpack.c.b16 %v2082, %v2081
          %v2088 = vpack.c.b16 %v2084, %v2083
          %vm2093 = vcmask 523264
          %v2095 = vsel %vm2093, %v2056, 0
          %v2098 = vsel %vm2093, %v2057, 0
          %v2101 = vsel %vm2093, %v2058, 0
          %v2104 = vsel %vm2093, %v2059, 0
          %2106 = vmatprep.subr.bf16.mxu0 0
          %2107 = vmatpush1.bf16.msra.mxu0 0
          %2108 = vmatprep.subr.bf16.mxu0 0
          %2109 = vmatpush1.bf16.msra.mxu0 0
          %2110 = vmatprep.subr.bf16.mxu0 0
          %2111 = vmatpush1.bf16.msra.mxu0 0
          %2112 = vmatprep.subr.bf16.mxu0 0
          %2113 = vmatpush1.bf16.msra.mxu0 0
          %2114 = vmatprep.subr.bf16.mxu0 0
          %2115 = vmatpush1.bf16.msra.mxu0 %v2088
          %2116 = vmatprep.subr.bf16.mxu0 0
          %2117 = vmatpush1.bf16.msra.mxu0 %v2087
          %2118 = vmatprep.subr.bf16.mxu0 0
          %2119 = vmatpush1.bf16.msra.mxu0 %v2086
          %2120 = vmatprep.subr.bf16.mxu0 0
          %2121 = vmatpush1.bf16.msra.mxu0 %v2085
          %2122 = vmatprep.subr.bf16.mxu0 0
          %2123 = vmatpush2.bf16.msra.mxu0 0
          %2124 = vmatprep.subr.bf16.mxu0 0
          %2125 = vmatpush2.bf16.msra.mxu0 0
          %2126 = vmatprep.subr.bf16.mxu0 0
          %2127 = vmatpush2.bf16.msra.mxu0 0
          %2128 = vmatprep.subr.bf16.mxu0 0
          %2129 = vmatpush2.bf16.msra.mxu0 0
          %2130 = vmatprep.subr.bf16.mxu0 0
          %2131 = vmatpush2.bf16.msra.mxu0 0
          %2132 = vmatprep.subr.bf16.mxu0 0
          %2133 = vmatpush2.bf16.msra.mxu0 0
          %2134 = vmatprep.subr.bf16.mxu0 0
          %2135 = vmatpush2.bf16.msra.mxu0 0
          %2136 = vmatprep.subr.bf16.mxu0 0
          %2137 = vmatpush2.bf16.msra.mxu0 0
          %2138 = vmatprep.mubr.bf16.mxu0 0
          %2139 = vmatmul.mubr.bf16.gmra.mxu0 %v2095
          %v2140 = vpop.f32.mrf.mxu0
          %v2141 = vadd.f32 0.0, %v2140
          %v2142 = vpop.f32.mrf.mxu0
          %v2143 = vpop.f32.mrf.mxu0
          %v2144 = vadd.f32 0.0, %v2143
          %v2145 = vpop.f32.mrf.mxu0
          %2146 = vmatprep.mubr.bf16.mxu0 0
          %2147 = vmatmul.mubr.bf16.gmra.mxu0 %v2098
          %v2148 = vpop.f32.mrf.mxu0
          %v2149 = vadd.f32 0.0, %v2148
          %v2150 = vpop.f32.mrf.mxu0
          %v2151 = vpop.f32.mrf.mxu0
          %v2152 = vadd.f32 0.0, %v2151
          %v2153 = vpop.f32.mrf.mxu0
          %2154 = vmatprep.mubr.bf16.mxu0 0
          %2155 = vmatmul.mubr.bf16.gmra.mxu0 %v2101
          %v2156 = vpop.f32.mrf.mxu0
          %v2157 = vadd.f32 0.0, %v2156
          %v2158 = vpop.f32.mrf.mxu0
          %v2159 = vpop.f32.mrf.mxu0
          %v2160 = vadd.f32 0.0, %v2159
          %v2161 = vpop.f32.mrf.mxu0
          %2162 = vmatprep.mubr.bf16.mxu0 0
          %2163 = vmatmul.mubr.bf16.gmra.mxu0 %v2104
          %v2164 = vpop.f32.mrf.mxu0
          %v2165 = vadd.f32 0.0, %v2164
          %v2166 = vpop.f32.mrf.mxu0
          %v2167 = vpop.f32.mrf.mxu0
          %v2168 = vadd.f32 0.0, %v2167
          %v2169 = vpop.f32.mrf.mxu0
          %2170 = vdwg.mxu0
          %v2172 = vlaneseq
          %v2173 = vshrl.u32 %v2172, 7
          %v2174 = vsub.s32 0, %v2173
          %v2175 = vrot.slane %v2060, %v2174
          %v2177 = vadd.f32 %v2175, %v2141
          %v2178 = vadd.f32 %v2175, %v2144
          %v2179 = vadd.f32 %v2175, %v2149
          %v2180 = vadd.f32 %v2175, %v2152
          %v2181 = vadd.f32 %v2175, %v2157
          %v2182 = vadd.f32 %v2175, %v2160
          %v2183 = vadd.f32 %v2175, %v2165
          %v2184 = vadd.f32 %v2175, %v2168
          %s2185 = scalar_lea.vmem %s3, 32
          %v2186 = vld [vmem:[%s2185] sm:$0xf]
          %v2187 = vld [vmem:[%s2185 + $0x4] sm:$0xf]
          %v2188 = vld [vmem:[%s2185 + $0x8] sm:$0xf]
          %v2189 = vld [vmem:[%s2185 + $0xc] sm:$0xf]
          %v2190 = vld [vmem:[%s2185 + $0x10] sm:$0xf]
          %v2191 = vld [vmem:[%s2185 + $0x14] sm:$0xf]
          %v2192 = vld [vmem:[%s2185 + $0x18] sm:$0xf]
          %v2193 = vld [vmem:[%s2185 + $0x1c] sm:$0xf]
          %v2202 = vunpack.c.l.b16 %v2186
          %v2203 = vunpack.c.l.b16 %v2187
          %v2204 = vunpack.c.l.b16 %v2188
          %v2205 = vunpack.c.l.b16 %v2189
          %v2206 = vunpack.c.l.b16 %v2190
          %v2207 = vunpack.c.l.b16 %v2191
          %v2208 = vunpack.c.l.b16 %v2192
          %v2209 = vunpack.c.l.b16 %v2193
          %v2210 = vpack.c.b16 %v2203, %v2202
          %v2211 = vpack.c.b16 %v2205, %v2204
          %v2212 = vpack.c.b16 %v2207, %v2206
          %v2213 = vpack.c.b16 %v2209, %v2208
          %v2219 = vsel %vm2093, %v2048, 0
          %v2222 = vsel %vm2093, %v2049, 0
          %v2225 = vsel %vm2093, %v2050, 0
          %v2228 = vsel %vm2093, %v2051, 0
          %2230 = vmatprep.subr.bf16.mxu0 0
          %2231 = vmatpush1.bf16.msra.mxu0 0
          %2232 = vmatprep.subr.bf16.mxu0 0
          %2233 = vmatpush1.bf16.msra.mxu0 0
          %2234 = vmatprep.subr.bf16.mxu0 0
          %2235 = vmatpush1.bf16.msra.mxu0 0
          %2236 = vmatprep.subr.bf16.mxu0 0
          %2237 = vmatpush1.bf16.msra.mxu0 0
          %2238 = vmatprep.subr.bf16.mxu0 0
          %2239 = vmatpush1.bf16.msra.mxu0 %v2213
          %2240 = vmatprep.subr.bf16.mxu0 0
          %2241 = vmatpush1.bf16.msra.mxu0 %v2212
          %2242 = vmatprep.subr.bf16.mxu0 0
          %2243 = vmatpush1.bf16.msra.mxu0 %v2211
          %2244 = vmatprep.subr.bf16.mxu0 0
          %2245 = vmatpush1.bf16.msra.mxu0 %v2210
          %2246 = vmatprep.subr.bf16.mxu0 0
          %2247 = vmatpush2.bf16.msra.mxu0 0
          %2248 = vmatprep.subr.bf16.mxu0 0
          %2249 = vmatpush2.bf16.msra.mxu0 0
          %2250 = vmatprep.subr.bf16.mxu0 0
          %2251 = vmatpush2.bf16.msra.mxu0 0
          %2252 = vmatprep.subr.bf16.mxu0 0
          %2253 = vmatpush2.bf16.msra.mxu0 0
          %2254 = vmatprep.subr.bf16.mxu0 0
          %2255 = vmatpush2.bf16.msra.mxu0 0
          %2256 = vmatprep.subr.bf16.mxu0 0
          %2257 = vmatpush2.bf16.msra.mxu0 0
          %2258 = vmatprep.subr.bf16.mxu0 0
          %2259 = vmatpush2.bf16.msra.mxu0 0
          %2260 = vmatprep.subr.bf16.mxu0 0
          %2261 = vmatpush2.bf16.msra.mxu0 0
          %2262 = vmatprep.mubr.bf16.mxu0 0
          %2263 = vmatmul.mubr.bf16.gmra.mxu0 %v2219
          %v2264 = vpop.f32.mrf.mxu0
          %v2265 = vadd.f32 0.0, %v2264
          %v2266 = vpop.f32.mrf.mxu0
          %v2267 = vpop.f32.mrf.mxu0
          %v2268 = vadd.f32 0.0, %v2267
          %v2269 = vpop.f32.mrf.mxu0
          %2270 = vmatprep.mubr.bf16.mxu0 0
          %2271 = vmatmul.mubr.bf16.gmra.mxu0 %v2222
          %v2272 = vpop.f32.mrf.mxu0
          %v2273 = vadd.f32 0.0, %v2272
          %v2274 = vpop.f32.mrf.mxu0
          %v2275 = vpop.f32.mrf.mxu0
          %v2276 = vadd.f32 0.0, %v2275
          %v2277 = vpop.f32.mrf.mxu0
          %2278 = vmatprep.mubr.bf16.mxu0 0
          %2279 = vmatmul.mubr.bf16.gmra.mxu0 %v2225
          %v2280 = vpop.f32.mrf.mxu0
          %v2281 = vadd.f32 0.0, %v2280
          %v2282 = vpop.f32.mrf.mxu0
          %v2283 = vpop.f32.mrf.mxu0
          %v2284 = vadd.f32 0.0, %v2283
          %v2285 = vpop.f32.mrf.mxu0
          %2286 = vmatprep.mubr.bf16.mxu0 0
          %2287 = vmatmul.mubr.bf16.gmra.mxu0 %v2228
          %v2288 = vpop.f32.mrf.mxu0
          %v2289 = vadd.f32 0.0, %v2288
          %v2290 = vpop.f32.mrf.mxu0
          %v2291 = vpop.f32.mrf.mxu0
          %v2292 = vadd.f32 0.0, %v2291
          %v2293 = vpop.f32.mrf.mxu0
          %2294 = vdwg.mxu0
          %v2295 = vadd.f32 %v2177, %v2265
          %v2296 = vadd.f32 %v2178, %v2268
          %v2297 = vadd.f32 %v2179, %v2273
          %v2298 = vadd.f32 %v2180, %v2276
          %v2299 = vadd.f32 %v2181, %v2281
          %v2300 = vadd.f32 %v2182, %v2284
          %v2301 = vadd.f32 %v2183, %v2289
          %v2302 = vadd.f32 %v2184, %v2292
          %s2303 = scalar_lea.vmem %s3, 64
          %v2304 = vld [vmem:[%s2303] sm:$0xf]
          %v2305 = vld [vmem:[%s2303 + $0x4] sm:$0xf]
          %v2306 = vld [vmem:[%s2303 + $0x8] sm:$0xf]
          %v2307 = vld [vmem:[%s2303 + $0xc] sm:$0xf]
          %v2308 = vld [vmem:[%s2303 + $0x10] sm:$0xf]
          %v2309 = vld [vmem:[%s2303 + $0x14] sm:$0xf]
          %v2310 = vld [vmem:[%s2303 + $0x18] sm:$0xf]
          %v2311 = vld [vmem:[%s2303 + $0x1c] sm:$0xf]
          %v2320 = vunpack.c.l.b16 %v2304
          %v2321 = vunpack.c.l.b16 %v2305
          %v2322 = vunpack.c.l.b16 %v2306
          %v2323 = vunpack.c.l.b16 %v2307
          %v2324 = vunpack.c.l.b16 %v2308
          %v2325 = vunpack.c.l.b16 %v2309
          %v2326 = vunpack.c.l.b16 %v2310
          %v2327 = vunpack.c.l.b16 %v2311
          %v2328 = vpack.c.b16 %v2321, %v2320
          %v2329 = vpack.c.b16 %v2323, %v2322
          %v2330 = vpack.c.b16 %v2325, %v2324
          %v2331 = vpack.c.b16 %v2327, %v2326
          %v2337 = vsel %vm2093, %v2052, 0
          %v2340 = vsel %vm2093, %v2053, 0
          %v2343 = vsel %vm2093, %v2054, 0
          %v2346 = vsel %vm2093, %v2055, 0
          %2348 = vmatprep.subr.bf16.mxu0 0
          %2349 = vmatpush1.bf16.msra.mxu0 0
          %2350 = vmatprep.subr.bf16.mxu0 0
          %2351 = vmatpush1.bf16.msra.mxu0 0
          %2352 = vmatprep.subr.bf16.mxu0 0
          %2353 = vmatpush1.bf16.msra.mxu0 0
          %2354 = vmatprep.subr.bf16.mxu0 0
          %2355 = vmatpush1.bf16.msra.mxu0 0
          %2356 = vmatprep.subr.bf16.mxu0 0
          %2357 = vmatpush1.bf16.msra.mxu0 %v2331
          %2358 = vmatprep.subr.bf16.mxu0 0
          %2359 = vmatpush1.bf16.msra.mxu0 %v2330
          %2360 = vmatprep.subr.bf16.mxu0 0
          %2361 = vmatpush1.bf16.msra.mxu0 %v2329
          %2362 = vmatprep.subr.bf16.mxu0 0
          %2363 = vmatpush1.bf16.msra.mxu0 %v2328
          %2364 = vmatprep.subr.bf16.mxu0 0
          %2365 = vmatpush2.bf16.msra.mxu0 0
          %2366 = vmatprep.subr.bf16.mxu0 0
          %2367 = vmatpush2.bf16.msra.mxu0 0
          %2368 = vmatprep.subr.bf16.mxu0 0
          %2369 = vmatpush2.bf16.msra.mxu0 0
          %2370 = vmatprep.subr.bf16.mxu0 0
          %2371 = vmatpush2.bf16.msra.mxu0 0
          %2372 = vmatprep.subr.bf16.mxu0 0
          %2373 = vmatpush2.bf16.msra.mxu0 0
          %2374 = vmatprep.subr.bf16.mxu0 0
          %2375 = vmatpush2.bf16.msra.mxu0 0
          %2376 = vmatprep.subr.bf16.mxu0 0
          %2377 = vmatpush2.bf16.msra.mxu0 0
          %2378 = vmatprep.subr.bf16.mxu0 0
          %2379 = vmatpush2.bf16.msra.mxu0 0
          %2380 = vmatprep.mubr.bf16.mxu0 0
          %2381 = vmatmul.mubr.bf16.gmra.mxu0 %v2337
          %v2382 = vpop.f32.mrf.mxu0
          %v2383 = vadd.f32 0.0, %v2382
          %v2384 = vpop.f32.mrf.mxu0
          %v2385 = vpop.f32.mrf.mxu0
          %v2386 = vadd.f32 0.0, %v2385
          %v2387 = vpop.f32.mrf.mxu0
          %2388 = vmatprep.mubr.bf16.mxu0 0
          %2389 = vmatmul.mubr.bf16.gmra.mxu0 %v2340
          %v2390 = vpop.f32.mrf.mxu0
          %v2391 = vadd.f32 0.0, %v2390
          %v2392 = vpop.f32.mrf.mxu0
          %v2393 = vpop.f32.mrf.mxu0
          %v2394 = vadd.f32 0.0, %v2393
          %v2395 = vpop.f32.mrf.mxu0
          %2396 = vmatprep.mubr.bf16.mxu0 0
          %2397 = vmatmul.mubr.bf16.gmra.mxu0 %v2343
          %v2398 = vpop.f32.mrf.mxu0
          %v2399 = vadd.f32 0.0, %v2398
          %v2400 = vpop.f32.mrf.mxu0
          %v2401 = vpop.f32.mrf.mxu0
          %v2402 = vadd.f32 0.0, %v2401
          %v2403 = vpop.f32.mrf.mxu0
          %2404 = vmatprep.mubr.bf16.mxu0 0
          %2405 = vmatmul.mubr.bf16.gmra.mxu0 %v2346
          %v2406 = vpop.f32.mrf.mxu0
          %v2407 = vadd.f32 0.0, %v2406
          %v2408 = vpop.f32.mrf.mxu0
          %v2409 = vpop.f32.mrf.mxu0
          %v2410 = vadd.f32 0.0, %v2409
          %v2411 = vpop.f32.mrf.mxu0
          %2412 = vdwg.mxu0
          %v2413 = vadd.f32 %v2295, %v2383
          %v2414 = vadd.f32 %v2296, %v2386
          %v2415 = vadd.f32 %v2297, %v2391
          %v2416 = vadd.f32 %v2298, %v2394
          %v2417 = vadd.f32 %v2299, %v2399
          %v2418 = vadd.f32 %v2300, %v2402
          %v2419 = vadd.f32 %v2301, %v2407
          %v2420 = vadd.f32 %v2302, %v2410
          %v2421 = vmul.f32 %v2413, 0.5
          %v2422 = vmul.f32 %v2414, 0.5
          %v2423 = vmul.f32 %v2415, 0.5
          %v2424 = vmul.f32 %v2416, 0.5
          %v2425 = vmul.f32 %v2417, 0.5
          %v2426 = vmul.f32 %v2418, 0.5
          %v2427 = vmul.f32 %v2419, 0.5
          %v2428 = vmul.f32 %v2420, 0.5
          %v2429 = vmul.f32 %v2413, 0.044715
          %v2430 = vmul.f32 %v2414, 0.044715
          %v2431 = vmul.f32 %v2415, 0.044715
          %v2432 = vmul.f32 %v2416, 0.044715
          %v2433 = vmul.f32 %v2417, 0.044715
          %v2434 = vmul.f32 %v2418, 0.044715
          %v2435 = vmul.f32 %v2419, 0.044715
          %v2436 = vmul.f32 %v2420, 0.044715
          %v2437 = vmul.f32 %v2429, %v2413
          %v2438 = vmul.f32 %v2430, %v2414
          %v2439 = vmul.f32 %v2431, %v2415
          %v2440 = vmul.f32 %v2432, %v2416
          %v2441 = vmul.f32 %v2433, %v2417
          %v2442 = vmul.f32 %v2434, %v2418
          %v2443 = vmul.f32 %v2435, %v2419
          %v2444 = vmul.f32 %v2436, %v2420
          %v2445 = vmul.f32 %v2437, %v2413
          %v2446 = vmul.f32 %v2438, %v2414
          %v2447 = vmul.f32 %v2439, %v2415
          %v2448 = vmul.f32 %v2440, %v2416
          %v2449 = vmul.f32 %v2441, %v2417
          %v2450 = vmul.f32 %v2442, %v2418
          %v2451 = vmul.f32 %v2443, %v2419
          %v2452 = vmul.f32 %v2444, %v2420
          %v2453 = vadd.f32 %v2413, %v2445
          %v2454 = vadd.f32 %v2414, %v2446
          %v2455 = vadd.f32 %v2415, %v2447
          %v2456 = vadd.f32 %v2416, %v2448
          %v2457 = vadd.f32 %v2417, %v2449
          %v2458 = vadd.f32 %v2418, %v2450
          %v2459 = vadd.f32 %v2419, %v2451
          %v2460 = vadd.f32 %v2420, %v2452
          %v2461 = vmul.f32 %v2453, 0.7978846
          %v2462 = vmul.f32 %v2454, 0.7978846
          %v2463 = vmul.f32 %v2455, 0.7978846
          %v2464 = vmul.f32 %v2456, 0.7978846
          %v2465 = vmul.f32 %v2457, 0.7978846
          %v2466 = vmul.f32 %v2458, 0.7978846
          %v2467 = vmul.f32 %v2459, 0.7978846
          %v2468 = vmul.f32 %v2460, 0.7978846
          %v2469 = vtanh.pop %v2461
          %v2470 = vtanh.pop %v2462
          %v2471 = vtanh.pop %v2463
          %v2472 = vtanh.pop %v2464
          %v2473 = vtanh.pop %v2465
          %v2474 = vtanh.pop %v2466
          %v2475 = vtanh.pop %v2467
          %v2476 = vtanh.pop %v2468
          %v2477 = vadd.f32 %v2469, 1.0
          %v2478 = vadd.f32 %v2470, 1.0
          %v2479 = vadd.f32 %v2471, 1.0
          %v2480 = vadd.f32 %v2472, 1.0
          %v2481 = vadd.f32 %v2473, 1.0
          %v2482 = vadd.f32 %v2474, 1.0
          %v2483 = vadd.f32 %v2475, 1.0
          %v2484 = vadd.f32 %v2476, 1.0
          %v2485 = vmul.f32 %v2421, %v2477
          %v2486 = vmul.f32 %v2422, %v2478
          %v2487 = vmul.f32 %v2423, %v2479
          %v2488 = vmul.f32 %v2424, %v2480
          %v2489 = vmul.f32 %v2425, %v2481
          %v2490 = vmul.f32 %v2426, %v2482
          %v2491 = vmul.f32 %v2427, %v2483
          %v2492 = vmul.f32 %v2428, %v2484
          %v2493 = vld [vmem:[%s5] sm:$0xff]
          %v2494 = vld [vmem:[%s5 + $0x8] sm:$0xff]
          %v2495 = vld [vmem:[%s5 + $0x10] sm:$0xff]
          %v2496 = vld [vmem:[%s5 + $0x18] sm:$0xff]
          %v2497 = vld [vmem:[%s5 + $0x20] sm:$0xff]
          %v2498 = vld [vmem:[%s5 + $0x28] sm:$0xff]
          %v2499 = vld [vmem:[%s5 + $0x30] sm:$0xff]
          %v2500 = vld [vmem:[%s5 + $0x38] sm:$0xff]
          %v2501 = vadd.f32 %v2485, %v2493
          %v2502 = vadd.f32 %v2486, %v2494
          %v2503 = vadd.f32 %v2487, %v2495
          %v2504 = vadd.f32 %v2488, %v2496
          %v2505 = vadd.f32 %v2489, %v2497
          %v2506 = vadd.f32 %v2490, %v2498
          %v2507 = vadd.f32 %v2491, %v2499
          %v2508 = vadd.f32 %v2492, %v2500
          %2509 = vst.msk [vmem:[#allocation2] sm:$0xff] %vm2093, %v2501
          %2510 = vst.msk [vmem:[#allocation2 + $0x8] sm:$0xff] %vm2093, %v2502
          %2511 = vst.msk [vmem:[#allocation2 + $0x10] sm:$0xff] %vm2093, %v2503
          %2512 = vst.msk [vmem:[#allocation2 + $0x18] sm:$0xff] %vm2093, %v2504
          %2513 = vst.msk [vmem:[#allocation2 + $0x20] sm:$0xff] %vm2093, %v2505
          %2514 = vst.msk [vmem:[#allocation2 + $0x28] sm:$0xff] %vm2093, %v2506
          %2515 = vst.msk [vmem:[#allocation2 + $0x30] sm:$0xff] %vm2093, %v2507
          %2516 = vst.msk [vmem:[#allocation2 + $0x38] sm:$0xff] %vm2093, %v2508
        $region88: #{whisper_encoder_forward.3} parent=83 // pred_fallthru
          _
        %p2517 = scmp.ge.s32.totalorder %s28, 1
        %p2518 = scmp.le.s32.totalorder %s28, 2
        %p2519 = pnand %p2517, %p2518
        %p2520 = pneg %p2519
        // Predicated region
        $region89: #{whisper_encoder_forward.3} parent=83 // pred_check
          _
        $region90: #{whisper_encoder_forward.3} parent=83 // pred_check_branch
          %2522 = sbr.rel (%p2519) target = $region92
        $region91: #{whisper_encoder_forward.3} parent=83 // pred_region
          %v2523 = vld [vmem:[#allocation2] sm:$0xff]
          %v2524 = vld [vmem:[#allocation2 + $0x8] sm:$0xff]
          %v2525 = vld [vmem:[#allocation2 + $0x10] sm:$0xff]
          %v2526 = vld [vmem:[#allocation2 + $0x18] sm:$0xff]
          %v2527 = vld [vmem:[#allocation2 + $0x20] sm:$0xff]
          %v2528 = vld [vmem:[#allocation2 + $0x28] sm:$0xff]
          %v2529 = vld [vmem:[#allocation2 + $0x30] sm:$0xff]
          %v2530 = vld [vmem:[#allocation2 + $0x38] sm:$0xff]
          %v2531 = vld [vmem:[%s840] sm:$0xf]
          %vm2532 = vcmask 523264
          %v2533 = vsel %vm2532, %v2523, 0.0
          %2534 = vadd.xlane.f32.xlu0 %v2533
          %v2535 = vpop.xlane.xlu0 %2534
          %v2536 = vsel %vm2532, %v2524, 0.0
          %2537 = vadd.xlane.f32.xlu0 %v2536
          %v2538 = vpop.xlane.xlu0 %2537
          %v2539 = vsel %vm2532, %v2525, 0.0
          %2540 = vadd.xlane.f32.xlu0 %v2539
          %v2541 = vpop.xlane.xlu0 %2540
          %v2542 = vsel %vm2532, %v2526, 0.0
          %2543 = vadd.xlane.f32.xlu0 %v2542
          %v2544 = vpop.xlane.xlu0 %2543
          %v2545 = vsel %vm2532, %v2527, 0.0
          %2546 = vadd.xlane.f32.xlu0 %v2545
          %v2547 = vpop.xlane.xlu0 %2546
          %v2548 = vsel %vm2532, %v2528, 0.0
          %2549 = vadd.xlane.f32.xlu0 %v2548
          %v2550 = vpop.xlane.xlu0 %2549
          %v2551 = vsel %vm2532, %v2529, 0.0
          %2552 = vadd.xlane.f32.xlu0 %v2551
          %v2553 = vpop.xlane.xlu0 %2552
          %v2554 = vsel %vm2532, %v2530, 0.0
          %2555 = vadd.xlane.f32.xlu0 %v2554
          %v2556 = vpop.xlane.xlu0 %2555
          %v2557 = vrcp.pop 64.0
          %v2558 = vmul.f32 %v2535, %v2557
          %v2559 = vmul.f32 %v2538, %v2557
          %v2560 = vmul.f32 %v2541, %v2557
          %v2561 = vmul.f32 %v2544, %v2557
          %v2562 = vmul.f32 %v2547, %v2557
          %v2563 = vmul.f32 %v2550, %v2557
          %v2564 = vmul.f32 %v2553, %v2557
          %v2565 = vmul.f32 %v2556, %v2557
          %v2566 = vsub.f32 %v2523, %v2558
          %v2567 = vsub.f32 %v2524, %v2559
          %v2568 = vsub.f32 %v2525, %v2560
          %v2569 = vsub.f32 %v2526, %v2561
          %v2570 = vsub.f32 %v2527, %v2562
          %v2571 = vsub.f32 %v2528, %v2563
          %v2572 = vsub.f32 %v2529, %v2564
          %v2573 = vsub.f32 %v2530, %v2565
          %v2574 = vmul.f32 %v2566, %v2566
          %v2575 = vmul.f32 %v2567, %v2567
          %v2576 = vmul.f32 %v2568, %v2568
          %v2577 = vmul.f32 %v2569, %v2569
          %v2578 = vmul.f32 %v2570, %v2570
          %v2579 = vmul.f32 %v2571, %v2571
          %v2580 = vmul.f32 %v2572, %v2572
          %v2581 = vmul.f32 %v2573, %v2573
          %v2582 = vsel %vm2532, %v2574, 0.0
          %2583 = vadd.xlane.f32.xlu0 %v2582
          %v2584 = vpop.xlane.xlu0 %2583
          %v2585 = vsel %vm2532, %v2575, 0.0
          %2586 = vadd.xlane.f32.xlu0 %v2585
          %v2587 = vpop.xlane.xlu0 %2586
          %v2588 = vsel %vm2532, %v2576, 0.0
          %2589 = vadd.xlane.f32.xlu0 %v2588
          %v2590 = vpop.xlane.xlu0 %2589
          %v2591 = vsel %vm2532, %v2577, 0.0
          %2592 = vadd.xlane.f32.xlu0 %v2591
          %v2593 = vpop.xlane.xlu0 %2592
          %v2594 = vsel %vm2532, %v2578, 0.0
          %2595 = vadd.xlane.f32.xlu0 %v2594
          %v2596 = vpop.xlane.xlu0 %2595
          %v2597 = vsel %vm2532, %v2579, 0.0
          %2598 = vadd.xlane.f32.xlu0 %v2597
          %v2599 = vpop.xlane.xlu0 %2598
          %v2600 = vsel %vm2532, %v2580, 0.0
          %2601 = vadd.xlane.f32.xlu0 %v2600
          %v2602 = vpop.xlane.xlu0 %2601
          %v2603 = vsel %vm2532, %v2581, 0.0
          %2604 = vadd.xlane.f32.xlu0 %v2603
          %v2605 = vpop.xlane.xlu0 %2604
          %v2606 = vmul.f32 %v2584, %v2557
          %v2607 = vmul.f32 %v2587, %v2557
          %v2608 = vmul.f32 %v2590, %v2557
          %v2609 = vmul.f32 %v2593, %v2557
          %v2610 = vmul.f32 %v2596, %v2557
          %v2611 = vmul.f32 %v2599, %v2557
          %v2612 = vmul.f32 %v2602, %v2557
          %v2613 = vmul.f32 %v2605, %v2557
          %v2614 = vadd.f32 %v2606, 1e-05
          %v2615 = vadd.f32 %v2607, 1e-05
          %v2616 = vadd.f32 %v2608, 1e-05
          %v2617 = vadd.f32 %v2609, 1e-05
          %v2618 = vadd.f32 %v2610, 1e-05
          %v2619 = vadd.f32 %v2611, 1e-05
          %v2620 = vadd.f32 %v2612, 1e-05
          %v2621 = vadd.f32 %v2613, 1e-05
          %v2622 = vrsqrt.pop %v2614
          %v2623 = vrsqrt.pop %v2615
          %v2624 = vrsqrt.pop %v2616
          %v2625 = vrsqrt.pop %v2617
          %v2626 = vrsqrt.pop %v2618
          %v2627 = vrsqrt.pop %v2619
          %v2628 = vrsqrt.pop %v2620
          %v2629 = vrsqrt.pop %v2621
          %v2630 = vmul.f32 %v2566, %v2622
          %v2631 = vmul.f32 %v2567, %v2623
          %v2632 = vmul.f32 %v2568, %v2624
          %v2633 = vmul.f32 %v2569, %v2625
          %v2634 = vmul.f32 %v2570, %v2626
          %v2635 = vmul.f32 %v2571, %v2627
          %v2636 = vmul.f32 %v2572, %v2628
          %v2637 = vmul.f32 %v2573, %v2629
          %v2638 = vlaneseq
          %v2639 = vshrl.u32 %v2638, 7
          %v2640 = vsub.s32 0, %v2639
          %v2641 = vrot.slane %v2531, %v2640
          %v2642 = vmul.f32 %v2630, %v2641
          %v2643 = vmul.f32 %v2631, %v2641
          %v2644 = vmul.f32 %v2632, %v2641
          %v2645 = vmul.f32 %v2633, %v2641
          %v2646 = vmul.f32 %v2634, %v2641
          %v2647 = vmul.f32 %v2635, %v2641
          %v2648 = vmul.f32 %v2636, %v2641
          %v2649 = vmul.f32 %v2637, %v2641
          %v2650 = vlaneseq
          %v2651 = vshrl.u32 %v2650, 7
          %v2652 = vsub.s32 1, %v2651
          %v2653 = vrot.slane %v2531, %v2652
          %v2654 = vadd.f32 %v2642, %v2653
          %v2655 = vadd.f32 %v2643, %v2653
          %v2656 = vadd.f32 %v2644, %v2653
          %v2657 = vadd.f32 %v2645, %v2653
          %v2658 = vadd.f32 %v2646, %v2653
          %v2659 = vadd.f32 %v2647, %v2653
          %v2660 = vadd.f32 %v2648, %v2653
          %v2661 = vadd.f32 %v2649, %v2653
          %v2662 = vpack.c.bf16 %v2655, %v2654
          %v2663 = vpack.c.bf16 %v2657, %v2656
          %v2664 = vpack.c.bf16 %v2659, %v2658
          %v2665 = vpack.c.bf16 %v2661, %v2660
          %v2666 = vld [vmem:[%s855] sm:$0xff]
          %v2667 = vld [vmem:[%s855 + $0x8] sm:$0xff]
          %v2668 = vld [vmem:[%s855 + $0x10] sm:$0xff]
          %v2669 = vld [vmem:[%s855 + $0x18] sm:$0xff]
          %v2670 = vld [vmem:[%s855 + $0x20] sm:$0xff]
          %v2671 = vld [vmem:[%s855 + $0x28] sm:$0xff]
          %v2672 = vld [vmem:[%s855 + $0x30] sm:$0xff]
          %v2673 = vld [vmem:[%s855 + $0x38] sm:$0xff]
          %v2674 = vld [vmem:[%s869] sm:$0x3]
          %v2676 = vlaneseq
          %v2677 = vshrl.u32 %v2676, 7
          %v2678 = vsub.s32 0, %v2677
          %v2679 = vrot.slane %v2674, %v2678
          %v2680 = vlaneseq
          %v2681 = vshrl.u32 %v2680, 7
          %v2682 = vsub.s32 1, %v2681
          %v2683 = vrot.slane %v2674, %v2682
          %v2694 = vunpack.c.l.b16 %v2666
          %v2695 = vunpack.c.h.b16 %v2666
          %v2696 = vunpack.c.l.b16 %v2667
          %v2697 = vunpack.c.h.b16 %v2667
          %v2698 = vunpack.c.l.b16 %v2668
          %v2699 = vunpack.c.h.b16 %v2668
          %v2700 = vunpack.c.l.b16 %v2669
          %v2701 = vunpack.c.h.b16 %v2669
          %v2702 = vunpack.c.l.b16 %v2670
          %v2703 = vunpack.c.h.b16 %v2670
          %v2704 = vunpack.c.l.b16 %v2671
          %v2705 = vunpack.c.h.b16 %v2671
          %v2706 = vunpack.c.l.b16 %v2672
          %v2707 = vunpack.c.h.b16 %v2672
          %v2708 = vunpack.c.l.b16 %v2673
          %v2709 = vunpack.c.h.b16 %v2673
          %v2710 = vpack.c.b16 %v2696, %v2694
          %v2711 = vpack.c.b16 %v2697, %v2695
          %v2712 = vpack.c.b16 %v2700, %v2698
          %v2713 = vpack.c.b16 %v2701, %v2699
          %v2714 = vpack.c.b16 %v2704, %v2702
          %v2715 = vpack.c.b16 %v2705, %v2703
          %v2716 = vpack.c.b16 %v2708, %v2706
          %v2717 = vpack.c.b16 %v2709, %v2707
          %v2727 = vsel %vm2532, %v2662, 0
          %v2730 = vsel %vm2532, %v2663, 0
          %v2733 = vsel %vm2532, %v2664, 0
          %v2736 = vsel %vm2532, %v2665, 0
          %2738 = vmatprep.subr.bf16.mxu0 0
          %2739 = vmatpush1.bf16.msra.mxu0 0
          %2740 = vmatprep.subr.bf16.mxu0 0
          %2741 = vmatpush1.bf16.msra.mxu0 0
          %2742 = vmatprep.subr.bf16.mxu0 0
          %2743 = vmatpush1.bf16.msra.mxu0 0
          %2744 = vmatprep.subr.bf16.mxu0 0
          %2745 = vmatpush1.bf16.msra.mxu0 0
          %2746 = vmatprep.subr.bf16.mxu0 %v2717
          %2747 = vmatpush1.bf16.msra.mxu0 %v2716
          %2748 = vmatprep.subr.bf16.mxu0 %v2715
          %2749 = vmatpush1.bf16.msra.mxu0 %v2714
          %2750 = vmatprep.subr.bf16.mxu0 %v2713
          %2751 = vmatpush1.bf16.msra.mxu0 %v2712
          %2752 = vmatprep.subr.bf16.mxu0 %v2711
          %2753 = vmatpush1.bf16.msra.mxu0 %v2710
          %2754 = vmatprep.subr.bf16.mxu0 0
          %2755 = vmatpush2.bf16.msra.mxu0 0
          %2756 = vmatprep.subr.bf16.mxu0 0
          %2757 = vmatpush2.bf16.msra.mxu0 0
          %2758 = vmatprep.subr.bf16.mxu0 0
          %2759 = vmatpush2.bf16.msra.mxu0 0
          %2760 = vmatprep.subr.bf16.mxu0 0
          %2761 = vmatpush2.bf16.msra.mxu0 0
          %2762 = vmatprep.subr.bf16.mxu0 0
          %2763 = vmatpush2.bf16.msra.mxu0 0
          %2764 = vmatprep.subr.bf16.mxu0 0
          %2765 = vmatpush2.bf16.msra.mxu0 0
          %2766 = vmatprep.subr.bf16.mxu0 0
          %2767 = vmatpush2.bf16.msra.mxu0 0
          %2768 = vmatprep.subr.bf16.mxu0 0
          %2769 = vmatpush2.bf16.msra.mxu0 0
          %2770 = vmatprep.mubr.bf16.mxu0 0
          %2771 = vmatmul.mubr.bf16.gmra.mxu0 %v2727
          %v2772 = vpop.f32.mrf.mxu0
          %v2773 = vadd.f32 %v2679, %v2772
          %v2774 = vpop.f32.mrf.mxu0
          %v2775 = vadd.f32 %v2683, %v2774
          %v2776 = vpop.f32.mrf.mxu0
          %v2777 = vadd.f32 %v2679, %v2776
          %v2778 = vpop.f32.mrf.mxu0
          %v2779 = vadd.f32 %v2683, %v2778
          %2780 = vmatprep.mubr.bf16.mxu0 0
          %2781 = vmatmul.mubr.bf16.gmra.mxu0 %v2730
          %v2782 = vpop.f32.mrf.mxu0
          %v2783 = vadd.f32 %v2679, %v2782
          %v2784 = vpop.f32.mrf.mxu0
          %v2785 = vadd.f32 %v2683, %v2784
          %v2786 = vpop.f32.mrf.mxu0
          %v2787 = vadd.f32 %v2679, %v2786
          %v2788 = vpop.f32.mrf.mxu0
          %v2789 = vadd.f32 %v2683, %v2788
          %2790 = vmatprep.mubr.bf16.mxu0 0
          %2791 = vmatmul.mubr.bf16.gmra.mxu0 %v2733
          %v2792 = vpop.f32.mrf.mxu0
          %v2793 = vadd.f32 %v2679, %v2792
          %v2794 = vpop.f32.mrf.mxu0
          %v2795 = vadd.f32 %v2683, %v2794
          %v2796 = vpop.f32.mrf.mxu0
          %v2797 = vadd.f32 %v2679, %v2796
          %v2798 = vpop.f32.mrf.mxu0
          %v2799 = vadd.f32 %v2683, %v2798
          %2800 = vmatprep.mubr.bf16.mxu0 0
          %2801 = vmatmul.mubr.bf16.gmra.mxu0 %v2736
          %v2802 = vpop.f32.mrf.mxu0
          %v2803 = vadd.f32 %v2679, %v2802
          %v2804 = vpop.f32.mrf.mxu0
          %v2805 = vadd.f32 %v2683, %v2804
          %v2806 = vpop.f32.mrf.mxu0
          %v2807 = vadd.f32 %v2679, %v2806
          %v2808 = vpop.f32.mrf.mxu0
          %v2809 = vadd.f32 %v2683, %v2808
          %2810 = vdwg.mxu0
          %v2811 = vpack.c.bf16 %v2777, %v2773
          %v2812 = vpack.c.bf16 %v2787, %v2783
          %v2813 = vpack.c.bf16 %v2797, %v2793
          %v2814 = vpack.c.bf16 %v2807, %v2803
          %v2815 = vpack.c.bf16 %v2779, %v2775
          %v2816 = vpack.c.bf16 %v2789, %v2785
          %v2817 = vpack.c.bf16 %v2799, %v2795
          %v2818 = vpack.c.bf16 %v2809, %v2805
          %2821 = vrot.lane.b32.xlu0 %v2811, 64
          %v2822 = vpop.permute.xlu0 %2821
          %2823 = vrot.lane.b32.xlu0 %v2812, 64
          %v2824 = vpop.permute.xlu0 %2823
          %vm2825 = vcmask 130048
          %v2827 = vsel %vm2825, %v2811, 0
          %v2830 = vsel %vm2825, %v2812, 0
          %v2833 = vsel %vm2825, %v2822, 0
          %v2836 = vsel %vm2825, %v2824, 0
          %2838 = vmatprep.subr.bf16.mxu0 0
          %2839 = vmatpush1.bf16.xpose.msra.mxu0 0
          %2840 = vmatprep.subr.bf16.mxu0 0
          %2841 = vmatpush1.bf16.xpose.msra.mxu0 0
          %2842 = vmatprep.subr.bf16.mxu0 0
          %2843 = vmatpush1.bf16.xpose.msra.mxu0 0
          %2844 = vmatprep.subr.bf16.mxu0 0
          %2845 = vmatpush1.bf16.xpose.msra.mxu0 0
          %2846 = vmatprep.subr.bf16.mxu0 0
          %2847 = vmatpush1.bf16.xpose.msra.mxu0 0
          %2848 = vmatprep.subr.bf16.mxu0 0
          %2849 = vmatpush1.bf16.xpose.msra.mxu0 0
          %2850 = vmatprep.subr.bf16.mxu0 0
          %2851 = vmatpush1.bf16.xpose.msra.mxu0 %v2836
          %2852 = vmatprep.subr.bf16.mxu0 0
          %2853 = vmatpush1.bf16.xpose.msra.mxu0 %v2833
          %2854 = vmatprep.subr.bf16.mxu0 0
          %2855 = vmatpush2.bf16.xpose.msra.mxu0 0
          %2856 = vmatprep.subr.bf16.mxu0 0
          %2857 = vmatpush2.bf16.xpose.msra.mxu0 0
          %2858 = vmatprep.subr.bf16.mxu0 0
          %2859 = vmatpush2.bf16.xpose.msra.mxu0 0
          %2860 = vmatprep.subr.bf16.mxu0 0
          %2861 = vmatpush2.bf16.xpose.msra.mxu0 0
          %2862 = vmatprep.subr.bf16.mxu0 0
          %2863 = vmatpush2.bf16.xpose.msra.mxu0 0
          %2864 = vmatprep.subr.bf16.mxu0 0
          %2865 = vmatpush2.bf16.xpose.msra.mxu0 0
          %2866 = vmatprep.subr.bf16.mxu0 0
          %2867 = vmatpush2.bf16.xpose.msra.mxu0 0
          %2868 = vmatprep.subr.bf16.mxu0 0
          %2869 = vmatpush2.bf16.xpose.msra.mxu0 0
          %2870 = vmatprep.mubr.bf16.mxu0 0
          %2871 = vmatmul.mubr.bf16.gmra.mxu0 %v2827
          %v2872 = vpop.f32.mrf.mxu0
          %v2873 = vadd.f32 0.0, %v2872
          %v2874 = vpop.f32.mrf.mxu0
          %v2875 = vpop.f32.mrf.mxu0
          %v2876 = vadd.f32 0.0, %v2875
          %v2877 = vpop.f32.mrf.mxu0
          %2878 = vmatprep.mubr.bf16.mxu0 0
          %2879 = vmatmul.mubr.bf16.gmra.mxu0 %v2830
          %v2880 = vpop.f32.mrf.mxu0
          %v2881 = vadd.f32 0.0, %v2880
          %v2882 = vpop.f32.mrf.mxu0
          %v2883 = vpop.f32.mrf.mxu0
          %v2884 = vadd.f32 0.0, %v2883
          %v2885 = vpop.f32.mrf.mxu0
          %2886 = vdwg.mxu0
          %2889 = vrot.lane.b32.xlu0 %v2813, 64
          %v2890 = vpop.permute.xlu0 %2889
          %2891 = vrot.lane.b32.xlu0 %v2814, 64
          %v2892 = vpop.permute.xlu0 %2891
          %v2894 = vsel %vm2825, %v2813, 0
          %v2897 = vsel %vm2825, %v2814, 0
          %v2900 = vsel %vm2825, %v2890, 0
          %v2903 = vsel %vm2825, %v2892, 0
          %2905 = vmatprep.subr.bf16.mxu0 0
          %2906 = vmatpush1.bf16.xpose.msra.mxu0 0
          %2907 = vmatprep.subr.bf16.mxu0 0
          %2908 = vmatpush1.bf16.xpose.msra.mxu0 0
          %2909 = vmatprep.subr.bf16.mxu0 0
          %2910 = vmatpush1.bf16.xpose.msra.mxu0 0
          %2911 = vmatprep.subr.bf16.mxu0 0
          %2912 = vmatpush1.bf16.xpose.msra.mxu0 0
          %2913 = vmatprep.subr.bf16.mxu0 0
          %2914 = vmatpush1.bf16.xpose.msra.mxu0 0
          %2915 = vmatprep.subr.bf16.mxu0 0
          %2916 = vmatpush1.bf16.xpose.msra.mxu0 0
          %2917 = vmatprep.subr.bf16.mxu0 0
          %2918 = vmatpush1.bf16.xpose.msra.mxu0 %v2903
          %2919 = vmatprep.subr.bf16.mxu0 0
          %2920 = vmatpush1.bf16.xpose.msra.mxu0 %v2900
          %2921 = vmatprep.subr.bf16.mxu0 0
          %2922 = vmatpush2.bf16.xpose.msra.mxu0 0
          %2923 = vmatprep.subr.bf16.mxu0 0
          %2924 = vmatpush2.bf16.xpose.msra.mxu0 0
          %2925 = vmatprep.subr.bf16.mxu0 0
          %2926 = vmatpush2.bf16.xpose.msra.mxu0 0
          %2927 = vmatprep.subr.bf16.mxu0 0
          %2928 = vmatpush2.bf16.xpose.msra.mxu0 0
          %2929 = vmatprep.subr.bf16.mxu0 0
          %2930 = vmatpush2.bf16.xpose.msra.mxu0 0
          %2931 = vmatprep.subr.bf16.mxu0 0
          %2932 = vmatpush2.bf16.xpose.msra.mxu0 0
          %2933 = vmatprep.subr.bf16.mxu0 0
          %2934 = vmatpush2.bf16.xpose.msra.mxu0 0
          %2935 = vmatprep.subr.bf16.mxu0 0
          %2936 = vmatpush2.bf16.xpose.msra.mxu0 0
          %2937 = vmatprep.mubr.bf16.mxu0 0
          %2938 = vmatmul.mubr.bf16.gmra.mxu0 %v2894
          %v2939 = vpop.f32.mrf.mxu0
          %v2940 = vadd.f32 0.0, %v2939
          %v2941 = vpop.f32.mrf.mxu0
          %v2942 = vpop.f32.mrf.mxu0
          %v2943 = vadd.f32 0.0, %v2942
          %v2944 = vpop.f32.mrf.mxu0
          %2945 = vmatprep.mubr.bf16.mxu0 0
          %2946 = vmatmul.mubr.bf16.gmra.mxu0 %v2897
          %v2947 = vpop.f32.mrf.mxu0
          %v2948 = vadd.f32 0.0, %v2947
          %v2949 = vpop.f32.mrf.mxu0
          %v2950 = vpop.f32.mrf.mxu0
          %v2951 = vadd.f32 0.0, %v2950
          %v2952 = vpop.f32.mrf.mxu0
          %2953 = vdwg.mxu0
          %vm2954 = vcmask 261120
          %v2955 = vsel %vm2954, %v2873, -inf
          %2956 = vmax.xlane.f32.xlu0 %v2955
          %v2957 = vpop.xlane.xlu0 %2956
          %v2958 = vsel %vm2954, %v2876, -inf
          %2959 = vmax.xlane.f32.xlu0 %v2958
          %v2960 = vpop.xlane.xlu0 %2959
          %v2961 = vsel %vm2954, %v2881, -inf
          %2962 = vmax.xlane.f32.xlu0 %v2961
          %v2963 = vpop.xlane.xlu0 %2962
          %v2964 = vsel %vm2954, %v2884, -inf
          %2965 = vmax.xlane.f32.xlu0 %v2964
          %v2966 = vpop.xlane.xlu0 %2965
          %v2967 = vsel %vm2954, %v2940, -inf
          %2968 = vmax.xlane.f32.xlu0 %v2967
          %v2969 = vpop.xlane.xlu0 %2968
          %v2970 = vsel %vm2954, %v2943, -inf
          %2971 = vmax.xlane.f32.xlu0 %v2970
          %v2972 = vpop.xlane.xlu0 %2971
          %v2973 = vsel %vm2954, %v2948, -inf
          %2974 = vmax.xlane.f32.xlu0 %v2973
          %v2975 = vpop.xlane.xlu0 %2974
          %v2976 = vsel %vm2954, %v2951, -inf
          %2977 = vmax.xlane.f32.xlu0 %v2976
          %v2978 = vpop.xlane.xlu0 %2977
          %v2979 = vsub.f32 %v2873, %v2957
          %v2980 = vsub.f32 %v2876, %v2960
          %v2981 = vsub.f32 %v2881, %v2963
          %v2982 = vsub.f32 %v2884, %v2966
          %v2983 = vsub.f32 %v2940, %v2969
          %v2984 = vsub.f32 %v2943, %v2972
          %v2985 = vsub.f32 %v2948, %v2975
          %v2986 = vsub.f32 %v2951, %v2978
          %v2987 = vmul.f32 %v2979, 1.442695
          %v2988 = vpow.pop %v2987
          %v2989 = vmul.f32 %v2980, 1.442695
          %v2990 = vpow.pop %v2989
          %v2991 = vmul.f32 %v2981, 1.442695
          %v2992 = vpow.pop %v2991
          %v2993 = vmul.f32 %v2982, 1.442695
          %v2994 = vpow.pop %v2993
          %v2995 = vmul.f32 %v2983, 1.442695
          %v2996 = vpow.pop %v2995
          %v2997 = vmul.f32 %v2984, 1.442695
          %v2998 = vpow.pop %v2997
          %v2999 = vmul.f32 %v2985, 1.442695
          %v3000 = vpow.pop %v2999
          %v3001 = vmul.f32 %v2986, 1.442695
          %v3002 = vpow.pop %v3001
          %v3003 = vsel %vm2954, %v2988, 0.0
          %3004 = vadd.xlane.f32.xlu0 %v3003
          %v3005 = vpop.xlane.xlu0 %3004
          %v3006 = vsel %vm2954, %v2990, 0.0
          %3007 = vadd.xlane.f32.xlu0 %v3006
          %v3008 = vpop.xlane.xlu0 %3007
          %v3009 = vsel %vm2954, %v2992, 0.0
          %3010 = vadd.xlane.f32.xlu0 %v3009
          %v3011 = vpop.xlane.xlu0 %3010
          %v3012 = vsel %vm2954, %v2994, 0.0
          %3013 = vadd.xlane.f32.xlu0 %v3012
          %v3014 = vpop.xlane.xlu0 %3013
          %v3015 = vsel %vm2954, %v2996, 0.0
          %3016 = vadd.xlane.f32.xlu0 %v3015
          %v3017 = vpop.xlane.xlu0 %3016
          %v3018 = vsel %vm2954, %v2998, 0.0
          %3019 = vadd.xlane.f32.xlu0 %v3018
          %v3020 = vpop.xlane.xlu0 %3019
          %v3021 = vsel %vm2954, %v3000, 0.0
          %3022 = vadd.xlane.f32.xlu0 %v3021
          %v3023 = vpop.xlane.xlu0 %3022
          %v3024 = vsel %vm2954, %v3002, 0.0
          %3025 = vadd.xlane.f32.xlu0 %v3024
          %v3026 = vpop.xlane.xlu0 %3025
          %v3027 = vrcp.pop %v3005
          %v3028 = vrcp.pop %v3008
          %v3029 = vrcp.pop %v3011
          %v3030 = vrcp.pop %v3014
          %v3031 = vrcp.pop %v3017
          %v3032 = vrcp.pop %v3020
          %v3033 = vrcp.pop %v3023
          %v3034 = vrcp.pop %v3026
          %v3035 = vmul.f32 %v2988, %v3027
          %v3036 = vmul.f32 %v2990, %v3028
          %v3037 = vmul.f32 %v2992, %v3029
          %v3038 = vmul.f32 %v2994, %v3030
          %v3039 = vmul.f32 %v2996, %v3031
          %v3040 = vmul.f32 %v2998, %v3032
          %v3041 = vmul.f32 %v3000, %v3033
          %v3042 = vmul.f32 %v3002, %v3034
          %v3043 = vpack.c.bf16 %v3036, %v3035
          %v3044 = vpack.c.bf16 %v3038, %v3037
          %v3045 = vpack.c.bf16 %v3040, %v3039
          %v3046 = vpack.c.bf16 %v3042, %v3041
          %v3048 = vsel %vm2954, %v3043, 0
          %v3051 = vsel %vm2954, %v3044, 0
          %3053 = vmatprep.subr.bf16.mxu0 0
          %3054 = vmatpush1.bf16.msra.mxu0 0
          %3055 = vmatprep.subr.bf16.mxu0 0
          %3056 = vmatpush1.bf16.msra.mxu0 0
          %3057 = vmatprep.subr.bf16.mxu0 0
          %3058 = vmatpush1.bf16.msra.mxu0 0
          %3059 = vmatprep.subr.bf16.mxu0 0
          %3060 = vmatpush1.bf16.msra.mxu0 0
          %3061 = vmatprep.subr.bf16.mxu0 0
          %3062 = vmatpush1.bf16.msra.mxu0 0
          %3063 = vmatprep.subr.bf16.mxu0 0
          %3064 = vmatpush1.bf16.msra.mxu0 0
          %3065 = vmatprep.subr.bf16.mxu0 0
          %3066 = vmatpush1.bf16.msra.mxu0 %v2816
          %3067 = vmatprep.subr.bf16.mxu0 0
          %3068 = vmatpush1.bf16.msra.mxu0 %v2815
          %3069 = vmatprep.subr.bf16.mxu0 0
          %3070 = vmatpush2.bf16.msra.mxu0 0
          %3071 = vmatprep.subr.bf16.mxu0 0
          %3072 = vmatpush2.bf16.msra.mxu0 0
          %3073 = vmatprep.subr.bf16.mxu0 0
          %3074 = vmatpush2.bf16.msra.mxu0 0
          %3075 = vmatprep.subr.bf16.mxu0 0
          %3076 = vmatpush2.bf16.msra.mxu0 0
          %3077 = vmatprep.subr.bf16.mxu0 0
          %3078 = vmatpush2.bf16.msra.mxu0 0
          %3079 = vmatprep.subr.bf16.mxu0 0
          %3080 = vmatpush2.bf16.msra.mxu0 0
          %3081 = vmatprep.subr.bf16.mxu0 0
          %3082 = vmatpush2.bf16.msra.mxu0 0
          %3083 = vmatprep.subr.bf16.mxu0 0
          %3084 = vmatpush2.bf16.msra.mxu0 0
          %3085 = vmatprep.mubr.bf16.mxu0 0
          %3086 = vmatmul.mubr.bf16.gmra.mxu0 %v3048
          %v3087 = vpop.f32.mrf.mxu0
          %v3088 = vadd.f32 0.0, %v3087
          %v3089 = vpop.f32.mrf.mxu0
          %v3090 = vpop.f32.mrf.mxu0
          %v3091 = vadd.f32 0.0, %v3090
          %v3092 = vpop.f32.mrf.mxu0
          %3093 = vmatprep.mubr.bf16.mxu0 0
          %3094 = vmatmul.mubr.bf16.gmra.mxu0 %v3051
          %v3095 = vpop.f32.mrf.mxu0
          %v3096 = vadd.f32 0.0, %v3095
          %v3097 = vpop.f32.mrf.mxu0
          %v3098 = vpop.f32.mrf.mxu0
          %v3099 = vadd.f32 0.0, %v3098
          %v3100 = vpop.f32.mrf.mxu0
          %3101 = vdwg.mxu0
          %v3103 = vsel %vm2954, %v3045, 0
          %v3106 = vsel %vm2954, %v3046, 0
          %3108 = vmatprep.subr.bf16.mxu0 0
          %3109 = vmatpush1.bf16.msra.mxu0 0
          %3110 = vmatprep.subr.bf16.mxu0 0
          %3111 = vmatpush1.bf16.msra.mxu0 0
          %3112 = vmatprep.subr.bf16.mxu0 0
          %3113 = vmatpush1.bf16.msra.mxu0 0
          %3114 = vmatprep.subr.bf16.mxu0 0
          %3115 = vmatpush1.bf16.msra.mxu0 0
          %3116 = vmatprep.subr.bf16.mxu0 0
          %3117 = vmatpush1.bf16.msra.mxu0 0
          %3118 = vmatprep.subr.bf16.mxu0 0
          %3119 = vmatpush1.bf16.msra.mxu0 0
          %3120 = vmatprep.subr.bf16.mxu0 0
          %3121 = vmatpush1.bf16.msra.mxu0 %v2818
          %3122 = vmatprep.subr.bf16.mxu0 0
          %3123 = vmatpush1.bf16.msra.mxu0 %v2817
          %3124 = vmatprep.subr.bf16.mxu0 0
          %3125 = vmatpush2.bf16.msra.mxu0 0
          %3126 = vmatprep.subr.bf16.mxu0 0
          %3127 = vmatpush2.bf16.msra.mxu0 0
          %3128 = vmatprep.subr.bf16.mxu0 0
          %3129 = vmatpush2.bf16.msra.mxu0 0
          %3130 = vmatprep.subr.bf16.mxu0 0
          %3131 = vmatpush2.bf16.msra.mxu0 0
          %3132 = vmatprep.subr.bf16.mxu0 0
          %3133 = vmatpush2.bf16.msra.mxu0 0
          %3134 = vmatprep.subr.bf16.mxu0 0
          %3135 = vmatpush2.bf16.msra.mxu0 0
          %3136 = vmatprep.subr.bf16.mxu0 0
          %3137 = vmatpush2.bf16.msra.mxu0 0
          %3138 = vmatprep.subr.bf16.mxu0 0
          %3139 = vmatpush2.bf16.msra.mxu0 0
          %3140 = vmatprep.mubr.bf16.mxu0 0
          %3141 = vmatmul.mubr.bf16.gmra.mxu0 %v3103
          %v3142 = vpop.f32.mrf.mxu0
          %v3143 = vadd.f32 0.0, %v3142
          %v3144 = vpop.f32.mrf.mxu0
          %v3145 = vpop.f32.mrf.mxu0
          %v3146 = vadd.f32 0.0, %v3145
          %v3147 = vpop.f32.mrf.mxu0
          %3148 = vmatprep.mubr.bf16.mxu0 0
          %3149 = vmatmul.mubr.bf16.gmra.mxu0 %v3106
          %v3150 = vpop.f32.mrf.mxu0
          %v3151 = vadd.f32 0.0, %v3150
          %v3152 = vpop.f32.mrf.mxu0
          %v3153 = vpop.f32.mrf.mxu0
          %v3154 = vadd.f32 0.0, %v3153
          %v3155 = vpop.f32.mrf.mxu0
          %3156 = vdwg.mxu0
          %3157 = vrot.lane.b32.xlu0 %v2811, 112
          %v3158 = vpop.permute.xlu0 %3157
          %3159 = vrot.lane.b32.xlu0 %v2812, 112
          %v3160 = vpop.permute.xlu0 %3159
          %3161 = vrot.lane.b32.xlu0 %v2811, 48
          %v3162 = vpop.permute.xlu0 %3161
          %3163 = vrot.lane.b32.xlu0 %v2812, 48
          %v3164 = vpop.permute.xlu0 %3163
          %v3166 = vsel %vm2825, %v3158, 0
          %v3169 = vsel %vm2825, %v3160, 0
          %v3172 = vsel %vm2825, %v3162, 0
          %v3175 = vsel %vm2825, %v3164, 0
          %3177 = vmatprep.subr.bf16.mxu0 0
          %3178 = vmatpush1.bf16.xpose.msra.mxu0 0
          %3179 = vmatprep.subr.bf16.mxu0 0
          %3180 = vmatpush1.bf16.xpose.msra.mxu0 0
          %3181 = vmatprep.subr.bf16.mxu0 0
          %3182 = vmatpush1.bf16.xpose.msra.mxu0 0
          %3183 = vmatprep.subr.bf16.mxu0 0
          %3184 = vmatpush1.bf16.xpose.msra.mxu0 0
          %3185 = vmatprep.subr.bf16.mxu0 0
          %3186 = vmatpush1.bf16.xpose.msra.mxu0 0
          %3187 = vmatprep.subr.bf16.mxu0 0
          %3188 = vmatpush1.bf16.xpose.msra.mxu0 0
          %3189 = vmatprep.subr.bf16.mxu0 0
          %3190 = vmatpush1.bf16.xpose.msra.mxu0 %v3175
          %3191 = vmatprep.subr.bf16.mxu0 0
          %3192 = vmatpush1.bf16.xpose.msra.mxu0 %v3172
          %3193 = vmatprep.subr.bf16.mxu0 0
          %3194 = vmatpush2.bf16.xpose.msra.mxu0 0
          %3195 = vmatprep.subr.bf16.mxu0 0
          %3196 = vmatpush2.bf16.xpose.msra.mxu0 0
          %3197 = vmatprep.subr.bf16.mxu0 0
          %3198 = vmatpush2.bf16.xpose.msra.mxu0 0
          %3199 = vmatprep.subr.bf16.mxu0 0
          %3200 = vmatpush2.bf16.xpose.msra.mxu0 0
          %3201 = vmatprep.subr.bf16.mxu0 0
          %3202 = vmatpush2.bf16.xpose.msra.mxu0 0
          %3203 = vmatprep.subr.bf16.mxu0 0
          %3204 = vmatpush2.bf16.xpose.msra.mxu0 0
          %3205 = vmatprep.subr.bf16.mxu0 0
          %3206 = vmatpush2.bf16.xpose.msra.mxu0 0
          %3207 = vmatprep.subr.bf16.mxu0 0
          %3208 = vmatpush2.bf16.xpose.msra.mxu0 0
          %3209 = vmatprep.mubr.bf16.mxu0 0
          %3210 = vmatmul.mubr.bf16.gmra.mxu0 %v3166
          %v3211 = vpop.f32.mrf.mxu0
          %v3212 = vadd.f32 0.0, %v3211
          %v3213 = vpop.f32.mrf.mxu0
          %v3214 = vpop.f32.mrf.mxu0
          %v3215 = vadd.f32 0.0, %v3214
          %v3216 = vpop.f32.mrf.mxu0
          %3217 = vmatprep.mubr.bf16.mxu0 0
          %3218 = vmatmul.mubr.bf16.gmra.mxu0 %v3169
          %v3219 = vpop.f32.mrf.mxu0
          %v3220 = vadd.f32 0.0, %v3219
          %v3221 = vpop.f32.mrf.mxu0
          %v3222 = vpop.f32.mrf.mxu0
          %v3223 = vadd.f32 0.0, %v3222
          %v3224 = vpop.f32.mrf.mxu0
          %3225 = vdwg.mxu0
          %3226 = vrot.lane.b32.xlu0 %v2813, 112
          %v3227 = vpop.permute.xlu0 %3226
          %3228 = vrot.lane.b32.xlu0 %v2814, 112
          %v3229 = vpop.permute.xlu0 %3228
          %3230 = vrot.lane.b32.xlu0 %v2813, 48
          %v3231 = vpop.permute.xlu0 %3230
          %3232 = vrot.lane.b32.xlu0 %v2814, 48
          %v3233 = vpop.permute.xlu0 %3232
          %v3235 = vsel %vm2825, %v3227, 0
          %v3238 = vsel %vm2825, %v3229, 0
          %v3241 = vsel %vm2825, %v3231, 0
          %v3244 = vsel %vm2825, %v3233, 0
          %3246 = vmatprep.subr.bf16.mxu0 0
          %3247 = vmatpush1.bf16.xpose.msra.mxu0 0
          %3248 = vmatprep.subr.bf16.mxu0 0
          %3249 = vmatpush1.bf16.xpose.msra.mxu0 0
          %3250 = vmatprep.subr.bf16.mxu0 0
          %3251 = vmatpush1.bf16.xpose.msra.mxu0 0
          %3252 = vmatprep.subr.bf16.mxu0 0
          %3253 = vmatpush1.bf16.xpose.msra.mxu0 0
          %3254 = vmatprep.subr.bf16.mxu0 0
          %3255 = vmatpush1.bf16.xpose.msra.mxu0 0
          %3256 = vmatprep.subr.bf16.mxu0 0
          %3257 = vmatpush1.bf16.xpose.msra.mxu0 0
          %3258 = vmatprep.subr.bf16.mxu0 0
          %3259 = vmatpush1.bf16.xpose.msra.mxu0 %v3244
          %3260 = vmatprep.subr.bf16.mxu0 0
          %3261 = vmatpush1.bf16.xpose.msra.mxu0 %v3241
          %3262 = vmatprep.subr.bf16.mxu0 0
          %3263 = vmatpush2.bf16.xpose.msra.mxu0 0
          %3264 = vmatprep.subr.bf16.mxu0 0
          %3265 = vmatpush2.bf16.xpose.msra.mxu0 0
          %3266 = vmatprep.subr.bf16.mxu0 0
          %3267 = vmatpush2.bf16.xpose.msra.mxu0 0
          %3268 = vmatprep.subr.bf16.mxu0 0
          %3269 = vmatpush2.bf16.xpose.msra.mxu0 0
          %3270 = vmatprep.subr.bf16.mxu0 0
          %3271 = vmatpush2.bf16.xpose.msra.mxu0 0
          %3272 = vmatprep.subr.bf16.mxu0 0
          %3273 = vmatpush2.bf16.xpose.msra.mxu0 0
          %3274 = vmatprep.subr.bf16.mxu0 0
          %3275 = vmatpush2.bf16.xpose.msra.mxu0 0
          %3276 = vmatprep.subr.bf16.mxu0 0
          %3277 = vmatpush2.bf16.xpose.msra.mxu0 0
          %3278 = vmatprep.mubr.bf16.mxu0 0
          %3279 = vmatmul.mubr.bf16.gmra.mxu0 %v3235
          %v3280 = vpop.f32.mrf.mxu0
          %v3281 = vadd.f32 0.0, %v3280
          %v3282 = vpop.f32.mrf.mxu0
          %v3283 = vpop.f32.mrf.mxu0
          %v3284 = vadd.f32 0.0, %v3283
          %v3285 = vpop.f32.mrf.mxu0
          %3286 = vmatprep.mubr.bf16.mxu0 0
          %3287 = vmatmul.mubr.bf16.gmra.mxu0 %v3238
          %v3288 = vpop.f32.mrf.mxu0
          %v3289 = vadd.f32 0.0, %v3288
          %v3290 = vpop.f32.mrf.mxu0
          %v3291 = vpop.f32.mrf.mxu0
          %v3292 = vadd.f32 0.0, %v3291
          %v3293 = vpop.f32.mrf.mxu0
          %3294 = vdwg.mxu0
          %v3295 = vsel %vm2954, %v3212, -inf
          %3296 = vmax.xlane.f32.xlu0 %v3295
          %v3297 = vpop.xlane.xlu0 %3296
          %v3298 = vsel %vm2954, %v3215, -inf
          %3299 = vmax.xlane.f32.xlu0 %v3298
          %v3300 = vpop.xlane.xlu0 %3299
          %v3301 = vsel %vm2954, %v3220, -inf
          %3302 = vmax.xlane.f32.xlu0 %v3301
          %v3303 = vpop.xlane.xlu0 %3302
          %v3304 = vsel %vm2954, %v3223, -inf
          %3305 = vmax.xlane.f32.xlu0 %v3304
          %v3306 = vpop.xlane.xlu0 %3305
          %v3307 = vsel %vm2954, %v3281, -inf
          %3308 = vmax.xlane.f32.xlu0 %v3307
          %v3309 = vpop.xlane.xlu0 %3308
          %v3310 = vsel %vm2954, %v3284, -inf
          %3311 = vmax.xlane.f32.xlu0 %v3310
          %v3312 = vpop.xlane.xlu0 %3311
          %v3313 = vsel %vm2954, %v3289, -inf
          %3314 = vmax.xlane.f32.xlu0 %v3313
          %v3315 = vpop.xlane.xlu0 %3314
          %v3316 = vsel %vm2954, %v3292, -inf
          %3317 = vmax.xlane.f32.xlu0 %v3316
          %v3318 = vpop.xlane.xlu0 %3317
          %v3319 = vsub.f32 %v3212, %v3297
          %v3320 = vsub.f32 %v3215, %v3300
          %v3321 = vsub.f32 %v3220, %v3303
          %v3322 = vsub.f32 %v3223, %v3306
          %v3323 = vsub.f32 %v3281, %v3309
          %v3324 = vsub.f32 %v3284, %v3312
          %v3325 = vsub.f32 %v3289, %v3315
          %v3326 = vsub.f32 %v3292, %v3318
          %v3327 = vmul.f32 %v3319, 1.442695
          %v3328 = vpow.pop %v3327
          %v3329 = vmul.f32 %v3320, 1.442695
          %v3330 = vpow.pop %v3329
          %v3331 = vmul.f32 %v3321, 1.442695
          %v3332 = vpow.pop %v3331
          %v3333 = vmul.f32 %v3322, 1.442695
          %v3334 = vpow.pop %v3333
          %v3335 = vmul.f32 %v3323, 1.442695
          %v3336 = vpow.pop %v3335
          %v3337 = vmul.f32 %v3324, 1.442695
          %v3338 = vpow.pop %v3337
          %v3339 = vmul.f32 %v3325, 1.442695
          %v3340 = vpow.pop %v3339
          %v3341 = vmul.f32 %v3326, 1.442695
          %v3342 = vpow.pop %v3341
          %v3343 = vsel %vm2954, %v3328, 0.0
          %3344 = vadd.xlane.f32.xlu0 %v3343
          %v3345 = vpop.xlane.xlu0 %3344
          %v3346 = vsel %vm2954, %v3330, 0.0
          %3347 = vadd.xlane.f32.xlu0 %v3346
          %v3348 = vpop.xlane.xlu0 %3347
          %v3349 = vsel %vm2954, %v3332, 0.0
          %3350 = vadd.xlane.f32.xlu0 %v3349
          %v3351 = vpop.xlane.xlu0 %3350
          %v3352 = vsel %vm2954, %v3334, 0.0
          %3353 = vadd.xlane.f32.xlu0 %v3352
          %v3354 = vpop.xlane.xlu0 %3353
          %v3355 = vsel %vm2954, %v3336, 0.0
          %3356 = vadd.xlane.f32.xlu0 %v3355
          %v3357 = vpop.xlane.xlu0 %3356
          %v3358 = vsel %vm2954, %v3338, 0.0
          %3359 = vadd.xlane.f32.xlu0 %v3358
          %v3360 = vpop.xlane.xlu0 %3359
          %v3361 = vsel %vm2954, %v3340, 0.0
          %3362 = vadd.xlane.f32.xlu0 %v3361
          %v3363 = vpop.xlane.xlu0 %3362
          %v3364 = vsel %vm2954, %v3342, 0.0
          %3365 = vadd.xlane.f32.xlu0 %v3364
          %v3366 = vpop.xlane.xlu0 %3365
          %v3367 = vrcp.pop %v3345
          %v3368 = vrcp.pop %v3348
          %v3369 = vrcp.pop %v3351
          %v3370 = vrcp.pop %v3354
          %v3371 = vrcp.pop %v3357
          %v3372 = vrcp.pop %v3360
          %v3373 = vrcp.pop %v3363
          %v3374 = vrcp.pop %v3366
          %v3375 = vmul.f32 %v3328, %v3367
          %v3376 = vmul.f32 %v3330, %v3368
          %v3377 = vmul.f32 %v3332, %v3369
          %v3378 = vmul.f32 %v3334, %v3370
          %v3379 = vmul.f32 %v3336, %v3371
          %v3380 = vmul.f32 %v3338, %v3372
          %v3381 = vmul.f32 %v3340, %v3373
          %v3382 = vmul.f32 %v3342, %v3374
          %v3383 = vpack.c.bf16 %v3376, %v3375
          %v3384 = vpack.c.bf16 %v3378, %v3377
          %v3385 = vpack.c.bf16 %v3380, %v3379
          %v3386 = vpack.c.bf16 %v3382, %v3381
          %3389 = vrot.lane.b32.xlu0 %v2815, 112
          %v3390 = vpop.permute.xlu0 %3389
          %3391 = vrot.lane.b32.xlu0 %v2816, 112
          %v3392 = vpop.permute.xlu0 %3391
          %v3396 = vsel %vm2954, %v3383, 0
          %v3399 = vsel %vm2954, %v3384, 0
          %3401 = vmatprep.subr.bf16.mxu0 0
          %3402 = vmatpush1.bf16.msra.mxu0 0
          %3403 = vmatprep.subr.bf16.mxu0 0
          %3404 = vmatpush1.bf16.msra.mxu0 0
          %3405 = vmatprep.subr.bf16.mxu0 0
          %3406 = vmatpush1.bf16.msra.mxu0 0
          %3407 = vmatprep.subr.bf16.mxu0 0
          %3408 = vmatpush1.bf16.msra.mxu0 0
          %3409 = vmatprep.subr.bf16.mxu0 0
          %3410 = vmatpush1.bf16.msra.mxu0 0
          %3411 = vmatprep.subr.bf16.mxu0 0
          %3412 = vmatpush1.bf16.msra.mxu0 0
          %3413 = vmatprep.subr.bf16.mxu0 0
          %3414 = vmatpush1.bf16.msra.mxu0 %v3392
          %3415 = vmatprep.subr.bf16.mxu0 0
          %3416 = vmatpush1.bf16.msra.mxu0 %v3390
          %3417 = vmatprep.subr.bf16.mxu0 0
          %3418 = vmatpush2.bf16.msra.mxu0 0
          %3419 = vmatprep.subr.bf16.mxu0 0
          %3420 = vmatpush2.bf16.msra.mxu0 0
          %3421 = vmatprep.subr.bf16.mxu0 0
          %3422 = vmatpush2.bf16.msra.mxu0 0
          %3423 = vmatprep.subr.bf16.mxu0 0
          %3424 = vmatpush2.bf16.msra.mxu0 0
          %3425 = vmatprep.subr.bf16.mxu0 0
          %3426 = vmatpush2.bf16.msra.mxu0 0
          %3427 = vmatprep.subr.bf16.mxu0 0
          %3428 = vmatpush2.bf16.msra.mxu0 0
          %3429 = vmatprep.subr.bf16.mxu0 0
          %3430 = vmatpush2.bf16.msra.mxu0 0
          %3431 = vmatprep.subr.bf16.mxu0 0
          %3432 = vmatpush2.bf16.msra.mxu0 0
          %3433 = vmatprep.mubr.bf16.mxu0 0
          %3434 = vmatmul.mubr.bf16.gmra.mxu0 %v3396
          %v3435 = vpop.f32.mrf.mxu0
          %v3436 = vadd.f32 0.0, %v3435
          %v3437 = vpop.f32.mrf.mxu0
          %v3438 = vpop.f32.mrf.mxu0
          %v3439 = vadd.f32 0.0, %v3438
          %v3440 = vpop.f32.mrf.mxu0
          %3441 = vmatprep.mubr.bf16.mxu0 0
          %3442 = vmatmul.mubr.bf16.gmra.mxu0 %v3399
          %v3443 = vpop.f32.mrf.mxu0
          %v3444 = vadd.f32 0.0, %v3443
          %v3445 = vpop.f32.mrf.mxu0
          %v3446 = vpop.f32.mrf.mxu0
          %v3447 = vadd.f32 0.0, %v3446
          %v3448 = vpop.f32.mrf.mxu0
          %3449 = vdwg.mxu0
          %3452 = vrot.lane.b32.xlu0 %v2817, 112
          %v3453 = vpop.permute.xlu0 %3452
          %3454 = vrot.lane.b32.xlu0 %v2818, 112
          %v3455 = vpop.permute.xlu0 %3454
          %v3459 = vsel %vm2954, %v3385, 0
          %v3462 = vsel %vm2954, %v3386, 0
          %3464 = vmatprep.subr.bf16.mxu0 0
          %3465 = vmatpush1.bf16.msra.mxu0 0
          %3466 = vmatprep.subr.bf16.mxu0 0
          %3467 = vmatpush1.bf16.msra.mxu0 0
          %3468 = vmatprep.subr.bf16.mxu0 0
          %3469 = vmatpush1.bf16.msra.mxu0 0
          %3470 = vmatprep.subr.bf16.mxu0 0
          %3471 = vmatpush1.bf16.msra.mxu0 0
          %3472 = vmatprep.subr.bf16.mxu0 0
          %3473 = vmatpush1.bf16.msra.mxu0 0
          %3474 = vmatprep.subr.bf16.mxu0 0
          %3475 = vmatpush1.bf16.msra.mxu0 0
          %3476 = vmatprep.subr.bf16.mxu0 0
          %3477 = vmatpush1.bf16.msra.mxu0 %v3455
          %3478 = vmatprep.subr.bf16.mxu0 0
          %3479 = vmatpush1.bf16.msra.mxu0 %v3453
          %3480 = vmatprep.subr.bf16.mxu0 0
          %3481 = vmatpush2.bf16.msra.mxu0 0
          %3482 = vmatprep.subr.bf16.mxu0 0
          %3483 = vmatpush2.bf16.msra.mxu0 0
          %3484 = vmatprep.subr.bf16.mxu0 0
          %3485 = vmatpush2.bf16.msra.mxu0 0
          %3486 = vmatprep.subr.bf16.mxu0 0
          %3487 = vmatpush2.bf16.msra.mxu0 0
          %3488 = vmatprep.subr.bf16.mxu0 0
          %3489 = vmatpush2.bf16.msra.mxu0 0
          %3490 = vmatprep.subr.bf16.mxu0 0
          %3491 = vmatpush2.bf16.msra.mxu0 0
          %3492 = vmatprep.subr.bf16.mxu0 0
          %3493 = vmatpush2.bf16.msra.mxu0 0
          %3494 = vmatprep.subr.bf16.mxu0 0
          %3495 = vmatpush2.bf16.msra.mxu0 0
          %3496 = vmatprep.mubr.bf16.mxu0 0
          %3497 = vmatmul.mubr.bf16.gmra.mxu0 %v3459
          %v3498 = vpop.f32.mrf.mxu0
          %v3499 = vadd.f32 0.0, %v3498
          %v3500 = vpop.f32.mrf.mxu0
          %v3501 = vpop.f32.mrf.mxu0
          %v3502 = vadd.f32 0.0, %v3501
          %v3503 = vpop.f32.mrf.mxu0
          %3504 = vmatprep.mubr.bf16.mxu0 0
          %3505 = vmatmul.mubr.bf16.gmra.mxu0 %v3462
          %v3506 = vpop.f32.mrf.mxu0
          %v3507 = vadd.f32 0.0, %v3506
          %v3508 = vpop.f32.mrf.mxu0
          %v3509 = vpop.f32.mrf.mxu0
          %v3510 = vadd.f32 0.0, %v3509
          %v3511 = vpop.f32.mrf.mxu0
          %3512 = vdwg.mxu0
          %3513 = vrot.lane.b32.xlu0 %v2811, 96
          %v3514 = vpop.permute.xlu0 %3513
          %3515 = vrot.lane.b32.xlu0 %v2812, 96
          %v3516 = vpop.permute.xlu0 %3515
          %3517 = vrot.lane.b32.xlu0 %v2811, 32
          %v3518 = vpop.permute.xlu0 %3517
          %3519 = vrot.lane.b32.xlu0 %v2812, 32
          %v3520 = vpop.permute.xlu0 %3519
          %v3522 = vsel %vm2825, %v3514, 0
          %v3525 = vsel %vm2825, %v3516, 0
          %v3528 = vsel %vm2825, %v3518, 0
          %v3531 = vsel %vm2825, %v3520, 0
          %3533 = vmatprep.subr.bf16.mxu0 0
          %3534 = vmatpush1.bf16.xpose.msra.mxu0 0
          %3535 = vmatprep.subr.bf16.mxu0 0
          %3536 = vmatpush1.bf16.xpose.msra.mxu0 0
          %3537 = vmatprep.subr.bf16.mxu0 0
          %3538 = vmatpush1.bf16.xpose.msra.mxu0 0
          %3539 = vmatprep.subr.bf16.mxu0 0
          %3540 = vmatpush1.bf16.xpose.msra.mxu0 0
          %3541 = vmatprep.subr.bf16.mxu0 0
          %3542 = vmatpush1.bf16.xpose.msra.mxu0 0
          %3543 = vmatprep.subr.bf16.mxu0 0
          %3544 = vmatpush1.bf16.xpose.msra.mxu0 0
          %3545 = vmatprep.subr.bf16.mxu0 0
          %3546 = vmatpush1.bf16.xpose.msra.mxu0 %v3531
          %3547 = vmatprep.subr.bf16.mxu0 0
          %3548 = vmatpush1.bf16.xpose.msra.mxu0 %v3528
          %3549 = vmatprep.subr.bf16.mxu0 0
          %3550 = vmatpush2.bf16.xpose.msra.mxu0 0
          %3551 = vmatprep.subr.bf16.mxu0 0
          %3552 = vmatpush2.bf16.xpose.msra.mxu0 0
          %3553 = vmatprep.subr.bf16.mxu0 0
          %3554 = vmatpush2.bf16.xpose.msra.mxu0 0
          %3555 = vmatprep.subr.bf16.mxu0 0
          %3556 = vmatpush2.bf16.xpose.msra.mxu0 0
          %3557 = vmatprep.subr.bf16.mxu0 0
          %3558 = vmatpush2.bf16.xpose.msra.mxu0 0
          %3559 = vmatprep.subr.bf16.mxu0 0
          %3560 = vmatpush2.bf16.xpose.msra.mxu0 0
          %3561 = vmatprep.subr.bf16.mxu0 0
          %3562 = vmatpush2.bf16.xpose.msra.mxu0 0
          %3563 = vmatprep.subr.bf16.mxu0 0
          %3564 = vmatpush2.bf16.xpose.msra.mxu0 0
          %3565 = vmatprep.mubr.bf16.mxu0 0
          %3566 = vmatmul.mubr.bf16.gmra.mxu0 %v3522
          %v3567 = vpop.f32.mrf.mxu0
          %v3568 = vadd.f32 0.0, %v3567
          %v3569 = vpop.f32.mrf.mxu0
          %v3570 = vpop.f32.mrf.mxu0
          %v3571 = vadd.f32 0.0, %v3570
          %v3572 = vpop.f32.mrf.mxu0
          %3573 = vmatprep.mubr.bf16.mxu0 0
          %3574 = vmatmul.mubr.bf16.gmra.mxu0 %v3525
          %v3575 = vpop.f32.mrf.mxu0
          %v3576 = vadd.f32 0.0, %v3575
          %v3577 = vpop.f32.mrf.mxu0
          %v3578 = vpop.f32.mrf.mxu0
          %v3579 = vadd.f32 0.0, %v3578
          %v3580 = vpop.f32.mrf.mxu0
          %3581 = vdwg.mxu0
          %3582 = vrot.lane.b32.xlu0 %v2813, 96
          %v3583 = vpop.permute.xlu0 %3582
          %3584 = vrot.lane.b32.xlu0 %v2814, 96
          %v3585 = vpop.permute.xlu0 %3584
          %3586 = vrot.lane.b32.xlu0 %v2813, 32
          %v3587 = vpop.permute.xlu0 %3586
          %3588 = vrot.lane.b32.xlu0 %v2814, 32
          %v3589 = vpop.permute.xlu0 %3588
          %v3591 = vsel %vm2825, %v3583, 0
          %v3594 = vsel %vm2825, %v3585, 0
          %v3597 = vsel %vm2825, %v3587, 0
          %v3600 = vsel %vm2825, %v3589, 0
          %3602 = vmatprep.subr.bf16.mxu0 0
          %3603 = vmatpush1.bf16.xpose.msra.mxu0 0
          %3604 = vmatprep.subr.bf16.mxu0 0
          %3605 = vmatpush1.bf16.xpose.msra.mxu0 0
          %3606 = vmatprep.subr.bf16.mxu0 0
          %3607 = vmatpush1.bf16.xpose.msra.mxu0 0
          %3608 = vmatprep.subr.bf16.mxu0 0
          %3609 = vmatpush1.bf16.xpose.msra.mxu0 0
          %3610 = vmatprep.subr.bf16.mxu0 0
          %3611 = vmatpush1.bf16.xpose.msra.mxu0 0
          %3612 = vmatprep.subr.bf16.mxu0 0
          %3613 = vmatpush1.bf16.xpose.msra.mxu0 0
          %3614 = vmatprep.subr.bf16.mxu0 0
          %3615 = vmatpush1.bf16.xpose.msra.mxu0 %v3600
          %3616 = vmatprep.subr.bf16.mxu0 0
          %3617 = vmatpush1.bf16.xpose.msra.mxu0 %v3597
          %3618 = vmatprep.subr.bf16.mxu0 0
          %3619 = vmatpush2.bf16.xpose.msra.mxu0 0
          %3620 = vmatprep.subr.bf16.mxu0 0
          %3621 = vmatpush2.bf16.xpose.msra.mxu0 0
          %3622 = vmatprep.subr.bf16.mxu0 0
          %3623 = vmatpush2.bf16.xpose.msra.mxu0 0
          %3624 = vmatprep.subr.bf16.mxu0 0
          %3625 = vmatpush2.bf16.xpose.msra.mxu0 0
          %3626 = vmatprep.subr.bf16.mxu0 0
          %3627 = vmatpush2.bf16.xpose.msra.mxu0 0
          %3628 = vmatprep.subr.bf16.mxu0 0
          %3629 = vmatpush2.bf16.xpose.msra.mxu0 0
          %3630 = vmatprep.subr.bf16.mxu0 0
          %3631 = vmatpush2.bf16.xpose.msra.mxu0 0
          %3632 = vmatprep.subr.bf16.mxu0 0
          %3633 = vmatpush2.bf16.xpose.msra.mxu0 0
          %3634 = vmatprep.mubr.bf16.mxu0 0
          %3635 = vmatmul.mubr.bf16.gmra.mxu0 %v3591
          %v3636 = vpop.f32.mrf.mxu0
          %v3637 = vadd.f32 0.0, %v3636
          %v3638 = vpop.f32.mrf.mxu0
          %v3639 = vpop.f32.mrf.mxu0
          %v3640 = vadd.f32 0.0, %v3639
          %v3641 = vpop.f32.mrf.mxu0
          %3642 = vmatprep.mubr.bf16.mxu0 0
          %3643 = vmatmul.mubr.bf16.gmra.mxu0 %v3594
          %v3644 = vpop.f32.mrf.mxu0
          %v3645 = vadd.f32 0.0, %v3644
          %v3646 = vpop.f32.mrf.mxu0
          %v3647 = vpop.f32.mrf.mxu0
          %v3648 = vadd.f32 0.0, %v3647
          %v3649 = vpop.f32.mrf.mxu0
          %3650 = vdwg.mxu0
          %v3651 = vsel %vm2954, %v3568, -inf
          %3652 = vmax.xlane.f32.xlu0 %v3651
          %v3653 = vpop.xlane.xlu0 %3652
          %v3654 = vsel %vm2954, %v3571, -inf
          %3655 = vmax.xlane.f32.xlu0 %v3654
          %v3656 = vpop.xlane.xlu0 %3655
          %v3657 = vsel %vm2954, %v3576, -inf
          %3658 = vmax.xlane.f32.xlu0 %v3657
          %v3659 = vpop.xlane.xlu0 %3658
          %v3660 = vsel %vm2954, %v3579, -inf
          %3661 = vmax.xlane.f32.xlu0 %v3660
          %v3662 = vpop.xlane.xlu0 %3661
          %v3663 = vsel %vm2954, %v3637, -inf
          %3664 = vmax.xlane.f32.xlu0 %v3663
          %v3665 = vpop.xlane.xlu0 %3664
          %v3666 = vsel %vm2954, %v3640, -inf
          %3667 = vmax.xlane.f32.xlu0 %v3666
          %v3668 = vpop.xlane.xlu0 %3667
          %v3669 = vsel %vm2954, %v3645, -inf
          %3670 = vmax.xlane.f32.xlu0 %v3669
          %v3671 = vpop.xlane.xlu0 %3670
          %v3672 = vsel %vm2954, %v3648, -inf
          %3673 = vmax.xlane.f32.xlu0 %v3672
          %v3674 = vpop.xlane.xlu0 %3673
          %v3675 = vsub.f32 %v3568, %v3653
          %v3676 = vsub.f32 %v3571, %v3656
          %v3677 = vsub.f32 %v3576, %v3659
          %v3678 = vsub.f32 %v3579, %v3662
          %v3679 = vsub.f32 %v3637, %v3665
          %v3680 = vsub.f32 %v3640, %v3668
          %v3681 = vsub.f32 %v3645, %v3671
          %v3682 = vsub.f32 %v3648, %v3674
          %v3683 = vmul.f32 %v3675, 1.442695
          %v3684 = vpow.pop %v3683
          %v3685 = vmul.f32 %v3676, 1.442695
          %v3686 = vpow.pop %v3685
          %v3687 = vmul.f32 %v3677, 1.442695
          %v3688 = vpow.pop %v3687
          %v3689 = vmul.f32 %v3678, 1.442695
          %v3690 = vpow.pop %v3689
          %v3691 = vmul.f32 %v3679, 1.442695
          %v3692 = vpow.pop %v3691
          %v3693 = vmul.f32 %v3680, 1.442695
          %v3694 = vpow.pop %v3693
          %v3695 = vmul.f32 %v3681, 1.442695
          %v3696 = vpow.pop %v3695
          %v3697 = vmul.f32 %v3682, 1.442695
          %v3698 = vpow.pop %v3697
          %v3699 = vsel %vm2954, %v3684, 0.0
          %3700 = vadd.xlane.f32.xlu0 %v3699
          %v3701 = vpop.xlane.xlu0 %3700
          %v3702 = vsel %vm2954, %v3686, 0.0
          %3703 = vadd.xlane.f32.xlu0 %v3702
          %v3704 = vpop.xlane.xlu0 %3703
          %v3705 = vsel %vm2954, %v3688, 0.0
          %3706 = vadd.xlane.f32.xlu0 %v3705
          %v3707 = vpop.xlane.xlu0 %3706
          %v3708 = vsel %vm2954, %v3690, 0.0
          %3709 = vadd.xlane.f32.xlu0 %v3708
          %v3710 = vpop.xlane.xlu0 %3709
          %v3711 = vsel %vm2954, %v3692, 0.0
          %3712 = vadd.xlane.f32.xlu0 %v3711
          %v3713 = vpop.xlane.xlu0 %3712
          %v3714 = vsel %vm2954, %v3694, 0.0
          %3715 = vadd.xlane.f32.xlu0 %v3714
          %v3716 = vpop.xlane.xlu0 %3715
          %v3717 = vsel %vm2954, %v3696, 0.0
          %3718 = vadd.xlane.f32.xlu0 %v3717
          %v3719 = vpop.xlane.xlu0 %3718
          %v3720 = vsel %vm2954, %v3698, 0.0
          %3721 = vadd.xlane.f32.xlu0 %v3720
          %v3722 = vpop.xlane.xlu0 %3721
          %v3723 = vrcp.pop %v3701
          %v3724 = vrcp.pop %v3704
          %v3725 = vrcp.pop %v3707
          %v3726 = vrcp.pop %v3710
          %v3727 = vrcp.pop %v3713
          %v3728 = vrcp.pop %v3716
          %v3729 = vrcp.pop %v3719
          %v3730 = vrcp.pop %v3722
          %v3731 = vmul.f32 %v3684, %v3723
          %v3732 = vmul.f32 %v3686, %v3724
          %v3733 = vmul.f32 %v3688, %v3725
          %v3734 = vmul.f32 %v3690, %v3726
          %v3735 = vmul.f32 %v3692, %v3727
          %v3736 = vmul.f32 %v3694, %v3728
          %v3737 = vmul.f32 %v3696, %v3729
          %v3738 = vmul.f32 %v3698, %v3730
          %v3739 = vpack.c.bf16 %v3732, %v3731
          %v3740 = vpack.c.bf16 %v3734, %v3733
          %v3741 = vpack.c.bf16 %v3736, %v3735
          %v3742 = vpack.c.bf16 %v3738, %v3737
          %3743 = vrot.lane.b32.xlu0 %v2815, 96
          %v3744 = vpop.permute.xlu0 %3743
          %3745 = vrot.lane.b32.xlu0 %v2816, 96
          %v3746 = vpop.permute.xlu0 %3745
          %v3750 = vsel %vm2954, %v3739, 0
          %v3753 = vsel %vm2954, %v3740, 0
          %3755 = vmatprep.subr.bf16.mxu0 0
          %3756 = vmatpush1.bf16.msra.mxu0 0
          %3757 = vmatprep.subr.bf16.mxu0 0
          %3758 = vmatpush1.bf16.msra.mxu0 0
          %3759 = vmatprep.subr.bf16.mxu0 0
          %3760 = vmatpush1.bf16.msra.mxu0 0
          %3761 = vmatprep.subr.bf16.mxu0 0
          %3762 = vmatpush1.bf16.msra.mxu0 0
          %3763 = vmatprep.subr.bf16.mxu0 0
          %3764 = vmatpush1.bf16.msra.mxu0 0
          %3765 = vmatprep.subr.bf16.mxu0 0
          %3766 = vmatpush1.bf16.msra.mxu0 0
          %3767 = vmatprep.subr.bf16.mxu0 0
          %3768 = vmatpush1.bf16.msra.mxu0 %v3746
          %3769 = vmatprep.subr.bf16.mxu0 0
          %3770 = vmatpush1.bf16.msra.mxu0 %v3744
          %3771 = vmatprep.subr.bf16.mxu0 0
          %3772 = vmatpush2.bf16.msra.mxu0 0
          %3773 = vmatprep.subr.bf16.mxu0 0
          %3774 = vmatpush2.bf16.msra.mxu0 0
          %3775 = vmatprep.subr.bf16.mxu0 0
          %3776 = vmatpush2.bf16.msra.mxu0 0
          %3777 = vmatprep.subr.bf16.mxu0 0
          %3778 = vmatpush2.bf16.msra.mxu0 0
          %3779 = vmatprep.subr.bf16.mxu0 0
          %3780 = vmatpush2.bf16.msra.mxu0 0
          %3781 = vmatprep.subr.bf16.mxu0 0
          %3782 = vmatpush2.bf16.msra.mxu0 0
          %3783 = vmatprep.subr.bf16.mxu0 0
          %3784 = vmatpush2.bf16.msra.mxu0 0
          %3785 = vmatprep.subr.bf16.mxu0 0
          %3786 = vmatpush2.bf16.msra.mxu0 0
          %3787 = vmatprep.mubr.bf16.mxu0 0
          %3788 = vmatmul.mubr.bf16.gmra.mxu0 %v3750
          %v3789 = vpop.f32.mrf.mxu0
          %v3790 = vadd.f32 0.0, %v3789
          %v3791 = vpop.f32.mrf.mxu0
          %v3792 = vpop.f32.mrf.mxu0
          %v3793 = vadd.f32 0.0, %v3792
          %v3794 = vpop.f32.mrf.mxu0
          %3795 = vmatprep.mubr.bf16.mxu0 0
          %3796 = vmatmul.mubr.bf16.gmra.mxu0 %v3753
          %v3797 = vpop.f32.mrf.mxu0
          %v3798 = vadd.f32 0.0, %v3797
          %v3799 = vpop.f32.mrf.mxu0
          %v3800 = vpop.f32.mrf.mxu0
          %v3801 = vadd.f32 0.0, %v3800
          %v3802 = vpop.f32.mrf.mxu0
          %3803 = vdwg.mxu0
          %3804 = vrot.lane.b32.xlu0 %v2817, 96
          %v3805 = vpop.permute.xlu0 %3804
          %3806 = vrot.lane.b32.xlu0 %v2818, 96
          %v3807 = vpop.permute.xlu0 %3806
          %v3811 = vsel %vm2954, %v3741, 0
          %v3814 = vsel %vm2954, %v3742, 0
          %3816 = vmatprep.subr.bf16.mxu0 0
          %3817 = vmatpush1.bf16.msra.mxu0 0
          %3818 = vmatprep.subr.bf16.mxu0 0
          %3819 = vmatpush1.bf16.msra.mxu0 0
          %3820 = vmatprep.subr.bf16.mxu0 0
          %3821 = vmatpush1.bf16.msra.mxu0 0
          %3822 = vmatprep.subr.bf16.mxu0 0
          %3823 = vmatpush1.bf16.msra.mxu0 0
          %3824 = vmatprep.subr.bf16.mxu0 0
          %3825 = vmatpush1.bf16.msra.mxu0 0
          %3826 = vmatprep.subr.bf16.mxu0 0
          %3827 = vmatpush1.bf16.msra.mxu0 0
          %3828 = vmatprep.subr.bf16.mxu0 0
          %3829 = vmatpush1.bf16.msra.mxu0 %v3807
          %3830 = vmatprep.subr.bf16.mxu0 0
          %3831 = vmatpush1.bf16.msra.mxu0 %v3805
          %3832 = vmatprep.subr.bf16.mxu0 0
          %3833 = vmatpush2.bf16.msra.mxu0 0
          %3834 = vmatprep.subr.bf16.mxu0 0
          %3835 = vmatpush2.bf16.msra.mxu0 0
          %3836 = vmatprep.subr.bf16.mxu0 0
          %3837 = vmatpush2.bf16.msra.mxu0 0
          %3838 = vmatprep.subr.bf16.mxu0 0
          %3839 = vmatpush2.bf16.msra.mxu0 0
          %3840 = vmatprep.subr.bf16.mxu0 0
          %3841 = vmatpush2.bf16.msra.mxu0 0
          %3842 = vmatprep.subr.bf16.mxu0 0
          %3843 = vmatpush2.bf16.msra.mxu0 0
          %3844 = vmatprep.subr.bf16.mxu0 0
          %3845 = vmatpush2.bf16.msra.mxu0 0
          %3846 = vmatprep.subr.bf16.mxu0 0
          %3847 = vmatpush2.bf16.msra.mxu0 0
          %3848 = vmatprep.mubr.bf16.mxu0 0
          %3849 = vmatmul.mubr.bf16.gmra.mxu0 %v3811
          %v3850 = vpop.f32.mrf.mxu0
          %v3851 = vadd.f32 0.0, %v3850
          %v3852 = vpop.f32.mrf.mxu0
          %v3853 = vpop.f32.mrf.mxu0
          %v3854 = vadd.f32 0.0, %v3853
          %v3855 = vpop.f32.mrf.mxu0
          %3856 = vmatprep.mubr.bf16.mxu0 0
          %3857 = vmatmul.mubr.bf16.gmra.mxu0 %v3814
          %v3858 = vpop.f32.mrf.mxu0
          %v3859 = vadd.f32 0.0, %v3858
          %v3860 = vpop.f32.mrf.mxu0
          %v3861 = vpop.f32.mrf.mxu0
          %v3862 = vadd.f32 0.0, %v3861
          %v3863 = vpop.f32.mrf.mxu0
          %3864 = vdwg.mxu0
          %3865 = vrot.lane.b32.xlu0 %v2811, 80
          %v3866 = vpop.permute.xlu0 %3865
          %3867 = vrot.lane.b32.xlu0 %v2812, 80
          %v3868 = vpop.permute.xlu0 %3867
          %3869 = vrot.lane.b32.xlu0 %v2811, 16
          %v3870 = vpop.permute.xlu0 %3869
          %3871 = vrot.lane.b32.xlu0 %v2812, 16
          %v3872 = vpop.permute.xlu0 %3871
          %v3874 = vsel %vm2825, %v3866, 0
          %v3877 = vsel %vm2825, %v3868, 0
          %v3880 = vsel %vm2825, %v3870, 0
          %v3883 = vsel %vm2825, %v3872, 0
          %3885 = vmatprep.subr.bf16.mxu0 0
          %3886 = vmatpush1.bf16.xpose.msra.mxu0 0
          %3887 = vmatprep.subr.bf16.mxu0 0
          %3888 = vmatpush1.bf16.xpose.msra.mxu0 0
          %3889 = vmatprep.subr.bf16.mxu0 0
          %3890 = vmatpush1.bf16.xpose.msra.mxu0 0
          %3891 = vmatprep.subr.bf16.mxu0 0
          %3892 = vmatpush1.bf16.xpose.msra.mxu0 0
          %3893 = vmatprep.subr.bf16.mxu0 0
          %3894 = vmatpush1.bf16.xpose.msra.mxu0 0
          %3895 = vmatprep.subr.bf16.mxu0 0
          %3896 = vmatpush1.bf16.xpose.msra.mxu0 0
          %3897 = vmatprep.subr.bf16.mxu0 0
          %3898 = vmatpush1.bf16.xpose.msra.mxu0 %v3883
          %3899 = vmatprep.subr.bf16.mxu0 0
          %3900 = vmatpush1.bf16.xpose.msra.mxu0 %v3880
          %3901 = vmatprep.subr.bf16.mxu0 0
          %3902 = vmatpush2.bf16.xpose.msra.mxu0 0
          %3903 = vmatprep.subr.bf16.mxu0 0
          %3904 = vmatpush2.bf16.xpose.msra.mxu0 0
          %3905 = vmatprep.subr.bf16.mxu0 0
          %3906 = vmatpush2.bf16.xpose.msra.mxu0 0
          %3907 = vmatprep.subr.bf16.mxu0 0
          %3908 = vmatpush2.bf16.xpose.msra.mxu0 0
          %3909 = vmatprep.subr.bf16.mxu0 0
          %3910 = vmatpush2.bf16.xpose.msra.mxu0 0
          %3911 = vmatprep.subr.bf16.mxu0 0
          %3912 = vmatpush2.bf16.xpose.msra.mxu0 0
          %3913 = vmatprep.subr.bf16.mxu0 0
          %3914 = vmatpush2.bf16.xpose.msra.mxu0 0
          %3915 = vmatprep.subr.bf16.mxu0 0
          %3916 = vmatpush2.bf16.xpose.msra.mxu0 0
          %3917 = vmatprep.mubr.bf16.mxu0 0
          %3918 = vmatmul.mubr.bf16.gmra.mxu0 %v3874
          %v3919 = vpop.f32.mrf.mxu0
          %v3920 = vadd.f32 0.0, %v3919
          %v3921 = vpop.f32.mrf.mxu0
          %v3922 = vpop.f32.mrf.mxu0
          %v3923 = vadd.f32 0.0, %v3922
          %v3924 = vpop.f32.mrf.mxu0
          %3925 = vmatprep.mubr.bf16.mxu0 0
          %3926 = vmatmul.mubr.bf16.gmra.mxu0 %v3877
          %v3927 = vpop.f32.mrf.mxu0
          %v3928 = vadd.f32 0.0, %v3927
          %v3929 = vpop.f32.mrf.mxu0
          %v3930 = vpop.f32.mrf.mxu0
          %v3931 = vadd.f32 0.0, %v3930
          %v3932 = vpop.f32.mrf.mxu0
          %3933 = vdwg.mxu0
          %3934 = vrot.lane.b32.xlu0 %v2813, 80
          %v3935 = vpop.permute.xlu0 %3934
          %3936 = vrot.lane.b32.xlu0 %v2814, 80
          %v3937 = vpop.permute.xlu0 %3936
          %3938 = vrot.lane.b32.xlu0 %v2813, 16
          %v3939 = vpop.permute.xlu0 %3938
          %3940 = vrot.lane.b32.xlu0 %v2814, 16
          %v3941 = vpop.permute.xlu0 %3940
          %v3943 = vsel %vm2825, %v3935, 0
          %v3946 = vsel %vm2825, %v3937, 0
          %v3949 = vsel %vm2825, %v3939, 0
          %v3952 = vsel %vm2825, %v3941, 0
          %3954 = vmatprep.subr.bf16.mxu0 0
          %3955 = vmatpush1.bf16.xpose.msra.mxu0 0
          %3956 = vmatprep.subr.bf16.mxu0 0
          %3957 = vmatpush1.bf16.xpose.msra.mxu0 0
          %3958 = vmatprep.subr.bf16.mxu0 0
          %3959 = vmatpush1.bf16.xpose.msra.mxu0 0
          %3960 = vmatprep.subr.bf16.mxu0 0
          %3961 = vmatpush1.bf16.xpose.msra.mxu0 0
          %3962 = vmatprep.subr.bf16.mxu0 0
          %3963 = vmatpush1.bf16.xpose.msra.mxu0 0
          %3964 = vmatprep.subr.bf16.mxu0 0
          %3965 = vmatpush1.bf16.xpose.msra.mxu0 0
          %3966 = vmatprep.subr.bf16.mxu0 0
          %3967 = vmatpush1.bf16.xpose.msra.mxu0 %v3952
          %3968 = vmatprep.subr.bf16.mxu0 0
          %3969 = vmatpush1.bf16.xpose.msra.mxu0 %v3949
          %3970 = vmatprep.subr.bf16.mxu0 0
          %3971 = vmatpush2.bf16.xpose.msra.mxu0 0
          %3972 = vmatprep.subr.bf16.mxu0 0
          %3973 = vmatpush2.bf16.xpose.msra.mxu0 0
          %3974 = vmatprep.subr.bf16.mxu0 0
          %3975 = vmatpush2.bf16.xpose.msra.mxu0 0
          %3976 = vmatprep.subr.bf16.mxu0 0
          %3977 = vmatpush2.bf16.xpose.msra.mxu0 0
          %3978 = vmatprep.subr.bf16.mxu0 0
          %3979 = vmatpush2.bf16.xpose.msra.mxu0 0
          %3980 = vmatprep.subr.bf16.mxu0 0
          %3981 = vmatpush2.bf16.xpose.msra.mxu0 0
          %3982 = vmatprep.subr.bf16.mxu0 0
          %3983 = vmatpush2.bf16.xpose.msra.mxu0 0
          %3984 = vmatprep.subr.bf16.mxu0 0
          %3985 = vmatpush2.bf16.xpose.msra.mxu0 0
          %3986 = vmatprep.mubr.bf16.mxu0 0
          %3987 = vmatmul.mubr.bf16.gmra.mxu0 %v3943
          %v3988 = vpop.f32.mrf.mxu0
          %v3989 = vadd.f32 0.0, %v3988
          %v3990 = vpop.f32.mrf.mxu0
          %v3991 = vpop.f32.mrf.mxu0
          %v3992 = vadd.f32 0.0, %v3991
          %v3993 = vpop.f32.mrf.mxu0
          %3994 = vmatprep.mubr.bf16.mxu0 0
          %3995 = vmatmul.mubr.bf16.gmra.mxu0 %v3946
          %v3996 = vpop.f32.mrf.mxu0
          %v3997 = vadd.f32 0.0, %v3996
          %v3998 = vpop.f32.mrf.mxu0
          %v3999 = vpop.f32.mrf.mxu0
          %v4000 = vadd.f32 0.0, %v3999
          %v4001 = vpop.f32.mrf.mxu0
          %4002 = vdwg.mxu0
          %v4003 = vsel %vm2954, %v3920, -inf
          %4004 = vmax.xlane.f32.xlu0 %v4003
          %v4005 = vpop.xlane.xlu0 %4004
          %v4006 = vsel %vm2954, %v3923, -inf
          %4007 = vmax.xlane.f32.xlu0 %v4006
          %v4008 = vpop.xlane.xlu0 %4007
          %v4009 = vsel %vm2954, %v3928, -inf
          %4010 = vmax.xlane.f32.xlu0 %v4009
          %v4011 = vpop.xlane.xlu0 %4010
          %v4012 = vsel %vm2954, %v3931, -inf
          %4013 = vmax.xlane.f32.xlu0 %v4012
          %v4014 = vpop.xlane.xlu0 %4013
          %v4015 = vsel %vm2954, %v3989, -inf
          %4016 = vmax.xlane.f32.xlu0 %v4015
          %v4017 = vpop.xlane.xlu0 %4016
          %v4018 = vsel %vm2954, %v3992, -inf
          %4019 = vmax.xlane.f32.xlu0 %v4018
          %v4020 = vpop.xlane.xlu0 %4019
          %v4021 = vsel %vm2954, %v3997, -inf
          %4022 = vmax.xlane.f32.xlu0 %v4021
          %v4023 = vpop.xlane.xlu0 %4022
          %v4024 = vsel %vm2954, %v4000, -inf
          %4025 = vmax.xlane.f32.xlu0 %v4024
          %v4026 = vpop.xlane.xlu0 %4025
          %v4027 = vsub.f32 %v3920, %v4005
          %v4028 = vsub.f32 %v3923, %v4008
          %v4029 = vsub.f32 %v3928, %v4011
          %v4030 = vsub.f32 %v3931, %v4014
          %v4031 = vsub.f32 %v3989, %v4017
          %v4032 = vsub.f32 %v3992, %v4020
          %v4033 = vsub.f32 %v3997, %v4023
          %v4034 = vsub.f32 %v4000, %v4026
          %v4035 = vmul.f32 %v4027, 1.442695
          %v4036 = vpow.pop %v4035
          %v4037 = vmul.f32 %v4028, 1.442695
          %v4038 = vpow.pop %v4037
          %v4039 = vmul.f32 %v4029, 1.442695
          %v4040 = vpow.pop %v4039
          %v4041 = vmul.f32 %v4030, 1.442695
          %v4042 = vpow.pop %v4041
          %v4043 = vmul.f32 %v4031, 1.442695
          %v4044 = vpow.pop %v4043
          %v4045 = vmul.f32 %v4032, 1.442695
          %v4046 = vpow.pop %v4045
          %v4047 = vmul.f32 %v4033, 1.442695
          %v4048 = vpow.pop %v4047
          %v4049 = vmul.f32 %v4034, 1.442695
          %v4050 = vpow.pop %v4049
          %v4051 = vsel %vm2954, %v4036, 0.0
          %4052 = vadd.xlane.f32.xlu0 %v4051
          %v4053 = vpop.xlane.xlu0 %4052
          %v4054 = vsel %vm2954, %v4038, 0.0
          %4055 = vadd.xlane.f32.xlu0 %v4054
          %v4056 = vpop.xlane.xlu0 %4055
          %v4057 = vsel %vm2954, %v4040, 0.0
          %4058 = vadd.xlane.f32.xlu0 %v4057
          %v4059 = vpop.xlane.xlu0 %4058
          %v4060 = vsel %vm2954, %v4042, 0.0
          %4061 = vadd.xlane.f32.xlu0 %v4060
          %v4062 = vpop.xlane.xlu0 %4061
          %v4063 = vsel %vm2954, %v4044, 0.0
          %4064 = vadd.xlane.f32.xlu0 %v4063
          %v4065 = vpop.xlane.xlu0 %4064
          %v4066 = vsel %vm2954, %v4046, 0.0
          %4067 = vadd.xlane.f32.xlu0 %v4066
          %v4068 = vpop.xlane.xlu0 %4067
          %v4069 = vsel %vm2954, %v4048, 0.0
          %4070 = vadd.xlane.f32.xlu0 %v4069
          %v4071 = vpop.xlane.xlu0 %4070
          %v4072 = vsel %vm2954, %v4050, 0.0
          %4073 = vadd.xlane.f32.xlu0 %v4072
          %v4074 = vpop.xlane.xlu0 %4073
          %v4075 = vrcp.pop %v4053
          %v4076 = vrcp.pop %v4056
          %v4077 = vrcp.pop %v4059
          %v4078 = vrcp.pop %v4062
          %v4079 = vrcp.pop %v4065
          %v4080 = vrcp.pop %v4068
          %v4081 = vrcp.pop %v4071
          %v4082 = vrcp.pop %v4074
          %v4083 = vmul.f32 %v4036, %v4075
          %v4084 = vmul.f32 %v4038, %v4076
          %v4085 = vmul.f32 %v4040, %v4077
          %v4086 = vmul.f32 %v4042, %v4078
          %v4087 = vmul.f32 %v4044, %v4079
          %v4088 = vmul.f32 %v4046, %v4080
          %v4089 = vmul.f32 %v4048, %v4081
          %v4090 = vmul.f32 %v4050, %v4082
          %v4091 = vpack.c.bf16 %v4084, %v4083
          %v4092 = vpack.c.bf16 %v4086, %v4085
          %v4093 = vpack.c.bf16 %v4088, %v4087
          %v4094 = vpack.c.bf16 %v4090, %v4089
          %4095 = vrot.lane.b32.xlu0 %v2815, 80
          %v4096 = vpop.permute.xlu0 %4095
          %4097 = vrot.lane.b32.xlu0 %v2816, 80
          %v4098 = vpop.permute.xlu0 %4097
          %v4102 = vsel %vm2954, %v4091, 0
          %v4105 = vsel %vm2954, %v4092, 0
          %4107 = vmatprep.subr.bf16.mxu0 0
          %4108 = vmatpush1.bf16.msra.mxu0 0
          %4109 = vmatprep.subr.bf16.mxu0 0
          %4110 = vmatpush1.bf16.msra.mxu0 0
          %4111 = vmatprep.subr.bf16.mxu0 0
          %4112 = vmatpush1.bf16.msra.mxu0 0
          %4113 = vmatprep.subr.bf16.mxu0 0
          %4114 = vmatpush1.bf16.msra.mxu0 0
          %4115 = vmatprep.subr.bf16.mxu0 0
          %4116 = vmatpush1.bf16.msra.mxu0 0
          %4117 = vmatprep.subr.bf16.mxu0 0
          %4118 = vmatpush1.bf16.msra.mxu0 0
          %4119 = vmatprep.subr.bf16.mxu0 0
          %4120 = vmatpush1.bf16.msra.mxu0 %v4098
          %4121 = vmatprep.subr.bf16.mxu0 0
          %4122 = vmatpush1.bf16.msra.mxu0 %v4096
          %4123 = vmatprep.subr.bf16.mxu0 0
          %4124 = vmatpush2.bf16.msra.mxu0 0
          %4125 = vmatprep.subr.bf16.mxu0 0
          %4126 = vmatpush2.bf16.msra.mxu0 0
          %4127 = vmatprep.subr.bf16.mxu0 0
          %4128 = vmatpush2.bf16.msra.mxu0 0
          %4129 = vmatprep.subr.bf16.mxu0 0
          %4130 = vmatpush2.bf16.msra.mxu0 0
          %4131 = vmatprep.subr.bf16.mxu0 0
          %4132 = vmatpush2.bf16.msra.mxu0 0
          %4133 = vmatprep.subr.bf16.mxu0 0
          %4134 = vmatpush2.bf16.msra.mxu0 0
          %4135 = vmatprep.subr.bf16.mxu0 0
          %4136 = vmatpush2.bf16.msra.mxu0 0
          %4137 = vmatprep.subr.bf16.mxu0 0
          %4138 = vmatpush2.bf16.msra.mxu0 0
          %4139 = vmatprep.mubr.bf16.mxu0 0
          %4140 = vmatmul.mubr.bf16.gmra.mxu0 %v4102
          %v4141 = vpop.f32.mrf.mxu0
          %v4142 = vadd.f32 0.0, %v4141
          %v4143 = vpop.f32.mrf.mxu0
          %v4144 = vpop.f32.mrf.mxu0
          %v4145 = vadd.f32 0.0, %v4144
          %v4146 = vpop.f32.mrf.mxu0
          %4147 = vmatprep.mubr.bf16.mxu0 0
          %4148 = vmatmul.mubr.bf16.gmra.mxu0 %v4105
          %v4149 = vpop.f32.mrf.mxu0
          %v4150 = vadd.f32 0.0, %v4149
          %v4151 = vpop.f32.mrf.mxu0
          %v4152 = vpop.f32.mrf.mxu0
          %v4153 = vadd.f32 0.0, %v4152
          %v4154 = vpop.f32.mrf.mxu0
          %4155 = vdwg.mxu0
          %4156 = vrot.lane.b32.xlu0 %v2817, 80
          %v4157 = vpop.permute.xlu0 %4156
          %4158 = vrot.lane.b32.xlu0 %v2818, 80
          %v4159 = vpop.permute.xlu0 %4158
          %v4163 = vsel %vm2954, %v4093, 0
          %v4166 = vsel %vm2954, %v4094, 0
          %4168 = vmatprep.subr.bf16.mxu0 0
          %4169 = vmatpush1.bf16.msra.mxu0 0
          %4170 = vmatprep.subr.bf16.mxu0 0
          %4171 = vmatpush1.bf16.msra.mxu0 0
          %4172 = vmatprep.subr.bf16.mxu0 0
          %4173 = vmatpush1.bf16.msra.mxu0 0
          %4174 = vmatprep.subr.bf16.mxu0 0
          %4175 = vmatpush1.bf16.msra.mxu0 0
          %4176 = vmatprep.subr.bf16.mxu0 0
          %4177 = vmatpush1.bf16.msra.mxu0 0
          %4178 = vmatprep.subr.bf16.mxu0 0
          %4179 = vmatpush1.bf16.msra.mxu0 0
          %4180 = vmatprep.subr.bf16.mxu0 0
          %4181 = vmatpush1.bf16.msra.mxu0 %v4159
          %4182 = vmatprep.subr.bf16.mxu0 0
          %4183 = vmatpush1.bf16.msra.mxu0 %v4157
          %4184 = vmatprep.subr.bf16.mxu0 0
          %4185 = vmatpush2.bf16.msra.mxu0 0
          %4186 = vmatprep.subr.bf16.mxu0 0
          %4187 = vmatpush2.bf16.msra.mxu0 0
          %4188 = vmatprep.subr.bf16.mxu0 0
          %4189 = vmatpush2.bf16.msra.mxu0 0
          %4190 = vmatprep.subr.bf16.mxu0 0
          %4191 = vmatpush2.bf16.msra.mxu0 0
          %4192 = vmatprep.subr.bf16.mxu0 0
          %4193 = vmatpush2.bf16.msra.mxu0 0
          %4194 = vmatprep.subr.bf16.mxu0 0
          %4195 = vmatpush2.bf16.msra.mxu0 0
          %4196 = vmatprep.subr.bf16.mxu0 0
          %4197 = vmatpush2.bf16.msra.mxu0 0
          %4198 = vmatprep.subr.bf16.mxu0 0
          %4199 = vmatpush2.bf16.msra.mxu0 0
          %4200 = vmatprep.mubr.bf16.mxu0 0
          %4201 = vmatmul.mubr.bf16.gmra.mxu0 %v4163
          %v4202 = vpop.f32.mrf.mxu0
          %v4203 = vadd.f32 0.0, %v4202
          %v4204 = vpop.f32.mrf.mxu0
          %v4205 = vpop.f32.mrf.mxu0
          %v4206 = vadd.f32 0.0, %v4205
          %v4207 = vpop.f32.mrf.mxu0
          %4208 = vmatprep.mubr.bf16.mxu0 0
          %4209 = vmatmul.mubr.bf16.gmra.mxu0 %v4166
          %v4210 = vpop.f32.mrf.mxu0
          %v4211 = vadd.f32 0.0, %v4210
          %v4212 = vpop.f32.mrf.mxu0
          %v4213 = vpop.f32.mrf.mxu0
          %v4214 = vadd.f32 0.0, %v4213
          %v4215 = vpop.f32.mrf.mxu0
          %4216 = vdwg.mxu0
          %4225 = vrot.lane.b32.xlu0 %v3436, 16
          %v4226 = vpop.permute.xlu0 %4225
          %4227 = vrot.lane.b32.xlu0 %v3439, 16
          %v4228 = vpop.permute.xlu0 %4227
          %4229 = vrot.lane.b32.xlu0 %v3444, 16
          %v4230 = vpop.permute.xlu0 %4229
          %4231 = vrot.lane.b32.xlu0 %v3447, 16
          %v4232 = vpop.permute.xlu0 %4231
          %4233 = vrot.lane.b32.xlu0 %v3499, 16
          %v4234 = vpop.permute.xlu0 %4233
          %4235 = vrot.lane.b32.xlu0 %v3502, 16
          %v4236 = vpop.permute.xlu0 %4235
          %4237 = vrot.lane.b32.xlu0 %v3507, 16
          %v4238 = vpop.permute.xlu0 %4237
          %4239 = vrot.lane.b32.xlu0 %v3510, 16
          %v4240 = vpop.permute.xlu0 %4239
          %4257 = vrot.lane.b32.xlu0 %v3790, 32
          %v4258 = vpop.permute.xlu0 %4257
          %4259 = vrot.lane.b32.xlu0 %v3793, 32
          %v4260 = vpop.permute.xlu0 %4259
          %4261 = vrot.lane.b32.xlu0 %v3798, 32
          %v4262 = vpop.permute.xlu0 %4261
          %4263 = vrot.lane.b32.xlu0 %v3801, 32
          %v4264 = vpop.permute.xlu0 %4263
          %4265 = vrot.lane.b32.xlu0 %v3851, 32
          %v4266 = vpop.permute.xlu0 %4265
          %4267 = vrot.lane.b32.xlu0 %v3854, 32
          %v4268 = vpop.permute.xlu0 %4267
          %4269 = vrot.lane.b32.xlu0 %v3859, 32
          %v4270 = vpop.permute.xlu0 %4269
          %4271 = vrot.lane.b32.xlu0 %v3862, 32
          %v4272 = vpop.permute.xlu0 %4271
          %4289 = vrot.lane.b32.xlu0 %v4142, 48
          %v4290 = vpop.permute.xlu0 %4289
          %4291 = vrot.lane.b32.xlu0 %v4145, 48
          %v4292 = vpop.permute.xlu0 %4291
          %4293 = vrot.lane.b32.xlu0 %v4150, 48
          %v4294 = vpop.permute.xlu0 %4293
          %4295 = vrot.lane.b32.xlu0 %v4153, 48
          %v4296 = vpop.permute.xlu0 %4295
          %4297 = vrot.lane.b32.xlu0 %v4203, 48
          %v4298 = vpop.permute.xlu0 %4297
          %4299 = vrot.lane.b32.xlu0 %v4206, 48
          %v4300 = vpop.permute.xlu0 %4299
          %4301 = vrot.lane.b32.xlu0 %v4211, 48
          %v4302 = vpop.permute.xlu0 %4301
          %4303 = vrot.lane.b32.xlu0 %v4214, 48
          %v4304 = vpop.permute.xlu0 %4303
          %v4313 = vsel %vm2825, %v3088, %v4226
          %v4314 = vsel %vm2825, %v3091, %v4228
          %v4315 = vsel %vm2825, %v3096, %v4230
          %v4316 = vsel %vm2825, %v3099, %v4232
          %v4317 = vsel %vm2825, %v3143, %v4234
          %v4318 = vsel %vm2825, %v3146, %v4236
          %v4319 = vsel %vm2825, %v3151, %v4238
          %v4320 = vsel %vm2825, %v3154, %v4240
          %v4321 = vsel %vm2954, %v4313, %v4258
          %v4322 = vsel %vm2954, %v4314, %v4260
          %v4323 = vsel %vm2954, %v4315, %v4262
          %v4324 = vsel %vm2954, %v4316, %v4264
          %v4325 = vsel %vm2954, %v4317, %v4266
          %v4326 = vsel %vm2954, %v4318, %v4268
          %v4327 = vsel %vm2954, %v4319, %v4270
          %v4328 = vsel %vm2954, %v4320, %v4272
          %vm4329 = vcmask 392192
          %v4330 = vsel %vm4329, %v4321, %v4290
          %v4331 = vsel %vm4329, %v4322, %v4292
          %v4332 = vsel %vm4329, %v4323, %v4294
          %v4333 = vsel %vm4329, %v4324, %v4296
          %v4334 = vsel %vm4329, %v4325, %v4298
          %v4335 = vsel %vm4329, %v4326, %v4300
          %v4336 = vsel %vm4329, %v4327, %v4302
          %v4337 = vsel %vm4329, %v4328, %v4304
          %v4338 = vld [vmem:[%s897] sm:$0x1]
          %v4340 = vlaneseq
          %v4341 = vshrl.u32 %v4340, 7
          %v4342 = vsub.s32 0, %v4341
          %v4343 = vrot.slane %v4338, %v4342
          %v4345 = vadd.f32 %v2523, %v4343
          %v4346 = vadd.f32 %v2524, %v4343
          %v4347 = vadd.f32 %v2525, %v4343
          %v4348 = vadd.f32 %v2526, %v4343
          %v4349 = vadd.f32 %v2527, %v4343
          %v4350 = vadd.f32 %v2528, %v4343
          %v4351 = vadd.f32 %v2529, %v4343
          %v4352 = vadd.f32 %v2530, %v4343
          %v4353 = vpack.c.bf16 %v4331, %v4330
          %v4354 = vpack.c.bf16 %v4333, %v4332
          %v4355 = vpack.c.bf16 %v4335, %v4334
          %v4356 = vpack.c.bf16 %v4337, %v4336
          %v4357 = vld [vmem:[%s884] sm:$0xf]
          %v4358 = vld [vmem:[%s884 + $0x4] sm:$0xf]
          %v4359 = vld [vmem:[%s884 + $0x8] sm:$0xf]
          %v4360 = vld [vmem:[%s884 + $0xc] sm:$0xf]
          %v4361 = vld [vmem:[%s884 + $0x10] sm:$0xf]
          %v4362 = vld [vmem:[%s884 + $0x14] sm:$0xf]
          %v4363 = vld [vmem:[%s884 + $0x18] sm:$0xf]
          %v4364 = vld [vmem:[%s884 + $0x1c] sm:$0xf]
          %v4373 = vunpack.c.l.b16 %v4357
          %v4374 = vunpack.c.l.b16 %v4358
          %v4375 = vunpack.c.l.b16 %v4359
          %v4376 = vunpack.c.l.b16 %v4360
          %v4377 = vunpack.c.l.b16 %v4361
          %v4378 = vunpack.c.l.b16 %v4362
          %v4379 = vunpack.c.l.b16 %v4363
          %v4380 = vunpack.c.l.b16 %v4364
          %v4381 = vpack.c.b16 %v4374, %v4373
          %v4382 = vpack.c.b16 %v4376, %v4375
          %v4383 = vpack.c.b16 %v4378, %v4377
          %v4384 = vpack.c.b16 %v4380, %v4379
          %v4390 = vsel %vm2532, %v4353, 0
          %v4393 = vsel %vm2532, %v4354, 0
          %v4396 = vsel %vm2532, %v4355, 0
          %v4399 = vsel %vm2532, %v4356, 0
          %4401 = vmatprep.subr.bf16.mxu0 0
          %4402 = vmatpush1.bf16.msra.mxu0 0
          %4403 = vmatprep.subr.bf16.mxu0 0
          %4404 = vmatpush1.bf16.msra.mxu0 0
          %4405 = vmatprep.subr.bf16.mxu0 0
          %4406 = vmatpush1.bf16.msra.mxu0 0
          %4407 = vmatprep.subr.bf16.mxu0 0
          %4408 = vmatpush1.bf16.msra.mxu0 0
          %4409 = vmatprep.subr.bf16.mxu0 0
          %4410 = vmatpush1.bf16.msra.mxu0 %v4384
          %4411 = vmatprep.subr.bf16.mxu0 0
          %4412 = vmatpush1.bf16.msra.mxu0 %v4383
          %4413 = vmatprep.subr.bf16.mxu0 0
          %4414 = vmatpush1.bf16.msra.mxu0 %v4382
          %4415 = vmatprep.subr.bf16.mxu0 0
          %4416 = vmatpush1.bf16.msra.mxu0 %v4381
          %4417 = vmatprep.subr.bf16.mxu0 0
          %4418 = vmatpush2.bf16.msra.mxu0 0
          %4419 = vmatprep.subr.bf16.mxu0 0
          %4420 = vmatpush2.bf16.msra.mxu0 0
          %4421 = vmatprep.subr.bf16.mxu0 0
          %4422 = vmatpush2.bf16.msra.mxu0 0
          %4423 = vmatprep.subr.bf16.mxu0 0
          %4424 = vmatpush2.bf16.msra.mxu0 0
          %4425 = vmatprep.subr.bf16.mxu0 0
          %4426 = vmatpush2.bf16.msra.mxu0 0
          %4427 = vmatprep.subr.bf16.mxu0 0
          %4428 = vmatpush2.bf16.msra.mxu0 0
          %4429 = vmatprep.subr.bf16.mxu0 0
          %4430 = vmatpush2.bf16.msra.mxu0 0
          %4431 = vmatprep.subr.bf16.mxu0 0
          %4432 = vmatpush2.bf16.msra.mxu0 0
          %4433 = vmatprep.mubr.bf16.mxu0 0
          %4434 = vmatmul.mubr.bf16.gmra.mxu0 %v4390
          %v4435 = vpop.f32.mrf.mxu0
          %v4436 = vadd.f32 0.0, %v4435
          %v4437 = vpop.f32.mrf.mxu0
          %v4438 = vpop.f32.mrf.mxu0
          %v4439 = vadd.f32 0.0, %v4438
          %v4440 = vpop.f32.mrf.mxu0
          %4441 = vmatprep.mubr.bf16.mxu0 0
          %4442 = vmatmul.mubr.bf16.gmra.mxu0 %v4393
          %v4443 = vpop.f32.mrf.mxu0
          %v4444 = vadd.f32 0.0, %v4443
          %v4445 = vpop.f32.mrf.mxu0
          %v4446 = vpop.f32.mrf.mxu0
          %v4447 = vadd.f32 0.0, %v4446
          %v4448 = vpop.f32.mrf.mxu0
          %4449 = vmatprep.mubr.bf16.mxu0 0
          %4450 = vmatmul.mubr.bf16.gmra.mxu0 %v4396
          %v4451 = vpop.f32.mrf.mxu0
          %v4452 = vadd.f32 0.0, %v4451
          %v4453 = vpop.f32.mrf.mxu0
          %v4454 = vpop.f32.mrf.mxu0
          %v4455 = vadd.f32 0.0, %v4454
          %v4456 = vpop.f32.mrf.mxu0
          %4457 = vmatprep.mubr.bf16.mxu0 0
          %4458 = vmatmul.mubr.bf16.gmra.mxu0 %v4399
          %v4459 = vpop.f32.mrf.mxu0
          %v4460 = vadd.f32 0.0, %v4459
          %v4461 = vpop.f32.mrf.mxu0
          %v4462 = vpop.f32.mrf.mxu0
          %v4463 = vadd.f32 0.0, %v4462
          %v4464 = vpop.f32.mrf.mxu0
          %4465 = vdwg.mxu0
          %v4466 = vadd.f32 %v4345, %v4436
          %v4467 = vadd.f32 %v4346, %v4439
          %v4468 = vadd.f32 %v4347, %v4444
          %v4469 = vadd.f32 %v4348, %v4447
          %v4470 = vadd.f32 %v4349, %v4452
          %v4471 = vadd.f32 %v4350, %v4455
          %v4472 = vadd.f32 %v4351, %v4460
          %v4473 = vadd.f32 %v4352, %v4463
          %v4474 = vsel %vm2532, %v4466, 0.0
          %4475 = vadd.xlane.f32.xlu0 %v4474
          %v4476 = vpop.xlane.xlu0 %4475
          %v4477 = vsel %vm2532, %v4467, 0.0
          %4478 = vadd.xlane.f32.xlu0 %v4477
          %v4479 = vpop.xlane.xlu0 %4478
          %v4480 = vsel %vm2532, %v4468, 0.0
          %4481 = vadd.xlane.f32.xlu0 %v4480
          %v4482 = vpop.xlane.xlu0 %4481
          %v4483 = vsel %vm2532, %v4469, 0.0
          %4484 = vadd.xlane.f32.xlu0 %v4483
          %v4485 = vpop.xlane.xlu0 %4484
          %v4486 = vsel %vm2532, %v4470, 0.0
          %4487 = vadd.xlane.f32.xlu0 %v4486
          %v4488 = vpop.xlane.xlu0 %4487
          %v4489 = vsel %vm2532, %v4471, 0.0
          %4490 = vadd.xlane.f32.xlu0 %v4489
          %v4491 = vpop.xlane.xlu0 %4490
          %v4492 = vsel %vm2532, %v4472, 0.0
          %4493 = vadd.xlane.f32.xlu0 %v4492
          %v4494 = vpop.xlane.xlu0 %4493
          %v4495 = vsel %vm2532, %v4473, 0.0
          %4496 = vadd.xlane.f32.xlu0 %v4495
          %v4497 = vpop.xlane.xlu0 %4496
          %v4498 = vmul.f32 %v4476, %v2557
          %v4499 = vmul.f32 %v4479, %v2557
          %v4500 = vmul.f32 %v4482, %v2557
          %v4501 = vmul.f32 %v4485, %v2557
          %v4502 = vmul.f32 %v4488, %v2557
          %v4503 = vmul.f32 %v4491, %v2557
          %v4504 = vmul.f32 %v4494, %v2557
          %v4505 = vmul.f32 %v4497, %v2557
          %v4506 = vsub.f32 %v4466, %v4498
          %v4507 = vsub.f32 %v4467, %v4499
          %v4508 = vsub.f32 %v4468, %v4500
          %v4509 = vsub.f32 %v4469, %v4501
          %v4510 = vsub.f32 %v4470, %v4502
          %v4511 = vsub.f32 %v4471, %v4503
          %v4512 = vsub.f32 %v4472, %v4504
          %v4513 = vsub.f32 %v4473, %v4505
          %v4514 = vmul.f32 %v4506, %v4506
          %v4515 = vmul.f32 %v4507, %v4507
          %v4516 = vmul.f32 %v4508, %v4508
          %v4517 = vmul.f32 %v4509, %v4509
          %v4518 = vmul.f32 %v4510, %v4510
          %v4519 = vmul.f32 %v4511, %v4511
          %v4520 = vmul.f32 %v4512, %v4512
          %v4521 = vmul.f32 %v4513, %v4513
          %v4522 = vsel %vm2532, %v4514, 0.0
          %4523 = vadd.xlane.f32.xlu0 %v4522
          %v4524 = vpop.xlane.xlu0 %4523
          %v4525 = vsel %vm2532, %v4515, 0.0
          %4526 = vadd.xlane.f32.xlu0 %v4525
          %v4527 = vpop.xlane.xlu0 %4526
          %v4528 = vsel %vm2532, %v4516, 0.0
          %4529 = vadd.xlane.f32.xlu0 %v4528
          %v4530 = vpop.xlane.xlu0 %4529
          %v4531 = vsel %vm2532, %v4517, 0.0
          %4532 = vadd.xlane.f32.xlu0 %v4531
          %v4533 = vpop.xlane.xlu0 %4532
          %v4534 = vsel %vm2532, %v4518, 0.0
          %4535 = vadd.xlane.f32.xlu0 %v4534
          %v4536 = vpop.xlane.xlu0 %4535
          %v4537 = vsel %vm2532, %v4519, 0.0
          %4538 = vadd.xlane.f32.xlu0 %v4537
          %v4539 = vpop.xlane.xlu0 %4538
          %v4540 = vsel %vm2532, %v4520, 0.0
          %4541 = vadd.xlane.f32.xlu0 %v4540
          %v4542 = vpop.xlane.xlu0 %4541
          %v4543 = vsel %vm2532, %v4521, 0.0
          %4544 = vadd.xlane.f32.xlu0 %v4543
          %v4545 = vpop.xlane.xlu0 %4544
          %v4546 = vmul.f32 %v4524, %v2557
          %v4547 = vmul.f32 %v4527, %v2557
          %v4548 = vmul.f32 %v4530, %v2557
          %v4549 = vmul.f32 %v4533, %v2557
          %v4550 = vmul.f32 %v4536, %v2557
          %v4551 = vmul.f32 %v4539, %v2557
          %v4552 = vmul.f32 %v4542, %v2557
          %v4553 = vmul.f32 %v4545, %v2557
          %v4554 = vadd.f32 %v4546, 1e-05
          %v4555 = vadd.f32 %v4547, 1e-05
          %v4556 = vadd.f32 %v4548, 1e-05
          %v4557 = vadd.f32 %v4549, 1e-05
          %v4558 = vadd.f32 %v4550, 1e-05
          %v4559 = vadd.f32 %v4551, 1e-05
          %v4560 = vadd.f32 %v4552, 1e-05
          %v4561 = vadd.f32 %v4553, 1e-05
          %v4562 = vrsqrt.pop %v4554
          %v4563 = vrsqrt.pop %v4555
          %v4564 = vrsqrt.pop %v4556
          %v4565 = vrsqrt.pop %v4557
          %v4566 = vrsqrt.pop %v4558
          %v4567 = vrsqrt.pop %v4559
          %v4568 = vrsqrt.pop %v4560
          %v4569 = vrsqrt.pop %v4561
          %v4570 = vmul.f32 %v4506, %v4562
          %v4571 = vmul.f32 %v4507, %v4563
          %v4572 = vmul.f32 %v4508, %v4564
          %v4573 = vmul.f32 %v4509, %v4565
          %v4574 = vmul.f32 %v4510, %v4566
          %v4575 = vmul.f32 %v4511, %v4567
          %v4576 = vmul.f32 %v4512, %v4568
          %v4577 = vmul.f32 %v4513, %v4569
          %v4578 = vlaneseq
          %v4579 = vshrl.u32 %v4578, 7
          %v4580 = vsub.s32 2, %v4579
          %v4581 = vrot.slane %v2531, %v4580
          %v4582 = vmul.f32 %v4570, %v4581
          %v4583 = vmul.f32 %v4571, %v4581
          %v4584 = vmul.f32 %v4572, %v4581
          %v4585 = vmul.f32 %v4573, %v4581
          %v4586 = vmul.f32 %v4574, %v4581
          %v4587 = vmul.f32 %v4575, %v4581
          %v4588 = vmul.f32 %v4576, %v4581
          %v4589 = vmul.f32 %v4577, %v4581
          %v4590 = vlaneseq
          %v4591 = vshrl.u32 %v4590, 7
          %v4592 = vsub.s32 3, %v4591
          %v4593 = vrot.slane %v2531, %v4592
          %v4594 = vadd.f32 %v4582, %v4593
          %v4595 = vadd.f32 %v4583, %v4593
          %v4596 = vadd.f32 %v4584, %v4593
          %v4597 = vadd.f32 %v4585, %v4593
          %v4598 = vadd.f32 %v4586, %v4593
          %v4599 = vadd.f32 %v4587, %v4593
          %v4600 = vadd.f32 %v4588, %v4593
          %v4601 = vadd.f32 %v4589, %v4593
          %v4602 = vpack.c.bf16 %v4595, %v4594
          %v4603 = vpack.c.bf16 %v4597, %v4596
          %v4604 = vpack.c.bf16 %v4599, %v4598
          %v4605 = vpack.c.bf16 %v4601, %v4600
          %v4606 = vld [vmem:[%s912] sm:$0xf]
          %v4607 = vld [vmem:[%s912 + $0x4] sm:$0xf]
          %v4608 = vld [vmem:[%s912 + $0x8] sm:$0xf]
          %v4609 = vld [vmem:[%s912 + $0xc] sm:$0xf]
          %v4610 = vld [vmem:[%s912 + $0x10] sm:$0xf]
          %v4611 = vld [vmem:[%s912 + $0x14] sm:$0xf]
          %v4612 = vld [vmem:[%s912 + $0x18] sm:$0xf]
          %v4613 = vld [vmem:[%s912 + $0x1c] sm:$0xf]
          %v4614 = vld [vmem:[%s925] sm:$0x1]
          %v4616 = vlaneseq
          %v4617 = vshrl.u32 %v4616, 7
          %v4618 = vsub.s32 0, %v4617
          %v4619 = vrot.slane %v4614, %v4618
          %v4629 = vunpack.c.l.b16 %v4606
          %v4630 = vunpack.c.l.b16 %v4607
          %v4631 = vunpack.c.l.b16 %v4608
          %v4632 = vunpack.c.l.b16 %v4609
          %v4633 = vunpack.c.l.b16 %v4610
          %v4634 = vunpack.c.l.b16 %v4611
          %v4635 = vunpack.c.l.b16 %v4612
          %v4636 = vunpack.c.l.b16 %v4613
          %v4637 = vpack.c.b16 %v4630, %v4629
          %v4638 = vpack.c.b16 %v4632, %v4631
          %v4639 = vpack.c.b16 %v4634, %v4633
          %v4640 = vpack.c.b16 %v4636, %v4635
          %v4646 = vsel %vm2532, %v4602, 0
          %v4649 = vsel %vm2532, %v4603, 0
          %v4652 = vsel %vm2532, %v4604, 0
          %v4655 = vsel %vm2532, %v4605, 0
          %4657 = vmatprep.subr.bf16.mxu0 0
          %4658 = vmatpush1.bf16.msra.mxu0 0
          %4659 = vmatprep.subr.bf16.mxu0 0
          %4660 = vmatpush1.bf16.msra.mxu0 0
          %4661 = vmatprep.subr.bf16.mxu0 0
          %4662 = vmatpush1.bf16.msra.mxu0 0
          %4663 = vmatprep.subr.bf16.mxu0 0
          %4664 = vmatpush1.bf16.msra.mxu0 0
          %4665 = vmatprep.subr.bf16.mxu0 0
          %4666 = vmatpush1.bf16.msra.mxu0 %v4640
          %4667 = vmatprep.subr.bf16.mxu0 0
          %4668 = vmatpush1.bf16.msra.mxu0 %v4639
          %4669 = vmatprep.subr.bf16.mxu0 0
          %4670 = vmatpush1.bf16.msra.mxu0 %v4638
          %4671 = vmatprep.subr.bf16.mxu0 0
          %4672 = vmatpush1.bf16.msra.mxu0 %v4637
          %4673 = vmatprep.subr.bf16.mxu0 0
          %4674 = vmatpush2.bf16.msra.mxu0 0
          %4675 = vmatprep.subr.bf16.mxu0 0
          %4676 = vmatpush2.bf16.msra.mxu0 0
          %4677 = vmatprep.subr.bf16.mxu0 0
          %4678 = vmatpush2.bf16.msra.mxu0 0
          %4679 = vmatprep.subr.bf16.mxu0 0
          %4680 = vmatpush2.bf16.msra.mxu0 0
          %4681 = vmatprep.subr.bf16.mxu0 0
          %4682 = vmatpush2.bf16.msra.mxu0 0
          %4683 = vmatprep.subr.bf16.mxu0 0
          %4684 = vmatpush2.bf16.msra.mxu0 0
          %4685 = vmatprep.subr.bf16.mxu0 0
          %4686 = vmatpush2.bf16.msra.mxu0 0
          %4687 = vmatprep.subr.bf16.mxu0 0
          %4688 = vmatpush2.bf16.msra.mxu0 0
          %4689 = vmatprep.mubr.bf16.mxu0 0
          %4690 = vmatmul.mubr.bf16.gmra.mxu0 %v4646
          %v4691 = vpop.f32.mrf.mxu0
          %v4692 = vadd.f32 %v4619, %v4691
          %v4693 = vpop.f32.mrf.mxu0
          %v4694 = vpop.f32.mrf.mxu0
          %v4695 = vadd.f32 %v4619, %v4694
          %v4696 = vpop.f32.mrf.mxu0
          %4697 = vmatprep.mubr.bf16.mxu0 0
          %4698 = vmatmul.mubr.bf16.gmra.mxu0 %v4649
          %v4699 = vpop.f32.mrf.mxu0
          %v4700 = vadd.f32 %v4619, %v4699
          %v4701 = vpop.f32.mrf.mxu0
          %v4702 = vpop.f32.mrf.mxu0
          %v4703 = vadd.f32 %v4619, %v4702
          %v4704 = vpop.f32.mrf.mxu0
          %4705 = vmatprep.mubr.bf16.mxu0 0
          %4706 = vmatmul.mubr.bf16.gmra.mxu0 %v4652
          %v4707 = vpop.f32.mrf.mxu0
          %v4708 = vadd.f32 %v4619, %v4707
          %v4709 = vpop.f32.mrf.mxu0
          %v4710 = vpop.f32.mrf.mxu0
          %v4711 = vadd.f32 %v4619, %v4710
          %v4712 = vpop.f32.mrf.mxu0
          %4713 = vmatprep.mubr.bf16.mxu0 0
          %4714 = vmatmul.mubr.bf16.gmra.mxu0 %v4655
          %v4715 = vpop.f32.mrf.mxu0
          %v4716 = vadd.f32 %v4619, %v4715
          %v4717 = vpop.f32.mrf.mxu0
          %v4718 = vpop.f32.mrf.mxu0
          %v4719 = vadd.f32 %v4619, %v4718
          %v4720 = vpop.f32.mrf.mxu0
          %4721 = vdwg.mxu0
          %v4722 = vmul.f32 %v4692, 0.5
          %v4723 = vmul.f32 %v4695, 0.5
          %v4724 = vmul.f32 %v4700, 0.5
          %v4725 = vmul.f32 %v4703, 0.5
          %v4726 = vmul.f32 %v4708, 0.5
          %v4727 = vmul.f32 %v4711, 0.5
          %v4728 = vmul.f32 %v4716, 0.5
          %v4729 = vmul.f32 %v4719, 0.5
          %v4730 = vmul.f32 %v4692, 0.044715
          %v4731 = vmul.f32 %v4695, 0.044715
          %v4732 = vmul.f32 %v4700, 0.044715
          %v4733 = vmul.f32 %v4703, 0.044715
          %v4734 = vmul.f32 %v4708, 0.044715
          %v4735 = vmul.f32 %v4711, 0.044715
          %v4736 = vmul.f32 %v4716, 0.044715
          %v4737 = vmul.f32 %v4719, 0.044715
          %v4738 = vmul.f32 %v4730, %v4692
          %v4739 = vmul.f32 %v4731, %v4695
          %v4740 = vmul.f32 %v4732, %v4700
          %v4741 = vmul.f32 %v4733, %v4703
          %v4742 = vmul.f32 %v4734, %v4708
          %v4743 = vmul.f32 %v4735, %v4711
          %v4744 = vmul.f32 %v4736, %v4716
          %v4745 = vmul.f32 %v4737, %v4719
          %v4746 = vmul.f32 %v4738, %v4692
          %v4747 = vmul.f32 %v4739, %v4695
          %v4748 = vmul.f32 %v4740, %v4700
          %v4749 = vmul.f32 %v4741, %v4703
          %v4750 = vmul.f32 %v4742, %v4708
          %v4751 = vmul.f32 %v4743, %v4711
          %v4752 = vmul.f32 %v4744, %v4716
          %v4753 = vmul.f32 %v4745, %v4719
          %v4754 = vadd.f32 %v4692, %v4746
          %v4755 = vadd.f32 %v4695, %v4747
          %v4756 = vadd.f32 %v4700, %v4748
          %v4757 = vadd.f32 %v4703, %v4749
          %v4758 = vadd.f32 %v4708, %v4750
          %v4759 = vadd.f32 %v4711, %v4751
          %v4760 = vadd.f32 %v4716, %v4752
          %v4761 = vadd.f32 %v4719, %v4753
          %v4762 = vmul.f32 %v4754, 0.7978846
          %v4763 = vmul.f32 %v4755, 0.7978846
          %v4764 = vmul.f32 %v4756, 0.7978846
          %v4765 = vmul.f32 %v4757, 0.7978846
          %v4766 = vmul.f32 %v4758, 0.7978846
          %v4767 = vmul.f32 %v4759, 0.7978846
          %v4768 = vmul.f32 %v4760, 0.7978846
          %v4769 = vmul.f32 %v4761, 0.7978846
          %v4770 = vtanh.pop %v4762
          %v4771 = vtanh.pop %v4763
          %v4772 = vtanh.pop %v4764
          %v4773 = vtanh.pop %v4765
          %v4774 = vtanh.pop %v4766
          %v4775 = vtanh.pop %v4767
          %v4776 = vtanh.pop %v4768
          %v4777 = vtanh.pop %v4769
          %v4778 = vadd.f32 %v4770, 1.0
          %v4779 = vadd.f32 %v4771, 1.0
          %v4780 = vadd.f32 %v4772, 1.0
          %v4781 = vadd.f32 %v4773, 1.0
          %v4782 = vadd.f32 %v4774, 1.0
          %v4783 = vadd.f32 %v4775, 1.0
          %v4784 = vadd.f32 %v4776, 1.0
          %v4785 = vadd.f32 %v4777, 1.0
          %v4786 = vmul.f32 %v4722, %v4778
          %v4787 = vmul.f32 %v4723, %v4779
          %v4788 = vmul.f32 %v4724, %v4780
          %v4789 = vmul.f32 %v4725, %v4781
          %v4790 = vmul.f32 %v4726, %v4782
          %v4791 = vmul.f32 %v4727, %v4783
          %v4792 = vmul.f32 %v4728, %v4784
          %v4793 = vmul.f32 %v4729, %v4785
          %v4794 = vpack.c.bf16 %v4787, %v4786
          %v4795 = vpack.c.bf16 %v4789, %v4788
          %v4796 = vpack.c.bf16 %v4791, %v4790
          %v4797 = vpack.c.bf16 %v4793, %v4792
          %v4798 = vld [vmem:[%s940] sm:$0xf]
          %v4799 = vld [vmem:[%s940 + $0x4] sm:$0xf]
          %v4800 = vld [vmem:[%s940 + $0x8] sm:$0xf]
          %v4801 = vld [vmem:[%s940 + $0xc] sm:$0xf]
          %v4802 = vld [vmem:[%s940 + $0x10] sm:$0xf]
          %v4803 = vld [vmem:[%s940 + $0x14] sm:$0xf]
          %v4804 = vld [vmem:[%s940 + $0x18] sm:$0xf]
          %v4805 = vld [vmem:[%s940 + $0x1c] sm:$0xf]
          %v4806 = vld [vmem:[%s940 + $0x20] sm:$0xf]
          %v4807 = vld [vmem:[%s940 + $0x24] sm:$0xf]
          %v4808 = vld [vmem:[%s940 + $0x28] sm:$0xf]
          %v4809 = vld [vmem:[%s940 + $0x2c] sm:$0xf]
          %v4810 = vld [vmem:[%s940 + $0x30] sm:$0xf]
          %v4811 = vld [vmem:[%s940 + $0x34] sm:$0xf]
          %v4812 = vld [vmem:[%s940 + $0x38] sm:$0xf]
          %v4813 = vld [vmem:[%s940 + $0x3c] sm:$0xf]
          %v4814 = vld [vmem:[%s953] sm:$0x1]
          %v4816 = vlaneseq
          %v4817 = vshrl.u32 %v4816, 7
          %v4818 = vsub.s32 0, %v4817
          %v4819 = vrot.slane %v4814, %v4818
          %v4837 = vunpack.c.l.b16 %v4798
          %v4838 = vunpack.c.l.b16 %v4799
          %v4839 = vunpack.c.l.b16 %v4800
          %v4840 = vunpack.c.l.b16 %v4801
          %v4841 = vunpack.c.l.b16 %v4802
          %v4842 = vunpack.c.l.b16 %v4803
          %v4843 = vunpack.c.l.b16 %v4804
          %v4844 = vunpack.c.l.b16 %v4805
          %v4845 = vunpack.c.l.b16 %v4806
          %v4846 = vunpack.c.l.b16 %v4807
          %v4847 = vunpack.c.l.b16 %v4808
          %v4848 = vunpack.c.l.b16 %v4809
          %v4849 = vunpack.c.l.b16 %v4810
          %v4850 = vunpack.c.l.b16 %v4811
          %v4851 = vunpack.c.l.b16 %v4812
          %v4852 = vunpack.c.l.b16 %v4813
          %v4853 = vpack.c.b16 %v4838, %v4837
          %v4854 = vpack.c.b16 %v4840, %v4839
          %v4855 = vpack.c.b16 %v4842, %v4841
          %v4856 = vpack.c.b16 %v4844, %v4843
          %v4857 = vpack.c.b16 %v4846, %v4845
          %v4858 = vpack.c.b16 %v4848, %v4847
          %v4859 = vpack.c.b16 %v4850, %v4849
          %v4860 = vpack.c.b16 %v4852, %v4851
          %4869 = vmatprep.subr.bf16.mxu0 0
          %4870 = vmatpush1.bf16.msra.mxu0 %v4860
          %4871 = vmatprep.subr.bf16.mxu0 0
          %4872 = vmatpush1.bf16.msra.mxu0 %v4859
          %4873 = vmatprep.subr.bf16.mxu0 0
          %4874 = vmatpush1.bf16.msra.mxu0 %v4858
          %4875 = vmatprep.subr.bf16.mxu0 0
          %4876 = vmatpush1.bf16.msra.mxu0 %v4857
          %4877 = vmatprep.subr.bf16.mxu0 0
          %4878 = vmatpush1.bf16.msra.mxu0 %v4856
          %4879 = vmatprep.subr.bf16.mxu0 0
          %4880 = vmatpush1.bf16.msra.mxu0 %v4855
          %4881 = vmatprep.subr.bf16.mxu0 0
          %4882 = vmatpush1.bf16.msra.mxu0 %v4854
          %4883 = vmatprep.subr.bf16.mxu0 0
          %4884 = vmatpush1.bf16.msra.mxu0 %v4853
          %4885 = vmatprep.subr.bf16.mxu0 0
          %4886 = vmatpush2.bf16.msra.mxu0 0
          %4887 = vmatprep.subr.bf16.mxu0 0
          %4888 = vmatpush2.bf16.msra.mxu0 0
          %4889 = vmatprep.subr.bf16.mxu0 0
          %4890 = vmatpush2.bf16.msra.mxu0 0
          %4891 = vmatprep.subr.bf16.mxu0 0
          %4892 = vmatpush2.bf16.msra.mxu0 0
          %4893 = vmatprep.subr.bf16.mxu0 0
          %4894 = vmatpush2.bf16.msra.mxu0 0
          %4895 = vmatprep.subr.bf16.mxu0 0
          %4896 = vmatpush2.bf16.msra.mxu0 0
          %4897 = vmatprep.subr.bf16.mxu0 0
          %4898 = vmatpush2.bf16.msra.mxu0 0
          %4899 = vmatprep.subr.bf16.mxu0 0
          %4900 = vmatpush2.bf16.msra.mxu0 0
          %4901 = vmatprep.mubr.bf16.mxu0 0
          %4902 = vmatmul.mubr.bf16.gmra.mxu0 %v4794
          %v4903 = vpop.f32.mrf.mxu0
          %v4904 = vadd.f32 %v4819, %v4903
          %v4905 = vpop.f32.mrf.mxu0
          %v4906 = vpop.f32.mrf.mxu0
          %v4907 = vadd.f32 %v4819, %v4906
          %v4908 = vpop.f32.mrf.mxu0
          %4909 = vmatprep.mubr.bf16.mxu0 0
          %4910 = vmatmul.mubr.bf16.gmra.mxu0 %v4795
          %v4911 = vpop.f32.mrf.mxu0
          %v4912 = vadd.f32 %v4819, %v4911
          %v4913 = vpop.f32.mrf.mxu0
          %v4914 = vpop.f32.mrf.mxu0
          %v4915 = vadd.f32 %v4819, %v4914
          %v4916 = vpop.f32.mrf.mxu0
          %4917 = vmatprep.mubr.bf16.mxu0 0
          %4918 = vmatmul.mubr.bf16.gmra.mxu0 %v4796
          %v4919 = vpop.f32.mrf.mxu0
          %v4920 = vadd.f32 %v4819, %v4919
          %v4921 = vpop.f32.mrf.mxu0
          %v4922 = vpop.f32.mrf.mxu0
          %v4923 = vadd.f32 %v4819, %v4922
          %v4924 = vpop.f32.mrf.mxu0
          %4925 = vmatprep.mubr.bf16.mxu0 0
          %4926 = vmatmul.mubr.bf16.gmra.mxu0 %v4797
          %v4927 = vpop.f32.mrf.mxu0
          %v4928 = vadd.f32 %v4819, %v4927
          %v4929 = vpop.f32.mrf.mxu0
          %v4930 = vpop.f32.mrf.mxu0
          %v4931 = vadd.f32 %v4819, %v4930
          %v4932 = vpop.f32.mrf.mxu0
          %4933 = vdwg.mxu0
          %v4934 = vadd.f32 %v4466, %v4904
          %v4935 = vadd.f32 %v4467, %v4907
          %v4936 = vadd.f32 %v4468, %v4912
          %v4937 = vadd.f32 %v4469, %v4915
          %v4938 = vadd.f32 %v4470, %v4920
          %v4939 = vadd.f32 %v4471, %v4923
          %v4940 = vadd.f32 %v4472, %v4928
          %v4941 = vadd.f32 %v4473, %v4931
          %4942 = vst.msk [vmem:[#allocation2] sm:$0xff] %vm2532, %v4934
          %4943 = vst.msk [vmem:[#allocation2 + $0x8] sm:$0xff] %vm2532, %v4935
          %4944 = vst.msk [vmem:[#allocation2 + $0x10] sm:$0xff] %vm2532, %v4936
          %4945 = vst.msk [vmem:[#allocation2 + $0x18] sm:$0xff] %vm2532, %v4937
          %4946 = vst.msk [vmem:[#allocation2 + $0x20] sm:$0xff] %vm2532, %v4938
          %4947 = vst.msk [vmem:[#allocation2 + $0x28] sm:$0xff] %vm2532, %v4939
          %4948 = vst.msk [vmem:[#allocation2 + $0x30] sm:$0xff] %vm2532, %v4940
          %4949 = vst.msk [vmem:[#allocation2 + $0x38] sm:$0xff] %vm2532, %v4941
        $region92: #{whisper_encoder_forward.3} parent=83 // pred_fallthru
          _
        %p4950 = scmp.eq.s32.totalorder %s28, 3
        // Predicated region
        $region93: #{whisper_encoder_forward.3} parent=83 // pred_check
          %p4951 = pneg %p4950
        $region94: #{whisper_encoder_forward.3} parent=83 // pred_check_branch
          %4953 = sbr.rel (%p4951) target = $region96
        $region95: #{whisper_encoder_forward.3} parent=83 // pred_region
          %v4954 = vld [vmem:[#allocation2] sm:$0xff]
          %v4955 = vld [vmem:[#allocation2 + $0x8] sm:$0xff]
          %v4956 = vld [vmem:[#allocation2 + $0x10] sm:$0xff]
          %v4957 = vld [vmem:[#allocation2 + $0x18] sm:$0xff]
          %v4958 = vld [vmem:[#allocation2 + $0x20] sm:$0xff]
          %v4959 = vld [vmem:[#allocation2 + $0x28] sm:$0xff]
          %v4960 = vld [vmem:[#allocation2 + $0x30] sm:$0xff]
          %v4961 = vld [vmem:[#allocation2 + $0x38] sm:$0xff]
          %v4962 = vld [vmem:[%s15] sm:$0x1]
          %v4963 = vld [vmem:[%s15 + $0x1] sm:$0x1]
          %vm4964 = vcmask 523264
          %v4965 = vsel %vm4964, %v4954, 0.0
          %4966 = vadd.xlane.f32.xlu0 %v4965
          %v4967 = vpop.xlane.xlu0 %4966
          %v4968 = vsel %vm4964, %v4955, 0.0
          %4969 = vadd.xlane.f32.xlu0 %v4968
          %v4970 = vpop.xlane.xlu0 %4969
          %v4971 = vsel %vm4964, %v4956, 0.0
          %4972 = vadd.xlane.f32.xlu0 %v4971
          %v4973 = vpop.xlane.xlu0 %4972
          %v4974 = vsel %vm4964, %v4957, 0.0
          %4975 = vadd.xlane.f32.xlu0 %v4974
          %v4976 = vpop.xlane.xlu0 %4975
          %v4977 = vsel %vm4964, %v4958, 0.0
          %4978 = vadd.xlane.f32.xlu0 %v4977
          %v4979 = vpop.xlane.xlu0 %4978
          %v4980 = vsel %vm4964, %v4959, 0.0
          %4981 = vadd.xlane.f32.xlu0 %v4980
          %v4982 = vpop.xlane.xlu0 %4981
          %v4983 = vsel %vm4964, %v4960, 0.0
          %4984 = vadd.xlane.f32.xlu0 %v4983
          %v4985 = vpop.xlane.xlu0 %4984
          %v4986 = vsel %vm4964, %v4961, 0.0
          %4987 = vadd.xlane.f32.xlu0 %v4986
          %v4988 = vpop.xlane.xlu0 %4987
          %v4989 = vrcp.pop 64.0
          %v4990 = vmul.f32 %v4967, %v4989
          %v4991 = vmul.f32 %v4970, %v4989
          %v4992 = vmul.f32 %v4973, %v4989
          %v4993 = vmul.f32 %v4976, %v4989
          %v4994 = vmul.f32 %v4979, %v4989
          %v4995 = vmul.f32 %v4982, %v4989
          %v4996 = vmul.f32 %v4985, %v4989
          %v4997 = vmul.f32 %v4988, %v4989
          %v4998 = vsub.f32 %v4954, %v4990
          %v4999 = vsub.f32 %v4955, %v4991
          %v5000 = vsub.f32 %v4956, %v4992
          %v5001 = vsub.f32 %v4957, %v4993
          %v5002 = vsub.f32 %v4958, %v4994
          %v5003 = vsub.f32 %v4959, %v4995
          %v5004 = vsub.f32 %v4960, %v4996
          %v5005 = vsub.f32 %v4961, %v4997
          %v5006 = vmul.f32 %v4998, %v4998
          %v5007 = vmul.f32 %v4999, %v4999
          %v5008 = vmul.f32 %v5000, %v5000
          %v5009 = vmul.f32 %v5001, %v5001
          %v5010 = vmul.f32 %v5002, %v5002
          %v5011 = vmul.f32 %v5003, %v5003
          %v5012 = vmul.f32 %v5004, %v5004
          %v5013 = vmul.f32 %v5005, %v5005
          %v5014 = vsel %vm4964, %v5006, 0.0
          %5015 = vadd.xlane.f32.xlu0 %v5014
          %v5016 = vpop.xlane.xlu0 %5015
          %v5017 = vsel %vm4964, %v5007, 0.0
          %5018 = vadd.xlane.f32.xlu0 %v5017
          %v5019 = vpop.xlane.xlu0 %5018
          %v5020 = vsel %vm4964, %v5008, 0.0
          %5021 = vadd.xlane.f32.xlu0 %v5020
          %v5022 = vpop.xlane.xlu0 %5021
          %v5023 = vsel %vm4964, %v5009, 0.0
          %5024 = vadd.xlane.f32.xlu0 %v5023
          %v5025 = vpop.xlane.xlu0 %5024
          %v5026 = vsel %vm4964, %v5010, 0.0
          %5027 = vadd.xlane.f32.xlu0 %v5026
          %v5028 = vpop.xlane.xlu0 %5027
          %v5029 = vsel %vm4964, %v5011, 0.0
          %5030 = vadd.xlane.f32.xlu0 %v5029
          %v5031 = vpop.xlane.xlu0 %5030
          %v5032 = vsel %vm4964, %v5012, 0.0
          %5033 = vadd.xlane.f32.xlu0 %v5032
          %v5034 = vpop.xlane.xlu0 %5033
          %v5035 = vsel %vm4964, %v5013, 0.0
          %5036 = vadd.xlane.f32.xlu0 %v5035
          %v5037 = vpop.xlane.xlu0 %5036
          %v5038 = vmul.f32 %v5016, %v4989
          %v5039 = vmul.f32 %v5019, %v4989
          %v5040 = vmul.f32 %v5022, %v4989
          %v5041 = vmul.f32 %v5025, %v4989
          %v5042 = vmul.f32 %v5028, %v4989
          %v5043 = vmul.f32 %v5031, %v4989
          %v5044 = vmul.f32 %v5034, %v4989
          %v5045 = vmul.f32 %v5037, %v4989
          %v5046 = vadd.f32 %v5038, 1e-05
          %v5047 = vadd.f32 %v5039, 1e-05
          %v5048 = vadd.f32 %v5040, 1e-05
          %v5049 = vadd.f32 %v5041, 1e-05
          %v5050 = vadd.f32 %v5042, 1e-05
          %v5051 = vadd.f32 %v5043, 1e-05
          %v5052 = vadd.f32 %v5044, 1e-05
          %v5053 = vadd.f32 %v5045, 1e-05
          %v5054 = vrsqrt.pop %v5046
          %v5055 = vrsqrt.pop %v5047
          %v5056 = vrsqrt.pop %v5048
          %v5057 = vrsqrt.pop %v5049
          %v5058 = vrsqrt.pop %v5050
          %v5059 = vrsqrt.pop %v5051
          %v5060 = vrsqrt.pop %v5052
          %v5061 = vrsqrt.pop %v5053
          %v5062 = vmul.f32 %v4998, %v5054
          %v5063 = vmul.f32 %v4999, %v5055
          %v5064 = vmul.f32 %v5000, %v5056
          %v5065 = vmul.f32 %v5001, %v5057
          %v5066 = vmul.f32 %v5002, %v5058
          %v5067 = vmul.f32 %v5003, %v5059
          %v5068 = vmul.f32 %v5004, %v5060
          %v5069 = vmul.f32 %v5005, %v5061
          %v5070 = vlaneseq
          %v5071 = vshrl.u32 %v5070, 7
          %v5072 = vsub.s32 0, %v5071
          %v5073 = vrot.slane %v4962, %v5072
          %v5074 = vmul.f32 %v5062, %v5073
          %v5075 = vmul.f32 %v5063, %v5073
          %v5076 = vmul.f32 %v5064, %v5073
          %v5077 = vmul.f32 %v5065, %v5073
          %v5078 = vmul.f32 %v5066, %v5073
          %v5079 = vmul.f32 %v5067, %v5073
          %v5080 = vmul.f32 %v5068, %v5073
          %v5081 = vmul.f32 %v5069, %v5073
          %v5082 = vlaneseq
          %v5083 = vshrl.u32 %v5082, 7
          %v5084 = vsub.s32 0, %v5083
          %v5085 = vrot.slane %v4963, %v5084
          %v5086 = vadd.f32 %v5074, %v5085
          %v5087 = vadd.f32 %v5075, %v5085
          %v5088 = vadd.f32 %v5076, %v5085
          %v5089 = vadd.f32 %v5077, %v5085
          %v5090 = vadd.f32 %v5078, %v5085
          %v5091 = vadd.f32 %v5079, %v5085
          %v5092 = vadd.f32 %v5080, %v5085
          %v5093 = vadd.f32 %v5081, %v5085
          %5094 = vst.msk [vmem:[#allocation2] sm:$0xff] %vm4964, %v5086
          %5095 = vst.msk [vmem:[#allocation2 + $0x8] sm:$0xff] %vm4964, %v5087
          %5096 = vst.msk [vmem:[#allocation2 + $0x10] sm:$0xff] %vm4964, %v5088
          %5097 = vst.msk [vmem:[#allocation2 + $0x18] sm:$0xff] %vm4964, %v5089
          %5098 = vst.msk [vmem:[#allocation2 + $0x20] sm:$0xff] %vm4964, %v5090
          %5099 = vst.msk [vmem:[#allocation2 + $0x28] sm:$0xff] %vm4964, %v5091
          %5100 = vst.msk [vmem:[#allocation2 + $0x30] sm:$0xff] %vm4964, %v5092
          %5101 = vst.msk [vmem:[#allocation2 + $0x38] sm:$0xff] %vm4964, %v5093
        $region96: #{whisper_encoder_forward.3} parent=83 // pred_fallthru
          _
        // Predicated region
        $region97: #{whisper_encoder_forward.3} parent=83 // pred_check
          %p5102 = pneg %p512
        $region98: #{whisper_encoder_forward.3} parent=83 // pred_check_branch
          %5104 = sbr.rel (%p5102) target = $region100
        $region99: #{whisper_encoder_forward.3} parent=83 // pred_region
          %s5106 = ssub.s32 1024, 1024
          %5107 = vsyncadd [#allocation3], %s5106
          %s5108 = sshll.u32 [#allocation2], 4
          %s5109 = int_to_ptr.vmem [resolvable:$true] %s5108
          %5114 = dma.vmem_to_hbm [thread:$0]  %s5109, 1024, %s16, [#allocation3], 128, 128, 8
        $region100: #{whisper_encoder_forward.3} parent=83 // pred_fallthru
          _
        // Predicated region
        $region101: #{whisper_encoder_forward.3} parent=83 // pred_check
          %p5115 = pneg %p512
        $region102: #{whisper_encoder_forward.3} parent=83 // pred_check_branch
          %5117 = sbr.rel (%p5115) target = $region104
        $region103: #{whisper_encoder_forward.3} parent=83 // pred_region
          %5118 = dma.done [#allocation3], 1024
        $region104: #{whisper_encoder_forward.3} parent=83 // pred_fallthru
          _
      $region84: #{whisper_encoder_forward.3} parent=5 // pred_fallthru
        _
      %p5119 = scmp.le.s32.totalorder 2, %s23
      // Predicated region
      $region105: #{whisper_encoder_forward.3} parent=5 // pred_check
        %p5120 = pneg %p5119
      $region106: #{whisper_encoder_forward.3} parent=5 // pred_check_branch
        %5122 = sbr.rel (%p5120) target = $region108
      $region107: #{whisper_encoder_forward.3} parent=5 // pred_region
        %s5123 = ssub.s32 %s23, 2
      $region108: #{whisper_encoder_forward.3} parent=5 // pred_fallthru
        _
    $region6: #{whisper_encoder_forward.3} parent=1 // loop_footer
      %s27 = sadd.s32 1, %s23
    $region7: #{whisper_encoder_forward.3} parent=1 // loop_footer_branch
      %22 = sbr.rel target = $region3
    $region8: #{whisper_encoder_forward.3} parent=1 // loop_exit
      _
    %5124 = vsyncpa [#allocation3], 1
    %s5125 = scalar_lea.sflag [#allocation3], 1
    %5126 = vsyncpa %s5125, 1

</llo_original>
